<compile_context>
chip_gen: v6e
topology: v6e:2x2x1
jax: 0.10.0
libtpu: 0.0.40
codegen_flags: <defaults>
</compile_context>

<pallas_src>
import functools
import math

import jax
import jax.numpy as jnp
from jax.experimental import pallas as pl
from jax.experimental.pallas import tpu as pltpu

# ----------------------------------------------------------------------------
# Small configuration (stand-ins for the real 1024x1024 / 512-dim model)
# ----------------------------------------------------------------------------
BS = 2                       # batch size
IN_C = 3                     # image channels
IN_RES = 16                  # input image resolution
ENC_RES = 32                 # stand-in for the 256x256 encoder resolution
LATENT = 32                  # stand-in for the 512-dim W space
HIDDEN = 32                  # opts.hidden_dim
OUT_RES = 16                 # opts.output_size
NUM_WS = int(math.log(OUT_RES, 2)) * 2 - 2   # = 6 (opts.n_styles / num_ws)
SYN_C = 8                    # synthesis feature channels
FEAT_DIM = 32                # per-layer code dim of the layer-wise encoder
HW = OUT_RES * OUT_RES       # 256 (lane-dense)

# target_shape ('conv_without_bias_without_torgb', resolution <= output_size):
TARGET_LAYERS = {
    "b8.conv0.weight": 2,
    "b8.conv1.weight": 3,
    "b16.conv0.weight": 4,
    "b16.conv1.weight": 5,
}
N_TARGET = len(TARGET_LAYERS)
LAYER_TO_TARGET = {lidx: t for t, lidx in enumerate(TARGET_LAYERS.values())}
WBAR_DIM = N_TARGET * FEAT_DIM          # 128
LRELU_GAIN = float(math.sqrt(2.0))

FLAT_IN = IN_C * IN_RES * IN_RES        # 768 (un-resized, resize folded into W)
STYLE_LEN = NUM_WS * SYN_C              # 48
W_OFF = STYLE_LEN                       # w lives at slab[:, 48:80]
SLAB = 128                              # lane-dense merged small-output slab
H_DIM = N_TARGET * HIDDEN               # 128
EXP_DIM = N_TARGET * HIDDEN * SYN_C     # 1024 (hyper head expansion)
PRED_DIM = N_TARGET * SYN_C * SYN_C     # 256


def _vmem_spec():
    return pl.BlockSpec(memory_space=pltpu.MemorySpace.VMEM)


# ----------------------------------------------------------------------------
# Shared synthesis body (transposed, lane-dense layout: feat is (SYN_C, hw)).
# Styles are folded into the transposed (Cout, Cin) weight:
#   ((feat * s) @ W)^T == (W^T * s[None,:]) @ feat^T      (exact for 1x1 conv)
# TODO(synk): real StyleGAN2-ADA synthesis (3x3 modulated convs, demodulation,
# noise inputs, upfirdn2d) is replaced by this 1x1-conv stand-in.
# ----------------------------------------------------------------------------
def _synthesis_sample(const, convwT_ref, torgbT, u1T, u2T, styles, b, delta_b):
    feat = const                                     # (SYN_C, 16)
    for l in range(NUM_WS):
        if l == 2:                                   # 4x4 -> 8x8 nearest
            feat = jnp.dot(feat, u1T, preferred_element_type=jnp.float32)
        elif l == 4:                                 # 8x8 -> 16x16 nearest
            feat = jnp.dot(feat, u2T, preferred_element_type=jnp.float32)
        wT = convwT_ref[l]                           # (Cout, Cin) = (8, 8)
        if delta_b is not None and l in LAYER_TO_TARGET:
            t = LAYER_TO_TARGET[l]
            wT = wT + delta_b[:, t * SYN_C:(t + 1) * SYN_C]
        s_l = styles[b:b + 1, l * SYN_C:(l + 1) * SYN_C]   # (1, 8) over Cin
        w_mod = wT * s_l                             # style folded into weight
        y = jnp.dot(w_mod, feat, preferred_element_type=jnp.float32)
        feat = jnp.where(y >= 0.0, y, 0.2 * y) * LRELU_GAIN
    return jnp.dot(torgbT, feat, preferred_element_type=jnp.float32)   # (3, hw)


# ----------------------------------------------------------------------------
# Kernel 1: fused W-encoder (+ affine styles, + w passthrough, resize folded
# into the weight) and synthesis pass 1 (no added weights).
#   slab = x_flat @ Wfold + bfold        (bs, 128) lane-dense
#     slab[:, :48]   = per-layer affine styles
#     slab[:, 48:80] = w (encoder output + latent_avg)
#   img  = synthesis(styles)             (bs, 3, 256) lane-dense
# ----------------------------------------------------------------------------
def _enc_syn1_kernel(x_ref, wfold_ref, bfold_ref, const_ref, convwT_ref,
                     torgbT_ref, u1T_ref, u2T_ref, slab_ref, img_ref):
    bs = x_ref.shape[0]
    slab = (jnp.dot(x_ref[...], wfold_ref[...],
                    preferred_element_type=jnp.float32) + bfold_ref[...])
    slab_ref[...] = slab
    styles = slab[:, :STYLE_LEN]

    const = const_ref[...]
    torgbT = torgbT_ref[...]
    u1T = u1T_ref[...]
    u2T = u2T_ref[...]
    for b in range(bs):                               # static unroll (bs small)
        img_ref[b] = _synthesis_sample(const, convwT_ref, torgbT, u1T, u2T,
                                       styles, b, None)


# ----------------------------------------------------------------------------
# Kernel 2: fused layer-wise encode of x AND the pass-1 image (one shared load
# of the folded w_bar encoder weight), hypernetwork (block-diag matmuls), and
# synthesis pass 2 with the predicted per-layer weight deltas.
# ----------------------------------------------------------------------------
def _hyper_syn2_kernel(x_ref, rgb1_ref, slab_ref, wbar_ref, wbar_b_ref,
                       bd1a_ref, bd1b_ref, b1_ref, bd2_ref, b2_ref,
                       rep_ref, w2cat_ref, summ_ref, b2stk_ref,
                       const_ref, convwT_ref, torgbT_ref, u1T_ref, u2T_ref,
                       preds_ref, img_ref):
    bs = x_ref.shape[0]
    wbar_w = wbar_ref[...]                            # loaded from HBM once
    wbar_b = wbar_b_ref[...]
    # layer-wise codes of the reconstructed image and of the input image
    wic = (jnp.dot(rgb1_ref[...].astype(jnp.bfloat16), wbar_w,
                   preferred_element_type=jnp.float32) + wbar_b)
    wbar = (jnp.dot(x_ref[...], wbar_w,
                    preferred_element_type=jnp.float32) + wbar_b)
    # hypernetwork hidden layer (block-diagonal per-target MLPs)
    h = (jnp.dot(wic, bd1a_ref[...], preferred_element_type=jnp.float32)
         + jnp.dot(wbar, bd1b_ref[...], preferred_element_type=jnp.float32)
         + b1_ref[...])
    h = jnp.maximum(h, 0.0)                           # (bs, 128)
    # flat lane-dense prediction (returned dict)
    preds_ref[...] = (jnp.dot(h, bd2_ref[...],
                              preferred_element_type=jnp.float32) + b2_ref[...])

    styles = slab_ref[...][:, :STYLE_LEN]
    const = const_ref[...]
    torgbT = torgbT_ref[...]
    u1T = u1T_ref[...]
    u2T = u2T_ref[...]
    w2cat = w2cat_ref[...]
    summ = summ_ref[...]
    b2stk = b2stk_ref[...]

    for b in range(bs):                               # static unroll (bs small)
        # same linear head, sublane-stacked layout: delta_b[oc, t*8+ic]
        h_b = h[b:b + 1, :]                                          # (1, 128)
        expand = jnp.dot(h_b, rep_ref[...],
                         preferred_element_type=jnp.float32)         # (1, 1024)
        delta_b = (jnp.dot(w2cat * expand, summ,
                           preferred_element_type=jnp.float32) + b2stk)  # (8, 32)
        img_ref[b] = _synthesis_sample(const, convwT_ref, torgbT, u1T, u2T,
                                       styles, b, delta_b)


# ----------------------------------------------------------------------------
# Host-side helpers (run once at prepare time, outside jit)
# ----------------------------------------------------------------------------
def _nearest_upsample_matrix(res):
    """0/1 matrix mapping a flattened (res,res) grid to (2res,2res) nearest."""
    out = 2 * res
    oi = jnp.arange(out * out)
    r = oi // out
    c = oi % out
    src = (r // 2) * res + (c // 2)
    return jax.nn.one_hot(src, res * res, dtype=jnp.float32)   # (4res^2, res^2)


def _block_diag(blocks):
    n = len(blocks)
    r, c = blocks[0].shape
    out = jnp.zeros((n * r, n * c), blocks[0].dtype)
    for t, blk in enumerate(blocks):
        out = out.at[t * r:(t + 1) * r, t * c:(t + 1) * c].set(blk)
    return out


def prepare_params(params):
    """Fold resizes / affines / layouts into kernel-ready tensors (run once)."""
    prep = {}

    # --- bilinear resize as a fixed linear operator R: (768, 3072) ----------
    # TODO(synk): jax.image.resize bilinear ~ F.interpolate(align_corners=False);
    # the fold itself is exact linear algebra.
    eye = jnp.eye(FLAT_IN, dtype=jnp.float32).reshape(FLAT_IN, IN_C, IN_RES, IN_RES)
    R = jax.image.resize(eye, (FLAT_IN, IN_C, ENC_RES, ENC_RES), method="bilinear")
    R = R.reshape(FLAT_IN, IN_C * ENC_RES * ENC_RES)

    wenc_f = R @ params["w_enc_W"]                       # (768, 32)
    wbar_f = R @ params["wbar_W"]                        # (768, 128)

    # --- fold (encoder -> +latent_avg -> affine styles | w passthrough) -----
    aff_w = jnp.transpose(params["affine_W"], (1, 0, 2)).reshape(LATENT, STYLE_LEN)
    M = jnp.zeros((LATENT, SLAB), jnp.float32)
    M = M.at[:, :STYLE_LEN].set(aff_w)
    M = M.at[:, W_OFF:W_OFF + LATENT].set(jnp.eye(LATENT, dtype=jnp.float32))
    w_bias = (params["w_enc_b"] + params["latent_avg"]).reshape(1, LATENT)
    bfold = w_bias @ M
    bfold = bfold.at[:, :STYLE_LEN].add(params["affine_b"].reshape(1, STYLE_LEN))
    prep["wfold"] = (wenc_f @ M).astype(jnp.bfloat16)    # (768, 128)
    prep["bfold"] = bfold                                # (1, 128)

    prep["wbar_f"] = wbar_f.astype(jnp.bfloat16)         # (768, 128)
    prep["wbar_b"] = params["wbar_b"].reshape(1, WBAR_DIM)

    # --- hypernetwork as block-diagonal matmuls ------------------------------
    w1a = params["hyp_W1"][:, :FEAT_DIM, :]              # acts on w_image_codes
    w1b = params["hyp_W1"][:, FEAT_DIM:, :]              # acts on w_bar_codes
    prep["bd1a"] = _block_diag([w1a[t] for t in range(N_TARGET)])      # (128,128)
    prep["bd1b"] = _block_diag([w1b[t] for t in range(N_TARGET)])      # (128,128)
    prep["bd2"] = _block_diag([params["hyp_W2"][t] for t in range(N_TARGET)])  # (128,256)
    prep["b1_row"] = params["hyp_b1"].reshape(1, H_DIM)
    prep["b2_row"] = params["hyp_b2"].reshape(1, PRED_DIM)

    # --- same head in sublane-stacked layout: delta[oc, t*8+ic] -------------
    w2r = params["hyp_W2"].reshape(N_TARGET, HIDDEN, SYN_C, SYN_C)  # [t,j,ic,oc]
    prep["w2cat"] = jnp.transpose(w2r, (3, 0, 1, 2)).reshape(SYN_C, EXP_DIM)
    rows = jnp.arange(H_DIM)
    base = (rows // HIDDEN) * (HIDDEN * SYN_C) + (rows % HIDDEN) * SYN_C
    cols = jnp.arange(EXP_DIM)
    prep["rep"] = ((cols[None, :] >= base[:, None])
                   & (cols[None, :] < base[:, None] + SYN_C)).astype(jnp.float32)
    t_c = cols // (HIDDEN * SYN_C)
    ic_c = cols % SYN_C
    prep["summ"] = jax.nn.one_hot(t_c * SYN_C + ic_c, N_TARGET * SYN_C,
                                  dtype=jnp.float32)                  # (1024, 32)
    prep["b2stk"] = jnp.transpose(
        params["hyp_b2"].reshape(N_TARGET, SYN_C, SYN_C), (2, 0, 1)
    ).reshape(SYN_C, N_TARGET * SYN_C)                                # (8, 32)

    # --- synthesis constants in the transposed (C, hw) layout ---------------
    prep["constT"] = jnp.transpose(params["const"], (2, 0, 1)).reshape(SYN_C, 16)
    prep["convwT"] = jnp.transpose(params["conv_W"], (0, 2, 1))       # (6, 8, 8)
    prep["torgbT"] = params["torgb_W"].T                              # (3, 8)
    prep["u1T"] = _nearest_upsample_matrix(4).T                       # (16, 64)
    prep["u2T"] = _nearest_upsample_matrix(8).T                       # (64, 256)
    return prep


# ----------------------------------------------------------------------------
# HyperInverter forward (2 pallas_calls)
# ----------------------------------------------------------------------------
def hyper_inverter_forward(prep, x, return_latents=False):
    """x: (bs, 3, IN_RES, IN_RES) float32, NCHW (PyTorch convention)."""
    bs = x.shape[0]
    x_flat = x.reshape(bs, FLAT_IN).astype(jnp.bfloat16)   # NCHW flatten

    # --- call 1: W-encoder + affine styles + synthesis pass 1 ---------------
    # TODO(synk): the pretrained ir_se50 Encoder4Editing is a dense projection
    # stand-in (with the bilinear resize folded into its weight).
    args1 = (x_flat, prep["wfold"], prep["bfold"], prep["constT"],
             prep["convwT"], prep["torgbT"], prep["u1T"], prep["u2T"])
    slab, rgb1 = pl.pallas_call(
        _enc_syn1_kernel,
        out_shape=(jax.ShapeDtypeStruct((bs, SLAB), jnp.float32),
                   jax.ShapeDtypeStruct((bs, IN_C, HW), jnp.float32)),
        in_specs=[_vmem_spec() for _ in args1],
        out_specs=(_vmem_spec(), _vmem_spec()),
    )(*args1)

    rgb1 = jax.lax.stop_gradient(rgb1)                     # torch.no_grad()
    w_images = rgb1.reshape(bs, IN_C, OUT_RES, OUT_RES)    # NCHW (free reshape)

    # --- call 2: layer-wise encodes + hypernetwork + synthesis pass 2 --------
    # TODO(synk): the pretrained LayerWiseEncoder is a dense projection stand-in.
    args2 = (x_flat, rgb1.reshape(bs, FLAT_IN), slab,
             prep["wbar_f"], prep["wbar_b"],
             prep["bd1a"], prep["bd1b"], prep["b1_row"], prep["bd2"],
             prep["b2_row"], prep["rep"], prep["w2cat"], prep["summ"],
             prep["b2stk"], prep["constT"], prep["convwT"], prep["torgbT"],
             prep["u1T"], prep["u2T"])
    preds_flat, rgb2 = pl.pallas_call(
        _hyper_syn2_kernel,
        out_shape=(jax.ShapeDtypeStruct((bs, PRED_DIM), jnp.float32),
                   jax.ShapeDtypeStruct((bs, IN_C, HW), jnp.float32)),
        in_specs=[_vmem_spec() for _ in args2],
        out_specs=(_vmem_spec(), _vmem_spec()),
    )(*args2)

    final_images = rgb2.reshape(bs, IN_C, OUT_RES, OUT_RES)

    predicted_weights = {}
    for t, name in enumerate(TARGET_LAYERS):
        predicted_weights[name] = preds_flat[
            :, t * SYN_C * SYN_C:(t + 1) * SYN_C * SYN_C].reshape(bs, SYN_C, SYN_C)

    return_data = (w_images, final_images, predicted_weights)
    if return_latents:
        w = slab[:, W_OFF:W_OFF + LATENT]                  # (bs, LATENT)
        w_codes = jnp.tile(w[:, None, :], (1, NUM_WS, 1))  # (bs, NUM_WS, LATENT)
        return_data = return_data + (w_codes,)
    return return_data


# ----------------------------------------------------------------------------
# Deterministic parameter initialization (stand-in "pretrained" weights)
# ----------------------------------------------------------------------------
def init_params(key):
    ks = jax.random.split(key, 10)
    flat_resized = ENC_RES * ENC_RES * IN_C
    p = {}
    p["w_enc_W"] = 0.02 * jax.random.normal(ks[0], (flat_resized, LATENT), jnp.float32)
    p["w_enc_b"] = jnp.zeros((LATENT,), jnp.float32)
    p["latent_avg"] = 0.1 * jax.random.normal(ks[1], (LATENT,), jnp.float32)
    p["wbar_W"] = 0.02 * jax.random.normal(ks[2], (flat_resized, WBAR_DIM), jnp.float32)
    p["wbar_b"] = jnp.zeros((WBAR_DIM,), jnp.float32)
    p["hyp_W1"] = 0.05 * jax.random.normal(ks[3], (N_TARGET, 2 * FEAT_DIM, HIDDEN), jnp.float32)
    p["hyp_b1"] = jnp.zeros((N_TARGET, HIDDEN), jnp.float32)
    p["hyp_W2"] = 0.05 * jax.random.normal(ks[4], (N_TARGET, HIDDEN, SYN_C * SYN_C), jnp.float32)
    p["hyp_b2"] = jnp.zeros((N_TARGET, SYN_C * SYN_C), jnp.float32)
    p["const"] = jax.random.normal(ks[5], (4, 4, SYN_C), jnp.float32)
    p["affine_W"] = 0.1 * jax.random.normal(ks[6], (NUM_WS, LATENT, SYN_C), jnp.float32)
    p["affine_b"] = jnp.ones((NUM_WS, SYN_C), jnp.float32)
    p["conv_W"] = (1.0 / math.sqrt(SYN_C)) * jax.random.normal(
        ks[7], (NUM_WS, SYN_C, SYN_C), jnp.float32)
    p["torgb_W"] = 0.1 * jax.random.normal(ks[8], (SYN_C, 3), jnp.float32)
    return p


# ----------------------------------------------------------------------------
if __name__ == "__main__":
    key = jax.random.PRNGKey(0)
    k_param, k_x = jax.random.split(key)
    params = init_params(k_param)
    prep = prepare_params(params)          # one-time fold, outside jit
    x = jax.random.normal(k_x, (BS, IN_C, IN_RES, IN_RES), jnp.float32)

    fwd = jax.jit(functools.partial(hyper_inverter_forward, return_latents=True))
    out = fwd(prep, x)
    out = jax.block_until_ready(out)

    w_images, final_images, predicted_weights, w_codes = out
    assert w_images.shape == (BS, IN_C, OUT_RES, OUT_RES)
    assert final_images.shape == (BS, IN_C, OUT_RES, OUT_RES)
    assert w_codes.shape == (BS, NUM_WS, LATENT)
    for name in TARGET_LAYERS:
        assert predicted_weights[name].shape == (BS, SYN_C, SYN_C)
    print("KERNEL_OK")
</pallas_src>

<mosaic_0001>
module attributes {stable_mosaic.version = 11 : i64} {
  func.func @_enc_syn1_kernel(%arg0: memref<2x768xbf16, #tpu.memory_space<vmem>>, %arg1: memref<768x128xbf16, #tpu.memory_space<vmem>>, %arg2: memref<1x128xf32, #tpu.memory_space<vmem>>, %arg3: memref<8x16xf32, #tpu.memory_space<vmem>>, %arg4: memref<6x8x8xf32, #tpu.memory_space<vmem>>, %arg5: memref<3x8xf32, #tpu.memory_space<vmem>>, %arg6: memref<16x64xf32, #tpu.memory_space<vmem>>, %arg7: memref<64x256xf32, #tpu.memory_space<vmem>>, %arg8: memref<2x128xf32, #tpu.memory_space<vmem>>, %arg9: memref<2x3x256xf32, #tpu.memory_space<vmem>>) attributes {dimension_semantics = [], scalar_prefetch = 0 : i64, scratch_operands = 0 : i64, tpu.core_type = #tpu.core_type<tc>} {
    %c0 = arith.constant 0 : index
    %c0_0 = arith.constant 0 : index
    %0 = vector.load %arg0[%c0, %c0_0] : memref<2x768xbf16, #tpu.memory_space<vmem>>, vector<2x768xbf16>
    %c0_1 = arith.constant 0 : index
    %c0_2 = arith.constant 0 : index
    %1 = vector.load %arg1[%c0_1, %c0_2] : memref<768x128xbf16, #tpu.memory_space<vmem>>, vector<768x128xbf16>
    %cst = arith.constant dense<0.000000e+00> : vector<2x128xf32>
    %2 = tpu.matmul %0, %1, %cst {dimension_numbers = #tpu.dot_dimension_numbers<[1], [0], [0], [1], [0, 0, 1, 1], [], []>} : vector<2x768xbf16>, vector<768x128xbf16>, vector<2x128xf32> -> vector<2x128xf32>
    %c0_3 = arith.constant 0 : index
    %c0_4 = arith.constant 0 : index
    %3 = vector.load %arg2[%c0_3, %c0_4] : memref<1x128xf32, #tpu.memory_space<vmem>>, vector<1x128xf32>
    %4 = vector.broadcast %3 : vector<1x128xf32> to vector<2x128xf32>
    %5 = arith.addf %2, %4 : vector<2x128xf32>
    %c0_5 = arith.constant 0 : index
    %c0_6 = arith.constant 0 : index
    %6 = vector.load %arg8[%c0_5, %c0_6] : memref<2x128xf32, #tpu.memory_space<vmem>>, vector<2x128xf32>
    tpu.vector_store %arg8[%c0_5, %c0_6], %5 {strides = array<i32>} : memref<2x128xf32, #tpu.memory_space<vmem>>, vector<2x128xf32>,
    %7 = vector.extract_strided_slice %5 {offsets = [0, 0], sizes = [2, 48], strides = [1, 1]} : vector<2x128xf32> to vector<2x48xf32>
    %c0_7 = arith.constant 0 : index
    %c0_8 = arith.constant 0 : index
    %8 = vector.load %arg3[%c0_7, %c0_8] : memref<8x16xf32, #tpu.memory_space<vmem>>, vector<8x16xf32>
    %c0_9 = arith.constant 0 : index
    %c0_10 = arith.constant 0 : index
    %9 = vector.load %arg5[%c0_9, %c0_10] : memref<3x8xf32, #tpu.memory_space<vmem>>, vector<3x8xf32>
    %c0_11 = arith.constant 0 : index
    %c0_12 = arith.constant 0 : index
    %10 = vector.load %arg6[%c0_11, %c0_12] : memref<16x64xf32, #tpu.memory_space<vmem>>, vector<16x64xf32>
    %c0_13 = arith.constant 0 : index
    %c0_14 = arith.constant 0 : index
    %11 = vector.load %arg7[%c0_13, %c0_14] : memref<64x256xf32, #tpu.memory_space<vmem>>, vector<64x256xf32>
    %c0_15 = arith.constant 0 : index
    %c0_16 = arith.constant 0 : index
    %c0_17 = arith.constant 0 : index
    %12 = vector.load %arg4[%c0_15, %c0_16, %c0_17] : memref<6x8x8xf32, #tpu.memory_space<vmem>>, vector<1x8x8xf32>
    %13 = vector.shape_cast %12 : vector<1x8x8xf32> to vector<8x8xf32>
    %14 = vector.extract_strided_slice %7 {offsets = [0, 0], sizes = [1, 8], strides = [1, 1]} : vector<2x48xf32> to vector<1x8xf32>
    %15 = vector.broadcast %14 : vector<1x8xf32> to vector<8x8xf32>
    %16 = arith.mulf %13, %15 : vector<8x8xf32>
    %cst_18 = arith.constant dense<0.000000e+00> : vector<8x16xf32>
    %17 = tpu.matmul %16, %8, %cst_18 {dimension_numbers = #tpu.dot_dimension_numbers<[1], [0], [0], [1], [0, 0, 1, 1], [], []>} : vector<8x8xf32>, vector<8x16xf32>, vector<8x16xf32> -> vector<8x16xf32>
    %cst_19 = arith.constant 0.000000e+00 : f32
    %18 = vector.broadcast %cst_19 : f32 to vector<8x16xf32>
    %19 = arith.cmpf oge, %17, %18 : vector<8x16xf32>
    %cst_20 = arith.constant 2.000000e-01 : f32
    %20 = vector.broadcast %cst_20 : f32 to vector<8x16xf32>
    %21 = arith.mulf %20, %17 : vector<8x16xf32>
    %22 = arith.select %19, %17, %21 : vector<8x16xi1>, vector<8x16xf32>
    %cst_21 = arith.constant 1.41421354 : f32
    %23 = vector.broadcast %cst_21 : f32 to vector<8x16xf32>
    %24 = arith.mulf %22, %23 : vector<8x16xf32>
    %c1 = arith.constant 1 : index
    %c0_22 = arith.constant 0 : index
    %c0_23 = arith.constant 0 : index
    %25 = vector.load %arg4[%c1, %c0_22, %c0_23] : memref<6x8x8xf32, #tpu.memory_space<vmem>>, vector<1x8x8xf32>
    %26 = vector.shape_cast %25 : vector<1x8x8xf32> to vector<8x8xf32>
    %27 = vector.extract_strided_slice %7 {offsets = [0, 8], sizes = [1, 8], strides = [1, 1]} : vector<2x48xf32> to vector<1x8xf32>
    %28 = vector.broadcast %27 : vector<1x8xf32> to vector<8x8xf32>
    %29 = arith.mulf %26, %28 : vector<8x8xf32>
    %cst_24 = arith.constant dense<0.000000e+00> : vector<8x16xf32>
    %30 = tpu.matmul %29, %24, %cst_24 {dimension_numbers = #tpu.dot_dimension_numbers<[1], [0], [0], [1], [0, 0, 1, 1], [], []>} : vector<8x8xf32>, vector<8x16xf32>, vector<8x16xf32> -> vector<8x16xf32>
    %cst_25 = arith.constant 0.000000e+00 : f32
    %31 = vector.broadcast %cst_25 : f32 to vector<8x16xf32>
    %32 = arith.cmpf oge, %30, %31 : vector<8x16xf32>
    %cst_26 = arith.constant 2.000000e-01 : f32
    %33 = vector.broadcast %cst_26 : f32 to vector<8x16xf32>
    %34 = arith.mulf %33, %30 : vector<8x16xf32>
    %35 = arith.select %32, %30, %34 : vector<8x16xi1>, vector<8x16xf32>
    %cst_27 = arith.constant 1.41421354 : f32
    %36 = vector.broadcast %cst_27 : f32 to vector<8x16xf32>
    %37 = arith.mulf %35, %36 : vector<8x16xf32>
    %cst_28 = arith.constant dense<0.000000e+00> : vector<8x64xf32>
    %38 = tpu.matmul %37, %10, %cst_28 {dimension_numbers = #tpu.dot_dimension_numbers<[1], [0], [0], [1], [0, 0, 1, 1], [], []>} : vector<8x16xf32>, vector<16x64xf32>, vector<8x64xf32> -> vector<8x64xf32>
    %c2 = arith.constant 2 : index
    %c0_29 = arith.constant 0 : index
    %c0_30 = arith.constant 0 : index
    %39 = vector.load %arg4[%c2, %c0_29, %c0_30] : memref<6x8x8xf32, #tpu.memory_space<vmem>>, vector<1x8x8xf32>
    %40 = vector.shape_cast %39 : vector<1x8x8xf32> to vector<8x8xf32>
    %41 = vector.extract_strided_slice %7 {offsets = [0, 16], sizes = [1, 8], strides = [1, 1]} : vector<2x48xf32> to vector<1x8xf32>
    %42 = vector.broadcast %41 : vector<1x8xf32> to vector<8x8xf32>
    %43 = arith.mulf %40, %42 : vector<8x8xf32>
    %cst_31 = arith.constant dense<0.000000e+00> : vector<8x64xf32>
    %44 = tpu.matmul %43, %38, %cst_31 {dimension_numbers = #tpu.dot_dimension_numbers<[1], [0], [0], [1], [0, 0, 1, 1], [], []>} : vector<8x8xf32>, vector<8x64xf32>, vector<8x64xf32> -> vector<8x64xf32>
    %cst_32 = arith.constant 0.000000e+00 : f32
    %45 = vector.broadcast %cst_32 : f32 to vector<8x64xf32>
    %46 = arith.cmpf oge, %44, %45 : vector<8x64xf32>
    %cst_33 = arith.constant 2.000000e-01 : f32
    %47 = vector.broadcast %cst_33 : f32 to vector<8x64xf32>
    %48 = arith.mulf %47, %44 : vector<8x64xf32>
    %49 = arith.select %46, %44, %48 : vector<8x64xi1>, vector<8x64xf32>
    %cst_34 = arith.constant 1.41421354 : f32
    %50 = vector.broadcast %cst_34 : f32 to vector<8x64xf32>
    %51 = arith.mulf %49, %50 : vector<8x64xf32>
    %c3 = arith.constant 3 : index
    %c0_35 = arith.constant 0 : index
    %c0_36 = arith.constant 0 : index
    %52 = vector.load %arg4[%c3, %c0_35, %c0_36] : memref<6x8x8xf32, #tpu.memory_space<vmem>>, vector<1x8x8xf32>
    %53 = vector.shape_cast %52 : vector<1x8x8xf32> to vector<8x8xf32>
    %54 = vector.extract_strided_slice %7 {offsets = [0, 24], sizes = [1, 8], strides = [1, 1]} : vector<2x48xf32> to vector<1x8xf32>
    %55 = vector.broadcast %54 : vector<1x8xf32> to vector<8x8xf32>
    %56 = arith.mulf %53, %55 : vector<8x8xf32>
    %cst_37 = arith.constant dense<0.000000e+00> : vector<8x64xf32>
    %57 = tpu.matmul %56, %51, %cst_37 {dimension_numbers = #tpu.dot_dimension_numbers<[1], [0], [0], [1], [0, 0, 1, 1], [], []>} : vector<8x8xf32>, vector<8x64xf32>, vector<8x64xf32> -> vector<8x64xf32>
    %cst_38 = arith.constant 0.000000e+00 : f32
    %58 = vector.broadcast %cst_38 : f32 to vector<8x64xf32>
    %59 = arith.cmpf oge, %57, %58 : vector<8x64xf32>
    %cst_39 = arith.constant 2.000000e-01 : f32
    %60 = vector.broadcast %cst_39 : f32 to vector<8x64xf32>
    %61 = arith.mulf %60, %57 : vector<8x64xf32>
    %62 = arith.select %59, %57, %61 : vector<8x64xi1>, vector<8x64xf32>
    %cst_40 = arith.constant 1.41421354 : f32
    %63 = vector.broadcast %cst_40 : f32 to vector<8x64xf32>
    %64 = arith.mulf %62, %63 : vector<8x64xf32>
    %cst_41 = arith.constant dense<0.000000e+00> : vector<8x256xf32>
    %65 = tpu.matmul %64, %11, %cst_41 {dimension_numbers = #tpu.dot_dimension_numbers<[1], [0], [0], [1], [0, 0, 1, 1], [], []>} : vector<8x64xf32>, vector<64x256xf32>, vector<8x256xf32> -> vector<8x256xf32>
    %c4 = arith.constant 4 : index
    %c0_42 = arith.constant 0 : index
    %c0_43 = arith.constant 0 : index
    %66 = vector.load %arg4[%c4, %c0_42, %c0_43] : memref<6x8x8xf32, #tpu.memory_space<vmem>>, vector<1x8x8xf32>
    %67 = vector.shape_cast %66 : vector<1x8x8xf32> to vector<8x8xf32>
    %68 = vector.extract_strided_slice %7 {offsets = [0, 32], sizes = [1, 8], strides = [1, 1]} : vector<2x48xf32> to vector<1x8xf32>
    %69 = vector.broadcast %68 : vector<1x8xf32> to vector<8x8xf32>
    %70 = arith.mulf %67, %69 : vector<8x8xf32>
    %cst_44 = arith.constant dense<0.000000e+00> : vector<8x256xf32>
    %71 = tpu.matmul %70, %65, %cst_44 {dimension_numbers = #tpu.dot_dimension_numbers<[1], [0], [0], [1], [0, 0, 1, 1], [], []>} : vector<8x8xf32>, vector<8x256xf32>, vector<8x256xf32> -> vector<8x256xf32>
    %cst_45 = arith.constant 0.000000e+00 : f32
    %72 = vector.broadcast %cst_45 : f32 to vector<8x256xf32>
    %73 = arith.cmpf oge, %71, %72 : vector<8x256xf32>
    %cst_46 = arith.constant 2.000000e-01 : f32
    %74 = vector.broadcast %cst_46 : f32 to vector<8x256xf32>
    %75 = arith.mulf %74, %71 : vector<8x256xf32>
    %76 = arith.select %73, %71, %75 : vector<8x256xi1>, vector<8x256xf32>
    %cst_47 = arith.constant 1.41421354 : f32
    %77 = vector.broadcast %cst_47 : f32 to vector<8x256xf32>
    %78 = arith.mulf %76, %77 : vector<8x256xf32>
    %c5 = arith.constant 5 : index
    %c0_48 = arith.constant 0 : index
    %c0_49 = arith.constant 0 : index
    %79 = vector.load %arg4[%c5, %c0_48, %c0_49] : memref<6x8x8xf32, #tpu.memory_space<vmem>>, vector<1x8x8xf32>
    %80 = vector.shape_cast %79 : vector<1x8x8xf32> to vector<8x8xf32>
    %81 = vector.extract_strided_slice %7 {offsets = [0, 40], sizes = [1, 8], strides = [1, 1]} : vector<2x48xf32> to vector<1x8xf32>
    %82 = vector.broadcast %81 : vector<1x8xf32> to vector<8x8xf32>
    %83 = arith.mulf %80, %82 : vector<8x8xf32>
    %cst_50 = arith.constant dense<0.000000e+00> : vector<8x256xf32>
    %84 = tpu.matmul %83, %78, %cst_50 {dimension_numbers = #tpu.dot_dimension_numbers<[1], [0], [0], [1], [0, 0, 1, 1], [], []>} : vector<8x8xf32>, vector<8x256xf32>, vector<8x256xf32> -> vector<8x256xf32>
    %cst_51 = arith.constant 0.000000e+00 : f32
    %85 = vector.broadcast %cst_51 : f32 to vector<8x256xf32>
    %86 = arith.cmpf oge, %84, %85 : vector<8x256xf32>
    %cst_52 = arith.constant 2.000000e-01 : f32
    %87 = vector.broadcast %cst_52 : f32 to vector<8x256xf32>
    %88 = arith.mulf %87, %84 : vector<8x256xf32>
    %89 = arith.select %86, %84, %88 : vector<8x256xi1>, vector<8x256xf32>
    %cst_53 = arith.constant 1.41421354 : f32
    %90 = vector.broadcast %cst_53 : f32 to vector<8x256xf32>
    %91 = arith.mulf %89, %90 : vector<8x256xf32>
    %cst_54 = arith.constant dense<0.000000e+00> : vector<3x256xf32>
    %92 = tpu.matmul %9, %91, %cst_54 {dimension_numbers = #tpu.dot_dimension_numbers<[1], [0], [0], [1], [0, 0, 1, 1], [], []>} : vector<3x8xf32>, vector<8x256xf32>, vector<3x256xf32> -> vector<3x256xf32>
    %c0_55 = arith.constant 0 : index
    %c0_56 = arith.constant 0 : index
    %c0_57 = arith.constant 0 : index
    %93 = vector.load %arg9[%c0_55, %c0_56, %c0_57] : memref<2x3x256xf32, #tpu.memory_space<vmem>>, vector<1x3x256xf32>
    %94 = vector.shape_cast %93 : vector<1x3x256xf32> to vector<3x256xf32>
    %95 = vector.shape_cast %92 : vector<3x256xf32> to vector<1x3x256xf32>
    tpu.vector_store %arg9[%c0_55, %c0_56, %c0_57], %95 {strides = array<i32>} : memref<2x3x256xf32, #tpu.memory_space<vmem>>, vector<1x3x256xf32>,
    %c0_58 = arith.constant 0 : index
    %c0_59 = arith.constant 0 : index
    %c0_60 = arith.constant 0 : index
    %96 = vector.load %arg4[%c0_58, %c0_59, %c0_60] : memref<6x8x8xf32, #tpu.memory_space<vmem>>, vector<1x8x8xf32>
    %97 = vector.shape_cast %96 : vector<1x8x8xf32> to vector<8x8xf32>
    %98 = vector.extract_strided_slice %7 {offsets = [1, 0], sizes = [1, 8], strides = [1, 1]} : vector<2x48xf32> to vector<1x8xf32>
    %99 = vector.broadcast %98 : vector<1x8xf32> to vector<8x8xf32>
    %100 = arith.mulf %97, %99 : vector<8x8xf32>
    %cst_61 = arith.constant dense<0.000000e+00> : vector<8x16xf32>
    %101 = tpu.matmul %100, %8, %cst_61 {dimension_numbers = #tpu.dot_dimension_numbers<[1], [0], [0], [1], [0, 0, 1, 1], [], []>} : vector<8x8xf32>, vector<8x16xf32>, vector<8x16xf32> -> vector<8x16xf32>
    %cst_62 = arith.constant 0.000000e+00 : f32
    %102 = vector.broadcast %cst_62 : f32 to vector<8x16xf32>
    %103 = arith.cmpf oge, %101, %102 : vector<8x16xf32>
    %cst_63 = arith.constant 2.000000e-01 : f32
    %104 = vector.broadcast %cst_63 : f32 to vector<8x16xf32>
    %105 = arith.mulf %104, %101 : vector<8x16xf32>
    %106 = arith.select %103, %101, %105 : vector<8x16xi1>, vector<8x16xf32>
    %cst_64 = arith.constant 1.41421354 : f32
    %107 = vector.broadcast %cst_64 : f32 to vector<8x16xf32>
    %108 = arith.mulf %106, %107 : vector<8x16xf32>
    %c1_65 = arith.constant 1 : index
    %c0_66 = arith.constant 0 : index
    %c0_67 = arith.constant 0 : index
    %109 = vector.load %arg4[%c1_65, %c0_66, %c0_67] : memref<6x8x8xf32, #tpu.memory_space<vmem>>, vector<1x8x8xf32>
    %110 = vector.shape_cast %109 : vector<1x8x8xf32> to vector<8x8xf32>
    %111 = vector.extract_strided_slice %7 {offsets = [1, 8], sizes = [1, 8], strides = [1, 1]} : vector<2x48xf32> to vector<1x8xf32>
    %112 = vector.broadcast %111 : vector<1x8xf32> to vector<8x8xf32>
    %113 = arith.mulf %110, %112 : vector<8x8xf32>
    %cst_68 = arith.constant dense<0.000000e+00> : vector<8x16xf32>
    %114 = tpu.matmul %113, %108, %cst_68 {dimension_numbers = #tpu.dot_dimension_numbers<[1], [0], [0], [1], [0, 0, 1, 1], [], []>} : vector<8x8xf32>, vector<8x16xf32>, vector<8x16xf32> -> vector<8x16xf32>
    %cst_69 = arith.constant 0.000000e+00 : f32
    %115 = vector.broadcast %cst_69 : f32 to vector<8x16xf32>
    %116 = arith.cmpf oge, %114, %115 : vector<8x16xf32>
    %cst_70 = arith.constant 2.000000e-01 : f32
    %117 = vector.broadcast %cst_70 : f32 to vector<8x16xf32>
    %118 = arith.mulf %117, %114 : vector<8x16xf32>
    %119 = arith.select %116, %114, %118 : vector<8x16xi1>, vector<8x16xf32>
    %cst_71 = arith.constant 1.41421354 : f32
    %120 = vector.broadcast %cst_71 : f32 to vector<8x16xf32>
    %121 = arith.mulf %119, %120 : vector<8x16xf32>
    %cst_72 = arith.constant dense<0.000000e+00> : vector<8x64xf32>
    %122 = tpu.matmul %121, %10, %cst_72 {dimension_numbers = #tpu.dot_dimension_numbers<[1], [0], [0], [1], [0, 0, 1, 1], [], []>} : vector<8x16xf32>, vector<16x64xf32>, vector<8x64xf32> -> vector<8x64xf32>
    %c2_73 = arith.constant 2 : index
    %c0_74 = arith.constant 0 : index
    %c0_75 = arith.constant 0 : index
    %123 = vector.load %arg4[%c2_73, %c0_74, %c0_75] : memref<6x8x8xf32, #tpu.memory_space<vmem>>, vector<1x8x8xf32>
    %124 = vector.shape_cast %123 : vector<1x8x8xf32> to vector<8x8xf32>
    %125 = vector.extract_strided_slice %7 {offsets = [1, 16], sizes = [1, 8], strides = [1, 1]} : vector<2x48xf32> to vector<1x8xf32>
    %126 = vector.broadcast %125 : vector<1x8xf32> to vector<8x8xf32>
    %127 = arith.mulf %124, %126 : vector<8x8xf32>
    %cst_76 = arith.constant dense<0.000000e+00> : vector<8x64xf32>
    %128 = tpu.matmul %127, %122, %cst_76 {dimension_numbers = #tpu.dot_dimension_numbers<[1], [0], [0], [1], [0, 0, 1, 1], [], []>} : vector<8x8xf32>, vector<8x64xf32>, vector<8x64xf32> -> vector<8x64xf32>
    %cst_77 = arith.constant 0.000000e+00 : f32
    %129 = vector.broadcast %cst_77 : f32 to vector<8x64xf32>
    %130 = arith.cmpf oge, %128, %129 : vector<8x64xf32>
    %cst_78 = arith.constant 2.000000e-01 : f32
    %131 = vector.broadcast %cst_78 : f32 to vector<8x64xf32>
    %132 = arith.mulf %131, %128 : vector<8x64xf32>
    %133 = arith.select %130, %128, %132 : vector<8x64xi1>, vector<8x64xf32>
    %cst_79 = arith.constant 1.41421354 : f32
    %134 = vector.broadcast %cst_79 : f32 to vector<8x64xf32>
    %135 = arith.mulf %133, %134 : vector<8x64xf32>
    %c3_80 = arith.constant 3 : index
    %c0_81 = arith.constant 0 : index
    %c0_82 = arith.constant 0 : index
    %136 = vector.load %arg4[%c3_80, %c0_81, %c0_82] : memref<6x8x8xf32, #tpu.memory_space<vmem>>, vector<1x8x8xf32>
    %137 = vector.shape_cast %136 : vector<1x8x8xf32> to vector<8x8xf32>
    %138 = vector.extract_strided_slice %7 {offsets = [1, 24], sizes = [1, 8], strides = [1, 1]} : vector<2x48xf32> to vector<1x8xf32>
    %139 = vector.broadcast %138 : vector<1x8xf32> to vector<8x8xf32>
    %140 = arith.mulf %137, %139 : vector<8x8xf32>
    %cst_83 = arith.constant dense<0.000000e+00> : vector<8x64xf32>
    %141 = tpu.matmul %140, %135, %cst_83 {dimension_numbers = #tpu.dot_dimension_numbers<[1], [0], [0], [1], [0, 0, 1, 1], [], []>} : vector<8x8xf32>, vector<8x64xf32>, vector<8x64xf32> -> vector<8x64xf32>
    %cst_84 = arith.constant 0.000000e+00 : f32
    %142 = vector.broadcast %cst_84 : f32 to vector<8x64xf32>
    %143 = arith.cmpf oge, %141, %142 : vector<8x64xf32>
    %cst_85 = arith.constant 2.000000e-01 : f32
    %144 = vector.broadcast %cst_85 : f32 to vector<8x64xf32>
    %145 = arith.mulf %144, %141 : vector<8x64xf32>
    %146 = arith.select %143, %141, %145 : vector<8x64xi1>, vector<8x64xf32>
    %cst_86 = arith.constant 1.41421354 : f32
    %147 = vector.broadcast %cst_86 : f32 to vector<8x64xf32>
    %148 = arith.mulf %146, %147 : vector<8x64xf32>
    %cst_87 = arith.constant dense<0.000000e+00> : vector<8x256xf32>
    %149 = tpu.matmul %148, %11, %cst_87 {dimension_numbers = #tpu.dot_dimension_numbers<[1], [0], [0], [1], [0, 0, 1, 1], [], []>} : vector<8x64xf32>, vector<64x256xf32>, vector<8x256xf32> -> vector<8x256xf32>
    %c4_88 = arith.constant 4 : index
    %c0_89 = arith.constant 0 : index
    %c0_90 = arith.constant 0 : index
    %150 = vector.load %arg4[%c4_88, %c0_89, %c0_90] : memref<6x8x8xf32, #tpu.memory_space<vmem>>, vector<1x8x8xf32>
    %151 = vector.shape_cast %150 : vector<1x8x8xf32> to vector<8x8xf32>
    %152 = vector.extract_strided_slice %7 {offsets = [1, 32], sizes = [1, 8], strides = [1, 1]} : vector<2x48xf32> to vector<1x8xf32>
    %153 = vector.broadcast %152 : vector<1x8xf32> to vector<8x8xf32>
    %154 = arith.mulf %151, %153 : vector<8x8xf32>
    %cst_91 = arith.constant dense<0.000000e+00> : vector<8x256xf32>
    %155 = tpu.matmul %154, %149, %cst_91 {dimension_numbers = #tpu.dot_dimension_numbers<[1], [0], [0], [1], [0, 0, 1, 1], [], []>} : vector<8x8xf32>, vector<8x256xf32>, vector<8x256xf32> -> vector<8x256xf32>
    %cst_92 = arith.constant 0.000000e+00 : f32
    %156 = vector.broadcast %cst_92 : f32 to vector<8x256xf32>
    %157 = arith.cmpf oge, %155, %156 : vector<8x256xf32>
    %cst_93 = arith.constant 2.000000e-01 : f32
    %158 = vector.broadcast %cst_93 : f32 to vector<8x256xf32>
    %159 = arith.mulf %158, %155 : vector<8x256xf32>
    %160 = arith.select %157, %155, %159 : vector<8x256xi1>, vector<8x256xf32>
    %cst_94 = arith.constant 1.41421354 : f32
    %161 = vector.broadcast %cst_94 : f32 to vector<8x256xf32>
    %162 = arith.mulf %160, %161 : vector<8x256xf32>
    %c5_95 = arith.constant 5 : index
    %c0_96 = arith.constant 0 : index
    %c0_97 = arith.constant 0 : index
    %163 = vector.load %arg4[%c5_95, %c0_96, %c0_97] : memref<6x8x8xf32, #tpu.memory_space<vmem>>, vector<1x8x8xf32>
    %164 = vector.shape_cast %163 : vector<1x8x8xf32> to vector<8x8xf32>
    %165 = vector.extract_strided_slice %7 {offsets = [1, 40], sizes = [1, 8], strides = [1, 1]} : vector<2x48xf32> to vector<1x8xf32>
    %166 = vector.broadcast %165 : vector<1x8xf32> to vector<8x8xf32>
    %167 = arith.mulf %164, %166 : vector<8x8xf32>
    %cst_98 = arith.constant dense<0.000000e+00> : vector<8x256xf32>
    %168 = tpu.matmul %167, %162, %cst_98 {dimension_numbers = #tpu.dot_dimension_numbers<[1], [0], [0], [1], [0, 0, 1, 1], [], []>} : vector<8x8xf32>, vector<8x256xf32>, vector<8x256xf32> -> vector<8x256xf32>
    %cst_99 = arith.constant 0.000000e+00 : f32
    %169 = vector.broadcast %cst_99 : f32 to vector<8x256xf32>
    %170 = arith.cmpf oge, %168, %169 : vector<8x256xf32>
    %cst_100 = arith.constant 2.000000e-01 : f32
    %171 = vector.broadcast %cst_100 : f32 to vector<8x256xf32>
    %172 = arith.mulf %171, %168 : vector<8x256xf32>
    %173 = arith.select %170, %168, %172 : vector<8x256xi1>, vector<8x256xf32>
    %cst_101 = arith.constant 1.41421354 : f32
    %174 = vector.broadcast %cst_101 : f32 to vector<8x256xf32>
    %175 = arith.mulf %173, %174 : vector<8x256xf32>
    %cst_102 = arith.constant dense<0.000000e+00> : vector<3x256xf32>
    %176 = tpu.matmul %9, %175, %cst_102 {dimension_numbers = #tpu.dot_dimension_numbers<[1], [0], [0], [1], [0, 0, 1, 1], [], []>} : vector<3x8xf32>, vector<8x256xf32>, vector<3x256xf32> -> vector<3x256xf32>
    %c1_103 = arith.constant 1 : index
    %c0_104 = arith.constant 0 : index
    %c0_105 = arith.constant 0 : index
    %177 = vector.load %arg9[%c1_103, %c0_104, %c0_105] : memref<2x3x256xf32, #tpu.memory_space<vmem>>, vector<1x3x256xf32>
    %178 = vector.shape_cast %177 : vector<1x3x256xf32> to vector<3x256xf32>
    %179 = vector.shape_cast %176 : vector<3x256xf32> to vector<1x3x256xf32>
    tpu.vector_store %arg9[%c1_103, %c0_104, %c0_105], %179 {strides = array<i32>} : memref<2x3x256xf32, #tpu.memory_space<vmem>>, vector<1x3x256xf32>,
    return
  }
}

module attributes {stable_mosaic.version = 11 : i64} {
  func.func @_hyper_syn2_kernel(%arg0: memref<2x768xbf16, #tpu.memory_space<vmem>>, %arg1: memref<2x768xf32, #tpu.memory_space<vmem>>, %arg2: memref<2x128xf32, #tpu.memory_space<vmem>>, %arg3: memref<768x128xbf16, #tpu.memory_space<vmem>>, %arg4: memref<1x128xf32, #tpu.memory_space<vmem>>, %arg5: memref<128x128xf32, #tpu.memory_space<vmem>>, %arg6: memref<128x128xf32, #tpu.memory_space<vmem>>, %arg7: memref<1x128xf32, #tpu.memory_space<vmem>>, %arg8: memref<128x256xf32, #tpu.memory_space<vmem>>, %arg9: memref<1x256xf32, #tpu.memory_space<vmem>>, %arg10: memref<128x1024xf32, #tpu.memory_space<vmem>>, %arg11: memref<8x1024xf32, #tpu.memory_space<vmem>>, %arg12: memref<1024x32xf32, #tpu.memory_space<vmem>>, %arg13: memref<8x32xf32, #tpu.memory_space<vmem>>, %arg14: memref<8x16xf32, #tpu.memory_space<vmem>>, %arg15: memref<6x8x8xf32, #tpu.memory_space<vmem>>, %arg16: memref<3x8xf32, #tpu.memory_space<vmem>>, %arg17: memref<16x64xf32, #tpu.memory_space<vmem>>, %arg18: memref<64x256xf32, #tpu.memory_space<vmem>>, %arg19: memref<2x256xf32, #tpu.memory_space<vmem>>, %arg20: memref<2x3x256xf32, #tpu.memory_space<vmem>>) attributes {dimension_semantics = [], scalar_prefetch = 0 : i64, scratch_operands = 0 : i64, tpu.core_type = #tpu.core_type<tc>} {
    %c0 = arith.constant 0 : index
    %c0_0 = arith.constant 0 : index
    %0 = vector.load %arg3[%c0, %c0_0] : memref<768x128xbf16, #tpu.memory_space<vmem>>, vector<768x128xbf16>
    %c0_1 = arith.constant 0 : index
    %c0_2 = arith.constant 0 : index
    %1 = vector.load %arg4[%c0_1, %c0_2] : memref<1x128xf32, #tpu.memory_space<vmem>>, vector<1x128xf32>
    %c0_3 = arith.constant 0 : index
    %c0_4 = arith.constant 0 : index
    %2 = vector.load %arg1[%c0_3, %c0_4] : memref<2x768xf32, #tpu.memory_space<vmem>>, vector<2x768xf32>
    %3 = arith.truncf %2 : vector<2x768xf32> to vector<2x768xbf16>
    %cst = arith.constant dense<0.000000e+00> : vector<2x128xf32>
    %4 = tpu.matmul %3, %0, %cst {dimension_numbers = #tpu.dot_dimension_numbers<[1], [0], [0], [1], [0, 0, 1, 1], [], []>} : vector<2x768xbf16>, vector<768x128xbf16>, vector<2x128xf32> -> vector<2x128xf32>
    %5 = vector.broadcast %1 : vector<1x128xf32> to vector<2x128xf32>
    %6 = arith.addf %4, %5 : vector<2x128xf32>
    %c0_5 = arith.constant 0 : index
    %c0_6 = arith.constant 0 : index
    %7 = vector.load %arg0[%c0_5, %c0_6] : memref<2x768xbf16, #tpu.memory_space<vmem>>, vector<2x768xbf16>
    %cst_7 = arith.constant dense<0.000000e+00> : vector<2x128xf32>
    %8 = tpu.matmul %7, %0, %cst_7 {dimension_numbers = #tpu.dot_dimension_numbers<[1], [0], [0], [1], [0, 0, 1, 1], [], []>} : vector<2x768xbf16>, vector<768x128xbf16>, vector<2x128xf32> -> vector<2x128xf32>
    %9 = vector.broadcast %1 : vector<1x128xf32> to vector<2x128xf32>
    %10 = arith.addf %8, %9 : vector<2x128xf32>
    %c0_8 = arith.constant 0 : index
    %c0_9 = arith.constant 0 : index
    %11 = vector.load %arg5[%c0_8, %c0_9] : memref<128x128xf32, #tpu.memory_space<vmem>>, vector<128x128xf32>
    %cst_10 = arith.constant dense<0.000000e+00> : vector<2x128xf32>
    %12 = tpu.matmul %6, %11, %cst_10 {dimension_numbers = #tpu.dot_dimension_numbers<[1], [0], [0], [1], [0, 0, 1, 1], [], []>} : vector<2x128xf32>, vector<128x128xf32>, vector<2x128xf32> -> vector<2x128xf32>
    %c0_11 = arith.constant 0 : index
    %c0_12 = arith.constant 0 : index
    %13 = vector.load %arg6[%c0_11, %c0_12] : memref<128x128xf32, #tpu.memory_space<vmem>>, vector<128x128xf32>
    %cst_13 = arith.constant dense<0.000000e+00> : vector<2x128xf32>
    %14 = tpu.matmul %10, %13, %cst_13 {dimension_numbers = #tpu.dot_dimension_numbers<[1], [0], [0], [1], [0, 0, 1, 1], [], []>} : vector<2x128xf32>, vector<128x128xf32>, vector<2x128xf32> -> vector<2x128xf32>
    %15 = arith.addf %12, %14 : vector<2x128xf32>
    %c0_14 = arith.constant 0 : index
    %c0_15 = arith.constant 0 : index
    %16 = vector.load %arg7[%c0_14, %c0_15] : memref<1x128xf32, #tpu.memory_space<vmem>>, vector<1x128xf32>
    %17 = vector.broadcast %16 : vector<1x128xf32> to vector<2x128xf32>
    %18 = arith.addf %15, %17 : vector<2x128xf32>
    %cst_16 = arith.constant 0.000000e+00 : f32
    %19 = vector.broadcast %cst_16 : f32 to vector<2x128xf32>
    %20 = arith.maximumf %18, %19 : vector<2x128xf32>
    %c0_17 = arith.constant 0 : index
    %c0_18 = arith.constant 0 : index
    %21 = vector.load %arg8[%c0_17, %c0_18] : memref<128x256xf32, #tpu.memory_space<vmem>>, vector<128x256xf32>
    %cst_19 = arith.constant dense<0.000000e+00> : vector<2x256xf32>
    %22 = tpu.matmul %20, %21, %cst_19 {dimension_numbers = #tpu.dot_dimension_numbers<[1], [0], [0], [1], [0, 0, 1, 1], [], []>} : vector<2x128xf32>, vector<128x256xf32>, vector<2x256xf32> -> vector<2x256xf32>
    %c0_20 = arith.constant 0 : index
    %c0_21 = arith.constant 0 : index
    %23 = vector.load %arg9[%c0_20, %c0_21] : memref<1x256xf32, #tpu.memory_space<vmem>>, vector<1x256xf32>
    %24 = vector.broadcast %23 : vector<1x256xf32> to vector<2x256xf32>
    %25 = arith.addf %22, %24 : vector<2x256xf32>
    %c0_22 = arith.constant 0 : index
    %c0_23 = arith.constant 0 : index
    %26 = vector.load %arg19[%c0_22, %c0_23] : memref<2x256xf32, #tpu.memory_space<vmem>>, vector<2x256xf32>
    tpu.vector_store %arg19[%c0_22, %c0_23], %25 {strides = array<i32>} : memref<2x256xf32, #tpu.memory_space<vmem>>, vector<2x256xf32>,
    %c0_24 = arith.constant 0 : index
    %c0_25 = arith.constant 0 : index
    %27 = vector.load %arg2[%c0_24, %c0_25] : memref<2x128xf32, #tpu.memory_space<vmem>>, vector<2x128xf32>
    %28 = vector.extract_strided_slice %27 {offsets = [0, 0], sizes = [2, 48], strides = [1, 1]} : vector<2x128xf32> to vector<2x48xf32>
    %c0_26 = arith.constant 0 : index
    %c0_27 = arith.constant 0 : index
    %29 = vector.load %arg14[%c0_26, %c0_27] : memref<8x16xf32, #tpu.memory_space<vmem>>, vector<8x16xf32>
    %c0_28 = arith.constant 0 : index
    %c0_29 = arith.constant 0 : index
    %30 = vector.load %arg16[%c0_28, %c0_29] : memref<3x8xf32, #tpu.memory_space<vmem>>, vector<3x8xf32>
    %c0_30 = arith.constant 0 : index
    %c0_31 = arith.constant 0 : index
    %31 = vector.load %arg17[%c0_30, %c0_31] : memref<16x64xf32, #tpu.memory_space<vmem>>, vector<16x64xf32>
    %c0_32 = arith.constant 0 : index
    %c0_33 = arith.constant 0 : index
    %32 = vector.load %arg18[%c0_32, %c0_33] : memref<64x256xf32, #tpu.memory_space<vmem>>, vector<64x256xf32>
    %c0_34 = arith.constant 0 : index
    %c0_35 = arith.constant 0 : index
    %33 = vector.load %arg11[%c0_34, %c0_35] : memref<8x1024xf32, #tpu.memory_space<vmem>>, vector<8x1024xf32>
    %c0_36 = arith.constant 0 : index
    %c0_37 = arith.constant 0 : index
    %34 = vector.load %arg12[%c0_36, %c0_37] : memref<1024x32xf32, #tpu.memory_space<vmem>>, vector<1024x32xf32>
    %c0_38 = arith.constant 0 : index
    %c0_39 = arith.constant 0 : index
    %35 = vector.load %arg13[%c0_38, %c0_39] : memref<8x32xf32, #tpu.memory_space<vmem>>, vector<8x32xf32>
    %36 = vector.extract_strided_slice %20 {offsets = [0, 0], sizes = [1, 128], strides = [1, 1]} : vector<2x128xf32> to vector<1x128xf32>
    %c0_40 = arith.constant 0 : index
    %c0_41 = arith.constant 0 : index
    %37 = vector.load %arg10[%c0_40, %c0_41] : memref<128x1024xf32, #tpu.memory_space<vmem>>, vector<128x1024xf32>
    %cst_42 = arith.constant dense<0.000000e+00> : vector<1x1024xf32>
    %38 = tpu.matmul %36, %37, %cst_42 {dimension_numbers = #tpu.dot_dimension_numbers<[1], [0], [0], [1], [0, 0, 1, 1], [], []>} : vector<1x128xf32>, vector<128x1024xf32>, vector<1x1024xf32> -> vector<1x1024xf32>
    %39 = vector.broadcast %38 : vector<1x1024xf32> to vector<8x1024xf32>
    %40 = arith.mulf %33, %39 : vector<8x1024xf32>
    %cst_43 = arith.constant dense<0.000000e+00> : vector<8x32xf32>
    %41 = tpu.matmul %40, %34, %cst_43 {dimension_numbers = #tpu.dot_dimension_numbers<[1], [0], [0], [1], [0, 0, 1, 1], [], []>} : vector<8x1024xf32>, vector<1024x32xf32>, vector<8x32xf32> -> vector<8x32xf32>
    %42 = arith.addf %41, %35 : vector<8x32xf32>
    %c0_44 = arith.constant 0 : index
    %c0_45 = arith.constant 0 : index
    %c0_46 = arith.constant 0 : index
    %43 = vector.load %arg15[%c0_44, %c0_45, %c0_46] : memref<6x8x8xf32, #tpu.memory_space<vmem>>, vector<1x8x8xf32>
    %44 = vector.shape_cast %43 : vector<1x8x8xf32> to vector<8x8xf32>
    %45 = vector.extract_strided_slice %28 {offsets = [0, 0], sizes = [1, 8], strides = [1, 1]} : vector<2x48xf32> to vector<1x8xf32>
    %46 = vector.broadcast %45 : vector<1x8xf32> to vector<8x8xf32>
    %47 = arith.mulf %44, %46 : vector<8x8xf32>
    %cst_47 = arith.constant dense<0.000000e+00> : vector<8x16xf32>
    %48 = tpu.matmul %47, %29, %cst_47 {dimension_numbers = #tpu.dot_dimension_numbers<[1], [0], [0], [1], [0, 0, 1, 1], [], []>} : vector<8x8xf32>, vector<8x16xf32>, vector<8x16xf32> -> vector<8x16xf32>
    %cst_48 = arith.constant 0.000000e+00 : f32
    %49 = vector.broadcast %cst_48 : f32 to vector<8x16xf32>
    %50 = arith.cmpf oge, %48, %49 : vector<8x16xf32>
    %cst_49 = arith.constant 2.000000e-01 : f32
    %51 = vector.broadcast %cst_49 : f32 to vector<8x16xf32>
    %52 = arith.mulf %51, %48 : vector<8x16xf32>
    %53 = arith.select %50, %48, %52 : vector<8x16xi1>, vector<8x16xf32>
    %cst_50 = arith.constant 1.41421354 : f32
    %54 = vector.broadcast %cst_50 : f32 to vector<8x16xf32>
    %55 = arith.mulf %53, %54 : vector<8x16xf32>
    %c1 = arith.constant 1 : index
    %c0_51 = arith.constant 0 : index
    %c0_52 = arith.constant 0 : index
    %56 = vector.load %arg15[%c1, %c0_51, %c0_52] : memref<6x8x8xf32, #tpu.memory_space<vmem>>, vector<1x8x8xf32>
    %57 = vector.shape_cast %56 : vector<1x8x8xf32> to vector<8x8xf32>
    %58 = vector.extract_strided_slice %28 {offsets = [0, 8], sizes = [1, 8], strides = [1, 1]} : vector<2x48xf32> to vector<1x8xf32>
    %59 = vector.broadcast %58 : vector<1x8xf32> to vector<8x8xf32>
    %60 = arith.mulf %57, %59 : vector<8x8xf32>
    %cst_53 = arith.constant dense<0.000000e+00> : vector<8x16xf32>
    %61 = tpu.matmul %60, %55, %cst_53 {dimension_numbers = #tpu.dot_dimension_numbers<[1], [0], [0], [1], [0, 0, 1, 1], [], []>} : vector<8x8xf32>, vector<8x16xf32>, vector<8x16xf32> -> vector<8x16xf32>
    %cst_54 = arith.constant 0.000000e+00 : f32
    %62 = vector.broadcast %cst_54 : f32 to vector<8x16xf32>
    %63 = arith.cmpf oge, %61, %62 : vector<8x16xf32>
    %cst_55 = arith.constant 2.000000e-01 : f32
    %64 = vector.broadcast %cst_55 : f32 to vector<8x16xf32>
    %65 = arith.mulf %64, %61 : vector<8x16xf32>
    %66 = arith.select %63, %61, %65 : vector<8x16xi1>, vector<8x16xf32>
    %cst_56 = arith.constant 1.41421354 : f32
    %67 = vector.broadcast %cst_56 : f32 to vector<8x16xf32>
    %68 = arith.mulf %66, %67 : vector<8x16xf32>
    %cst_57 = arith.constant dense<0.000000e+00> : vector<8x64xf32>
    %69 = tpu.matmul %68, %31, %cst_57 {dimension_numbers = #tpu.dot_dimension_numbers<[1], [0], [0], [1], [0, 0, 1, 1], [], []>} : vector<8x16xf32>, vector<16x64xf32>, vector<8x64xf32> -> vector<8x64xf32>
    %c2 = arith.constant 2 : index
    %c0_58 = arith.constant 0 : index
    %c0_59 = arith.constant 0 : index
    %70 = vector.load %arg15[%c2, %c0_58, %c0_59] : memref<6x8x8xf32, #tpu.memory_space<vmem>>, vector<1x8x8xf32>
    %71 = vector.shape_cast %70 : vector<1x8x8xf32> to vector<8x8xf32>
    %72 = vector.extract_strided_slice %42 {offsets = [0, 0], sizes = [8, 8], strides = [1, 1]} : vector<8x32xf32> to vector<8x8xf32>
    %73 = arith.addf %71, %72 : vector<8x8xf32>
    %74 = vector.extract_strided_slice %28 {offsets = [0, 16], sizes = [1, 8], strides = [1, 1]} : vector<2x48xf32> to vector<1x8xf32>
    %75 = vector.broadcast %74 : vector<1x8xf32> to vector<8x8xf32>
    %76 = arith.mulf %73, %75 : vector<8x8xf32>
    %cst_60 = arith.constant dense<0.000000e+00> : vector<8x64xf32>
    %77 = tpu.matmul %76, %69, %cst_60 {dimension_numbers = #tpu.dot_dimension_numbers<[1], [0], [0], [1], [0, 0, 1, 1], [], []>} : vector<8x8xf32>, vector<8x64xf32>, vector<8x64xf32> -> vector<8x64xf32>
    %cst_61 = arith.constant 0.000000e+00 : f32
    %78 = vector.broadcast %cst_61 : f32 to vector<8x64xf32>
    %79 = arith.cmpf oge, %77, %78 : vector<8x64xf32>
    %cst_62 = arith.constant 2.000000e-01 : f32
    %80 = vector.broadcast %cst_62 : f32 to vector<8x64xf32>
    %81 = arith.mulf %80, %77 : vector<8x64xf32>
    %82 = arith.select %79, %77, %81 : vector<8x64xi1>, vector<8x64xf32>
    %cst_63 = arith.constant 1.41421354 : f32
    %83 = vector.broadcast %cst_63 : f32 to vector<8x64xf32>
    %84 = arith.mulf %82, %83 : vector<8x64xf32>
    %c3 = arith.constant 3 : index
    %c0_64 = arith.constant 0 : index
    %c0_65 = arith.constant 0 : index
    %85 = vector.load %arg15[%c3, %c0_64, %c0_65] : memref<6x8x8xf32, #tpu.memory_space<vmem>>, vector<1x8x8xf32>
    %86 = vector.shape_cast %85 : vector<1x8x8xf32> to vector<8x8xf32>
    %87 = vector.extract_strided_slice %42 {offsets = [0, 8], sizes = [8, 8], strides = [1, 1]} : vector<8x32xf32> to vector<8x8xf32>
    %88 = arith.addf %86, %87 : vector<8x8xf32>
    %89 = vector.extract_strided_slice %28 {offsets = [0, 24], sizes = [1, 8], strides = [1, 1]} : vector<2x48xf32> to vector<1x8xf32>
    %90 = vector.broadcast %89 : vector<1x8xf32> to vector<8x8xf32>
    %91 = arith.mulf %88, %90 : vector<8x8xf32>
    %cst_66 = arith.constant dense<0.000000e+00> : vector<8x64xf32>
    %92 = tpu.matmul %91, %84, %cst_66 {dimension_numbers = #tpu.dot_dimension_numbers<[1], [0], [0], [1], [0, 0, 1, 1], [], []>} : vector<8x8xf32>, vector<8x64xf32>, vector<8x64xf32> -> vector<8x64xf32>
    %cst_67 = arith.constant 0.000000e+00 : f32
    %93 = vector.broadcast %cst_67 : f32 to vector<8x64xf32>
    %94 = arith.cmpf oge, %92, %93 : vector<8x64xf32>
    %cst_68 = arith.constant 2.000000e-01 : f32
    %95 = vector.broadcast %cst_68 : f32 to vector<8x64xf32>
    %96 = arith.mulf %95, %92 : vector<8x64xf32>
    %97 = arith.select %94, %92, %96 : vector<8x64xi1>, vector<8x64xf32>
    %cst_69 = arith.constant 1.41421354 : f32
    %98 = vector.broadcast %cst_69 : f32 to vector<8x64xf32>
    %99 = arith.mulf %97, %98 : vector<8x64xf32>
    %cst_70 = arith.constant dense<0.000000e+00> : vector<8x256xf32>
    %100 = tpu.matmul %99, %32, %cst_70 {dimension_numbers = #tpu.dot_dimension_numbers<[1], [0], [0], [1], [0, 0, 1, 1], [], []>} : vector<8x64xf32>, vector<64x256xf32>, vector<8x256xf32> -> vector<8x256xf32>
    %c4 = arith.constant 4 : index
    %c0_71 = arith.constant 0 : index
    %c0_72 = arith.constant 0 : index
    %101 = vector.load %arg15[%c4, %c0_71, %c0_72] : memref<6x8x8xf32, #tpu.memory_space<vmem>>, vector<1x8x8xf32>
    %102 = vector.shape_cast %101 : vector<1x8x8xf32> to vector<8x8xf32>
    %103 = vector.extract_strided_slice %42 {offsets = [0, 16], sizes = [8, 8], strides = [1, 1]} : vector<8x32xf32> to vector<8x8xf32>
    %104 = arith.addf %102, %103 : vector<8x8xf32>
    %105 = vector.extract_strided_slice %28 {offsets = [0, 32], sizes = [1, 8], strides = [1, 1]} : vector<2x48xf32> to vector<1x8xf32>
    %106 = vector.broadcast %105 : vector<1x8xf32> to vector<8x8xf32>
    %107 = arith.mulf %104, %106 : vector<8x8xf32>
    %cst_73 = arith.constant dense<0.000000e+00> : vector<8x256xf32>
    %108 = tpu.matmul %107, %100, %cst_73 {dimension_numbers = #tpu.dot_dimension_numbers<[1], [0], [0], [1], [0, 0, 1, 1], [], []>} : vector<8x8xf32>, vector<8x256xf32>, vector<8x256xf32> -> vector<8x256xf32>
    %cst_74 = arith.constant 0.000000e+00 : f32
    %109 = vector.broadcast %cst_74 : f32 to vector<8x256xf32>
    %110 = arith.cmpf oge, %108, %109 : vector<8x256xf32>
    %cst_75 = arith.constant 2.000000e-01 : f32
    %111 = vector.broadcast %cst_75 : f32 to vector<8x256xf32>
    %112 = arith.mulf %111, %108 : vector<8x256xf32>
    %113 = arith.select %110, %108, %112 : vector<8x256xi1>, vector<8x256xf32>
    %cst_76 = arith.constant 1.41421354 : f32
    %114 = vector.broadcast %cst_76 : f32 to vector<8x256xf32>
    %115 = arith.mulf %113, %114 : vector<8x256xf32>
    %c5 = arith.constant 5 : index
    %c0_77 = arith.constant 0 : index
    %c0_78 = arith.constant 0 : index
    %116 = vector.load %arg15[%c5, %c0_77, %c0_78] : memref<6x8x8xf32, #tpu.memory_space<vmem>>, vector<1x8x8xf32>
    %117 = vector.shape_cast %116 : vector<1x8x8xf32> to vector<8x8xf32>
    %118 = vector.extract_strided_slice %42 {offsets = [0, 24], sizes = [8, 8], strides = [1, 1]} : vector<8x32xf32> to vector<8x8xf32>
    %119 = arith.addf %117, %118 : vector<8x8xf32>
    %120 = vector.extract_strided_slice %28 {offsets = [0, 40], sizes = [1, 8], strides = [1, 1]} : vector<2x48xf32> to vector<1x8xf32>
    %121 = vector.broadcast %120 : vector<1x8xf32> to vector<8x8xf32>
    %122 = arith.mulf %119, %121 : vector<8x8xf32>
    %cst_79 = arith.constant dense<0.000000e+00> : vector<8x256xf32>
    %123 = tpu.matmul %122, %115, %cst_79 {dimension_numbers = #tpu.dot_dimension_numbers<[1], [0], [0], [1], [0, 0, 1, 1], [], []>} : vector<8x8xf32>, vector<8x256xf32>, vector<8x256xf32> -> vector<8x256xf32>
    %cst_80 = arith.constant 0.000000e+00 : f32
    %124 = vector.broadcast %cst_80 : f32 to vector<8x256xf32>
    %125 = arith.cmpf oge, %123, %124 : vector<8x256xf32>
    %cst_81 = arith.constant 2.000000e-01 : f32
    %126 = vector.broadcast %cst_81 : f32 to vector<8x256xf32>
    %127 = arith.mulf %126, %123 : vector<8x256xf32>
    %128 = arith.select %125, %123, %127 : vector<8x256xi1>, vector<8x256xf32>
    %cst_82 = arith.constant 1.41421354 : f32
    %129 = vector.broadcast %cst_82 : f32 to vector<8x256xf32>
    %130 = arith.mulf %128, %129 : vector<8x256xf32>
    %cst_83 = arith.constant dense<0.000000e+00> : vector<3x256xf32>
    %131 = tpu.matmul %30, %130, %cst_83 {dimension_numbers = #tpu.dot_dimension_numbers<[1], [0], [0], [1], [0, 0, 1, 1], [], []>} : vector<3x8xf32>, vector<8x256xf32>, vector<3x256xf32> -> vector<3x256xf32>
    %c0_84 = arith.constant 0 : index
    %c0_85 = arith.constant 0 : index
    %c0_86 = arith.constant 0 : index
    %132 = vector.load %arg20[%c0_84, %c0_85, %c0_86] : memref<2x3x256xf32, #tpu.memory_space<vmem>>, vector<1x3x256xf32>
    %133 = vector.shape_cast %132 : vector<1x3x256xf32> to vector<3x256xf32>
    %134 = vector.shape_cast %131 : vector<3x256xf32> to vector<1x3x256xf32>
    tpu.vector_store %arg20[%c0_84, %c0_85, %c0_86], %134 {strides = array<i32>} : memref<2x3x256xf32, #tpu.memory_space<vmem>>, vector<1x3x256xf32>,
    %135 = vector.extract_strided_slice %20 {offsets = [1, 0], sizes = [1, 128], strides = [1, 1]} : vector<2x128xf32> to vector<1x128xf32>
    %c0_87 = arith.constant 0 : index
    %c0_88 = arith.constant 0 : index
    %136 = vector.load %arg10[%c0_87, %c0_88] : memref<128x1024xf32, #tpu.memory_space<vmem>>, vector<128x1024xf32>
    %cst_89 = arith.constant dense<0.000000e+00> : vector<1x1024xf32>
    %137 = tpu.matmul %135, %136, %cst_89 {dimension_numbers = #tpu.dot_dimension_numbers<[1], [0], [0], [1], [0, 0, 1, 1], [], []>} : vector<1x128xf32>, vector<128x1024xf32>, vector<1x1024xf32> -> vector<1x1024xf32>
    %138 = vector.broadcast %137 : vector<1x1024xf32> to vector<8x1024xf32>
    %139 = arith.mulf %33, %138 : vector<8x1024xf32>
    %cst_90 = arith.constant dense<0.000000e+00> : vector<8x32xf32>
    %140 = tpu.matmul %139, %34, %cst_90 {dimension_numbers = #tpu.dot_dimension_numbers<[1], [0], [0], [1], [0, 0, 1, 1], [], []>} : vector<8x1024xf32>, vector<1024x32xf32>, vector<8x32xf32> -> vector<8x32xf32>
    %141 = arith.addf %140, %35 : vector<8x32xf32>
    %c0_91 = arith.constant 0 : index
    %c0_92 = arith.constant 0 : index
    %c0_93 = arith.constant 0 : index
    %142 = vector.load %arg15[%c0_91, %c0_92, %c0_93] : memref<6x8x8xf32, #tpu.memory_space<vmem>>, vector<1x8x8xf32>
    %143 = vector.shape_cast %142 : vector<1x8x8xf32> to vector<8x8xf32>
    %144 = vector.extract_strided_slice %28 {offsets = [1, 0], sizes = [1, 8], strides = [1, 1]} : vector<2x48xf32> to vector<1x8xf32>
    %145 = vector.broadcast %144 : vector<1x8xf32> to vector<8x8xf32>
    %146 = arith.mulf %143, %145 : vector<8x8xf32>
    %cst_94 = arith.constant dense<0.000000e+00> : vector<8x16xf32>
    %147 = tpu.matmul %146, %29, %cst_94 {dimension_numbers = #tpu.dot_dimension_numbers<[1], [0], [0], [1], [0, 0, 1, 1], [], []>} : vector<8x8xf32>, vector<8x16xf32>, vector<8x16xf32> -> vector<8x16xf32>
    %cst_95 = arith.constant 0.000000e+00 : f32
    %148 = vector.broadcast %cst_95 : f32 to vector<8x16xf32>
    %149 = arith.cmpf oge, %147, %148 : vector<8x16xf32>
    %cst_96 = arith.constant 2.000000e-01 : f32
    %150 = vector.broadcast %cst_96 : f32 to vector<8x16xf32>
    %151 = arith.mulf %150, %147 : vector<8x16xf32>
    %152 = arith.select %149, %147, %151 : vector<8x16xi1>, vector<8x16xf32>
    %cst_97 = arith.constant 1.41421354 : f32
    %153 = vector.broadcast %cst_97 : f32 to vector<8x16xf32>
    %154 = arith.mulf %152, %153 : vector<8x16xf32>
    %c1_98 = arith.constant 1 : index
    %c0_99 = arith.constant 0 : index
    %c0_100 = arith.constant 0 : index
    %155 = vector.load %arg15[%c1_98, %c0_99, %c0_100] : memref<6x8x8xf32, #tpu.memory_space<vmem>>, vector<1x8x8xf32>
    %156 = vector.shape_cast %155 : vector<1x8x8xf32> to vector<8x8xf32>
    %157 = vector.extract_strided_slice %28 {offsets = [1, 8], sizes = [1, 8], strides = [1, 1]} : vector<2x48xf32> to vector<1x8xf32>
    %158 = vector.broadcast %157 : vector<1x8xf32> to vector<8x8xf32>
    %159 = arith.mulf %156, %158 : vector<8x8xf32>
    %cst_101 = arith.constant dense<0.000000e+00> : vector<8x16xf32>
    %160 = tpu.matmul %159, %154, %cst_101 {dimension_numbers = #tpu.dot_dimension_numbers<[1], [0], [0], [1], [0, 0, 1, 1], [], []>} : vector<8x8xf32>, vector<8x16xf32>, vector<8x16xf32> -> vector<8x16xf32>
    %cst_102 = arith.constant 0.000000e+00 : f32
    %161 = vector.broadcast %cst_102 : f32 to vector<8x16xf32>
    %162 = arith.cmpf oge, %160, %161 : vector<8x16xf32>
    %cst_103 = arith.constant 2.000000e-01 : f32
    %163 = vector.broadcast %cst_103 : f32 to vector<8x16xf32>
    %164 = arith.mulf %163, %160 : vector<8x16xf32>
    %165 = arith.select %162, %160, %164 : vector<8x16xi1>, vector<8x16xf32>
    %cst_104 = arith.constant 1.41421354 : f32
    %166 = vector.broadcast %cst_104 : f32 to vector<8x16xf32>
    %167 = arith.mulf %165, %166 : vector<8x16xf32>
    %cst_105 = arith.constant dense<0.000000e+00> : vector<8x64xf32>
    %168 = tpu.matmul %167, %31, %cst_105 {dimension_numbers = #tpu.dot_dimension_numbers<[1], [0], [0], [1], [0, 0, 1, 1], [], []>} : vector<8x16xf32>, vector<16x64xf32>, vector<8x64xf32> -> vector<8x64xf32>
    %c2_106 = arith.constant 2 : index
    %c0_107 = arith.constant 0 : index
    %c0_108 = arith.constant 0 : index
    %169 = vector.load %arg15[%c2_106, %c0_107, %c0_108] : memref<6x8x8xf32, #tpu.memory_space<vmem>>, vector<1x8x8xf32>
    %170 = vector.shape_cast %169 : vector<1x8x8xf32> to vector<8x8xf32>
    %171 = vector.extract_strided_slice %141 {offsets = [0, 0], sizes = [8, 8], strides = [1, 1]} : vector<8x32xf32> to vector<8x8xf32>
    %172 = arith.addf %170, %171 : vector<8x8xf32>
    %173 = vector.extract_strided_slice %28 {offsets = [1, 16], sizes = [1, 8], strides = [1, 1]} : vector<2x48xf32> to vector<1x8xf32>
    %174 = vector.broadcast %173 : vector<1x8xf32> to vector<8x8xf32>
    %175 = arith.mulf %172, %174 : vector<8x8xf32>
    %cst_109 = arith.constant dense<0.000000e+00> : vector<8x64xf32>
    %176 = tpu.matmul %175, %168, %cst_109 {dimension_numbers = #tpu.dot_dimension_numbers<[1], [0], [0], [1], [0, 0, 1, 1], [], []>} : vector<8x8xf32>, vector<8x64xf32>, vector<8x64xf32> -> vector<8x64xf32>
    %cst_110 = arith.constant 0.000000e+00 : f32
    %177 = vector.broadcast %cst_110 : f32 to vector<8x64xf32>
    %178 = arith.cmpf oge, %176, %177 : vector<8x64xf32>
    %cst_111 = arith.constant 2.000000e-01 : f32
    %179 = vector.broadcast %cst_111 : f32 to vector<8x64xf32>
    %180 = arith.mulf %179, %176 : vector<8x64xf32>
    %181 = arith.select %178, %176, %180 : vector<8x64xi1>, vector<8x64xf32>
    %cst_112 = arith.constant 1.41421354 : f32
    %182 = vector.broadcast %cst_112 : f32 to vector<8x64xf32>
    %183 = arith.mulf %181, %182 : vector<8x64xf32>
    %c3_113 = arith.constant 3 : index
    %c0_114 = arith.constant 0 : index
    %c0_115 = arith.constant 0 : index
    %184 = vector.load %arg15[%c3_113, %c0_114, %c0_115] : memref<6x8x8xf32, #tpu.memory_space<vmem>>, vector<1x8x8xf32>
    %185 = vector.shape_cast %184 : vector<1x8x8xf32> to vector<8x8xf32>
    %186 = vector.extract_strided_slice %141 {offsets = [0, 8], sizes = [8, 8], strides = [1, 1]} : vector<8x32xf32> to vector<8x8xf32>
    %187 = arith.addf %185, %186 : vector<8x8xf32>
    %188 = vector.extract_strided_slice %28 {offsets = [1, 24], sizes = [1, 8], strides = [1, 1]} : vector<2x48xf32> to vector<1x8xf32>
    %189 = vector.broadcast %188 : vector<1x8xf32> to vector<8x8xf32>
    %190 = arith.mulf %187, %189 : vector<8x8xf32>
    %cst_116 = arith.constant dense<0.000000e+00> : vector<8x64xf32>
    %191 = tpu.matmul %190, %183, %cst_116 {dimension_numbers = #tpu.dot_dimension_numbers<[1], [0], [0], [1], [0, 0, 1, 1], [], []>} : vector<8x8xf32>, vector<8x64xf32>, vector<8x64xf32> -> vector<8x64xf32>
    %cst_117 = arith.constant 0.000000e+00 : f32
    %192 = vector.broadcast %cst_117 : f32 to vector<8x64xf32>
    %193 = arith.cmpf oge, %191, %192 : vector<8x64xf32>
    %cst_118 = arith.constant 2.000000e-01 : f32
    %194 = vector.broadcast %cst_118 : f32 to vector<8x64xf32>
    %195 = arith.mulf %194, %191 : vector<8x64xf32>
    %196 = arith.select %193, %191, %195 : vector<8x64xi1>, vector<8x64xf32>
    %cst_119 = arith.constant 1.41421354 : f32
    %197 = vector.broadcast %cst_119 : f32 to vector<8x64xf32>
    %198 = arith.mulf %196, %197 : vector<8x64xf32>
    %cst_120 = arith.constant dense<0.000000e+00> : vector<8x256xf32>
    %199 = tpu.matmul %198, %32, %cst_120 {dimension_numbers = #tpu.dot_dimension_numbers<[1], [0], [0], [1], [0, 0, 1, 1], [], []>} : vector<8x64xf32>, vector<64x256xf32>, vector<8x256xf32> -> vector<8x256xf32>
    %c4_121 = arith.constant 4 : index
    %c0_122 = arith.constant 0 : index
    %c0_123 = arith.constant 0 : index
    %200 = vector.load %arg15[%c4_121, %c0_122, %c0_123] : memref<6x8x8xf32, #tpu.memory_space<vmem>>, vector<1x8x8xf32>
    %201 = vector.shape_cast %200 : vector<1x8x8xf32> to vector<8x8xf32>
    %202 = vector.extract_strided_slice %141 {offsets = [0, 16], sizes = [8, 8], strides = [1, 1]} : vector<8x32xf32> to vector<8x8xf32>
    %203 = arith.addf %201, %202 : vector<8x8xf32>
    %204 = vector.extract_strided_slice %28 {offsets = [1, 32], sizes = [1, 8], strides = [1, 1]} : vector<2x48xf32> to vector<1x8xf32>
    %205 = vector.broadcast %204 : vector<1x8xf32> to vector<8x8xf32>
    %206 = arith.mulf %203, %205 : vector<8x8xf32>
    %cst_124 = arith.constant dense<0.000000e+00> : vector<8x256xf32>
    %207 = tpu.matmul %206, %199, %cst_124 {dimension_numbers = #tpu.dot_dimension_numbers<[1], [0], [0], [1], [0, 0, 1, 1], [], []>} : vector<8x8xf32>, vector<8x256xf32>, vector<8x256xf32> -> vector<8x256xf32>
    %cst_125 = arith.constant 0.000000e+00 : f32
    %208 = vector.broadcast %cst_125 : f32 to vector<8x256xf32>
    %209 = arith.cmpf oge, %207, %208 : vector<8x256xf32>
    %cst_126 = arith.constant 2.000000e-01 : f32
    %210 = vector.broadcast %cst_126 : f32 to vector<8x256xf32>
    %211 = arith.mulf %210, %207 : vector<8x256xf32>
    %212 = arith.select %209, %207, %211 : vector<8x256xi1>, vector<8x256xf32>
    %cst_127 = arith.constant 1.41421354 : f32
    %213 = vector.broadcast %cst_127 : f32 to vector<8x256xf32>
    %214 = arith.mulf %212, %213 : vector<8x256xf32>
    %c5_128 = arith.constant 5 : index
    %c0_129 = arith.constant 0 : index
    %c0_130 = arith.constant 0 : index
    %215 = vector.load %arg15[%c5_128, %c0_129, %c0_130] : memref<6x8x8xf32, #tpu.memory_space<vmem>>, vector<1x8x8xf32>
    %216 = vector.shape_cast %215 : vector<1x8x8xf32> to vector<8x8xf32>
    %217 = vector.extract_strided_slice %141 {offsets = [0, 24], sizes = [8, 8], strides = [1, 1]} : vector<8x32xf32> to vector<8x8xf32>
    %218 = arith.addf %216, %217 : vector<8x8xf32>
    %219 = vector.extract_strided_slice %28 {offsets = [1, 40], sizes = [1, 8], strides = [1, 1]} : vector<2x48xf32> to vector<1x8xf32>
    %220 = vector.broadcast %219 : vector<1x8xf32> to vector<8x8xf32>
    %221 = arith.mulf %218, %220 : vector<8x8xf32>
    %cst_131 = arith.constant dense<0.000000e+00> : vector<8x256xf32>
    %222 = tpu.matmul %221, %214, %cst_131 {dimension_numbers = #tpu.dot_dimension_numbers<[1], [0], [0], [1], [0, 0, 1, 1], [], []>} : vector<8x8xf32>, vector<8x256xf32>, vector<8x256xf32> -> vector<8x256xf32>
    %cst_132 = arith.constant 0.000000e+00 : f32
    %223 = vector.broadcast %cst_132 : f32 to vector<8x256xf32>
    %224 = arith.cmpf oge, %222, %223 : vector<8x256xf32>
    %cst_133 = arith.constant 2.000000e-01 : f32
    %225 = vector.broadcast %cst_133 : f32 to vector<8x256xf32>
    %226 = arith.mulf %225, %222 : vector<8x256xf32>
    %227 = arith.select %224, %222, %226 : vector<8x256xi1>, vector<8x256xf32>
    %cst_134 = arith.constant 1.41421354 : f32
    %228 = vector.broadcast %cst_134 : f32 to vector<8x256xf32>
    %229 = arith.mulf %227, %228 : vector<8x256xf32>
    %cst_135 = arith.constant dense<0.000000e+00> : vector<3x256xf32>
    %230 = tpu.matmul %30, %229, %cst_135 {dimension_numbers = #tpu.dot_dimension_numbers<[1], [0], [0], [1], [0, 0, 1, 1], [], []>} : vector<3x8xf32>, vector<8x256xf32>, vector<3x256xf32> -> vector<3x256xf32>
    %c1_136 = arith.constant 1 : index
    %c0_137 = arith.constant 0 : index
    %c0_138 = arith.constant 0 : index
    %231 = vector.load %arg20[%c1_136, %c0_137, %c0_138] : memref<2x3x256xf32, #tpu.memory_space<vmem>>, vector<1x3x256xf32>
    %232 = vector.shape_cast %231 : vector<1x3x256xf32> to vector<3x256xf32>
    %233 = vector.shape_cast %230 : vector<3x256xf32> to vector<1x3x256xf32>
    tpu.vector_store %arg20[%c1_136, %c0_137, %c0_138], %233 {strides = array<i32>} : memref<2x3x256xf32, #tpu.memory_space<vmem>>, vector<1x3x256xf32>,
    return
  }
}

</mosaic_0001>

<llo_original>
// kernel: hyper_inverter_forward.2
$region0: #{hyper_inverter_forward.2}
  #allocation0 [shape = 'u32[]', space=smem, size = 0x4, offset = 0x4, fixed_abs, tag = 'smem constant byte address 0x4 - core index']
  #allocation1 [shape = 'u32[144,128]{1,0:T(1,128)}', space=vmem, size = 0x12000, scoped, tag = 'internal scratch']
  %s0 = inlined_call_operand.vmem [shape: bf16[2,768], index: 0, kind: input, shape index: {}]
  %s1 = inlined_call_operand.hbm [shape: bf16[768,128], index: 1, kind: input, shape index: {}]
  %s2 = inlined_call_operand.vmem [shape: f32[1,128], index: 2, kind: input, shape index: {}]
  %s3 = inlined_call_operand.vmem [shape: f32[8,16], index: 3, kind: input, shape index: {}]
  %s4 = inlined_call_operand.vmem [shape: f32[6,8,8], index: 4, kind: input, shape index: {}]
  %s5 = inlined_call_operand.vmem [shape: f32[3,8], index: 5, kind: input, shape index: {}]
  %s6 = inlined_call_operand.vmem [shape: f32[16,64], index: 6, kind: input, shape index: {}]
  %s7 = inlined_call_operand.vmem [shape: f32[64,256], index: 7, kind: input, shape index: {}]
  %s8 = inlined_call_operand.vmem [shape: f32[2,128], index: 8, kind: output, shape index: {0}]
  %s9 = inlined_call_operand.vmem [shape: f32[2,3,256], index: 9, kind: output, shape index: {1}]
  %10 = xla_tuple %s8, %s9
  %s11 = sld [smem:[#allocation0]]
  $region54: #{hyper_inverter_forward.2} parent=0
    _
  %s13 = ssub.s32 1, %s11
  %s14 = scalar_select 0, %s13, %s11
  $region1: #{hyper_inverter_forward.2} parent=0
    #allocation2 [shape = 'u8[196608]{0}', space=vmem, size = 0x30000, scoped, tag = 'input window, operand 1, single buffered']
    #allocation3 [shape = 's32[1]{0}', space=sflag, size = 0x4, scoped, tag = 'scoped memory for hyper_inverter_forward.2']
    %15 = vsyncpa [#allocation3], 0
    // Predicated region
    $region2: #{hyper_inverter_forward.2} parent=1 // pred_check
      _
    $region3: #{hyper_inverter_forward.2} parent=1 // pred_check_branch
      %17 = sbr.rel (0) target = $region5
    $region4: #{hyper_inverter_forward.2} parent=1 // pred_region
      _
    $region5: #{hyper_inverter_forward.2} parent=1 // pred_fallthru
      _
    // Predicated region
    $region6: #{hyper_inverter_forward.2} parent=1 // pred_check
      _
    $region7: #{hyper_inverter_forward.2} parent=1 // pred_check_branch
      %19 = sbr.rel (0) target = $region9
    $region8: #{hyper_inverter_forward.2} parent=1 // pred_region
      %s21 = ssub.s32 6144, 6144
      %22 = vsyncadd [#allocation3], %s21
      %s23 = sshll.u32 [#allocation2], 4
      %s24 = int_to_ptr.vmem [resolvable:$true] %s23
      %29 = dma.hbm_to_vmem [thread:$0]  %s1, 6144, %s24, [#allocation3], 64, 64, 4
    $region9: #{hyper_inverter_forward.2} parent=1 // pred_fallthru
      _
    // Predicated region
    $region10: #{hyper_inverter_forward.2} parent=1 // pred_check
      _
    $region11: #{hyper_inverter_forward.2} parent=1 // pred_check_branch
      %31 = sbr.rel (0) target = $region13
    $region12: #{hyper_inverter_forward.2} parent=1 // pred_region
      _
    $region13: #{hyper_inverter_forward.2} parent=1 // pred_fallthru
      _
    // Predicated region
    $region14: #{hyper_inverter_forward.2} parent=1 // pred_check
      _
    $region15: #{hyper_inverter_forward.2} parent=1 // pred_check_branch
      %33 = sbr.rel (0) target = $region17
    $region16: #{hyper_inverter_forward.2} parent=1 // pred_region
      _
    $region17: #{hyper_inverter_forward.2} parent=1 // pred_fallthru
      _
    // Predicated region
    $region18: #{hyper_inverter_forward.2} parent=1 // pred_check
      _
    $region19: #{hyper_inverter_forward.2} parent=1 // pred_check_branch
      %35 = sbr.rel (0) target = $region21
    $region20: #{hyper_inverter_forward.2} parent=1 // pred_region
      _
    $region21: #{hyper_inverter_forward.2} parent=1 // pred_fallthru
      _
    // Predicated region
    $region22: #{hyper_inverter_forward.2} parent=1 // pred_check
      _
    $region23: #{hyper_inverter_forward.2} parent=1 // pred_check_branch
      %37 = sbr.rel (0) target = $region25
    $region24: #{hyper_inverter_forward.2} parent=1 // pred_region
      _
    $region25: #{hyper_inverter_forward.2} parent=1 // pred_fallthru
      _
    // Predicated region
    $region26: #{hyper_inverter_forward.2} parent=1 // pred_check
      _
    $region27: #{hyper_inverter_forward.2} parent=1 // pred_check_branch
      %39 = sbr.rel (0) target = $region29
    $region28: #{hyper_inverter_forward.2} parent=1 // pred_region
      _
    $region29: #{hyper_inverter_forward.2} parent=1 // pred_fallthru
      _
    // Predicated region
    $region30: #{hyper_inverter_forward.2} parent=1 // pred_check
      _
    $region31: #{hyper_inverter_forward.2} parent=1 // pred_check_branch
      %41 = sbr.rel (0) target = $region33
    $region32: #{hyper_inverter_forward.2} parent=1 // pred_region
      _
    $region33: #{hyper_inverter_forward.2} parent=1 // pred_fallthru
      _
    // Predicated region
    $region34: #{hyper_inverter_forward.2} parent=1 // pred_check
      _
    $region35: #{hyper_inverter_forward.2} parent=1 // pred_check_branch
      %43 = sbr.rel (0) target = $region37
    $region36: #{hyper_inverter_forward.2} parent=1 // pred_region
      %44 = dma.done [#allocation3], 6144
    $region37: #{hyper_inverter_forward.2} parent=1 // pred_fallthru
      _
    %v46 = vld [vmem:[%s0] sm:$0x3f]
    %v47 = vld [vmem:[#allocation2] sm:$0xf]
    %v48 = vld [vmem:[#allocation2 + $0x4] sm:$0xf]
    %v49 = vld [vmem:[#allocation2 + $0x8] sm:$0xf]
    %v50 = vld [vmem:[#allocation2 + $0xc] sm:$0xf]
    %v51 = vld [vmem:[#allocation2 + $0x10] sm:$0xf]
    %v52 = vld [vmem:[#allocation2 + $0x14] sm:$0xf]
    %v53 = vld [vmem:[#allocation2 + $0x18] sm:$0xf]
    %v54 = vld [vmem:[#allocation2 + $0x1c] sm:$0xf]
    %v55 = vld [vmem:[#allocation2 + $0x20] sm:$0xf]
    %v56 = vld [vmem:[#allocation2 + $0x24] sm:$0xf]
    %v57 = vld [vmem:[#allocation2 + $0x28] sm:$0xf]
    %v58 = vld [vmem:[#allocation2 + $0x2c] sm:$0xf]
    %v59 = vld [vmem:[#allocation2 + $0x30] sm:$0xf]
    %v60 = vld [vmem:[#allocation2 + $0x34] sm:$0xf]
    %v61 = vld [vmem:[#allocation2 + $0x38] sm:$0xf]
    %v62 = vld [vmem:[#allocation2 + $0x3c] sm:$0xf]
    %v63 = vld [vmem:[#allocation2 + $0x40] sm:$0xf]
    %v64 = vld [vmem:[#allocation2 + $0x44] sm:$0xf]
    %v65 = vld [vmem:[#allocation2 + $0x48] sm:$0xf]
    %v66 = vld [vmem:[#allocation2 + $0x4c] sm:$0xf]
    %v67 = vld [vmem:[#allocation2 + $0x50] sm:$0xf]
    %v68 = vld [vmem:[#allocation2 + $0x54] sm:$0xf]
    %v69 = vld [vmem:[#allocation2 + $0x58] sm:$0xf]
    %v70 = vld [vmem:[#allocation2 + $0x5c] sm:$0xf]
    %v71 = vld [vmem:[#allocation2 + $0x60] sm:$0xf]
    %v72 = vld [vmem:[#allocation2 + $0x64] sm:$0xf]
    %v73 = vld [vmem:[#allocation2 + $0x68] sm:$0xf]
    %v74 = vld [vmem:[#allocation2 + $0x6c] sm:$0xf]
    %v75 = vld [vmem:[#allocation2 + $0x70] sm:$0xf]
    %v76 = vld [vmem:[#allocation2 + $0x74] sm:$0xf]
    %v77 = vld [vmem:[#allocation2 + $0x78] sm:$0xf]
    %v78 = vld [vmem:[#allocation2 + $0x7c] sm:$0xf]
    %v79 = vld [vmem:[#allocation2 + $0x80] sm:$0xf]
    %v80 = vld [vmem:[#allocation2 + $0x84] sm:$0xf]
    %v81 = vld [vmem:[#allocation2 + $0x88] sm:$0xf]
    %v82 = vld [vmem:[#allocation2 + $0x8c] sm:$0xf]
    %v83 = vld [vmem:[#allocation2 + $0x90] sm:$0xf]
    %v84 = vld [vmem:[#allocation2 + $0x94] sm:$0xf]
    %v85 = vld [vmem:[#allocation2 + $0x98] sm:$0xf]
    %v86 = vld [vmem:[#allocation2 + $0x9c] sm:$0xf]
    %v87 = vld [vmem:[#allocation2 + $0xa0] sm:$0xf]
    %v88 = vld [vmem:[#allocation2 + $0xa4] sm:$0xf]
    %v89 = vld [vmem:[#allocation2 + $0xa8] sm:$0xf]
    %v90 = vld [vmem:[#allocation2 + $0xac] sm:$0xf]
    %v91 = vld [vmem:[#allocation2 + $0xb0] sm:$0xf]
    %v92 = vld [vmem:[#allocation2 + $0xb4] sm:$0xf]
    %v93 = vld [vmem:[#allocation2 + $0xb8] sm:$0xf]
    %v94 = vld [vmem:[#allocation2 + $0xbc] sm:$0xf]
    %v95 = vld [vmem:[#allocation2 + $0xc0] sm:$0xf]
    %v96 = vld [vmem:[#allocation2 + $0xc4] sm:$0xf]
    %v97 = vld [vmem:[#allocation2 + $0xc8] sm:$0xf]
    %v98 = vld [vmem:[#allocation2 + $0xcc] sm:$0xf]
    %v99 = vld [vmem:[#allocation2 + $0xd0] sm:$0xf]
    %v100 = vld [vmem:[#allocation2 + $0xd4] sm:$0xf]
    %v101 = vld [vmem:[#allocation2 + $0xd8] sm:$0xf]
    %v102 = vld [vmem:[#allocation2 + $0xdc] sm:$0xf]
    %v103 = vld [vmem:[#allocation2 + $0xe0] sm:$0xf]
    %v104 = vld [vmem:[#allocation2 + $0xe4] sm:$0xf]
    %v105 = vld [vmem:[#allocation2 + $0xe8] sm:$0xf]
    %v106 = vld [vmem:[#allocation2 + $0xec] sm:$0xf]
    %v107 = vld [vmem:[#allocation2 + $0xf0] sm:$0xf]
    %v108 = vld [vmem:[#allocation2 + $0xf4] sm:$0xf]
    %v109 = vld [vmem:[#allocation2 + $0xf8] sm:$0xf]
    %v110 = vld [vmem:[#allocation2 + $0xfc] sm:$0xf]
    %v111 = vld [vmem:[#allocation2 + $0x100] sm:$0xf]
    %v112 = vld [vmem:[#allocation2 + $0x104] sm:$0xf]
    %v113 = vld [vmem:[#allocation2 + $0x108] sm:$0xf]
    %v114 = vld [vmem:[#allocation2 + $0x10c] sm:$0xf]
    %v115 = vld [vmem:[#allocation2 + $0x110] sm:$0xf]
    %v116 = vld [vmem:[#allocation2 + $0x114] sm:$0xf]
    %v117 = vld [vmem:[#allocation2 + $0x118] sm:$0xf]
    %v118 = vld [vmem:[#allocation2 + $0x11c] sm:$0xf]
    %v119 = vld [vmem:[#allocation2 + $0x120] sm:$0xf]
    %v120 = vld [vmem:[#allocation2 + $0x124] sm:$0xf]
    %v121 = vld [vmem:[#allocation2 + $0x128] sm:$0xf]
    %v122 = vld [vmem:[#allocation2 + $0x12c] sm:$0xf]
    %v123 = vld [vmem:[#allocation2 + $0x130] sm:$0xf]
    %v124 = vld [vmem:[#allocation2 + $0x134] sm:$0xf]
    %v125 = vld [vmem:[#allocation2 + $0x138] sm:$0xf]
    %v126 = vld [vmem:[#allocation2 + $0x13c] sm:$0xf]
    %v127 = vld [vmem:[#allocation2 + $0x140] sm:$0xf]
    %v128 = vld [vmem:[#allocation2 + $0x144] sm:$0xf]
    %v129 = vld [vmem:[#allocation2 + $0x148] sm:$0xf]
    %v130 = vld [vmem:[#allocation2 + $0x14c] sm:$0xf]
    %v131 = vld [vmem:[#allocation2 + $0x150] sm:$0xf]
    %v132 = vld [vmem:[#allocation2 + $0x154] sm:$0xf]
    %v133 = vld [vmem:[#allocation2 + $0x158] sm:$0xf]
    %v134 = vld [vmem:[#allocation2 + $0x15c] sm:$0xf]
    %v135 = vld [vmem:[#allocation2 + $0x160] sm:$0xf]
    %v136 = vld [vmem:[#allocation2 + $0x164] sm:$0xf]
    %v137 = vld [vmem:[#allocation2 + $0x168] sm:$0xf]
    %v138 = vld [vmem:[#allocation2 + $0x16c] sm:$0xf]
    %v139 = vld [vmem:[#allocation2 + $0x170] sm:$0xf]
    %v140 = vld [vmem:[#allocation2 + $0x174] sm:$0xf]
    %v141 = vld [vmem:[#allocation2 + $0x178] sm:$0xf]
    %v142 = vld [vmem:[#allocation2 + $0x17c] sm:$0xf]
    %v143 = vld [vmem:[%s2] sm:$0x1]
    %v145 = vlaneseq
    %v146 = vshrl.u32 %v145, 7
    %v147 = vsub.s32 0, %v146
    %v148 = vrot.slane %v143, %v147
    %v151 = vcombine.high %v46, %v46
    %v153 = vunpack.c.l.s4 1966171168
    %v154 = vunpack.c.0.s8 %v153
    %v155 = vlaneseq
    %v156 = vshrl.u32 %v155, 7
    %v157 = vsub.s32 %v154, %v156
    %v158 = vrot.slane %v46, %v157
    %v160 = vunpack.c.l.s4 1966171168
    %v161 = vunpack.c.0.s8 %v160
    %v162 = vlaneseq
    %v163 = vshrl.u32 %v162, 7
    %v164 = vsub.s32 %v161, %v163
    %v165 = vrot.slane %v151, %v164
    %v166 = vcombine.high %v158, %v158
    %v167 = vcombine.high %v165, %v165
    %v169 = vunpack.c.l.s4 1966171168
    %v170 = vunpack.c.0.s8 %v169
    %v171 = vlaneseq
    %v172 = vshrl.u32 %v171, 7
    %v173 = vsub.s32 %v170, %v172
    %v174 = vrot.slane %v158, %v173
    %v176 = vunpack.c.l.s4 1966171168
    %v177 = vunpack.c.0.s8 %v176
    %v178 = vlaneseq
    %v179 = vshrl.u32 %v178, 7
    %v180 = vsub.s32 %v177, %v179
    %v181 = vrot.slane %v165, %v180
    %v183 = vunpack.c.l.s4 1966171168
    %v184 = vunpack.c.0.s8 %v183
    %v185 = vlaneseq
    %v186 = vshrl.u32 %v185, 7
    %v187 = vsub.s32 %v184, %v186
    %v188 = vrot.slane %v166, %v187
    %v190 = vunpack.c.l.s4 1966171168
    %v191 = vunpack.c.0.s8 %v190
    %v192 = vlaneseq
    %v193 = vshrl.u32 %v192, 7
    %v194 = vsub.s32 %v191, %v193
    %v195 = vrot.slane %v167, %v194
    %v196 = vcombine.high %v174, %v174
    %v197 = vcombine.high %v188, %v188
    %v300 = vunpack.c.l.b16 %v47
    %v301 = vunpack.c.l.b16 %v48
    %v302 = vunpack.c.l.b16 %v49
    %v303 = vunpack.c.l.b16 %v50
    %v304 = vunpack.c.l.b16 %v51
    %v305 = vunpack.c.l.b16 %v52
    %v306 = vunpack.c.l.b16 %v53
    %v307 = vunpack.c.l.b16 %v54
    %v308 = vunpack.c.l.b16 %v55
    %v309 = vunpack.c.l.b16 %v56
    %v310 = vunpack.c.l.b16 %v57
    %v311 = vunpack.c.l.b16 %v58
    %v312 = vunpack.c.l.b16 %v59
    %v313 = vunpack.c.l.b16 %v60
    %v314 = vunpack.c.l.b16 %v61
    %v315 = vunpack.c.l.b16 %v62
    %v316 = vunpack.c.l.b16 %v63
    %v317 = vunpack.c.l.b16 %v64
    %v318 = vunpack.c.l.b16 %v65
    %v319 = vunpack.c.l.b16 %v66
    %v320 = vunpack.c.l.b16 %v67
    %v321 = vunpack.c.l.b16 %v68
    %v322 = vunpack.c.l.b16 %v69
    %v323 = vunpack.c.l.b16 %v70
    %v324 = vunpack.c.l.b16 %v71
    %v325 = vunpack.c.l.b16 %v72
    %v326 = vunpack.c.l.b16 %v73
    %v327 = vunpack.c.l.b16 %v74
    %v328 = vunpack.c.l.b16 %v75
    %v329 = vunpack.c.l.b16 %v76
    %v330 = vunpack.c.l.b16 %v77
    %v331 = vunpack.c.l.b16 %v78
    %v332 = vunpack.c.l.b16 %v79
    %v333 = vunpack.c.l.b16 %v80
    %v334 = vunpack.c.l.b16 %v81
    %v335 = vunpack.c.l.b16 %v82
    %v336 = vunpack.c.l.b16 %v83
    %v337 = vunpack.c.l.b16 %v84
    %v338 = vunpack.c.l.b16 %v85
    %v339 = vunpack.c.l.b16 %v86
    %v340 = vunpack.c.l.b16 %v87
    %v341 = vunpack.c.l.b16 %v88
    %v342 = vunpack.c.l.b16 %v89
    %v343 = vunpack.c.l.b16 %v90
    %v344 = vunpack.c.l.b16 %v91
    %v345 = vunpack.c.l.b16 %v92
    %v346 = vunpack.c.l.b16 %v93
    %v347 = vunpack.c.l.b16 %v94
    %v348 = vunpack.c.l.b16 %v95
    %v349 = vunpack.c.l.b16 %v96
    %v350 = vunpack.c.l.b16 %v97
    %v351 = vunpack.c.l.b16 %v98
    %v352 = vunpack.c.l.b16 %v99
    %v353 = vunpack.c.l.b16 %v100
    %v354 = vunpack.c.l.b16 %v101
    %v355 = vunpack.c.l.b16 %v102
    %v356 = vunpack.c.l.b16 %v103
    %v357 = vunpack.c.l.b16 %v104
    %v358 = vunpack.c.l.b16 %v105
    %v359 = vunpack.c.l.b16 %v106
    %v360 = vunpack.c.l.b16 %v107
    %v361 = vunpack.c.l.b16 %v108
    %v362 = vunpack.c.l.b16 %v109
    %v363 = vunpack.c.l.b16 %v110
    %v364 = vunpack.c.l.b16 %v111
    %v365 = vunpack.c.l.b16 %v112
    %v366 = vunpack.c.l.b16 %v113
    %v367 = vunpack.c.l.b16 %v114
    %v368 = vunpack.c.l.b16 %v115
    %v369 = vunpack.c.l.b16 %v116
    %v370 = vunpack.c.l.b16 %v117
    %v371 = vunpack.c.l.b16 %v118
    %v372 = vunpack.c.l.b16 %v119
    %v373 = vunpack.c.l.b16 %v120
    %v374 = vunpack.c.l.b16 %v121
    %v375 = vunpack.c.l.b16 %v122
    %v376 = vunpack.c.l.b16 %v123
    %v377 = vunpack.c.l.b16 %v124
    %v378 = vunpack.c.l.b16 %v125
    %v379 = vunpack.c.l.b16 %v126
    %v380 = vunpack.c.l.b16 %v127
    %v381 = vunpack.c.l.b16 %v128
    %v382 = vunpack.c.l.b16 %v129
    %v383 = vunpack.c.l.b16 %v130
    %v384 = vunpack.c.l.b16 %v131
    %v385 = vunpack.c.l.b16 %v132
    %v386 = vunpack.c.l.b16 %v133
    %v387 = vunpack.c.l.b16 %v134
    %v388 = vunpack.c.l.b16 %v135
    %v389 = vunpack.c.l.b16 %v136
    %v390 = vunpack.c.l.b16 %v137
    %v391 = vunpack.c.l.b16 %v138
    %v392 = vunpack.c.l.b16 %v139
    %v393 = vunpack.c.l.b16 %v140
    %v394 = vunpack.c.l.b16 %v141
    %v395 = vunpack.c.l.b16 %v142
    %v396 = vpack.c.b16 %v301, %v300
    %v397 = vpack.c.b16 %v303, %v302
    %v398 = vpack.c.b16 %v305, %v304
    %v399 = vpack.c.b16 %v307, %v306
    %v400 = vpack.c.b16 %v309, %v308
    %v401 = vpack.c.b16 %v311, %v310
    %v402 = vpack.c.b16 %v313, %v312
    %v403 = vpack.c.b16 %v315, %v314
    %v404 = vpack.c.b16 %v317, %v316
    %v405 = vpack.c.b16 %v319, %v318
    %v406 = vpack.c.b16 %v321, %v320
    %v407 = vpack.c.b16 %v323, %v322
    %v408 = vpack.c.b16 %v325, %v324
    %v409 = vpack.c.b16 %v327, %v326
    %v410 = vpack.c.b16 %v329, %v328
    %v411 = vpack.c.b16 %v331, %v330
    %v412 = vpack.c.b16 %v333, %v332
    %v413 = vpack.c.b16 %v335, %v334
    %v414 = vpack.c.b16 %v337, %v336
    %v415 = vpack.c.b16 %v339, %v338
    %v416 = vpack.c.b16 %v341, %v340
    %v417 = vpack.c.b16 %v343, %v342
    %v418 = vpack.c.b16 %v345, %v344
    %v419 = vpack.c.b16 %v347, %v346
    %v420 = vpack.c.b16 %v349, %v348
    %v421 = vpack.c.b16 %v351, %v350
    %v422 = vpack.c.b16 %v353, %v352
    %v423 = vpack.c.b16 %v355, %v354
    %v424 = vpack.c.b16 %v357, %v356
    %v425 = vpack.c.b16 %v359, %v358
    %v426 = vpack.c.b16 %v361, %v360
    %v427 = vpack.c.b16 %v363, %v362
    %v428 = vpack.c.b16 %v365, %v364
    %v429 = vpack.c.b16 %v367, %v366
    %v430 = vpack.c.b16 %v369, %v368
    %v431 = vpack.c.b16 %v371, %v370
    %v432 = vpack.c.b16 %v373, %v372
    %v433 = vpack.c.b16 %v375, %v374
    %v434 = vpack.c.b16 %v377, %v376
    %v435 = vpack.c.b16 %v379, %v378
    %v436 = vpack.c.b16 %v381, %v380
    %v437 = vpack.c.b16 %v383, %v382
    %v438 = vpack.c.b16 %v385, %v384
    %v439 = vpack.c.b16 %v387, %v386
    %v440 = vpack.c.b16 %v389, %v388
    %v441 = vpack.c.b16 %v391, %v390
    %v442 = vpack.c.b16 %v393, %v392
    %v443 = vpack.c.b16 %v395, %v394
    %492 = vmatprep.subr.bf16.mxu0 0
    %493 = vmatpush1.bf16.msra.mxu0 %v403
    %494 = vmatprep.subr.bf16.mxu0 0
    %495 = vmatpush1.bf16.msra.mxu0 %v402
    %496 = vmatprep.subr.bf16.mxu0 0
    %497 = vmatpush1.bf16.msra.mxu0 %v401
    %498 = vmatprep.subr.bf16.mxu0 0
    %499 = vmatpush1.bf16.msra.mxu0 %v400
    %500 = vmatprep.subr.bf16.mxu0 0
    %501 = vmatpush1.bf16.msra.mxu0 %v399
    %502 = vmatprep.subr.bf16.mxu0 0
    %503 = vmatpush1.bf16.msra.mxu0 %v398
    %504 = vmatprep.subr.bf16.mxu0 0
    %505 = vmatpush1.bf16.msra.mxu0 %v397
    %506 = vmatprep.subr.bf16.mxu0 0
    %507 = vmatpush1.bf16.msra.mxu0 %v396
    %508 = vmatprep.subr.bf16.mxu0 0
    %509 = vmatpush2.bf16.msra.mxu0 %v411
    %510 = vmatprep.subr.bf16.mxu0 0
    %511 = vmatpush2.bf16.msra.mxu0 %v410
    %512 = vmatprep.subr.bf16.mxu0 0
    %513 = vmatpush2.bf16.msra.mxu0 %v409
    %514 = vmatprep.subr.bf16.mxu0 0
    %515 = vmatpush2.bf16.msra.mxu0 %v408
    %516 = vmatprep.subr.bf16.mxu0 0
    %517 = vmatpush2.bf16.msra.mxu0 %v407
    %518 = vmatprep.subr.bf16.mxu0 0
    %519 = vmatpush2.bf16.msra.mxu0 %v406
    %520 = vmatprep.subr.bf16.mxu0 0
    %521 = vmatpush2.bf16.msra.mxu0 %v405
    %522 = vmatprep.subr.bf16.mxu0 0
    %523 = vmatpush2.bf16.msra.mxu0 %v404
    %524 = vmatprep.mubr.bf16.mxu0 %v188
    %525 = vmatmul.mubr.bf16.gmra.mxu0 %v174
    %v526 = vpop.f32.mrf.mxu0
    %v527 = vadd.f32 %v148, %v526
    %v528 = vpop.f32.mrf.mxu0
    %v529 = vpop.f32.mrf.mxu0
    %v530 = vpop.f32.mrf.mxu0
    %531 = vdwg.mxu0
    %532 = vmatprep.subr.bf16.mxu0 0
    %533 = vmatpush1.bf16.msra.mxu0 %v419
    %534 = vmatprep.subr.bf16.mxu0 0
    %535 = vmatpush1.bf16.msra.mxu0 %v418
    %536 = vmatprep.subr.bf16.mxu0 0
    %537 = vmatpush1.bf16.msra.mxu0 %v417
    %538 = vmatprep.subr.bf16.mxu0 0
    %539 = vmatpush1.bf16.msra.mxu0 %v416
    %540 = vmatprep.subr.bf16.mxu0 0
    %541 = vmatpush1.bf16.msra.mxu0 %v415
    %542 = vmatprep.subr.bf16.mxu0 0
    %543 = vmatpush1.bf16.msra.mxu0 %v414
    %544 = vmatprep.subr.bf16.mxu0 0
    %545 = vmatpush1.bf16.msra.mxu0 %v413
    %546 = vmatprep.subr.bf16.mxu0 0
    %547 = vmatpush1.bf16.msra.mxu0 %v412
    %548 = vmatprep.subr.bf16.mxu0 0
    %549 = vmatpush2.bf16.msra.mxu0 %v427
    %550 = vmatprep.subr.bf16.mxu0 0
    %551 = vmatpush2.bf16.msra.mxu0 %v426
    %552 = vmatprep.subr.bf16.mxu0 0
    %553 = vmatpush2.bf16.msra.mxu0 %v425
    %554 = vmatprep.subr.bf16.mxu0 0
    %555 = vmatpush2.bf16.msra.mxu0 %v424
    %556 = vmatprep.subr.bf16.mxu0 0
    %557 = vmatpush2.bf16.msra.mxu0 %v423
    %558 = vmatprep.subr.bf16.mxu0 0
    %559 = vmatpush2.bf16.msra.mxu0 %v422
    %560 = vmatprep.subr.bf16.mxu0 0
    %561 = vmatpush2.bf16.msra.mxu0 %v421
    %562 = vmatprep.subr.bf16.mxu0 0
    %563 = vmatpush2.bf16.msra.mxu0 %v420
    %564 = vmatprep.mubr.bf16.mxu0 %v197
    %565 = vmatmul.mubr.bf16.gmra.mxu0 %v196
    %v566 = vpop.f32.mrf.mxu0
    %v567 = vadd.f32 %v527, %v566
    %v568 = vpop.f32.mrf.mxu0
    %v569 = vpop.f32.mrf.mxu0
    %v570 = vpop.f32.mrf.mxu0
    %571 = vdwg.mxu0
    %572 = vmatprep.subr.bf16.mxu0 0
    %573 = vmatpush1.bf16.msra.mxu0 %v435
    %574 = vmatprep.subr.bf16.mxu0 0
    %575 = vmatpush1.bf16.msra.mxu0 %v434
    %576 = vmatprep.subr.bf16.mxu0 0
    %577 = vmatpush1.bf16.msra.mxu0 %v433
    %578 = vmatprep.subr.bf16.mxu0 0
    %579 = vmatpush1.bf16.msra.mxu0 %v432
    %580 = vmatprep.subr.bf16.mxu0 0
    %581 = vmatpush1.bf16.msra.mxu0 %v431
    %582 = vmatprep.subr.bf16.mxu0 0
    %583 = vmatpush1.bf16.msra.mxu0 %v430
    %584 = vmatprep.subr.bf16.mxu0 0
    %585 = vmatpush1.bf16.msra.mxu0 %v429
    %586 = vmatprep.subr.bf16.mxu0 0
    %587 = vmatpush1.bf16.msra.mxu0 %v428
    %588 = vmatprep.subr.bf16.mxu0 0
    %589 = vmatpush2.bf16.msra.mxu0 %v443
    %590 = vmatprep.subr.bf16.mxu0 0
    %591 = vmatpush2.bf16.msra.mxu0 %v442
    %592 = vmatprep.subr.bf16.mxu0 0
    %593 = vmatpush2.bf16.msra.mxu0 %v441
    %594 = vmatprep.subr.bf16.mxu0 0
    %595 = vmatpush2.bf16.msra.mxu0 %v440
    %596 = vmatprep.subr.bf16.mxu0 0
    %597 = vmatpush2.bf16.msra.mxu0 %v439
    %598 = vmatprep.subr.bf16.mxu0 0
    %599 = vmatpush2.bf16.msra.mxu0 %v438
    %600 = vmatprep.subr.bf16.mxu0 0
    %601 = vmatpush2.bf16.msra.mxu0 %v437
    %602 = vmatprep.subr.bf16.mxu0 0
    %603 = vmatpush2.bf16.msra.mxu0 %v436
    %604 = vmatprep.mubr.bf16.mxu0 %v195
    %605 = vmatmul.mubr.bf16.gmra.mxu0 %v181
    %v606 = vpop.f32.mrf.mxu0
    %v607 = vadd.f32 %v567, %v606
    %v608 = vpop.f32.mrf.mxu0
    %v609 = vpop.f32.mrf.mxu0
    %v610 = vpop.f32.mrf.mxu0
    %611 = vdwg.mxu0
    %612 = vst [vmem:[%s8] sm:$0x3] %v607
    %v613 = vld [vmem:[%s3] sm:$0xff]
    %v614 = vld [vmem:[%s5] sm:$0x7]
    %v615 = vld [vmem:[%s6] sm:$0xff]
    %v616 = vld [vmem:[%s6 + $0x8] sm:$0xff]
    %v617 = vld [vmem:[%s7] sm:$0xff]
    %v618 = vld [vmem:[%s7 + $0x8] sm:$0xff]
    %v619 = vld [vmem:[%s7 + $0x10] sm:$0xff]
    %v620 = vld [vmem:[%s7 + $0x18] sm:$0xff]
    %v621 = vld [vmem:[%s7 + $0x20] sm:$0xff]
    %v622 = vld [vmem:[%s7 + $0x28] sm:$0xff]
    %v623 = vld [vmem:[%s7 + $0x30] sm:$0xff]
    %v624 = vld [vmem:[%s7 + $0x38] sm:$0xff]
    %v625 = vld [vmem:[%s7 + $0x40] sm:$0xff]
    %v626 = vld [vmem:[%s7 + $0x48] sm:$0xff]
    %v627 = vld [vmem:[%s7 + $0x50] sm:$0xff]
    %v628 = vld [vmem:[%s7 + $0x58] sm:$0xff]
    %v629 = vld [vmem:[%s7 + $0x60] sm:$0xff]
    %v630 = vld [vmem:[%s7 + $0x68] sm:$0xff]
    %v631 = vld [vmem:[%s7 + $0x70] sm:$0xff]
    %v632 = vld [vmem:[%s7 + $0x78] sm:$0xff]
    %v633 = vld [vmem:[%s4] sm:$0xff]
    %v634 = vlaneseq
    %v635 = vshrl.u32 %v634, 7
    %v636 = vsub.s32 0, %v635
    %v637 = vrot.slane %v607, %v636
    %v638 = vmul.f32 %v633, %v637
    %vm639 = vcmask 64512
    %v641 = vsel %vm639, %v638, 0
    %643 = vmatprep.subr.mxu0 0.0
    %644 = vmatpush1.msra.mxu0 0.0
    %645 = vmatprep.subr.mxu0 0.0
    %646 = vmatpush1.msra.mxu0 0.0
    %647 = vmatprep.subr.mxu0 0.0
    %648 = vmatpush1.msra.mxu0 0.0
    %649 = vmatprep.subr.mxu0 0.0
    %650 = vmatpush1.msra.mxu0 0.0
    %651 = vmatprep.subr.mxu0 0.0
    %652 = vmatpush1.msra.mxu0 0.0
    %653 = vmatprep.subr.mxu0 0.0
    %654 = vmatpush1.msra.mxu0 0.0
    %655 = vmatprep.subr.mxu0 0.0
    %656 = vmatpush1.msra.mxu0 0.0
    %657 = vmatprep.subr.mxu0 0.0
    %658 = vmatpush1.msra.mxu0 0.0
    %659 = vmatprep.subr.mxu0 0.0
    %660 = vmatpush1.msra.mxu0 0.0
    %661 = vmatprep.subr.mxu0 0.0
    %662 = vmatpush1.msra.mxu0 0.0
    %663 = vmatprep.subr.mxu0 0.0
    %664 = vmatpush1.msra.mxu0 0.0
    %665 = vmatprep.subr.mxu0 0.0
    %666 = vmatpush1.msra.mxu0 0.0
    %667 = vmatprep.subr.mxu0 0.0
    %668 = vmatpush1.msra.mxu0 0.0
    %669 = vmatprep.subr.mxu0 0.0
    %670 = vmatpush1.msra.mxu0 0.0
    %671 = vmatprep.subr.mxu0 0.0
    %672 = vmatpush1.msra.mxu0 0.0
    %673 = vmatprep.subr.mxu0 0.0
    %674 = vmatpush1.msra.mxu0 %v613
    %675 = vmatprep.subr.mxu0 0.0
    %676 = vmatpush2.msra.mxu0 0.0
    %677 = vmatprep.subr.mxu0 0.0
    %678 = vmatpush2.msra.mxu0 0.0
    %679 = vmatprep.subr.mxu0 0.0
    %680 = vmatpush2.msra.mxu0 0.0
    %681 = vmatprep.subr.mxu0 0.0
    %682 = vmatpush2.msra.mxu0 0.0
    %683 = vmatprep.subr.mxu0 0.0
    %684 = vmatpush2.msra.mxu0 0.0
    %685 = vmatprep.subr.mxu0 0.0
    %686 = vmatpush2.msra.mxu0 0.0
    %687 = vmatprep.subr.mxu0 0.0
    %688 = vmatpush2.msra.mxu0 0.0
    %689 = vmatprep.subr.mxu0 0.0
    %690 = vmatpush2.msra.mxu0 0.0
    %691 = vmatprep.subr.mxu0 0.0
    %692 = vmatpush2.msra.mxu0 0.0
    %693 = vmatprep.subr.mxu0 0.0
    %694 = vmatpush2.msra.mxu0 0.0
    %695 = vmatprep.subr.mxu0 0.0
    %696 = vmatpush2.msra.mxu0 0.0
    %697 = vmatprep.subr.mxu0 0.0
    %698 = vmatpush2.msra.mxu0 0.0
    %699 = vmatprep.subr.mxu0 0.0
    %700 = vmatpush2.msra.mxu0 0.0
    %701 = vmatprep.subr.mxu0 0.0
    %702 = vmatpush2.msra.mxu0 0.0
    %703 = vmatprep.subr.mxu0 0.0
    %704 = vmatpush2.msra.mxu0 0.0
    %705 = vmatprep.subr.mxu0 0.0
    %706 = vmatpush2.msra.mxu0 0.0
    %707 = vmatprep.mubr.f32.mxu0 0.0
    %708 = vmatmul.mubr.f32.gmra.mxu0 %v641
    %v709 = vpop.f32.mrf.mxu0
    %v710 = vadd.f32 0.0, %v709
    %v711 = vpop.f32.mrf.mxu0
    %712 = vdwg.mxu0
    %vm713 = vcmp.ge.f32.partialorder %v710, 0.0
    %v714 = vmul.f32 %v710, 0.2
    %v715 = vsel %vm713, %v710, %v714
    %v716 = vmul.f32 %v715, 1.4142135
    %s717 = scalar_lea.vmem %s4, 8
    %v718 = vld [vmem:[%s717] sm:$0xff]
    %720 = vrot.lane.b32.xlu0 %v637, 120
    %v721 = vpop.permute.xlu0 %720
    %v723 = vmul.f32 %v718, %v721
    %v725 = vsel %vm639, %v723, 0
    %727 = vmatprep.subr.mxu0 0.0
    %728 = vmatpush1.msra.mxu0 0.0
    %729 = vmatprep.subr.mxu0 0.0
    %730 = vmatpush1.msra.mxu0 0.0
    %731 = vmatprep.subr.mxu0 0.0
    %732 = vmatpush1.msra.mxu0 0.0
    %733 = vmatprep.subr.mxu0 0.0
    %734 = vmatpush1.msra.mxu0 0.0
    %735 = vmatprep.subr.mxu0 0.0
    %736 = vmatpush1.msra.mxu0 0.0
    %737 = vmatprep.subr.mxu0 0.0
    %738 = vmatpush1.msra.mxu0 0.0
    %739 = vmatprep.subr.mxu0 0.0
    %740 = vmatpush1.msra.mxu0 0.0
    %741 = vmatprep.subr.mxu0 0.0
    %742 = vmatpush1.msra.mxu0 0.0
    %743 = vmatprep.subr.mxu0 0.0
    %744 = vmatpush1.msra.mxu0 0.0
    %745 = vmatprep.subr.mxu0 0.0
    %746 = vmatpush1.msra.mxu0 0.0
    %747 = vmatprep.subr.mxu0 0.0
    %748 = vmatpush1.msra.mxu0 0.0
    %749 = vmatprep.subr.mxu0 0.0
    %750 = vmatpush1.msra.mxu0 0.0
    %751 = vmatprep.subr.mxu0 0.0
    %752 = vmatpush1.msra.mxu0 0.0
    %753 = vmatprep.subr.mxu0 0.0
    %754 = vmatpush1.msra.mxu0 0.0
    %755 = vmatprep.subr.mxu0 0.0
    %756 = vmatpush1.msra.mxu0 0.0
    %757 = vmatprep.subr.mxu0 0.0
    %758 = vmatpush1.msra.mxu0 %v716
    %759 = vmatprep.subr.mxu0 0.0
    %760 = vmatpush2.msra.mxu0 0.0
    %761 = vmatprep.subr.mxu0 0.0
    %762 = vmatpush2.msra.mxu0 0.0
    %763 = vmatprep.subr.mxu0 0.0
    %764 = vmatpush2.msra.mxu0 0.0
    %765 = vmatprep.subr.mxu0 0.0
    %766 = vmatpush2.msra.mxu0 0.0
    %767 = vmatprep.subr.mxu0 0.0
    %768 = vmatpush2.msra.mxu0 0.0
    %769 = vmatprep.subr.mxu0 0.0
    %770 = vmatpush2.msra.mxu0 0.0
    %771 = vmatprep.subr.mxu0 0.0
    %772 = vmatpush2.msra.mxu0 0.0
    %773 = vmatprep.subr.mxu0 0.0
    %774 = vmatpush2.msra.mxu0 0.0
    %775 = vmatprep.subr.mxu0 0.0
    %776 = vmatpush2.msra.mxu0 0.0
    %777 = vmatprep.subr.mxu0 0.0
    %778 = vmatpush2.msra.mxu0 0.0
    %779 = vmatprep.subr.mxu0 0.0
    %780 = vmatpush2.msra.mxu0 0.0
    %781 = vmatprep.subr.mxu0 0.0
    %782 = vmatpush2.msra.mxu0 0.0
    %783 = vmatprep.subr.mxu0 0.0
    %784 = vmatpush2.msra.mxu0 0.0
    %785 = vmatprep.subr.mxu0 0.0
    %786 = vmatpush2.msra.mxu0 0.0
    %787 = vmatprep.subr.mxu0 0.0
    %788 = vmatpush2.msra.mxu0 0.0
    %789 = vmatprep.subr.mxu0 0.0
    %790 = vmatpush2.msra.mxu0 0.0
    %791 = vmatprep.mubr.f32.mxu0 0.0
    %792 = vmatmul.mubr.f32.gmra.mxu0 %v725
    %v793 = vpop.f32.mrf.mxu0
    %v794 = vadd.f32 0.0, %v793
    %v795 = vpop.f32.mrf.mxu0
    %796 = vdwg.mxu0
    %vm797 = vcmp.ge.f32.partialorder %v794, 0.0
    %v798 = vmul.f32 %v794, 0.2
    %v799 = vsel %vm797, %v794, %v798
    %v800 = vmul.f32 %v799, 1.4142135
    %vm801 = vcmask 130048
    %v803 = vsel %vm801, %v800, 0
    %805 = vmatprep.subr.mxu0 0.0
    %806 = vmatpush1.msra.mxu0 0.0
    %807 = vmatprep.subr.mxu0 0.0
    %808 = vmatpush1.msra.mxu0 0.0
    %809 = vmatprep.subr.mxu0 0.0
    %810 = vmatpush1.msra.mxu0 0.0
    %811 = vmatprep.subr.mxu0 0.0
    %812 = vmatpush1.msra.mxu0 0.0
    %813 = vmatprep.subr.mxu0 0.0
    %814 = vmatpush1.msra.mxu0 0.0
    %815 = vmatprep.subr.mxu0 0.0
    %816 = vmatpush1.msra.mxu0 0.0
    %817 = vmatprep.subr.mxu0 0.0
    %818 = vmatpush1.msra.mxu0 0.0
    %819 = vmatprep.subr.mxu0 0.0
    %820 = vmatpush1.msra.mxu0 0.0
    %821 = vmatprep.subr.mxu0 0.0
    %822 = vmatpush1.msra.mxu0 0.0
    %823 = vmatprep.subr.mxu0 0.0
    %824 = vmatpush1.msra.mxu0 0.0
    %825 = vmatprep.subr.mxu0 0.0
    %826 = vmatpush1.msra.mxu0 0.0
    %827 = vmatprep.subr.mxu0 0.0
    %828 = vmatpush1.msra.mxu0 0.0
    %829 = vmatprep.subr.mxu0 0.0
    %830 = vmatpush1.msra.mxu0 0.0
    %831 = vmatprep.subr.mxu0 0.0
    %832 = vmatpush1.msra.mxu0 0.0
    %833 = vmatprep.subr.mxu0 0.0
    %834 = vmatpush1.msra.mxu0 %v616
    %835 = vmatprep.subr.mxu0 0.0
    %836 = vmatpush1.msra.mxu0 %v615
    %837 = vmatprep.subr.mxu0 0.0
    %838 = vmatpush2.msra.mxu0 0.0
    %839 = vmatprep.subr.mxu0 0.0
    %840 = vmatpush2.msra.mxu0 0.0
    %841 = vmatprep.subr.mxu0 0.0
    %842 = vmatpush2.msra.mxu0 0.0
    %843 = vmatprep.subr.mxu0 0.0
    %844 = vmatpush2.msra.mxu0 0.0
    %845 = vmatprep.subr.mxu0 0.0
    %846 = vmatpush2.msra.mxu0 0.0
    %847 = vmatprep.subr.mxu0 0.0
    %848 = vmatpush2.msra.mxu0 0.0
    %849 = vmatprep.subr.mxu0 0.0
    %850 = vmatpush2.msra.mxu0 0.0
    %851 = vmatprep.subr.mxu0 0.0
    %852 = vmatpush2.msra.mxu0 0.0
    %853 = vmatprep.subr.mxu0 0.0
    %854 = vmatpush2.msra.mxu0 0.0
    %855 = vmatprep.subr.mxu0 0.0
    %856 = vmatpush2.msra.mxu0 0.0
    %857 = vmatprep.subr.mxu0 0.0
    %858 = vmatpush2.msra.mxu0 0.0
    %859 = vmatprep.subr.mxu0 0.0
    %860 = vmatpush2.msra.mxu0 0.0
    %861 = vmatprep.subr.mxu0 0.0
    %862 = vmatpush2.msra.mxu0 0.0
    %863 = vmatprep.subr.mxu0 0.0
    %864 = vmatpush2.msra.mxu0 0.0
    %865 = vmatprep.subr.mxu0 0.0
    %866 = vmatpush2.msra.mxu0 0.0
    %867 = vmatprep.subr.mxu0 0.0
    %868 = vmatpush2.msra.mxu0 0.0
    %869 = vmatprep.mubr.f32.mxu0 0.0
    %870 = vmatmul.mubr.f32.gmra.mxu0 %v803
    %v871 = vpop.f32.mrf.mxu0
    %v872 = vadd.f32 0.0, %v871
    %v873 = vpop.f32.mrf.mxu0
    %874 = vdwg.mxu0
    %s875 = scalar_lea.vmem %s4, 16
    %v876 = vld [vmem:[%s875] sm:$0xff]
    %877 = vrot.lane.b32.xlu0 %v637, 112
    %v878 = vpop.permute.xlu0 %877
    %v880 = vmul.f32 %v876, %v878
    %v882 = vsel %vm639, %v880, 0
    %884 = vmatprep.subr.mxu0 0.0
    %885 = vmatpush1.msra.mxu0 0.0
    %886 = vmatprep.subr.mxu0 0.0
    %887 = vmatpush1.msra.mxu0 0.0
    %888 = vmatprep.subr.mxu0 0.0
    %889 = vmatpush1.msra.mxu0 0.0
    %890 = vmatprep.subr.mxu0 0.0
    %891 = vmatpush1.msra.mxu0 0.0
    %892 = vmatprep.subr.mxu0 0.0
    %893 = vmatpush1.msra.mxu0 0.0
    %894 = vmatprep.subr.mxu0 0.0
    %895 = vmatpush1.msra.mxu0 0.0
    %896 = vmatprep.subr.mxu0 0.0
    %897 = vmatpush1.msra.mxu0 0.0
    %898 = vmatprep.subr.mxu0 0.0
    %899 = vmatpush1.msra.mxu0 0.0
    %900 = vmatprep.subr.mxu0 0.0
    %901 = vmatpush1.msra.mxu0 0.0
    %902 = vmatprep.subr.mxu0 0.0
    %903 = vmatpush1.msra.mxu0 0.0
    %904 = vmatprep.subr.mxu0 0.0
    %905 = vmatpush1.msra.mxu0 0.0
    %906 = vmatprep.subr.mxu0 0.0
    %907 = vmatpush1.msra.mxu0 0.0
    %908 = vmatprep.subr.mxu0 0.0
    %909 = vmatpush1.msra.mxu0 0.0
    %910 = vmatprep.subr.mxu0 0.0
    %911 = vmatpush1.msra.mxu0 0.0
    %912 = vmatprep.subr.mxu0 0.0
    %913 = vmatpush1.msra.mxu0 0.0
    %914 = vmatprep.subr.mxu0 0.0
    %915 = vmatpush1.msra.mxu0 %v872
    %916 = vmatprep.subr.mxu0 0.0
    %917 = vmatpush2.msra.mxu0 0.0
    %918 = vmatprep.subr.mxu0 0.0
    %919 = vmatpush2.msra.mxu0 0.0
    %920 = vmatprep.subr.mxu0 0.0
    %921 = vmatpush2.msra.mxu0 0.0
    %922 = vmatprep.subr.mxu0 0.0
    %923 = vmatpush2.msra.mxu0 0.0
    %924 = vmatprep.subr.mxu0 0.0
    %925 = vmatpush2.msra.mxu0 0.0
    %926 = vmatprep.subr.mxu0 0.0
    %927 = vmatpush2.msra.mxu0 0.0
    %928 = vmatprep.subr.mxu0 0.0
    %929 = vmatpush2.msra.mxu0 0.0
    %930 = vmatprep.subr.mxu0 0.0
    %931 = vmatpush2.msra.mxu0 0.0
    %932 = vmatprep.subr.mxu0 0.0
    %933 = vmatpush2.msra.mxu0 0.0
    %934 = vmatprep.subr.mxu0 0.0
    %935 = vmatpush2.msra.mxu0 0.0
    %936 = vmatprep.subr.mxu0 0.0
    %937 = vmatpush2.msra.mxu0 0.0
    %938 = vmatprep.subr.mxu0 0.0
    %939 = vmatpush2.msra.mxu0 0.0
    %940 = vmatprep.subr.mxu0 0.0
    %941 = vmatpush2.msra.mxu0 0.0
    %942 = vmatprep.subr.mxu0 0.0
    %943 = vmatpush2.msra.mxu0 0.0
    %944 = vmatprep.subr.mxu0 0.0
    %945 = vmatpush2.msra.mxu0 0.0
    %946 = vmatprep.subr.mxu0 0.0
    %947 = vmatpush2.msra.mxu0 0.0
    %948 = vmatprep.mubr.f32.mxu0 0.0
    %949 = vmatmul.mubr.f32.gmra.mxu0 %v882
    %v950 = vpop.f32.mrf.mxu0
    %v951 = vadd.f32 0.0, %v950
    %v952 = vpop.f32.mrf.mxu0
    %953 = vdwg.mxu0
    %vm954 = vcmp.ge.f32.partialorder %v951, 0.0
    %v955 = vmul.f32 %v951, 0.2
    %v956 = vsel %vm954, %v951, %v955
    %v957 = vmul.f32 %v956, 1.4142135
    %s958 = scalar_lea.vmem %s4, 24
    %v959 = vld [vmem:[%s958] sm:$0xff]
    %960 = vrot.lane.b32.xlu0 %v637, 104
    %v961 = vpop.permute.xlu0 %960
    %v963 = vmul.f32 %v959, %v961
    %v965 = vsel %vm639, %v963, 0
    %967 = vmatprep.subr.mxu0 0.0
    %968 = vmatpush1.msra.mxu0 0.0
    %969 = vmatprep.subr.mxu0 0.0
    %970 = vmatpush1.msra.mxu0 0.0
    %971 = vmatprep.subr.mxu0 0.0
    %972 = vmatpush1.msra.mxu0 0.0
    %973 = vmatprep.subr.mxu0 0.0
    %974 = vmatpush1.msra.mxu0 0.0
    %975 = vmatprep.subr.mxu0 0.0
    %976 = vmatpush1.msra.mxu0 0.0
    %977 = vmatprep.subr.mxu0 0.0
    %978 = vmatpush1.msra.mxu0 0.0
    %979 = vmatprep.subr.mxu0 0.0
    %980 = vmatpush1.msra.mxu0 0.0
    %981 = vmatprep.subr.mxu0 0.0
    %982 = vmatpush1.msra.mxu0 0.0
    %983 = vmatprep.subr.mxu0 0.0
    %984 = vmatpush1.msra.mxu0 0.0
    %985 = vmatprep.subr.mxu0 0.0
    %986 = vmatpush1.msra.mxu0 0.0
    %987 = vmatprep.subr.mxu0 0.0
    %988 = vmatpush1.msra.mxu0 0.0
    %989 = vmatprep.subr.mxu0 0.0
    %990 = vmatpush1.msra.mxu0 0.0
    %991 = vmatprep.subr.mxu0 0.0
    %992 = vmatpush1.msra.mxu0 0.0
    %993 = vmatprep.subr.mxu0 0.0
    %994 = vmatpush1.msra.mxu0 0.0
    %995 = vmatprep.subr.mxu0 0.0
    %996 = vmatpush1.msra.mxu0 0.0
    %997 = vmatprep.subr.mxu0 0.0
    %998 = vmatpush1.msra.mxu0 %v957
    %999 = vmatprep.subr.mxu0 0.0
    %1000 = vmatpush2.msra.mxu0 0.0
    %1001 = vmatprep.subr.mxu0 0.0
    %1002 = vmatpush2.msra.mxu0 0.0
    %1003 = vmatprep.subr.mxu0 0.0
    %1004 = vmatpush2.msra.mxu0 0.0
    %1005 = vmatprep.subr.mxu0 0.0
    %1006 = vmatpush2.msra.mxu0 0.0
    %1007 = vmatprep.subr.mxu0 0.0
    %1008 = vmatpush2.msra.mxu0 0.0
    %1009 = vmatprep.subr.mxu0 0.0
    %1010 = vmatpush2.msra.mxu0 0.0
    %1011 = vmatprep.subr.mxu0 0.0
    %1012 = vmatpush2.msra.mxu0 0.0
    %1013 = vmatprep.subr.mxu0 0.0
    %1014 = vmatpush2.msra.mxu0 0.0
    %1015 = vmatprep.subr.mxu0 0.0
    %1016 = vmatpush2.msra.mxu0 0.0
    %1017 = vmatprep.subr.mxu0 0.0
    %1018 = vmatpush2.msra.mxu0 0.0
    %1019 = vmatprep.subr.mxu0 0.0
    %1020 = vmatpush2.msra.mxu0 0.0
    %1021 = vmatprep.subr.mxu0 0.0
    %1022 = vmatpush2.msra.mxu0 0.0
    %1023 = vmatprep.subr.mxu0 0.0
    %1024 = vmatpush2.msra.mxu0 0.0
    %1025 = vmatprep.subr.mxu0 0.0
    %1026 = vmatpush2.msra.mxu0 0.0
    %1027 = vmatprep.subr.mxu0 0.0
    %1028 = vmatpush2.msra.mxu0 0.0
    %1029 = vmatprep.subr.mxu0 0.0
    %1030 = vmatpush2.msra.mxu0 0.0
    %1031 = vmatprep.mubr.f32.mxu0 0.0
    %1032 = vmatmul.mubr.f32.gmra.mxu0 %v965
    %v1033 = vpop.f32.mrf.mxu0
    %v1034 = vadd.f32 0.0, %v1033
    %v1035 = vpop.f32.mrf.mxu0
    %1036 = vdwg.mxu0
    %vm1037 = vcmp.ge.f32.partialorder %v1034, 0.0
    %v1038 = vmul.f32 %v1034, 0.2
    %v1039 = vsel %vm1037, %v1034, %v1038
    %v1040 = vmul.f32 %v1039, 1.4142135
    %vm1041 = vcmask 523264
    %v1043 = vsel %vm1041, %v1040, 0
    %1045 = vmatprep.subr.mxu0 0.0
    %1046 = vmatpush1.msra.mxu0 0.0
    %1047 = vmatprep.subr.mxu0 0.0
    %1048 = vmatpush1.msra.mxu0 0.0
    %1049 = vmatprep.subr.mxu0 0.0
    %1050 = vmatpush1.msra.mxu0 0.0
    %1051 = vmatprep.subr.mxu0 0.0
    %1052 = vmatpush1.msra.mxu0 0.0
    %1053 = vmatprep.subr.mxu0 0.0
    %1054 = vmatpush1.msra.mxu0 0.0
    %1055 = vmatprep.subr.mxu0 0.0
    %1056 = vmatpush1.msra.mxu0 0.0
    %1057 = vmatprep.subr.mxu0 0.0
    %1058 = vmatpush1.msra.mxu0 0.0
    %1059 = vmatprep.subr.mxu0 0.0
    %1060 = vmatpush1.msra.mxu0 0.0
    %1061 = vmatprep.subr.mxu0 %v632
    %1062 = vmatpush1.msra.mxu0 %v631
    %1063 = vmatprep.subr.mxu0 %v630
    %1064 = vmatpush1.msra.mxu0 %v629
    %1065 = vmatprep.subr.mxu0 %v628
    %1066 = vmatpush1.msra.mxu0 %v627
    %1067 = vmatprep.subr.mxu0 %v626
    %1068 = vmatpush1.msra.mxu0 %v625
    %1069 = vmatprep.subr.mxu0 %v624
    %1070 = vmatpush1.msra.mxu0 %v623
    %1071 = vmatprep.subr.mxu0 %v622
    %1072 = vmatpush1.msra.mxu0 %v621
    %1073 = vmatprep.subr.mxu0 %v620
    %1074 = vmatpush1.msra.mxu0 %v619
    %1075 = vmatprep.subr.mxu0 %v618
    %1076 = vmatpush1.msra.mxu0 %v617
    %1077 = vmatprep.subr.mxu0 0.0
    %1078 = vmatpush2.msra.mxu0 0.0
    %1079 = vmatprep.subr.mxu0 0.0
    %1080 = vmatpush2.msra.mxu0 0.0
    %1081 = vmatprep.subr.mxu0 0.0
    %1082 = vmatpush2.msra.mxu0 0.0
    %1083 = vmatprep.subr.mxu0 0.0
    %1084 = vmatpush2.msra.mxu0 0.0
    %1085 = vmatprep.subr.mxu0 0.0
    %1086 = vmatpush2.msra.mxu0 0.0
    %1087 = vmatprep.subr.mxu0 0.0
    %1088 = vmatpush2.msra.mxu0 0.0
    %1089 = vmatprep.subr.mxu0 0.0
    %1090 = vmatpush2.msra.mxu0 0.0
    %1091 = vmatprep.subr.mxu0 0.0
    %1092 = vmatpush2.msra.mxu0 0.0
    %1093 = vmatprep.subr.mxu0 0.0
    %1094 = vmatpush2.msra.mxu0 0.0
    %1095 = vmatprep.subr.mxu0 0.0
    %1096 = vmatpush2.msra.mxu0 0.0
    %1097 = vmatprep.subr.mxu0 0.0
    %1098 = vmatpush2.msra.mxu0 0.0
    %1099 = vmatprep.subr.mxu0 0.0
    %1100 = vmatpush2.msra.mxu0 0.0
    %1101 = vmatprep.subr.mxu0 0.0
    %1102 = vmatpush2.msra.mxu0 0.0
    %1103 = vmatprep.subr.mxu0 0.0
    %1104 = vmatpush2.msra.mxu0 0.0
    %1105 = vmatprep.subr.mxu0 0.0
    %1106 = vmatpush2.msra.mxu0 0.0
    %1107 = vmatprep.subr.mxu0 0.0
    %1108 = vmatpush2.msra.mxu0 0.0
    %1109 = vmatprep.mubr.f32.mxu0 0.0
    %1110 = vmatmul.mubr.f32.gmra.mxu0 %v1043
    %v1111 = vpop.f32.mrf.mxu0
    %v1112 = vadd.f32 0.0, %v1111
    %v1113 = vpop.f32.mrf.mxu0
    %v1114 = vadd.f32 0.0, %v1113
    %1115 = vdwg.mxu0
    %s1116 = scalar_lea.vmem %s4, 32
    %v1117 = vld [vmem:[%s1116] sm:$0xff]
    %1118 = vrot.lane.b32.xlu0 %v637, 96
    %v1119 = vpop.permute.xlu0 %1118
    %v1121 = vmul.f32 %v1117, %v1119
    %v1123 = vsel %vm639, %v1121, 0
    %1125 = vmatprep.subr.mxu0 0.0
    %1126 = vmatpush1.msra.mxu0 0.0
    %1127 = vmatprep.subr.mxu0 0.0
    %1128 = vmatpush1.msra.mxu0 0.0
    %1129 = vmatprep.subr.mxu0 0.0
    %1130 = vmatpush1.msra.mxu0 0.0
    %1131 = vmatprep.subr.mxu0 0.0
    %1132 = vmatpush1.msra.mxu0 0.0
    %1133 = vmatprep.subr.mxu0 0.0
    %1134 = vmatpush1.msra.mxu0 0.0
    %1135 = vmatprep.subr.mxu0 0.0
    %1136 = vmatpush1.msra.mxu0 0.0
    %1137 = vmatprep.subr.mxu0 0.0
    %1138 = vmatpush1.msra.mxu0 0.0
    %1139 = vmatprep.subr.mxu0 0.0
    %1140 = vmatpush1.msra.mxu0 0.0
    %1141 = vmatprep.subr.mxu0 0.0
    %1142 = vmatpush1.msra.mxu0 0.0
    %1143 = vmatprep.subr.mxu0 0.0
    %1144 = vmatpush1.msra.mxu0 0.0
    %1145 = vmatprep.subr.mxu0 0.0
    %1146 = vmatpush1.msra.mxu0 0.0
    %1147 = vmatprep.subr.mxu0 0.0
    %1148 = vmatpush1.msra.mxu0 0.0
    %1149 = vmatprep.subr.mxu0 0.0
    %1150 = vmatpush1.msra.mxu0 0.0
    %1151 = vmatprep.subr.mxu0 0.0
    %1152 = vmatpush1.msra.mxu0 0.0
    %1153 = vmatprep.subr.mxu0 0.0
    %1154 = vmatpush1.msra.mxu0 0.0
    %1155 = vmatprep.subr.mxu0 %v1114
    %1156 = vmatpush1.msra.mxu0 %v1112
    %1157 = vmatprep.subr.mxu0 0.0
    %1158 = vmatpush2.msra.mxu0 0.0
    %1159 = vmatprep.subr.mxu0 0.0
    %1160 = vmatpush2.msra.mxu0 0.0
    %1161 = vmatprep.subr.mxu0 0.0
    %1162 = vmatpush2.msra.mxu0 0.0
    %1163 = vmatprep.subr.mxu0 0.0
    %1164 = vmatpush2.msra.mxu0 0.0
    %1165 = vmatprep.subr.mxu0 0.0
    %1166 = vmatpush2.msra.mxu0 0.0
    %1167 = vmatprep.subr.mxu0 0.0
    %1168 = vmatpush2.msra.mxu0 0.0
    %1169 = vmatprep.subr.mxu0 0.0
    %1170 = vmatpush2.msra.mxu0 0.0
    %1171 = vmatprep.subr.mxu0 0.0
    %1172 = vmatpush2.msra.mxu0 0.0
    %1173 = vmatprep.subr.mxu0 0.0
    %1174 = vmatpush2.msra.mxu0 0.0
    %1175 = vmatprep.subr.mxu0 0.0
    %1176 = vmatpush2.msra.mxu0 0.0
    %1177 = vmatprep.subr.mxu0 0.0
    %1178 = vmatpush2.msra.mxu0 0.0
    %1179 = vmatprep.subr.mxu0 0.0
    %1180 = vmatpush2.msra.mxu0 0.0
    %1181 = vmatprep.subr.mxu0 0.0
    %1182 = vmatpush2.msra.mxu0 0.0
    %1183 = vmatprep.subr.mxu0 0.0
    %1184 = vmatpush2.msra.mxu0 0.0
    %1185 = vmatprep.subr.mxu0 0.0
    %1186 = vmatpush2.msra.mxu0 0.0
    %1187 = vmatprep.subr.mxu0 0.0
    %1188 = vmatpush2.msra.mxu0 0.0
    %1189 = vmatprep.mubr.f32.mxu0 0.0
    %1190 = vmatmul.mubr.f32.gmra.mxu0 %v1123
    %v1191 = vpop.f32.mrf.mxu0
    %v1192 = vadd.f32 0.0, %v1191
    %v1193 = vpop.f32.mrf.mxu0
    %v1194 = vadd.f32 0.0, %v1193
    %1195 = vdwg.mxu0
    %vm1196 = vcmp.ge.f32.partialorder %v1192, 0.0
    %vm1197 = vcmp.ge.f32.partialorder %v1194, 0.0
    %v1198 = vmul.f32 %v1192, 0.2
    %v1199 = vmul.f32 %v1194, 0.2
    %v1200 = vsel %vm1196, %v1192, %v1198
    %v1201 = vsel %vm1197, %v1194, %v1199
    %v1202 = vmul.f32 %v1200, 1.4142135
    %v1203 = vmul.f32 %v1201, 1.4142135
    %s1204 = scalar_lea.vmem %s4, 40
    %v1205 = vld [vmem:[%s1204] sm:$0xff]
    %1206 = vrot.lane.b32.xlu0 %v637, 88
    %v1207 = vpop.permute.xlu0 %1206
    %v1209 = vmul.f32 %v1205, %v1207
    %v1211 = vsel %vm639, %v1209, 0
    %1213 = vmatprep.subr.mxu0 0.0
    %1214 = vmatpush1.msra.mxu0 0.0
    %1215 = vmatprep.subr.mxu0 0.0
    %1216 = vmatpush1.msra.mxu0 0.0
    %1217 = vmatprep.subr.mxu0 0.0
    %1218 = vmatpush1.msra.mxu0 0.0
    %1219 = vmatprep.subr.mxu0 0.0
    %1220 = vmatpush1.msra.mxu0 0.0
    %1221 = vmatprep.subr.mxu0 0.0
    %1222 = vmatpush1.msra.mxu0 0.0
    %1223 = vmatprep.subr.mxu0 0.0
    %1224 = vmatpush1.msra.mxu0 0.0
    %1225 = vmatprep.subr.mxu0 0.0
    %1226 = vmatpush1.msra.mxu0 0.0
    %1227 = vmatprep.subr.mxu0 0.0
    %1228 = vmatpush1.msra.mxu0 0.0
    %1229 = vmatprep.subr.mxu0 0.0
    %1230 = vmatpush1.msra.mxu0 0.0
    %1231 = vmatprep.subr.mxu0 0.0
    %1232 = vmatpush1.msra.mxu0 0.0
    %1233 = vmatprep.subr.mxu0 0.0
    %1234 = vmatpush1.msra.mxu0 0.0
    %1235 = vmatprep.subr.mxu0 0.0
    %1236 = vmatpush1.msra.mxu0 0.0
    %1237 = vmatprep.subr.mxu0 0.0
    %1238 = vmatpush1.msra.mxu0 0.0
    %1239 = vmatprep.subr.mxu0 0.0
    %1240 = vmatpush1.msra.mxu0 0.0
    %1241 = vmatprep.subr.mxu0 0.0
    %1242 = vmatpush1.msra.mxu0 0.0
    %1243 = vmatprep.subr.mxu0 %v1203
    %1244 = vmatpush1.msra.mxu0 %v1202
    %1245 = vmatprep.subr.mxu0 0.0
    %1246 = vmatpush2.msra.mxu0 0.0
    %1247 = vmatprep.subr.mxu0 0.0
    %1248 = vmatpush2.msra.mxu0 0.0
    %1249 = vmatprep.subr.mxu0 0.0
    %1250 = vmatpush2.msra.mxu0 0.0
    %1251 = vmatprep.subr.mxu0 0.0
    %1252 = vmatpush2.msra.mxu0 0.0
    %1253 = vmatprep.subr.mxu0 0.0
    %1254 = vmatpush2.msra.mxu0 0.0
    %1255 = vmatprep.subr.mxu0 0.0
    %1256 = vmatpush2.msra.mxu0 0.0
    %1257 = vmatprep.subr.mxu0 0.0
    %1258 = vmatpush2.msra.mxu0 0.0
    %1259 = vmatprep.subr.mxu0 0.0
    %1260 = vmatpush2.msra.mxu0 0.0
    %1261 = vmatprep.subr.mxu0 0.0
    %1262 = vmatpush2.msra.mxu0 0.0
    %1263 = vmatprep.subr.mxu0 0.0
    %1264 = vmatpush2.msra.mxu0 0.0
    %1265 = vmatprep.subr.mxu0 0.0
    %1266 = vmatpush2.msra.mxu0 0.0
    %1267 = vmatprep.subr.mxu0 0.0
    %1268 = vmatpush2.msra.mxu0 0.0
    %1269 = vmatprep.subr.mxu0 0.0
    %1270 = vmatpush2.msra.mxu0 0.0
    %1271 = vmatprep.subr.mxu0 0.0
    %1272 = vmatpush2.msra.mxu0 0.0
    %1273 = vmatprep.subr.mxu0 0.0
    %1274 = vmatpush2.msra.mxu0 0.0
    %1275 = vmatprep.subr.mxu0 0.0
    %1276 = vmatpush2.msra.mxu0 0.0
    %1277 = vmatprep.mubr.f32.mxu0 0.0
    %1278 = vmatmul.mubr.f32.gmra.mxu0 %v1211
    %v1279 = vpop.f32.mrf.mxu0
    %v1280 = vadd.f32 0.0, %v1279
    %v1281 = vpop.f32.mrf.mxu0
    %v1282 = vadd.f32 0.0, %v1281
    %1283 = vdwg.mxu0
    %vm1284 = vcmp.ge.f32.partialorder %v1280, 0.0
    %vm1285 = vcmp.ge.f32.partialorder %v1282, 0.0
    %v1286 = vmul.f32 %v1280, 0.2
    %v1287 = vmul.f32 %v1282, 0.2
    %v1288 = vsel %vm1284, %v1280, %v1286
    %v1289 = vsel %vm1285, %v1282, %v1287
    %v1290 = vmul.f32 %v1288, 1.4142135
    %v1291 = vmul.f32 %v1289, 1.4142135
    %v1293 = vsel %vm639, %v614, 0
    %1295 = vmatprep.subr.mxu0 0.0
    %1296 = vmatpush1.msra.mxu0 0.0
    %1297 = vmatprep.subr.mxu0 0.0
    %1298 = vmatpush1.msra.mxu0 0.0
    %1299 = vmatprep.subr.mxu0 0.0
    %1300 = vmatpush1.msra.mxu0 0.0
    %1301 = vmatprep.subr.mxu0 0.0
    %1302 = vmatpush1.msra.mxu0 0.0
    %1303 = vmatprep.subr.mxu0 0.0
    %1304 = vmatpush1.msra.mxu0 0.0
    %1305 = vmatprep.subr.mxu0 0.0
    %1306 = vmatpush1.msra.mxu0 0.0
    %1307 = vmatprep.subr.mxu0 0.0
    %1308 = vmatpush1.msra.mxu0 0.0
    %1309 = vmatprep.subr.mxu0 0.0
    %1310 = vmatpush1.msra.mxu0 0.0
    %1311 = vmatprep.subr.mxu0 0.0
    %1312 = vmatpush1.msra.mxu0 0.0
    %1313 = vmatprep.subr.mxu0 0.0
    %1314 = vmatpush1.msra.mxu0 0.0
    %1315 = vmatprep.subr.mxu0 0.0
    %1316 = vmatpush1.msra.mxu0 0.0
    %1317 = vmatprep.subr.mxu0 0.0
    %1318 = vmatpush1.msra.mxu0 0.0
    %1319 = vmatprep.subr.mxu0 0.0
    %1320 = vmatpush1.msra.mxu0 0.0
    %1321 = vmatprep.subr.mxu0 0.0
    %1322 = vmatpush1.msra.mxu0 0.0
    %1323 = vmatprep.subr.mxu0 0.0
    %1324 = vmatpush1.msra.mxu0 0.0
    %1325 = vmatprep.subr.mxu0 %v1291
    %1326 = vmatpush1.msra.mxu0 %v1290
    %1327 = vmatprep.subr.mxu0 0.0
    %1328 = vmatpush2.msra.mxu0 0.0
    %1329 = vmatprep.subr.mxu0 0.0
    %1330 = vmatpush2.msra.mxu0 0.0
    %1331 = vmatprep.subr.mxu0 0.0
    %1332 = vmatpush2.msra.mxu0 0.0
    %1333 = vmatprep.subr.mxu0 0.0
    %1334 = vmatpush2.msra.mxu0 0.0
    %1335 = vmatprep.subr.mxu0 0.0
    %1336 = vmatpush2.msra.mxu0 0.0
    %1337 = vmatprep.subr.mxu0 0.0
    %1338 = vmatpush2.msra.mxu0 0.0
    %1339 = vmatprep.subr.mxu0 0.0
    %1340 = vmatpush2.msra.mxu0 0.0
    %1341 = vmatprep.subr.mxu0 0.0
    %1342 = vmatpush2.msra.mxu0 0.0
    %1343 = vmatprep.subr.mxu0 0.0
    %1344 = vmatpush2.msra.mxu0 0.0
    %1345 = vmatprep.subr.mxu0 0.0
    %1346 = vmatpush2.msra.mxu0 0.0
    %1347 = vmatprep.subr.mxu0 0.0
    %1348 = vmatpush2.msra.mxu0 0.0
    %1349 = vmatprep.subr.mxu0 0.0
    %1350 = vmatpush2.msra.mxu0 0.0
    %1351 = vmatprep.subr.mxu0 0.0
    %1352 = vmatpush2.msra.mxu0 0.0
    %1353 = vmatprep.subr.mxu0 0.0
    %1354 = vmatpush2.msra.mxu0 0.0
    %1355 = vmatprep.subr.mxu0 0.0
    %1356 = vmatpush2.msra.mxu0 0.0
    %1357 = vmatprep.subr.mxu0 0.0
    %1358 = vmatpush2.msra.mxu0 0.0
    %1359 = vmatprep.mubr.f32.mxu0 0.0
    %1360 = vmatmul.mubr.f32.gmra.mxu0 %v1293
    %v1361 = vpop.f32.mrf.mxu0
    %v1362 = vadd.f32 0.0, %v1361
    %v1363 = vpop.f32.mrf.mxu0
    %v1364 = vadd.f32 0.0, %v1363
    %1365 = vdwg.mxu0
    %v1368 = vcombine.low %v1362, %v1364
    %1370 = vst [vmem:[%s9] sm:$0x77] %v1368
    %v1371 = vld [vmem:[%s4] sm:$0xff]
    %v1372 = vlaneseq
    %v1373 = vshrl.u32 %v1372, 7
    %v1374 = vsub.s32 1, %v1373
    %v1375 = vrot.slane %v607, %v1374
    %v1376 = vmul.f32 %v1371, %v1375
    %v1378 = vsel %vm639, %v1376, 0
    %1380 = vmatprep.subr.mxu0 0.0
    %1381 = vmatpush1.msra.mxu0 0.0
    %1382 = vmatprep.subr.mxu0 0.0
    %1383 = vmatpush1.msra.mxu0 0.0
    %1384 = vmatprep.subr.mxu0 0.0
    %1385 = vmatpush1.msra.mxu0 0.0
    %1386 = vmatprep.subr.mxu0 0.0
    %1387 = vmatpush1.msra.mxu0 0.0
    %1388 = vmatprep.subr.mxu0 0.0
    %1389 = vmatpush1.msra.mxu0 0.0
    %1390 = vmatprep.subr.mxu0 0.0
    %1391 = vmatpush1.msra.mxu0 0.0
    %1392 = vmatprep.subr.mxu0 0.0
    %1393 = vmatpush1.msra.mxu0 0.0
    %1394 = vmatprep.subr.mxu0 0.0
    %1395 = vmatpush1.msra.mxu0 0.0
    %1396 = vmatprep.subr.mxu0 0.0
    %1397 = vmatpush1.msra.mxu0 0.0
    %1398 = vmatprep.subr.mxu0 0.0
    %1399 = vmatpush1.msra.mxu0 0.0
    %1400 = vmatprep.subr.mxu0 0.0
    %1401 = vmatpush1.msra.mxu0 0.0
    %1402 = vmatprep.subr.mxu0 0.0
    %1403 = vmatpush1.msra.mxu0 0.0
    %1404 = vmatprep.subr.mxu0 0.0
    %1405 = vmatpush1.msra.mxu0 0.0
    %1406 = vmatprep.subr.mxu0 0.0
    %1407 = vmatpush1.msra.mxu0 0.0
    %1408 = vmatprep.subr.mxu0 0.0
    %1409 = vmatpush1.msra.mxu0 0.0
    %1410 = vmatprep.subr.mxu0 0.0
    %1411 = vmatpush1.msra.mxu0 %v613
    %1412 = vmatprep.subr.mxu0 0.0
    %1413 = vmatpush2.msra.mxu0 0.0
    %1414 = vmatprep.subr.mxu0 0.0
    %1415 = vmatpush2.msra.mxu0 0.0
    %1416 = vmatprep.subr.mxu0 0.0
    %1417 = vmatpush2.msra.mxu0 0.0
    %1418 = vmatprep.subr.mxu0 0.0
    %1419 = vmatpush2.msra.mxu0 0.0
    %1420 = vmatprep.subr.mxu0 0.0
    %1421 = vmatpush2.msra.mxu0 0.0
    %1422 = vmatprep.subr.mxu0 0.0
    %1423 = vmatpush2.msra.mxu0 0.0
    %1424 = vmatprep.subr.mxu0 0.0
    %1425 = vmatpush2.msra.mxu0 0.0
    %1426 = vmatprep.subr.mxu0 0.0
    %1427 = vmatpush2.msra.mxu0 0.0
    %1428 = vmatprep.subr.mxu0 0.0
    %1429 = vmatpush2.msra.mxu0 0.0
    %1430 = vmatprep.subr.mxu0 0.0
    %1431 = vmatpush2.msra.mxu0 0.0
    %1432 = vmatprep.subr.mxu0 0.0
    %1433 = vmatpush2.msra.mxu0 0.0
    %1434 = vmatprep.subr.mxu0 0.0
    %1435 = vmatpush2.msra.mxu0 0.0
    %1436 = vmatprep.subr.mxu0 0.0
    %1437 = vmatpush2.msra.mxu0 0.0
    %1438 = vmatprep.subr.mxu0 0.0
    %1439 = vmatpush2.msra.mxu0 0.0
    %1440 = vmatprep.subr.mxu0 0.0
    %1441 = vmatpush2.msra.mxu0 0.0
    %1442 = vmatprep.subr.mxu0 0.0
    %1443 = vmatpush2.msra.mxu0 0.0
    %1444 = vmatprep.mubr.f32.mxu0 0.0
    %1445 = vmatmul.mubr.f32.gmra.mxu0 %v1378
    %v1446 = vpop.f32.mrf.mxu0
    %v1447 = vadd.f32 0.0, %v1446
    %v1448 = vpop.f32.mrf.mxu0
    %1449 = vdwg.mxu0
    %vm1450 = vcmp.ge.f32.partialorder %v1447, 0.0
    %v1451 = vmul.f32 %v1447, 0.2
    %v1452 = vsel %vm1450, %v1447, %v1451
    %v1453 = vmul.f32 %v1452, 1.4142135
    %v1454 = vld [vmem:[%s717] sm:$0xff]
    %1456 = vrot.lane.b32.xlu0 %v1375, 120
    %v1457 = vpop.permute.xlu0 %1456
    %v1459 = vmul.f32 %v1454, %v1457
    %v1461 = vsel %vm639, %v1459, 0
    %1463 = vmatprep.subr.mxu0 0.0
    %1464 = vmatpush1.msra.mxu0 0.0
    %1465 = vmatprep.subr.mxu0 0.0
    %1466 = vmatpush1.msra.mxu0 0.0
    %1467 = vmatprep.subr.mxu0 0.0
    %1468 = vmatpush1.msra.mxu0 0.0
    %1469 = vmatprep.subr.mxu0 0.0
    %1470 = vmatpush1.msra.mxu0 0.0
    %1471 = vmatprep.subr.mxu0 0.0
    %1472 = vmatpush1.msra.mxu0 0.0
    %1473 = vmatprep.subr.mxu0 0.0
    %1474 = vmatpush1.msra.mxu0 0.0
    %1475 = vmatprep.subr.mxu0 0.0
    %1476 = vmatpush1.msra.mxu0 0.0
    %1477 = vmatprep.subr.mxu0 0.0
    %1478 = vmatpush1.msra.mxu0 0.0
    %1479 = vmatprep.subr.mxu0 0.0
    %1480 = vmatpush1.msra.mxu0 0.0
    %1481 = vmatprep.subr.mxu0 0.0
    %1482 = vmatpush1.msra.mxu0 0.0
    %1483 = vmatprep.subr.mxu0 0.0
    %1484 = vmatpush1.msra.mxu0 0.0
    %1485 = vmatprep.subr.mxu0 0.0
    %1486 = vmatpush1.msra.mxu0 0.0
    %1487 = vmatprep.subr.mxu0 0.0
    %1488 = vmatpush1.msra.mxu0 0.0
    %1489 = vmatprep.subr.mxu0 0.0
    %1490 = vmatpush1.msra.mxu0 0.0
    %1491 = vmatprep.subr.mxu0 0.0
    %1492 = vmatpush1.msra.mxu0 0.0
    %1493 = vmatprep.subr.mxu0 0.0
    %1494 = vmatpush1.msra.mxu0 %v1453
    %1495 = vmatprep.subr.mxu0 0.0
    %1496 = vmatpush2.msra.mxu0 0.0
    %1497 = vmatprep.subr.mxu0 0.0
    %1498 = vmatpush2.msra.mxu0 0.0
    %1499 = vmatprep.subr.mxu0 0.0
    %1500 = vmatpush2.msra.mxu0 0.0
    %1501 = vmatprep.subr.mxu0 0.0
    %1502 = vmatpush2.msra.mxu0 0.0
    %1503 = vmatprep.subr.mxu0 0.0
    %1504 = vmatpush2.msra.mxu0 0.0
    %1505 = vmatprep.subr.mxu0 0.0
    %1506 = vmatpush2.msra.mxu0 0.0
    %1507 = vmatprep.subr.mxu0 0.0
    %1508 = vmatpush2.msra.mxu0 0.0
    %1509 = vmatprep.subr.mxu0 0.0
    %1510 = vmatpush2.msra.mxu0 0.0
    %1511 = vmatprep.subr.mxu0 0.0
    %1512 = vmatpush2.msra.mxu0 0.0
    %1513 = vmatprep.subr.mxu0 0.0
    %1514 = vmatpush2.msra.mxu0 0.0
    %1515 = vmatprep.subr.mxu0 0.0
    %1516 = vmatpush2.msra.mxu0 0.0
    %1517 = vmatprep.subr.mxu0 0.0
    %1518 = vmatpush2.msra.mxu0 0.0
    %1519 = vmatprep.subr.mxu0 0.0
    %1520 = vmatpush2.msra.mxu0 0.0
    %1521 = vmatprep.subr.mxu0 0.0
    %1522 = vmatpush2.msra.mxu0 0.0
    %1523 = vmatprep.subr.mxu0 0.0
    %1524 = vmatpush2.msra.mxu0 0.0
    %1525 = vmatprep.subr.mxu0 0.0
    %1526 = vmatpush2.msra.mxu0 0.0
    %1527 = vmatprep.mubr.f32.mxu0 0.0
    %1528 = vmatmul.mubr.f32.gmra.mxu0 %v1461
    %v1529 = vpop.f32.mrf.mxu0
    %v1530 = vadd.f32 0.0, %v1529
    %v1531 = vpop.f32.mrf.mxu0
    %1532 = vdwg.mxu0
    %vm1533 = vcmp.ge.f32.partialorder %v1530, 0.0
    %v1534 = vmul.f32 %v1530, 0.2
    %v1535 = vsel %vm1533, %v1530, %v1534
    %v1536 = vmul.f32 %v1535, 1.4142135
    %v1538 = vsel %vm801, %v1536, 0
    %1540 = vmatprep.subr.mxu0 0.0
    %1541 = vmatpush1.msra.mxu0 0.0
    %1542 = vmatprep.subr.mxu0 0.0
    %1543 = vmatpush1.msra.mxu0 0.0
    %1544 = vmatprep.subr.mxu0 0.0
    %1545 = vmatpush1.msra.mxu0 0.0
    %1546 = vmatprep.subr.mxu0 0.0
    %1547 = vmatpush1.msra.mxu0 0.0
    %1548 = vmatprep.subr.mxu0 0.0
    %1549 = vmatpush1.msra.mxu0 0.0
    %1550 = vmatprep.subr.mxu0 0.0
    %1551 = vmatpush1.msra.mxu0 0.0
    %1552 = vmatprep.subr.mxu0 0.0
    %1553 = vmatpush1.msra.mxu0 0.0
    %1554 = vmatprep.subr.mxu0 0.0
    %1555 = vmatpush1.msra.mxu0 0.0
    %1556 = vmatprep.subr.mxu0 0.0
    %1557 = vmatpush1.msra.mxu0 0.0
    %1558 = vmatprep.subr.mxu0 0.0
    %1559 = vmatpush1.msra.mxu0 0.0
    %1560 = vmatprep.subr.mxu0 0.0
    %1561 = vmatpush1.msra.mxu0 0.0
    %1562 = vmatprep.subr.mxu0 0.0
    %1563 = vmatpush1.msra.mxu0 0.0
    %1564 = vmatprep.subr.mxu0 0.0
    %1565 = vmatpush1.msra.mxu0 0.0
    %1566 = vmatprep.subr.mxu0 0.0
    %1567 = vmatpush1.msra.mxu0 0.0
    %1568 = vmatprep.subr.mxu0 0.0
    %1569 = vmatpush1.msra.mxu0 %v616
    %1570 = vmatprep.subr.mxu0 0.0
    %1571 = vmatpush1.msra.mxu0 %v615
    %1572 = vmatprep.subr.mxu0 0.0
    %1573 = vmatpush2.msra.mxu0 0.0
    %1574 = vmatprep.subr.mxu0 0.0
    %1575 = vmatpush2.msra.mxu0 0.0
    %1576 = vmatprep.subr.mxu0 0.0
    %1577 = vmatpush2.msra.mxu0 0.0
    %1578 = vmatprep.subr.mxu0 0.0
    %1579 = vmatpush2.msra.mxu0 0.0
    %1580 = vmatprep.subr.mxu0 0.0
    %1581 = vmatpush2.msra.mxu0 0.0
    %1582 = vmatprep.subr.mxu0 0.0
    %1583 = vmatpush2.msra.mxu0 0.0
    %1584 = vmatprep.subr.mxu0 0.0
    %1585 = vmatpush2.msra.mxu0 0.0
    %1586 = vmatprep.subr.mxu0 0.0
    %1587 = vmatpush2.msra.mxu0 0.0
    %1588 = vmatprep.subr.mxu0 0.0
    %1589 = vmatpush2.msra.mxu0 0.0
    %1590 = vmatprep.subr.mxu0 0.0
    %1591 = vmatpush2.msra.mxu0 0.0
    %1592 = vmatprep.subr.mxu0 0.0
    %1593 = vmatpush2.msra.mxu0 0.0
    %1594 = vmatprep.subr.mxu0 0.0
    %1595 = vmatpush2.msra.mxu0 0.0
    %1596 = vmatprep.subr.mxu0 0.0
    %1597 = vmatpush2.msra.mxu0 0.0
    %1598 = vmatprep.subr.mxu0 0.0
    %1599 = vmatpush2.msra.mxu0 0.0
    %1600 = vmatprep.subr.mxu0 0.0
    %1601 = vmatpush2.msra.mxu0 0.0
    %1602 = vmatprep.subr.mxu0 0.0
    %1603 = vmatpush2.msra.mxu0 0.0
    %1604 = vmatprep.mubr.f32.mxu0 0.0
    %1605 = vmatmul.mubr.f32.gmra.mxu0 %v1538
    %v1606 = vpop.f32.mrf.mxu0
    %v1607 = vadd.f32 0.0, %v1606
    %v1608 = vpop.f32.mrf.mxu0
    %1609 = vdwg.mxu0
    %v1610 = vld [vmem:[%s875] sm:$0xff]
    %1611 = vrot.lane.b32.xlu0 %v1375, 112
    %v1612 = vpop.permute.xlu0 %1611
    %v1614 = vmul.f32 %v1610, %v1612
    %v1616 = vsel %vm639, %v1614, 0
    %1618 = vmatprep.subr.mxu0 0.0
    %1619 = vmatpush1.msra.mxu0 0.0
    %1620 = vmatprep.subr.mxu0 0.0
    %1621 = vmatpush1.msra.mxu0 0.0
    %1622 = vmatprep.subr.mxu0 0.0
    %1623 = vmatpush1.msra.mxu0 0.0
    %1624 = vmatprep.subr.mxu0 0.0
    %1625 = vmatpush1.msra.mxu0 0.0
    %1626 = vmatprep.subr.mxu0 0.0
    %1627 = vmatpush1.msra.mxu0 0.0
    %1628 = vmatprep.subr.mxu0 0.0
    %1629 = vmatpush1.msra.mxu0 0.0
    %1630 = vmatprep.subr.mxu0 0.0
    %1631 = vmatpush1.msra.mxu0 0.0
    %1632 = vmatprep.subr.mxu0 0.0
    %1633 = vmatpush1.msra.mxu0 0.0
    %1634 = vmatprep.subr.mxu0 0.0
    %1635 = vmatpush1.msra.mxu0 0.0
    %1636 = vmatprep.subr.mxu0 0.0
    %1637 = vmatpush1.msra.mxu0 0.0
    %1638 = vmatprep.subr.mxu0 0.0
    %1639 = vmatpush1.msra.mxu0 0.0
    %1640 = vmatprep.subr.mxu0 0.0
    %1641 = vmatpush1.msra.mxu0 0.0
    %1642 = vmatprep.subr.mxu0 0.0
    %1643 = vmatpush1.msra.mxu0 0.0
    %1644 = vmatprep.subr.mxu0 0.0
    %1645 = vmatpush1.msra.mxu0 0.0
    %1646 = vmatprep.subr.mxu0 0.0
    %1647 = vmatpush1.msra.mxu0 0.0
    %1648 = vmatprep.subr.mxu0 0.0
    %1649 = vmatpush1.msra.mxu0 %v1607
    %1650 = vmatprep.subr.mxu0 0.0
    %1651 = vmatpush2.msra.mxu0 0.0
    %1652 = vmatprep.subr.mxu0 0.0
    %1653 = vmatpush2.msra.mxu0 0.0
    %1654 = vmatprep.subr.mxu0 0.0
    %1655 = vmatpush2.msra.mxu0 0.0
    %1656 = vmatprep.subr.mxu0 0.0
    %1657 = vmatpush2.msra.mxu0 0.0
    %1658 = vmatprep.subr.mxu0 0.0
    %1659 = vmatpush2.msra.mxu0 0.0
    %1660 = vmatprep.subr.mxu0 0.0
    %1661 = vmatpush2.msra.mxu0 0.0
    %1662 = vmatprep.subr.mxu0 0.0
    %1663 = vmatpush2.msra.mxu0 0.0
    %1664 = vmatprep.subr.mxu0 0.0
    %1665 = vmatpush2.msra.mxu0 0.0
    %1666 = vmatprep.subr.mxu0 0.0
    %1667 = vmatpush2.msra.mxu0 0.0
    %1668 = vmatprep.subr.mxu0 0.0
    %1669 = vmatpush2.msra.mxu0 0.0
    %1670 = vmatprep.subr.mxu0 0.0
    %1671 = vmatpush2.msra.mxu0 0.0
    %1672 = vmatprep.subr.mxu0 0.0
    %1673 = vmatpush2.msra.mxu0 0.0
    %1674 = vmatprep.subr.mxu0 0.0
    %1675 = vmatpush2.msra.mxu0 0.0
    %1676 = vmatprep.subr.mxu0 0.0
    %1677 = vmatpush2.msra.mxu0 0.0
    %1678 = vmatprep.subr.mxu0 0.0
    %1679 = vmatpush2.msra.mxu0 0.0
    %1680 = vmatprep.subr.mxu0 0.0
    %1681 = vmatpush2.msra.mxu0 0.0
    %1682 = vmatprep.mubr.f32.mxu0 0.0
    %1683 = vmatmul.mubr.f32.gmra.mxu0 %v1616
    %v1684 = vpop.f32.mrf.mxu0
    %v1685 = vadd.f32 0.0, %v1684
    %v1686 = vpop.f32.mrf.mxu0
    %1687 = vdwg.mxu0
    %vm1688 = vcmp.ge.f32.partialorder %v1685, 0.0
    %v1689 = vmul.f32 %v1685, 0.2
    %v1690 = vsel %vm1688, %v1685, %v1689
    %v1691 = vmul.f32 %v1690, 1.4142135
    %v1692 = vld [vmem:[%s958] sm:$0xff]
    %1693 = vrot.lane.b32.xlu0 %v1375, 104
    %v1694 = vpop.permute.xlu0 %1693
    %v1696 = vmul.f32 %v1692, %v1694
    %v1698 = vsel %vm639, %v1696, 0
    %1700 = vmatprep.subr.mxu0 0.0
    %1701 = vmatpush1.msra.mxu0 0.0
    %1702 = vmatprep.subr.mxu0 0.0
    %1703 = vmatpush1.msra.mxu0 0.0
    %1704 = vmatprep.subr.mxu0 0.0
    %1705 = vmatpush1.msra.mxu0 0.0
    %1706 = vmatprep.subr.mxu0 0.0
    %1707 = vmatpush1.msra.mxu0 0.0
    %1708 = vmatprep.subr.mxu0 0.0
    %1709 = vmatpush1.msra.mxu0 0.0
    %1710 = vmatprep.subr.mxu0 0.0
    %1711 = vmatpush1.msra.mxu0 0.0
    %1712 = vmatprep.subr.mxu0 0.0
    %1713 = vmatpush1.msra.mxu0 0.0
    %1714 = vmatprep.subr.mxu0 0.0
    %1715 = vmatpush1.msra.mxu0 0.0
    %1716 = vmatprep.subr.mxu0 0.0
    %1717 = vmatpush1.msra.mxu0 0.0
    %1718 = vmatprep.subr.mxu0 0.0
    %1719 = vmatpush1.msra.mxu0 0.0
    %1720 = vmatprep.subr.mxu0 0.0
    %1721 = vmatpush1.msra.mxu0 0.0
    %1722 = vmatprep.subr.mxu0 0.0
    %1723 = vmatpush1.msra.mxu0 0.0
    %1724 = vmatprep.subr.mxu0 0.0
    %1725 = vmatpush1.msra.mxu0 0.0
    %1726 = vmatprep.subr.mxu0 0.0
    %1727 = vmatpush1.msra.mxu0 0.0
    %1728 = vmatprep.subr.mxu0 0.0
    %1729 = vmatpush1.msra.mxu0 0.0
    %1730 = vmatprep.subr.mxu0 0.0
    %1731 = vmatpush1.msra.mxu0 %v1691
    %1732 = vmatprep.subr.mxu0 0.0
    %1733 = vmatpush2.msra.mxu0 0.0
    %1734 = vmatprep.subr.mxu0 0.0
    %1735 = vmatpush2.msra.mxu0 0.0
    %1736 = vmatprep.subr.mxu0 0.0
    %1737 = vmatpush2.msra.mxu0 0.0
    %1738 = vmatprep.subr.mxu0 0.0
    %1739 = vmatpush2.msra.mxu0 0.0
    %1740 = vmatprep.subr.mxu0 0.0
    %1741 = vmatpush2.msra.mxu0 0.0
    %1742 = vmatprep.subr.mxu0 0.0
    %1743 = vmatpush2.msra.mxu0 0.0
    %1744 = vmatprep.subr.mxu0 0.0
    %1745 = vmatpush2.msra.mxu0 0.0
    %1746 = vmatprep.subr.mxu0 0.0
    %1747 = vmatpush2.msra.mxu0 0.0
    %1748 = vmatprep.subr.mxu0 0.0
    %1749 = vmatpush2.msra.mxu0 0.0
    %1750 = vmatprep.subr.mxu0 0.0
    %1751 = vmatpush2.msra.mxu0 0.0
    %1752 = vmatprep.subr.mxu0 0.0
    %1753 = vmatpush2.msra.mxu0 0.0
    %1754 = vmatprep.subr.mxu0 0.0
    %1755 = vmatpush2.msra.mxu0 0.0
    %1756 = vmatprep.subr.mxu0 0.0
    %1757 = vmatpush2.msra.mxu0 0.0
    %1758 = vmatprep.subr.mxu0 0.0
    %1759 = vmatpush2.msra.mxu0 0.0
    %1760 = vmatprep.subr.mxu0 0.0
    %1761 = vmatpush2.msra.mxu0 0.0
    %1762 = vmatprep.subr.mxu0 0.0
    %1763 = vmatpush2.msra.mxu0 0.0
    %1764 = vmatprep.mubr.f32.mxu0 0.0
    %1765 = vmatmul.mubr.f32.gmra.mxu0 %v1698
    %v1766 = vpop.f32.mrf.mxu0
    %v1767 = vadd.f32 0.0, %v1766
    %v1768 = vpop.f32.mrf.mxu0
    %1769 = vdwg.mxu0
    %vm1770 = vcmp.ge.f32.partialorder %v1767, 0.0
    %v1771 = vmul.f32 %v1767, 0.2
    %v1772 = vsel %vm1770, %v1767, %v1771
    %v1773 = vmul.f32 %v1772, 1.4142135
    %v1775 = vsel %vm1041, %v1773, 0
    %1777 = vmatprep.subr.mxu0 0.0
    %1778 = vmatpush1.msra.mxu0 0.0
    %1779 = vmatprep.subr.mxu0 0.0
    %1780 = vmatpush1.msra.mxu0 0.0
    %1781 = vmatprep.subr.mxu0 0.0
    %1782 = vmatpush1.msra.mxu0 0.0
    %1783 = vmatprep.subr.mxu0 0.0
    %1784 = vmatpush1.msra.mxu0 0.0
    %1785 = vmatprep.subr.mxu0 0.0
    %1786 = vmatpush1.msra.mxu0 0.0
    %1787 = vmatprep.subr.mxu0 0.0
    %1788 = vmatpush1.msra.mxu0 0.0
    %1789 = vmatprep.subr.mxu0 0.0
    %1790 = vmatpush1.msra.mxu0 0.0
    %1791 = vmatprep.subr.mxu0 0.0
    %1792 = vmatpush1.msra.mxu0 0.0
    %1793 = vmatprep.subr.mxu0 %v632
    %1794 = vmatpush1.msra.mxu0 %v631
    %1795 = vmatprep.subr.mxu0 %v630
    %1796 = vmatpush1.msra.mxu0 %v629
    %1797 = vmatprep.subr.mxu0 %v628
    %1798 = vmatpush1.msra.mxu0 %v627
    %1799 = vmatprep.subr.mxu0 %v626
    %1800 = vmatpush1.msra.mxu0 %v625
    %1801 = vmatprep.subr.mxu0 %v624
    %1802 = vmatpush1.msra.mxu0 %v623
    %1803 = vmatprep.subr.mxu0 %v622
    %1804 = vmatpush1.msra.mxu0 %v621
    %1805 = vmatprep.subr.mxu0 %v620
    %1806 = vmatpush1.msra.mxu0 %v619
    %1807 = vmatprep.subr.mxu0 %v618
    %1808 = vmatpush1.msra.mxu0 %v617
    %1809 = vmatprep.subr.mxu0 0.0
    %1810 = vmatpush2.msra.mxu0 0.0
    %1811 = vmatprep.subr.mxu0 0.0
    %1812 = vmatpush2.msra.mxu0 0.0
    %1813 = vmatprep.subr.mxu0 0.0
    %1814 = vmatpush2.msra.mxu0 0.0
    %1815 = vmatprep.subr.mxu0 0.0
    %1816 = vmatpush2.msra.mxu0 0.0
    %1817 = vmatprep.subr.mxu0 0.0
    %1818 = vmatpush2.msra.mxu0 0.0
    %1819 = vmatprep.subr.mxu0 0.0
    %1820 = vmatpush2.msra.mxu0 0.0
    %1821 = vmatprep.subr.mxu0 0.0
    %1822 = vmatpush2.msra.mxu0 0.0
    %1823 = vmatprep.subr.mxu0 0.0
    %1824 = vmatpush2.msra.mxu0 0.0
    %1825 = vmatprep.subr.mxu0 0.0
    %1826 = vmatpush2.msra.mxu0 0.0
    %1827 = vmatprep.subr.mxu0 0.0
    %1828 = vmatpush2.msra.mxu0 0.0
    %1829 = vmatprep.subr.mxu0 0.0
    %1830 = vmatpush2.msra.mxu0 0.0
    %1831 = vmatprep.subr.mxu0 0.0
    %1832 = vmatpush2.msra.mxu0 0.0
    %1833 = vmatprep.subr.mxu0 0.0
    %1834 = vmatpush2.msra.mxu0 0.0
    %1835 = vmatprep.subr.mxu0 0.0
    %1836 = vmatpush2.msra.mxu0 0.0
    %1837 = vmatprep.subr.mxu0 0.0
    %1838 = vmatpush2.msra.mxu0 0.0
    %1839 = vmatprep.subr.mxu0 0.0
    %1840 = vmatpush2.msra.mxu0 0.0
    %1841 = vmatprep.mubr.f32.mxu0 0.0
    %1842 = vmatmul.mubr.f32.gmra.mxu0 %v1775
    %v1843 = vpop.f32.mrf.mxu0
    %v1844 = vadd.f32 0.0, %v1843
    %v1845 = vpop.f32.mrf.mxu0
    %v1846 = vadd.f32 0.0, %v1845
    %1847 = vdwg.mxu0
    %v1848 = vld [vmem:[%s1116] sm:$0xff]
    %1849 = vrot.lane.b32.xlu0 %v1375, 96
    %v1850 = vpop.permute.xlu0 %1849
    %v1852 = vmul.f32 %v1848, %v1850
    %v1854 = vsel %vm639, %v1852, 0
    %1856 = vmatprep.subr.mxu0 0.0
    %1857 = vmatpush1.msra.mxu0 0.0
    %1858 = vmatprep.subr.mxu0 0.0
    %1859 = vmatpush1.msra.mxu0 0.0
    %1860 = vmatprep.subr.mxu0 0.0
    %1861 = vmatpush1.msra.mxu0 0.0
    %1862 = vmatprep.subr.mxu0 0.0
    %1863 = vmatpush1.msra.mxu0 0.0
    %1864 = vmatprep.subr.mxu0 0.0
    %1865 = vmatpush1.msra.mxu0 0.0
    %1866 = vmatprep.subr.mxu0 0.0
    %1867 = vmatpush1.msra.mxu0 0.0
    %1868 = vmatprep.subr.mxu0 0.0
    %1869 = vmatpush1.msra.mxu0 0.0
    %1870 = vmatprep.subr.mxu0 0.0
    %1871 = vmatpush1.msra.mxu0 0.0
    %1872 = vmatprep.subr.mxu0 0.0
    %1873 = vmatpush1.msra.mxu0 0.0
    %1874 = vmatprep.subr.mxu0 0.0
    %1875 = vmatpush1.msra.mxu0 0.0
    %1876 = vmatprep.subr.mxu0 0.0
    %1877 = vmatpush1.msra.mxu0 0.0
    %1878 = vmatprep.subr.mxu0 0.0
    %1879 = vmatpush1.msra.mxu0 0.0
    %1880 = vmatprep.subr.mxu0 0.0
    %1881 = vmatpush1.msra.mxu0 0.0
    %1882 = vmatprep.subr.mxu0 0.0
    %1883 = vmatpush1.msra.mxu0 0.0
    %1884 = vmatprep.subr.mxu0 0.0
    %1885 = vmatpush1.msra.mxu0 0.0
    %1886 = vmatprep.subr.mxu0 %v1846
    %1887 = vmatpush1.msra.mxu0 %v1844
    %1888 = vmatprep.subr.mxu0 0.0
    %1889 = vmatpush2.msra.mxu0 0.0
    %1890 = vmatprep.subr.mxu0 0.0
    %1891 = vmatpush2.msra.mxu0 0.0
    %1892 = vmatprep.subr.mxu0 0.0
    %1893 = vmatpush2.msra.mxu0 0.0
    %1894 = vmatprep.subr.mxu0 0.0
    %1895 = vmatpush2.msra.mxu0 0.0
    %1896 = vmatprep.subr.mxu0 0.0
    %1897 = vmatpush2.msra.mxu0 0.0
    %1898 = vmatprep.subr.mxu0 0.0
    %1899 = vmatpush2.msra.mxu0 0.0
    %1900 = vmatprep.subr.mxu0 0.0
    %1901 = vmatpush2.msra.mxu0 0.0
    %1902 = vmatprep.subr.mxu0 0.0
    %1903 = vmatpush2.msra.mxu0 0.0
    %1904 = vmatprep.subr.mxu0 0.0
    %1905 = vmatpush2.msra.mxu0 0.0
    %1906 = vmatprep.subr.mxu0 0.0
    %1907 = vmatpush2.msra.mxu0 0.0
    %1908 = vmatprep.subr.mxu0 0.0
    %1909 = vmatpush2.msra.mxu0 0.0
    %1910 = vmatprep.subr.mxu0 0.0
    %1911 = vmatpush2.msra.mxu0 0.0
    %1912 = vmatprep.subr.mxu0 0.0
    %1913 = vmatpush2.msra.mxu0 0.0
    %1914 = vmatprep.subr.mxu0 0.0
    %1915 = vmatpush2.msra.mxu0 0.0
    %1916 = vmatprep.subr.mxu0 0.0
    %1917 = vmatpush2.msra.mxu0 0.0
    %1918 = vmatprep.subr.mxu0 0.0
    %1919 = vmatpush2.msra.mxu0 0.0
    %1920 = vmatprep.mubr.f32.mxu0 0.0
    %1921 = vmatmul.mubr.f32.gmra.mxu0 %v1854
    %v1922 = vpop.f32.mrf.mxu0
    %v1923 = vadd.f32 0.0, %v1922
    %v1924 = vpop.f32.mrf.mxu0
    %v1925 = vadd.f32 0.0, %v1924
    %1926 = vdwg.mxu0
    %vm1927 = vcmp.ge.f32.partialorder %v1923, 0.0
    %vm1928 = vcmp.ge.f32.partialorder %v1925, 0.0
    %v1929 = vmul.f32 %v1923, 0.2
    %v1930 = vmul.f32 %v1925, 0.2
    %v1931 = vsel %vm1927, %v1923, %v1929
    %v1932 = vsel %vm1928, %v1925, %v1930
    %v1933 = vmul.f32 %v1931, 1.4142135
    %v1934 = vmul.f32 %v1932, 1.4142135
    %v1935 = vld [vmem:[%s1204] sm:$0xff]
    %1936 = vrot.lane.b32.xlu0 %v1375, 88
    %v1937 = vpop.permute.xlu0 %1936
    %v1939 = vmul.f32 %v1935, %v1937
    %v1941 = vsel %vm639, %v1939, 0
    %1943 = vmatprep.subr.mxu0 0.0
    %1944 = vmatpush1.msra.mxu0 0.0
    %1945 = vmatprep.subr.mxu0 0.0
    %1946 = vmatpush1.msra.mxu0 0.0
    %1947 = vmatprep.subr.mxu0 0.0
    %1948 = vmatpush1.msra.mxu0 0.0
    %1949 = vmatprep.subr.mxu0 0.0
    %1950 = vmatpush1.msra.mxu0 0.0
    %1951 = vmatprep.subr.mxu0 0.0
    %1952 = vmatpush1.msra.mxu0 0.0
    %1953 = vmatprep.subr.mxu0 0.0
    %1954 = vmatpush1.msra.mxu0 0.0
    %1955 = vmatprep.subr.mxu0 0.0
    %1956 = vmatpush1.msra.mxu0 0.0
    %1957 = vmatprep.subr.mxu0 0.0
    %1958 = vmatpush1.msra.mxu0 0.0
    %1959 = vmatprep.subr.mxu0 0.0
    %1960 = vmatpush1.msra.mxu0 0.0
    %1961 = vmatprep.subr.mxu0 0.0
    %1962 = vmatpush1.msra.mxu0 0.0
    %1963 = vmatprep.subr.mxu0 0.0
    %1964 = vmatpush1.msra.mxu0 0.0
    %1965 = vmatprep.subr.mxu0 0.0
    %1966 = vmatpush1.msra.mxu0 0.0
    %1967 = vmatprep.subr.mxu0 0.0
    %1968 = vmatpush1.msra.mxu0 0.0
    %1969 = vmatprep.subr.mxu0 0.0
    %1970 = vmatpush1.msra.mxu0 0.0
    %1971 = vmatprep.subr.mxu0 0.0
    %1972 = vmatpush1.msra.mxu0 0.0
    %1973 = vmatprep.subr.mxu0 %v1934
    %1974 = vmatpush1.msra.mxu0 %v1933
    %1975 = vmatprep.subr.mxu0 0.0
    %1976 = vmatpush2.msra.mxu0 0.0
    %1977 = vmatprep.subr.mxu0 0.0
    %1978 = vmatpush2.msra.mxu0 0.0
    %1979 = vmatprep.subr.mxu0 0.0
    %1980 = vmatpush2.msra.mxu0 0.0
    %1981 = vmatprep.subr.mxu0 0.0
    %1982 = vmatpush2.msra.mxu0 0.0
    %1983 = vmatprep.subr.mxu0 0.0
    %1984 = vmatpush2.msra.mxu0 0.0
    %1985 = vmatprep.subr.mxu0 0.0
    %1986 = vmatpush2.msra.mxu0 0.0
    %1987 = vmatprep.subr.mxu0 0.0
    %1988 = vmatpush2.msra.mxu0 0.0
    %1989 = vmatprep.subr.mxu0 0.0
    %1990 = vmatpush2.msra.mxu0 0.0
    %1991 = vmatprep.subr.mxu0 0.0
    %1992 = vmatpush2.msra.mxu0 0.0
    %1993 = vmatprep.subr.mxu0 0.0
    %1994 = vmatpush2.msra.mxu0 0.0
    %1995 = vmatprep.subr.mxu0 0.0
    %1996 = vmatpush2.msra.mxu0 0.0
    %1997 = vmatprep.subr.mxu0 0.0
    %1998 = vmatpush2.msra.mxu0 0.0
    %1999 = vmatprep.subr.mxu0 0.0
    %2000 = vmatpush2.msra.mxu0 0.0
    %2001 = vmatprep.subr.mxu0 0.0
    %2002 = vmatpush2.msra.mxu0 0.0
    %2003 = vmatprep.subr.mxu0 0.0
    %2004 = vmatpush2.msra.mxu0 0.0
    %2005 = vmatprep.subr.mxu0 0.0
    %2006 = vmatpush2.msra.mxu0 0.0
    %2007 = vmatprep.mubr.f32.mxu0 0.0
    %2008 = vmatmul.mubr.f32.gmra.mxu0 %v1941
    %v2009 = vpop.f32.mrf.mxu0
    %v2010 = vadd.f32 0.0, %v2009
    %v2011 = vpop.f32.mrf.mxu0
    %v2012 = vadd.f32 0.0, %v2011
    %2013 = vdwg.mxu0
    %vm2014 = vcmp.ge.f32.partialorder %v2010, 0.0
    %vm2015 = vcmp.ge.f32.partialorder %v2012, 0.0
    %v2016 = vmul.f32 %v2010, 0.2
    %v2017 = vmul.f32 %v2012, 0.2
    %v2018 = vsel %vm2014, %v2010, %v2016
    %v2019 = vsel %vm2015, %v2012, %v2017
    %v2020 = vmul.f32 %v2018, 1.4142135
    %v2021 = vmul.f32 %v2019, 1.4142135
    %2022 = vmatprep.subr.mxu0 0.0
    %2023 = vmatpush1.msra.mxu0 0.0
    %2024 = vmatprep.subr.mxu0 0.0
    %2025 = vmatpush1.msra.mxu0 0.0
    %2026 = vmatprep.subr.mxu0 0.0
    %2027 = vmatpush1.msra.mxu0 0.0
    %2028 = vmatprep.subr.mxu0 0.0
    %2029 = vmatpush1.msra.mxu0 0.0
    %2030 = vmatprep.subr.mxu0 0.0
    %2031 = vmatpush1.msra.mxu0 0.0
    %2032 = vmatprep.subr.mxu0 0.0
    %2033 = vmatpush1.msra.mxu0 0.0
    %2034 = vmatprep.subr.mxu0 0.0
    %2035 = vmatpush1.msra.mxu0 0.0
    %2036 = vmatprep.subr.mxu0 0.0
    %2037 = vmatpush1.msra.mxu0 0.0
    %2038 = vmatprep.subr.mxu0 0.0
    %2039 = vmatpush1.msra.mxu0 0.0
    %2040 = vmatprep.subr.mxu0 0.0
    %2041 = vmatpush1.msra.mxu0 0.0
    %2042 = vmatprep.subr.mxu0 0.0
    %2043 = vmatpush1.msra.mxu0 0.0
    %2044 = vmatprep.subr.mxu0 0.0
    %2045 = vmatpush1.msra.mxu0 0.0
    %2046 = vmatprep.subr.mxu0 0.0
    %2047 = vmatpush1.msra.mxu0 0.0
    %2048 = vmatprep.subr.mxu0 0.0
    %2049 = vmatpush1.msra.mxu0 0.0
    %2050 = vmatprep.subr.mxu0 0.0
    %2051 = vmatpush1.msra.mxu0 0.0
    %2052 = vmatprep.subr.mxu0 %v2021
    %2053 = vmatpush1.msra.mxu0 %v2020
    %2054 = vmatprep.subr.mxu0 0.0
    %2055 = vmatpush2.msra.mxu0 0.0
    %2056 = vmatprep.subr.mxu0 0.0
    %2057 = vmatpush2.msra.mxu0 0.0
    %2058 = vmatprep.subr.mxu0 0.0
    %2059 = vmatpush2.msra.mxu0 0.0
    %2060 = vmatprep.subr.mxu0 0.0
    %2061 = vmatpush2.msra.mxu0 0.0
    %2062 = vmatprep.subr.mxu0 0.0
    %2063 = vmatpush2.msra.mxu0 0.0
    %2064 = vmatprep.subr.mxu0 0.0
    %2065 = vmatpush2.msra.mxu0 0.0
    %2066 = vmatprep.subr.mxu0 0.0
    %2067 = vmatpush2.msra.mxu0 0.0
    %2068 = vmatprep.subr.mxu0 0.0
    %2069 = vmatpush2.msra.mxu0 0.0
    %2070 = vmatprep.subr.mxu0 0.0
    %2071 = vmatpush2.msra.mxu0 0.0
    %2072 = vmatprep.subr.mxu0 0.0
    %2073 = vmatpush2.msra.mxu0 0.0
    %2074 = vmatprep.subr.mxu0 0.0
    %2075 = vmatpush2.msra.mxu0 0.0
    %2076 = vmatprep.subr.mxu0 0.0
    %2077 = vmatpush2.msra.mxu0 0.0
    %2078 = vmatprep.subr.mxu0 0.0
    %2079 = vmatpush2.msra.mxu0 0.0
    %2080 = vmatprep.subr.mxu0 0.0
    %2081 = vmatpush2.msra.mxu0 0.0
    %2082 = vmatprep.subr.mxu0 0.0
    %2083 = vmatpush2.msra.mxu0 0.0
    %2084 = vmatprep.subr.mxu0 0.0
    %2085 = vmatpush2.msra.mxu0 0.0
    %2086 = vmatprep.mubr.f32.mxu0 0.0
    %2087 = vmatmul.mubr.f32.gmra.mxu0 %v1293
    %v2088 = vpop.f32.mrf.mxu0
    %v2089 = vadd.f32 0.0, %v2088
    %v2090 = vpop.f32.mrf.mxu0
    %v2091 = vadd.f32 0.0, %v2090
    %2092 = vdwg.mxu0
    %v2095 = vcombine.low %v2089, %v2091
    %s2097 = scalar_lea.vmem %s9, 8
    %2098 = vst [vmem:[%s2097] sm:$0x77] %v2095
    // Predicated region
    $region38: #{hyper_inverter_forward.2} parent=1 // pred_check
      _
    $region39: #{hyper_inverter_forward.2} parent=1 // pred_check_branch
      %2100 = sbr.rel (0) target = $region41
    $region40: #{hyper_inverter_forward.2} parent=1 // pred_region
      _
    $region41: #{hyper_inverter_forward.2} parent=1 // pred_fallthru
      _
    // Predicated region
    $region42: #{hyper_inverter_forward.2} parent=1 // pred_check
      _
    $region43: #{hyper_inverter_forward.2} parent=1 // pred_check_branch
      %2102 = sbr.rel (0) target = $region45
    $region44: #{hyper_inverter_forward.2} parent=1 // pred_region
      _
    $region45: #{hyper_inverter_forward.2} parent=1 // pred_fallthru
      _
    // Predicated region
    $region46: #{hyper_inverter_forward.2} parent=1 // pred_check
      _
    $region47: #{hyper_inverter_forward.2} parent=1 // pred_check_branch
      %2104 = sbr.rel (0) target = $region49
    $region48: #{hyper_inverter_forward.2} parent=1 // pred_region
      _
    $region49: #{hyper_inverter_forward.2} parent=1 // pred_fallthru
      _
    // Predicated region
    $region50: #{hyper_inverter_forward.2} parent=1 // pred_check
      _
    $region51: #{hyper_inverter_forward.2} parent=1 // pred_check_branch
      %2106 = sbr.rel (0) target = $region53
    $region52: #{hyper_inverter_forward.2} parent=1 // pred_region
      _
    $region53: #{hyper_inverter_forward.2} parent=1 // pred_fallthru
      _
    %2107 = vsyncpa [#allocation3], 1

// kernel: hyper_inverter_forward.3
$region0: #{hyper_inverter_forward.3}
  #allocation0 [shape = 'u32[]', space=smem, size = 0x4, offset = 0x4, fixed_abs, tag = 'smem constant byte address 0x4 - core index']
  #allocation1 [shape = 'u32[144,128]{1,0:T(1,128)}', space=vmem, size = 0x12000, scoped, tag = 'internal scratch']
  %s0 = inlined_call_operand.vmem [shape: bf16[2,768], index: 0, kind: input, shape index: {}]
  %s1 = inlined_call_operand.vmem [shape: f32[2,768], index: 1, kind: input, shape index: {}]
  %s2 = inlined_call_operand.vmem [shape: f32[2,128], index: 2, kind: input, shape index: {}]
  %s3 = inlined_call_operand.vmem [shape: bf16[768,128], index: 3, kind: input, shape index: {}]
  %s4 = inlined_call_operand.vmem [shape: f32[1,128], index: 4, kind: input, shape index: {}]
  %s5 = inlined_call_operand.hbm [shape: f32[128,128], index: 5, kind: input, shape index: {}]
  %s6 = inlined_call_operand.hbm [shape: f32[128,128], index: 6, kind: input, shape index: {}]
  %s7 = inlined_call_operand.vmem [shape: f32[1,128], index: 7, kind: input, shape index: {}]
  %s8 = inlined_call_operand.vmem [shape: f32[128,256], index: 8, kind: input, shape index: {}]
  %s9 = inlined_call_operand.vmem [shape: f32[1,256], index: 9, kind: input, shape index: {}]
  %s10 = inlined_call_operand.vmem [shape: f32[128,1024], index: 10, kind: input, shape index: {}]
  %s11 = inlined_call_operand.hbm [shape: f32[8,1024], index: 11, kind: input, shape index: {}]
  %s12 = inlined_call_operand.vmem [shape: f32[1024,32], index: 12, kind: input, shape index: {}]
  %s13 = inlined_call_operand.hbm [shape: f32[8,32], index: 13, kind: input, shape index: {}]
  %s14 = inlined_call_operand.vmem [shape: f32[8,16], index: 14, kind: input, shape index: {}]
  %s15 = inlined_call_operand.vmem [shape: f32[6,8,8], index: 15, kind: input, shape index: {}]
  %s16 = inlined_call_operand.vmem [shape: f32[3,8], index: 16, kind: input, shape index: {}]
  %s17 = inlined_call_operand.vmem [shape: f32[16,64], index: 17, kind: input, shape index: {}]
  %s18 = inlined_call_operand.vmem [shape: f32[64,256], index: 18, kind: input, shape index: {}]
  %s19 = inlined_call_operand.vmem [shape: f32[2,256], index: 19, kind: output, shape index: {0}]
  %s20 = inlined_call_operand.vmem [shape: f32[2,3,256], index: 20, kind: output, shape index: {1}]
  %21 = xla_tuple %s19, %s20
  %s22 = sld [smem:[#allocation0]]
  $region110: #{hyper_inverter_forward.3} parent=0
    _
  %s24 = ssub.s32 1, %s22
  %s25 = scalar_select 0, %s24, %s22
  $region1: #{hyper_inverter_forward.3} parent=0
    #allocation2 [shape = 'u8[65536]{0}', space=vmem, size = 0x10000, scoped, tag = 'input window, operand 5, single buffered']
    #allocation3 [shape = 's32[1]{0}', space=sflag, size = 0x4, scoped, tag = 'scoped memory for hyper_inverter_forward.3']
    #allocation4 [shape = 'u8[65536]{0}', space=vmem, size = 0x10000, scoped, tag = 'input window, operand 6, single buffered']
    #allocation5 [shape = 's32[1]{0}', space=sflag, size = 0x4, scoped, tag = 'scoped memory for hyper_inverter_forward.3']
    #allocation6 [shape = 'u8[32768]{0}', space=vmem, size = 0x8000, scoped, tag = 'input window, operand 11, single buffered']
    #allocation7 [shape = 'u8[4096]{0}', space=vmem, size = 0x1000, scoped, tag = 'input window, operand 13, single buffered']
    #allocation8 [shape = 's32[1]{0}', space=sflag, size = 0x4, scoped, tag = 'scoped memory for hyper_inverter_forward.3']
    %26 = vsyncpa [#allocation3], 0
    %27 = vsyncpa [#allocation5], 0
    %28 = vsyncpa [#allocation8], 0
    // Predicated region
    $region2: #{hyper_inverter_forward.3} parent=1 // pred_check
      _
    $region3: #{hyper_inverter_forward.3} parent=1 // pred_check_branch
      %30 = sbr.rel (0) target = $region5
    $region4: #{hyper_inverter_forward.3} parent=1 // pred_region
      _
    $region5: #{hyper_inverter_forward.3} parent=1 // pred_fallthru
      _
    // Predicated region
    $region6: #{hyper_inverter_forward.3} parent=1 // pred_check
      _
    $region7: #{hyper_inverter_forward.3} parent=1 // pred_check_branch
      %32 = sbr.rel (0) target = $region9
    $region8: #{hyper_inverter_forward.3} parent=1 // pred_region
      _
    $region9: #{hyper_inverter_forward.3} parent=1 // pred_fallthru
      _
    // Predicated region
    $region10: #{hyper_inverter_forward.3} parent=1 // pred_check
      _
    $region11: #{hyper_inverter_forward.3} parent=1 // pred_check_branch
      %34 = sbr.rel (0) target = $region13
    $region12: #{hyper_inverter_forward.3} parent=1 // pred_region
      _
    $region13: #{hyper_inverter_forward.3} parent=1 // pred_fallthru
      _
    // Predicated region
    $region14: #{hyper_inverter_forward.3} parent=1 // pred_check
      _
    $region15: #{hyper_inverter_forward.3} parent=1 // pred_check_branch
      %36 = sbr.rel (0) target = $region17
    $region16: #{hyper_inverter_forward.3} parent=1 // pred_region
      _
    $region17: #{hyper_inverter_forward.3} parent=1 // pred_fallthru
      _
    // Predicated region
    $region18: #{hyper_inverter_forward.3} parent=1 // pred_check
      _
    $region19: #{hyper_inverter_forward.3} parent=1 // pred_check_branch
      %38 = sbr.rel (0) target = $region21
    $region20: #{hyper_inverter_forward.3} parent=1 // pred_region
      _
    $region21: #{hyper_inverter_forward.3} parent=1 // pred_fallthru
      _
    // Predicated region
    $region22: #{hyper_inverter_forward.3} parent=1 // pred_check
      _
    $region23: #{hyper_inverter_forward.3} parent=1 // pred_check_branch
      %40 = sbr.rel (0) target = $region25
    $region24: #{hyper_inverter_forward.3} parent=1 // pred_region
      %s42 = ssub.s32 2048, 2048
      %43 = vsyncadd [#allocation3], %s42
      %s44 = sshll.u32 [#allocation2], 4
      %s45 = int_to_ptr.vmem [resolvable:$true] %s44
      %50 = dma.hbm_to_vmem [thread:$0]  %s5, 2048, %s45, [#allocation3], 128, 128, 8
    $region25: #{hyper_inverter_forward.3} parent=1 // pred_fallthru
      _
    // Predicated region
    $region26: #{hyper_inverter_forward.3} parent=1 // pred_check
      _
    $region27: #{hyper_inverter_forward.3} parent=1 // pred_check_branch
      %52 = sbr.rel (0) target = $region29
    $region28: #{hyper_inverter_forward.3} parent=1 // pred_region
      %s54 = ssub.s32 2048, 2048
      %55 = vsyncadd [#allocation5], %s54
      %s56 = sshll.u32 [#allocation4], 4
      %s57 = int_to_ptr.vmem [resolvable:$true] %s56
      %62 = dma.hbm_to_vmem [thread:$0]  %s6, 2048, %s57, [#allocation5], 128, 128, 8
    $region29: #{hyper_inverter_forward.3} parent=1 // pred_fallthru
      _
    // Predicated region
    $region30: #{hyper_inverter_forward.3} parent=1 // pred_check
      _
    $region31: #{hyper_inverter_forward.3} parent=1 // pred_check_branch
      %64 = sbr.rel (0) target = $region33
    $region32: #{hyper_inverter_forward.3} parent=1 // pred_region
      _
    $region33: #{hyper_inverter_forward.3} parent=1 // pred_fallthru
      _
    // Predicated region
    $region34: #{hyper_inverter_forward.3} parent=1 // pred_check
      _
    $region35: #{hyper_inverter_forward.3} parent=1 // pred_check_branch
      %66 = sbr.rel (0) target = $region37
    $region36: #{hyper_inverter_forward.3} parent=1 // pred_region
      _
    $region37: #{hyper_inverter_forward.3} parent=1 // pred_fallthru
      _
    // Predicated region
    $region38: #{hyper_inverter_forward.3} parent=1 // pred_check
      _
    $region39: #{hyper_inverter_forward.3} parent=1 // pred_check_branch
      %68 = sbr.rel (0) target = $region41
    $region40: #{hyper_inverter_forward.3} parent=1 // pred_region
      _
    $region41: #{hyper_inverter_forward.3} parent=1 // pred_fallthru
      _
    // Predicated region
    $region42: #{hyper_inverter_forward.3} parent=1 // pred_check
      _
    $region43: #{hyper_inverter_forward.3} parent=1 // pred_check_branch
      %70 = sbr.rel (0) target = $region45
    $region44: #{hyper_inverter_forward.3} parent=1 // pred_region
      _
    $region45: #{hyper_inverter_forward.3} parent=1 // pred_fallthru
      _
    // Predicated region
    $region46: #{hyper_inverter_forward.3} parent=1 // pred_check
      _
    $region47: #{hyper_inverter_forward.3} parent=1 // pred_check_branch
      %72 = sbr.rel (0) target = $region49
    $region48: #{hyper_inverter_forward.3} parent=1 // pred_region
      %s74 = ssub.s32 1024, 1024
      %75 = vsyncadd [#allocation5], %s74
      %s77 = sshll.u32 [#allocation6], 4
      %s78 = int_to_ptr.vmem [resolvable:$true] %s77
      %80 = dma.hbm_to_vmem [thread:$0]  %s11, 1024, %s78, [#allocation5]
    $region49: #{hyper_inverter_forward.3} parent=1 // pred_fallthru
      _
    // Predicated region
    $region50: #{hyper_inverter_forward.3} parent=1 // pred_check
      _
    $region51: #{hyper_inverter_forward.3} parent=1 // pred_check_branch
      %82 = sbr.rel (0) target = $region53
    $region52: #{hyper_inverter_forward.3} parent=1 // pred_region
      _
    $region53: #{hyper_inverter_forward.3} parent=1 // pred_fallthru
      _
    // Predicated region
    $region54: #{hyper_inverter_forward.3} parent=1 // pred_check
      _
    $region55: #{hyper_inverter_forward.3} parent=1 // pred_check_branch
      %84 = sbr.rel (0) target = $region57
    $region56: #{hyper_inverter_forward.3} parent=1 // pred_region
      %s86 = ssub.s32 128, 128
      %87 = vsyncadd [#allocation8], %s86
      %s89 = sshll.u32 [#allocation7], 4
      %s90 = int_to_ptr.vmem [resolvable:$true] %s89
      %92 = dma.hbm_to_vmem [thread:$0]  %s13, 128, %s90, [#allocation8]
    $region57: #{hyper_inverter_forward.3} parent=1 // pred_fallthru
      _
    // Predicated region
    $region58: #{hyper_inverter_forward.3} parent=1 // pred_check
      _
    $region59: #{hyper_inverter_forward.3} parent=1 // pred_check_branch
      %94 = sbr.rel (0) target = $region61
    $region60: #{hyper_inverter_forward.3} parent=1 // pred_region
      _
    $region61: #{hyper_inverter_forward.3} parent=1 // pred_fallthru
      _
    // Predicated region
    $region62: #{hyper_inverter_forward.3} parent=1 // pred_check
      _
    $region63: #{hyper_inverter_forward.3} parent=1 // pred_check_branch
      %96 = sbr.rel (0) target = $region65
    $region64: #{hyper_inverter_forward.3} parent=1 // pred_region
      _
    $region65: #{hyper_inverter_forward.3} parent=1 // pred_fallthru
      _
    // Predicated region
    $region66: #{hyper_inverter_forward.3} parent=1 // pred_check
      _
    $region67: #{hyper_inverter_forward.3} parent=1 // pred_check_branch
      %98 = sbr.rel (0) target = $region69
    $region68: #{hyper_inverter_forward.3} parent=1 // pred_region
      _
    $region69: #{hyper_inverter_forward.3} parent=1 // pred_fallthru
      _
    // Predicated region
    $region70: #{hyper_inverter_forward.3} parent=1 // pred_check
      _
    $region71: #{hyper_inverter_forward.3} parent=1 // pred_check_branch
      %100 = sbr.rel (0) target = $region73
    $region72: #{hyper_inverter_forward.3} parent=1 // pred_region
      _
    $region73: #{hyper_inverter_forward.3} parent=1 // pred_fallthru
      _
    // Predicated region
    $region74: #{hyper_inverter_forward.3} parent=1 // pred_check
      _
    $region75: #{hyper_inverter_forward.3} parent=1 // pred_check_branch
      %102 = sbr.rel (0) target = $region77
    $region76: #{hyper_inverter_forward.3} parent=1 // pred_region
      _
    $region77: #{hyper_inverter_forward.3} parent=1 // pred_fallthru
      _
    // Predicated region
    $region78: #{hyper_inverter_forward.3} parent=1 // pred_check
      _
    $region79: #{hyper_inverter_forward.3} parent=1 // pred_check_branch
      %104 = sbr.rel (0) target = $region81
    $region80: #{hyper_inverter_forward.3} parent=1 // pred_region
      %105 = dma.done [#allocation3], 2048
    $region81: #{hyper_inverter_forward.3} parent=1 // pred_fallthru
      _
    // Predicated region
    $region82: #{hyper_inverter_forward.3} parent=1 // pred_check
      _
    $region83: #{hyper_inverter_forward.3} parent=1 // pred_check_branch
      %107 = sbr.rel (0) target = $region85
    $region84: #{hyper_inverter_forward.3} parent=1 // pred_region
      %108 = dma.done [#allocation5], 2048
    $region85: #{hyper_inverter_forward.3} parent=1 // pred_fallthru
      _
    // Predicated region
    $region86: #{hyper_inverter_forward.3} parent=1 // pred_check
      _
    $region87: #{hyper_inverter_forward.3} parent=1 // pred_check_branch
      %110 = sbr.rel (0) target = $region89
    $region88: #{hyper_inverter_forward.3} parent=1 // pred_region
      %111 = dma.done [#allocation5], 1024
    $region89: #{hyper_inverter_forward.3} parent=1 // pred_fallthru
      _
    // Predicated region
    $region90: #{hyper_inverter_forward.3} parent=1 // pred_check
      _
    $region91: #{hyper_inverter_forward.3} parent=1 // pred_check_branch
      %113 = sbr.rel (0) target = $region93
    $region92: #{hyper_inverter_forward.3} parent=1 // pred_region
      %114 = dma.done [#allocation8], 128
    $region93: #{hyper_inverter_forward.3} parent=1 // pred_fallthru
      _
    %v116 = vld [vmem:[%s3] sm:$0xf]
    %v117 = vld [vmem:[%s3 + $0x4] sm:$0xf]
    %v118 = vld [vmem:[%s3 + $0x8] sm:$0xf]
    %v119 = vld [vmem:[%s3 + $0xc] sm:$0xf]
    %v120 = vld [vmem:[%s3 + $0x10] sm:$0xf]
    %v121 = vld [vmem:[%s3 + $0x14] sm:$0xf]
    %v122 = vld [vmem:[%s3 + $0x18] sm:$0xf]
    %v123 = vld [vmem:[%s3 + $0x1c] sm:$0xf]
    %v124 = vld [vmem:[%s3 + $0x20] sm:$0xf]
    %v125 = vld [vmem:[%s3 + $0x24] sm:$0xf]
    %v126 = vld [vmem:[%s3 + $0x28] sm:$0xf]
    %v127 = vld [vmem:[%s3 + $0x2c] sm:$0xf]
    %v128 = vld [vmem:[%s3 + $0x30] sm:$0xf]
    %v129 = vld [vmem:[%s3 + $0x34] sm:$0xf]
    %v130 = vld [vmem:[%s3 + $0x38] sm:$0xf]
    %v131 = vld [vmem:[%s3 + $0x3c] sm:$0xf]
    %v132 = vld [vmem:[%s3 + $0x40] sm:$0xf]
    %v133 = vld [vmem:[%s3 + $0x44] sm:$0xf]
    %v134 = vld [vmem:[%s3 + $0x48] sm:$0xf]
    %v135 = vld [vmem:[%s3 + $0x4c] sm:$0xf]
    %v136 = vld [vmem:[%s3 + $0x50] sm:$0xf]
    %v137 = vld [vmem:[%s3 + $0x54] sm:$0xf]
    %v138 = vld [vmem:[%s3 + $0x58] sm:$0xf]
    %v139 = vld [vmem:[%s3 + $0x5c] sm:$0xf]
    %v140 = vld [vmem:[%s3 + $0x60] sm:$0xf]
    %v141 = vld [vmem:[%s3 + $0x64] sm:$0xf]
    %v142 = vld [vmem:[%s3 + $0x68] sm:$0xf]
    %v143 = vld [vmem:[%s3 + $0x6c] sm:$0xf]
    %v144 = vld [vmem:[%s3 + $0x70] sm:$0xf]
    %v145 = vld [vmem:[%s3 + $0x74] sm:$0xf]
    %v146 = vld [vmem:[%s3 + $0x78] sm:$0xf]
    %v147 = vld [vmem:[%s3 + $0x7c] sm:$0xf]
    %v148 = vld [vmem:[%s3 + $0x80] sm:$0xf]
    %v149 = vld [vmem:[%s3 + $0x84] sm:$0xf]
    %v150 = vld [vmem:[%s3 + $0x88] sm:$0xf]
    %v151 = vld [vmem:[%s3 + $0x8c] sm:$0xf]
    %v152 = vld [vmem:[%s3 + $0x90] sm:$0xf]
    %v153 = vld [vmem:[%s3 + $0x94] sm:$0xf]
    %v154 = vld [vmem:[%s3 + $0x98] sm:$0xf]
    %v155 = vld [vmem:[%s3 + $0x9c] sm:$0xf]
    %v156 = vld [vmem:[%s3 + $0xa0] sm:$0xf]
    %v157 = vld [vmem:[%s3 + $0xa4] sm:$0xf]
    %v158 = vld [vmem:[%s3 + $0xa8] sm:$0xf]
    %v159 = vld [vmem:[%s3 + $0xac] sm:$0xf]
    %v160 = vld [vmem:[%s3 + $0xb0] sm:$0xf]
    %v161 = vld [vmem:[%s3 + $0xb4] sm:$0xf]
    %v162 = vld [vmem:[%s3 + $0xb8] sm:$0xf]
    %v163 = vld [vmem:[%s3 + $0xbc] sm:$0xf]
    %v164 = vld [vmem:[%s3 + $0xc0] sm:$0xf]
    %v165 = vld [vmem:[%s3 + $0xc4] sm:$0xf]
    %v166 = vld [vmem:[%s3 + $0xc8] sm:$0xf]
    %v167 = vld [vmem:[%s3 + $0xcc] sm:$0xf]
    %v168 = vld [vmem:[%s3 + $0xd0] sm:$0xf]
    %v169 = vld [vmem:[%s3 + $0xd4] sm:$0xf]
    %v170 = vld [vmem:[%s3 + $0xd8] sm:$0xf]
    %v171 = vld [vmem:[%s3 + $0xdc] sm:$0xf]
    %v172 = vld [vmem:[%s3 + $0xe0] sm:$0xf]
    %v173 = vld [vmem:[%s3 + $0xe4] sm:$0xf]
    %v174 = vld [vmem:[%s3 + $0xe8] sm:$0xf]
    %v175 = vld [vmem:[%s3 + $0xec] sm:$0xf]
    %v176 = vld [vmem:[%s3 + $0xf0] sm:$0xf]
    %v177 = vld [vmem:[%s3 + $0xf4] sm:$0xf]
    %v178 = vld [vmem:[%s3 + $0xf8] sm:$0xf]
    %v179 = vld [vmem:[%s3 + $0xfc] sm:$0xf]
    %v180 = vld [vmem:[%s3 + $0x100] sm:$0xf]
    %v181 = vld [vmem:[%s3 + $0x104] sm:$0xf]
    %v182 = vld [vmem:[%s3 + $0x108] sm:$0xf]
    %v183 = vld [vmem:[%s3 + $0x10c] sm:$0xf]
    %v184 = vld [vmem:[%s3 + $0x110] sm:$0xf]
    %v185 = vld [vmem:[%s3 + $0x114] sm:$0xf]
    %v186 = vld [vmem:[%s3 + $0x118] sm:$0xf]
    %v187 = vld [vmem:[%s3 + $0x11c] sm:$0xf]
    %v188 = vld [vmem:[%s3 + $0x120] sm:$0xf]
    %v189 = vld [vmem:[%s3 + $0x124] sm:$0xf]
    %v190 = vld [vmem:[%s3 + $0x128] sm:$0xf]
    %v191 = vld [vmem:[%s3 + $0x12c] sm:$0xf]
    %v192 = vld [vmem:[%s3 + $0x130] sm:$0xf]
    %v193 = vld [vmem:[%s3 + $0x134] sm:$0xf]
    %v194 = vld [vmem:[%s3 + $0x138] sm:$0xf]
    %v195 = vld [vmem:[%s3 + $0x13c] sm:$0xf]
    %v196 = vld [vmem:[%s3 + $0x140] sm:$0xf]
    %v197 = vld [vmem:[%s3 + $0x144] sm:$0xf]
    %v198 = vld [vmem:[%s3 + $0x148] sm:$0xf]
    %v199 = vld [vmem:[%s3 + $0x14c] sm:$0xf]
    %v200 = vld [vmem:[%s3 + $0x150] sm:$0xf]
    %v201 = vld [vmem:[%s3 + $0x154] sm:$0xf]
    %v202 = vld [vmem:[%s3 + $0x158] sm:$0xf]
    %v203 = vld [vmem:[%s3 + $0x15c] sm:$0xf]
    %v204 = vld [vmem:[%s3 + $0x160] sm:$0xf]
    %v205 = vld [vmem:[%s3 + $0x164] sm:$0xf]
    %v206 = vld [vmem:[%s3 + $0x168] sm:$0xf]
    %v207 = vld [vmem:[%s3 + $0x16c] sm:$0xf]
    %v208 = vld [vmem:[%s3 + $0x170] sm:$0xf]
    %v209 = vld [vmem:[%s3 + $0x174] sm:$0xf]
    %v210 = vld [vmem:[%s3 + $0x178] sm:$0xf]
    %v211 = vld [vmem:[%s3 + $0x17c] sm:$0xf]
    %v212 = vld [vmem:[%s4] sm:$0x1]
    %v213 = vld [vmem:[%s1] sm:$0xff]
    %v214 = vld [vmem:[%s1 + $0x8] sm:$0xf]
    %v217 = vcombine.high %v213, %v213
    %v219 = vunpack.c.l.s4 1983009808
    %v220 = vunpack.c.0.s8 %v219
    %v221 = vlaneseq
    %v222 = vshrl.u32 %v221, 7
    %v223 = vsub.s32 %v220, %v222
    %v224 = vrot.slane %v213, %v223
    %v226 = vunpack.c.l.s4 1983009808
    %v227 = vunpack.c.0.s8 %v226
    %v228 = vlaneseq
    %v229 = vshrl.u32 %v228, 7
    %v230 = vsub.s32 %v227, %v229
    %v231 = vrot.slane %v217, %v230
    %v232 = vcombine.high %v224, %v224
    %v233 = vcombine.high %v231, %v231
    %v235 = vunpack.c.l.s4 1983009808
    %v236 = vunpack.c.0.s8 %v235
    %v237 = vlaneseq
    %v238 = vshrl.u32 %v237, 7
    %v239 = vsub.s32 %v236, %v238
    %v240 = vrot.slane %v214, %v239
    %v241 = vcombine.high %v240, %v240
    %v248 = vpack.c.bf16 %v224, %v224
    %v249 = vpack.c.bf16 %v232, %v232
    %v250 = vpack.c.bf16 %v231, %v231
    %v251 = vpack.c.bf16 %v233, %v233
    %v252 = vpack.c.bf16 %v240, %v240
    %v253 = vpack.c.bf16 %v241, %v241
    %v255 = vlaneseq
    %v256 = vshrl.u32 %v255, 7
    %v257 = vsub.s32 0, %v256
    %v258 = vrot.slane %v212, %v257
    %v356 = vunpack.c.l.b16 %v116
    %v357 = vunpack.c.l.b16 %v117
    %v358 = vunpack.c.l.b16 %v118
    %v359 = vunpack.c.l.b16 %v119
    %v360 = vunpack.c.l.b16 %v120
    %v361 = vunpack.c.l.b16 %v121
    %v362 = vunpack.c.l.b16 %v122
    %v363 = vunpack.c.l.b16 %v123
    %v364 = vunpack.c.l.b16 %v124
    %v365 = vunpack.c.l.b16 %v125
    %v366 = vunpack.c.l.b16 %v126
    %v367 = vunpack.c.l.b16 %v127
    %v368 = vunpack.c.l.b16 %v128
    %v369 = vunpack.c.l.b16 %v129
    %v370 = vunpack.c.l.b16 %v130
    %v371 = vunpack.c.l.b16 %v131
    %v372 = vunpack.c.l.b16 %v132
    %v373 = vunpack.c.l.b16 %v133
    %v374 = vunpack.c.l.b16 %v134
    %v375 = vunpack.c.l.b16 %v135
    %v376 = vunpack.c.l.b16 %v136
    %v377 = vunpack.c.l.b16 %v137
    %v378 = vunpack.c.l.b16 %v138
    %v379 = vunpack.c.l.b16 %v139
    %v380 = vunpack.c.l.b16 %v140
    %v381 = vunpack.c.l.b16 %v141
    %v382 = vunpack.c.l.b16 %v142
    %v383 = vunpack.c.l.b16 %v143
    %v384 = vunpack.c.l.b16 %v144
    %v385 = vunpack.c.l.b16 %v145
    %v386 = vunpack.c.l.b16 %v146
    %v387 = vunpack.c.l.b16 %v147
    %v388 = vunpack.c.l.b16 %v148
    %v389 = vunpack.c.l.b16 %v149
    %v390 = vunpack.c.l.b16 %v150
    %v391 = vunpack.c.l.b16 %v151
    %v392 = vunpack.c.l.b16 %v152
    %v393 = vunpack.c.l.b16 %v153
    %v394 = vunpack.c.l.b16 %v154
    %v395 = vunpack.c.l.b16 %v155
    %v396 = vunpack.c.l.b16 %v156
    %v397 = vunpack.c.l.b16 %v157
    %v398 = vunpack.c.l.b16 %v158
    %v399 = vunpack.c.l.b16 %v159
    %v400 = vunpack.c.l.b16 %v160
    %v401 = vunpack.c.l.b16 %v161
    %v402 = vunpack.c.l.b16 %v162
    %v403 = vunpack.c.l.b16 %v163
    %v404 = vunpack.c.l.b16 %v164
    %v405 = vunpack.c.l.b16 %v165
    %v406 = vunpack.c.l.b16 %v166
    %v407 = vunpack.c.l.b16 %v167
    %v408 = vunpack.c.l.b16 %v168
    %v409 = vunpack.c.l.b16 %v169
    %v410 = vunpack.c.l.b16 %v170
    %v411 = vunpack.c.l.b16 %v171
    %v412 = vunpack.c.l.b16 %v172
    %v413 = vunpack.c.l.b16 %v173
    %v414 = vunpack.c.l.b16 %v174
    %v415 = vunpack.c.l.b16 %v175
    %v416 = vunpack.c.l.b16 %v176
    %v417 = vunpack.c.l.b16 %v177
    %v418 = vunpack.c.l.b16 %v178
    %v419 = vunpack.c.l.b16 %v179
    %v420 = vunpack.c.l.b16 %v180
    %v421 = vunpack.c.l.b16 %v181
    %v422 = vunpack.c.l.b16 %v182
    %v423 = vunpack.c.l.b16 %v183
    %v424 = vunpack.c.l.b16 %v184
    %v425 = vunpack.c.l.b16 %v185
    %v426 = vunpack.c.l.b16 %v186
    %v427 = vunpack.c.l.b16 %v187
    %v428 = vunpack.c.l.b16 %v188
    %v429 = vunpack.c.l.b16 %v189
    %v430 = vunpack.c.l.b16 %v190
    %v431 = vunpack.c.l.b16 %v191
    %v432 = vunpack.c.l.b16 %v192
    %v433 = vunpack.c.l.b16 %v193
    %v434 = vunpack.c.l.b16 %v194
    %v435 = vunpack.c.l.b16 %v195
    %v436 = vunpack.c.l.b16 %v196
    %v437 = vunpack.c.l.b16 %v197
    %v438 = vunpack.c.l.b16 %v198
    %v439 = vunpack.c.l.b16 %v199
    %v440 = vunpack.c.l.b16 %v200
    %v441 = vunpack.c.l.b16 %v201
    %v442 = vunpack.c.l.b16 %v202
    %v443 = vunpack.c.l.b16 %v203
    %v444 = vunpack.c.l.b16 %v204
    %v445 = vunpack.c.l.b16 %v205
    %v446 = vunpack.c.l.b16 %v206
    %v447 = vunpack.c.l.b16 %v207
    %v448 = vunpack.c.l.b16 %v208
    %v449 = vunpack.c.l.b16 %v209
    %v450 = vunpack.c.l.b16 %v210
    %v451 = vunpack.c.l.b16 %v211
    %v452 = vpack.c.b16 %v357, %v356
    %v453 = vpack.c.b16 %v359, %v358
    %v454 = vpack.c.b16 %v361, %v360
    %v455 = vpack.c.b16 %v363, %v362
    %v456 = vpack.c.b16 %v365, %v364
    %v457 = vpack.c.b16 %v367, %v366
    %v458 = vpack.c.b16 %v369, %v368
    %v459 = vpack.c.b16 %v371, %v370
    %v460 = vpack.c.b16 %v373, %v372
    %v461 = vpack.c.b16 %v375, %v374
    %v462 = vpack.c.b16 %v377, %v376
    %v463 = vpack.c.b16 %v379, %v378
    %v464 = vpack.c.b16 %v381, %v380
    %v465 = vpack.c.b16 %v383, %v382
    %v466 = vpack.c.b16 %v385, %v384
    %v467 = vpack.c.b16 %v387, %v386
    %v468 = vpack.c.b16 %v389, %v388
    %v469 = vpack.c.b16 %v391, %v390
    %v470 = vpack.c.b16 %v393, %v392
    %v471 = vpack.c.b16 %v395, %v394
    %v472 = vpack.c.b16 %v397, %v396
    %v473 = vpack.c.b16 %v399, %v398
    %v474 = vpack.c.b16 %v401, %v400
    %v475 = vpack.c.b16 %v403, %v402
    %v476 = vpack.c.b16 %v405, %v404
    %v477 = vpack.c.b16 %v407, %v406
    %v478 = vpack.c.b16 %v409, %v408
    %v479 = vpack.c.b16 %v411, %v410
    %v480 = vpack.c.b16 %v413, %v412
    %v481 = vpack.c.b16 %v415, %v414
    %v482 = vpack.c.b16 %v417, %v416
    %v483 = vpack.c.b16 %v419, %v418
    %v484 = vpack.c.b16 %v421, %v420
    %v485 = vpack.c.b16 %v423, %v422
    %v486 = vpack.c.b16 %v425, %v424
    %v487 = vpack.c.b16 %v427, %v426
    %v488 = vpack.c.b16 %v429, %v428
    %v489 = vpack.c.b16 %v431, %v430
    %v490 = vpack.c.b16 %v433, %v432
    %v491 = vpack.c.b16 %v435, %v434
    %v492 = vpack.c.b16 %v437, %v436
    %v493 = vpack.c.b16 %v439, %v438
    %v494 = vpack.c.b16 %v441, %v440
    %v495 = vpack.c.b16 %v443, %v442
    %v496 = vpack.c.b16 %v445, %v444
    %v497 = vpack.c.b16 %v447, %v446
    %v498 = vpack.c.b16 %v449, %v448
    %v499 = vpack.c.b16 %v451, %v450
    %548 = vmatprep.subr.bf16.mxu0 0
    %549 = vmatpush1.bf16.msra.mxu0 %v459
    %550 = vmatprep.subr.bf16.mxu0 0
    %551 = vmatpush1.bf16.msra.mxu0 %v458
    %552 = vmatprep.subr.bf16.mxu0 0
    %553 = vmatpush1.bf16.msra.mxu0 %v457
    %554 = vmatprep.subr.bf16.mxu0 0
    %555 = vmatpush1.bf16.msra.mxu0 %v456
    %556 = vmatprep.subr.bf16.mxu0 0
    %557 = vmatpush1.bf16.msra.mxu0 %v455
    %558 = vmatprep.subr.bf16.mxu0 0
    %559 = vmatpush1.bf16.msra.mxu0 %v454
    %560 = vmatprep.subr.bf16.mxu0 0
    %561 = vmatpush1.bf16.msra.mxu0 %v453
    %562 = vmatprep.subr.bf16.mxu0 0
    %563 = vmatpush1.bf16.msra.mxu0 %v452
    %564 = vmatprep.subr.bf16.mxu0 0
    %565 = vmatpush2.bf16.msra.mxu0 %v467
    %566 = vmatprep.subr.bf16.mxu0 0
    %567 = vmatpush2.bf16.msra.mxu0 %v466
    %568 = vmatprep.subr.bf16.mxu0 0
    %569 = vmatpush2.bf16.msra.mxu0 %v465
    %570 = vmatprep.subr.bf16.mxu0 0
    %571 = vmatpush2.bf16.msra.mxu0 %v464
    %572 = vmatprep.subr.bf16.mxu0 0
    %573 = vmatpush2.bf16.msra.mxu0 %v463
    %574 = vmatprep.subr.bf16.mxu0 0
    %575 = vmatpush2.bf16.msra.mxu0 %v462
    %576 = vmatprep.subr.bf16.mxu0 0
    %577 = vmatpush2.bf16.msra.mxu0 %v461
    %578 = vmatprep.subr.bf16.mxu0 0
    %579 = vmatpush2.bf16.msra.mxu0 %v460
    %580 = vmatprep.mubr.bf16.mxu0 %v249
    %581 = vmatmul.mubr.bf16.gmra.mxu0 %v248
    %v582 = vpop.f32.mrf.mxu0
    %v583 = vadd.f32 %v258, %v582
    %v584 = vpop.f32.mrf.mxu0
    %v585 = vpop.f32.mrf.mxu0
    %v586 = vpop.f32.mrf.mxu0
    %587 = vdwg.mxu0
    %588 = vmatprep.subr.bf16.mxu0 0
    %589 = vmatpush1.bf16.msra.mxu0 %v475
    %590 = vmatprep.subr.bf16.mxu0 0
    %591 = vmatpush1.bf16.msra.mxu0 %v474
    %592 = vmatprep.subr.bf16.mxu0 0
    %593 = vmatpush1.bf16.msra.mxu0 %v473
    %594 = vmatprep.subr.bf16.mxu0 0
    %595 = vmatpush1.bf16.msra.mxu0 %v472
    %596 = vmatprep.subr.bf16.mxu0 0
    %597 = vmatpush1.bf16.msra.mxu0 %v471
    %598 = vmatprep.subr.bf16.mxu0 0
    %599 = vmatpush1.bf16.msra.mxu0 %v470
    %600 = vmatprep.subr.bf16.mxu0 0
    %601 = vmatpush1.bf16.msra.mxu0 %v469
    %602 = vmatprep.subr.bf16.mxu0 0
    %603 = vmatpush1.bf16.msra.mxu0 %v468
    %604 = vmatprep.subr.bf16.mxu0 0
    %605 = vmatpush2.bf16.msra.mxu0 %v483
    %606 = vmatprep.subr.bf16.mxu0 0
    %607 = vmatpush2.bf16.msra.mxu0 %v482
    %608 = vmatprep.subr.bf16.mxu0 0
    %609 = vmatpush2.bf16.msra.mxu0 %v481
    %610 = vmatprep.subr.bf16.mxu0 0
    %611 = vmatpush2.bf16.msra.mxu0 %v480
    %612 = vmatprep.subr.bf16.mxu0 0
    %613 = vmatpush2.bf16.msra.mxu0 %v479
    %614 = vmatprep.subr.bf16.mxu0 0
    %615 = vmatpush2.bf16.msra.mxu0 %v478
    %616 = vmatprep.subr.bf16.mxu0 0
    %617 = vmatpush2.bf16.msra.mxu0 %v477
    %618 = vmatprep.subr.bf16.mxu0 0
    %619 = vmatpush2.bf16.msra.mxu0 %v476
    %620 = vmatprep.mubr.bf16.mxu0 %v251
    %621 = vmatmul.mubr.bf16.gmra.mxu0 %v250
    %v622 = vpop.f32.mrf.mxu0
    %v623 = vadd.f32 %v583, %v622
    %v624 = vpop.f32.mrf.mxu0
    %v625 = vpop.f32.mrf.mxu0
    %v626 = vpop.f32.mrf.mxu0
    %627 = vdwg.mxu0
    %628 = vmatprep.subr.bf16.mxu0 0
    %629 = vmatpush1.bf16.msra.mxu0 %v491
    %630 = vmatprep.subr.bf16.mxu0 0
    %631 = vmatpush1.bf16.msra.mxu0 %v490
    %632 = vmatprep.subr.bf16.mxu0 0
    %633 = vmatpush1.bf16.msra.mxu0 %v489
    %634 = vmatprep.subr.bf16.mxu0 0
    %635 = vmatpush1.bf16.msra.mxu0 %v488
    %636 = vmatprep.subr.bf16.mxu0 0
    %637 = vmatpush1.bf16.msra.mxu0 %v487
    %638 = vmatprep.subr.bf16.mxu0 0
    %639 = vmatpush1.bf16.msra.mxu0 %v486
    %640 = vmatprep.subr.bf16.mxu0 0
    %641 = vmatpush1.bf16.msra.mxu0 %v485
    %642 = vmatprep.subr.bf16.mxu0 0
    %643 = vmatpush1.bf16.msra.mxu0 %v484
    %644 = vmatprep.subr.bf16.mxu0 0
    %645 = vmatpush2.bf16.msra.mxu0 %v499
    %646 = vmatprep.subr.bf16.mxu0 0
    %647 = vmatpush2.bf16.msra.mxu0 %v498
    %648 = vmatprep.subr.bf16.mxu0 0
    %649 = vmatpush2.bf16.msra.mxu0 %v497
    %650 = vmatprep.subr.bf16.mxu0 0
    %651 = vmatpush2.bf16.msra.mxu0 %v496
    %652 = vmatprep.subr.bf16.mxu0 0
    %653 = vmatpush2.bf16.msra.mxu0 %v495
    %654 = vmatprep.subr.bf16.mxu0 0
    %655 = vmatpush2.bf16.msra.mxu0 %v494
    %656 = vmatprep.subr.bf16.mxu0 0
    %657 = vmatpush2.bf16.msra.mxu0 %v493
    %658 = vmatprep.subr.bf16.mxu0 0
    %659 = vmatpush2.bf16.msra.mxu0 %v492
    %660 = vmatprep.mubr.bf16.mxu0 %v253
    %661 = vmatmul.mubr.bf16.gmra.mxu0 %v252
    %v662 = vpop.f32.mrf.mxu0
    %v663 = vadd.f32 %v623, %v662
    %v664 = vpop.f32.mrf.mxu0
    %v665 = vpop.f32.mrf.mxu0
    %v666 = vpop.f32.mrf.mxu0
    %667 = vdwg.mxu0
    %v668 = vld [vmem:[%s0] sm:$0x3f]
    %v670 = vcombine.high %v668, %v668
    %v672 = vunpack.c.l.s4 1966171168
    %v673 = vunpack.c.0.s8 %v672
    %v674 = vlaneseq
    %v675 = vshrl.u32 %v674, 7
    %v676 = vsub.s32 %v673, %v675
    %v677 = vrot.slane %v668, %v676
    %v679 = vunpack.c.l.s4 1966171168
    %v680 = vunpack.c.0.s8 %v679
    %v681 = vlaneseq
    %v682 = vshrl.u32 %v681, 7
    %v683 = vsub.s32 %v680, %v682
    %v684 = vrot.slane %v670, %v683
    %v685 = vcombine.high %v677, %v677
    %v686 = vcombine.high %v684, %v684
    %v688 = vunpack.c.l.s4 1966171168
    %v689 = vunpack.c.0.s8 %v688
    %v690 = vlaneseq
    %v691 = vshrl.u32 %v690, 7
    %v692 = vsub.s32 %v689, %v691
    %v693 = vrot.slane %v677, %v692
    %v695 = vunpack.c.l.s4 1966171168
    %v696 = vunpack.c.0.s8 %v695
    %v697 = vlaneseq
    %v698 = vshrl.u32 %v697, 7
    %v699 = vsub.s32 %v696, %v698
    %v700 = vrot.slane %v684, %v699
    %v702 = vunpack.c.l.s4 1966171168
    %v703 = vunpack.c.0.s8 %v702
    %v704 = vlaneseq
    %v705 = vshrl.u32 %v704, 7
    %v706 = vsub.s32 %v703, %v705
    %v707 = vrot.slane %v685, %v706
    %v709 = vunpack.c.l.s4 1966171168
    %v710 = vunpack.c.0.s8 %v709
    %v711 = vlaneseq
    %v712 = vshrl.u32 %v711, 7
    %v713 = vsub.s32 %v710, %v712
    %v714 = vrot.slane %v686, %v713
    %v715 = vcombine.high %v693, %v693
    %v716 = vcombine.high %v707, %v707
    %723 = vmatprep.subr.bf16.mxu0 0
    %724 = vmatpush1.bf16.msra.mxu0 %v459
    %725 = vmatprep.subr.bf16.mxu0 0
    %726 = vmatpush1.bf16.msra.mxu0 %v458
    %727 = vmatprep.subr.bf16.mxu0 0
    %728 = vmatpush1.bf16.msra.mxu0 %v457
    %729 = vmatprep.subr.bf16.mxu0 0
    %730 = vmatpush1.bf16.msra.mxu0 %v456
    %731 = vmatprep.subr.bf16.mxu0 0
    %732 = vmatpush1.bf16.msra.mxu0 %v455
    %733 = vmatprep.subr.bf16.mxu0 0
    %734 = vmatpush1.bf16.msra.mxu0 %v454
    %735 = vmatprep.subr.bf16.mxu0 0
    %736 = vmatpush1.bf16.msra.mxu0 %v453
    %737 = vmatprep.subr.bf16.mxu0 0
    %738 = vmatpush1.bf16.msra.mxu0 %v452
    %739 = vmatprep.subr.bf16.mxu0 0
    %740 = vmatpush2.bf16.msra.mxu0 %v467
    %741 = vmatprep.subr.bf16.mxu0 0
    %742 = vmatpush2.bf16.msra.mxu0 %v466
    %743 = vmatprep.subr.bf16.mxu0 0
    %744 = vmatpush2.bf16.msra.mxu0 %v465
    %745 = vmatprep.subr.bf16.mxu0 0
    %746 = vmatpush2.bf16.msra.mxu0 %v464
    %747 = vmatprep.subr.bf16.mxu0 0
    %748 = vmatpush2.bf16.msra.mxu0 %v463
    %749 = vmatprep.subr.bf16.mxu0 0
    %750 = vmatpush2.bf16.msra.mxu0 %v462
    %751 = vmatprep.subr.bf16.mxu0 0
    %752 = vmatpush2.bf16.msra.mxu0 %v461
    %753 = vmatprep.subr.bf16.mxu0 0
    %754 = vmatpush2.bf16.msra.mxu0 %v460
    %755 = vmatprep.mubr.bf16.mxu0 %v707
    %756 = vmatmul.mubr.bf16.gmra.mxu0 %v693
    %v757 = vpop.f32.mrf.mxu0
    %v758 = vadd.f32 %v258, %v757
    %v759 = vpop.f32.mrf.mxu0
    %v760 = vpop.f32.mrf.mxu0
    %v761 = vpop.f32.mrf.mxu0
    %762 = vdwg.mxu0
    %763 = vmatprep.subr.bf16.mxu0 0
    %764 = vmatpush1.bf16.msra.mxu0 %v475
    %765 = vmatprep.subr.bf16.mxu0 0
    %766 = vmatpush1.bf16.msra.mxu0 %v474
    %767 = vmatprep.subr.bf16.mxu0 0
    %768 = vmatpush1.bf16.msra.mxu0 %v473
    %769 = vmatprep.subr.bf16.mxu0 0
    %770 = vmatpush1.bf16.msra.mxu0 %v472
    %771 = vmatprep.subr.bf16.mxu0 0
    %772 = vmatpush1.bf16.msra.mxu0 %v471
    %773 = vmatprep.subr.bf16.mxu0 0
    %774 = vmatpush1.bf16.msra.mxu0 %v470
    %775 = vmatprep.subr.bf16.mxu0 0
    %776 = vmatpush1.bf16.msra.mxu0 %v469
    %777 = vmatprep.subr.bf16.mxu0 0
    %778 = vmatpush1.bf16.msra.mxu0 %v468
    %779 = vmatprep.subr.bf16.mxu0 0
    %780 = vmatpush2.bf16.msra.mxu0 %v483
    %781 = vmatprep.subr.bf16.mxu0 0
    %782 = vmatpush2.bf16.msra.mxu0 %v482
    %783 = vmatprep.subr.bf16.mxu0 0
    %784 = vmatpush2.bf16.msra.mxu0 %v481
    %785 = vmatprep.subr.bf16.mxu0 0
    %786 = vmatpush2.bf16.msra.mxu0 %v480
    %787 = vmatprep.subr.bf16.mxu0 0
    %788 = vmatpush2.bf16.msra.mxu0 %v479
    %789 = vmatprep.subr.bf16.mxu0 0
    %790 = vmatpush2.bf16.msra.mxu0 %v478
    %791 = vmatprep.subr.bf16.mxu0 0
    %792 = vmatpush2.bf16.msra.mxu0 %v477
    %793 = vmatprep.subr.bf16.mxu0 0
    %794 = vmatpush2.bf16.msra.mxu0 %v476
    %795 = vmatprep.mubr.bf16.mxu0 %v716
    %796 = vmatmul.mubr.bf16.gmra.mxu0 %v715
    %v797 = vpop.f32.mrf.mxu0
    %v798 = vadd.f32 %v758, %v797
    %v799 = vpop.f32.mrf.mxu0
    %v800 = vpop.f32.mrf.mxu0
    %v801 = vpop.f32.mrf.mxu0
    %802 = vdwg.mxu0
    %803 = vmatprep.subr.bf16.mxu0 0
    %804 = vmatpush1.bf16.msra.mxu0 %v491
    %805 = vmatprep.subr.bf16.mxu0 0
    %806 = vmatpush1.bf16.msra.mxu0 %v490
    %807 = vmatprep.subr.bf16.mxu0 0
    %808 = vmatpush1.bf16.msra.mxu0 %v489
    %809 = vmatprep.subr.bf16.mxu0 0
    %810 = vmatpush1.bf16.msra.mxu0 %v488
    %811 = vmatprep.subr.bf16.mxu0 0
    %812 = vmatpush1.bf16.msra.mxu0 %v487
    %813 = vmatprep.subr.bf16.mxu0 0
    %814 = vmatpush1.bf16.msra.mxu0 %v486
    %815 = vmatprep.subr.bf16.mxu0 0
    %816 = vmatpush1.bf16.msra.mxu0 %v485
    %817 = vmatprep.subr.bf16.mxu0 0
    %818 = vmatpush1.bf16.msra.mxu0 %v484
    %819 = vmatprep.subr.bf16.mxu0 0
    %820 = vmatpush2.bf16.msra.mxu0 %v499
    %821 = vmatprep.subr.bf16.mxu0 0
    %822 = vmatpush2.bf16.msra.mxu0 %v498
    %823 = vmatprep.subr.bf16.mxu0 0
    %824 = vmatpush2.bf16.msra.mxu0 %v497
    %825 = vmatprep.subr.bf16.mxu0 0
    %826 = vmatpush2.bf16.msra.mxu0 %v496
    %827 = vmatprep.subr.bf16.mxu0 0
    %828 = vmatpush2.bf16.msra.mxu0 %v495
    %829 = vmatprep.subr.bf16.mxu0 0
    %830 = vmatpush2.bf16.msra.mxu0 %v494
    %831 = vmatprep.subr.bf16.mxu0 0
    %832 = vmatpush2.bf16.msra.mxu0 %v493
    %833 = vmatprep.subr.bf16.mxu0 0
    %834 = vmatpush2.bf16.msra.mxu0 %v492
    %835 = vmatprep.mubr.bf16.mxu0 %v714
    %836 = vmatmul.mubr.bf16.gmra.mxu0 %v700
    %v837 = vpop.f32.mrf.mxu0
    %v838 = vadd.f32 %v798, %v837
    %v839 = vpop.f32.mrf.mxu0
    %v840 = vpop.f32.mrf.mxu0
    %v841 = vpop.f32.mrf.mxu0
    %842 = vdwg.mxu0
    %v843 = vld [vmem:[#allocation2] sm:$0xff]
    %v844 = vld [vmem:[#allocation2 + $0x8] sm:$0xff]
    %v845 = vld [vmem:[#allocation2 + $0x10] sm:$0xff]
    %v846 = vld [vmem:[#allocation2 + $0x18] sm:$0xff]
    %v847 = vld [vmem:[#allocation2 + $0x20] sm:$0xff]
    %v848 = vld [vmem:[#allocation2 + $0x28] sm:$0xff]
    %v849 = vld [vmem:[#allocation2 + $0x30] sm:$0xff]
    %v850 = vld [vmem:[#allocation2 + $0x38] sm:$0xff]
    %v851 = vld [vmem:[#allocation2 + $0x40] sm:$0xff]
    %v852 = vld [vmem:[#allocation2 + $0x48] sm:$0xff]
    %v853 = vld [vmem:[#allocation2 + $0x50] sm:$0xff]
    %v854 = vld [vmem:[#allocation2 + $0x58] sm:$0xff]
    %v855 = vld [vmem:[#allocation2 + $0x60] sm:$0xff]
    %v856 = vld [vmem:[#allocation2 + $0x68] sm:$0xff]
    %v857 = vld [vmem:[#allocation2 + $0x70] sm:$0xff]
    %v858 = vld [vmem:[#allocation2 + $0x78] sm:$0xff]
    %v859 = vld [vmem:[#allocation4] sm:$0xff]
    %v860 = vld [vmem:[#allocation4 + $0x8] sm:$0xff]
    %v861 = vld [vmem:[#allocation4 + $0x10] sm:$0xff]
    %v862 = vld [vmem:[#allocation4 + $0x18] sm:$0xff]
    %v863 = vld [vmem:[#allocation4 + $0x20] sm:$0xff]
    %v864 = vld [vmem:[#allocation4 + $0x28] sm:$0xff]
    %v865 = vld [vmem:[#allocation4 + $0x30] sm:$0xff]
    %v866 = vld [vmem:[#allocation4 + $0x38] sm:$0xff]
    %v867 = vld [vmem:[#allocation4 + $0x40] sm:$0xff]
    %v868 = vld [vmem:[#allocation4 + $0x48] sm:$0xff]
    %v869 = vld [vmem:[#allocation4 + $0x50] sm:$0xff]
    %v870 = vld [vmem:[#allocation4 + $0x58] sm:$0xff]
    %v871 = vld [vmem:[#allocation4 + $0x60] sm:$0xff]
    %v872 = vld [vmem:[#allocation4 + $0x68] sm:$0xff]
    %v873 = vld [vmem:[#allocation4 + $0x70] sm:$0xff]
    %v874 = vld [vmem:[#allocation4 + $0x78] sm:$0xff]
    %875 = vmatprep.subr.mxu0 0.0
    %876 = vmatpush1.msra.mxu0 %v874
    %877 = vmatprep.subr.mxu0 0.0
    %878 = vmatpush1.msra.mxu0 %v873
    %879 = vmatprep.subr.mxu0 0.0
    %880 = vmatpush1.msra.mxu0 %v872
    %881 = vmatprep.subr.mxu0 0.0
    %882 = vmatpush1.msra.mxu0 %v871
    %883 = vmatprep.subr.mxu0 0.0
    %884 = vmatpush1.msra.mxu0 %v870
    %885 = vmatprep.subr.mxu0 0.0
    %886 = vmatpush1.msra.mxu0 %v869
    %887 = vmatprep.subr.mxu0 0.0
    %888 = vmatpush1.msra.mxu0 %v868
    %889 = vmatprep.subr.mxu0 0.0
    %890 = vmatpush1.msra.mxu0 %v867
    %891 = vmatprep.subr.mxu0 0.0
    %892 = vmatpush1.msra.mxu0 %v866
    %893 = vmatprep.subr.mxu0 0.0
    %894 = vmatpush1.msra.mxu0 %v865
    %895 = vmatprep.subr.mxu0 0.0
    %896 = vmatpush1.msra.mxu0 %v864
    %897 = vmatprep.subr.mxu0 0.0
    %898 = vmatpush1.msra.mxu0 %v863
    %899 = vmatprep.subr.mxu0 0.0
    %900 = vmatpush1.msra.mxu0 %v862
    %901 = vmatprep.subr.mxu0 0.0
    %902 = vmatpush1.msra.mxu0 %v861
    %903 = vmatprep.subr.mxu0 0.0
    %904 = vmatpush1.msra.mxu0 %v860
    %905 = vmatprep.subr.mxu0 0.0
    %906 = vmatpush1.msra.mxu0 %v859
    %907 = vmatprep.subr.mxu0 0.0
    %908 = vmatpush2.msra.mxu0 0.0
    %909 = vmatprep.subr.mxu0 0.0
    %910 = vmatpush2.msra.mxu0 0.0
    %911 = vmatprep.subr.mxu0 0.0
    %912 = vmatpush2.msra.mxu0 0.0
    %913 = vmatprep.subr.mxu0 0.0
    %914 = vmatpush2.msra.mxu0 0.0
    %915 = vmatprep.subr.mxu0 0.0
    %916 = vmatpush2.msra.mxu0 0.0
    %917 = vmatprep.subr.mxu0 0.0
    %918 = vmatpush2.msra.mxu0 0.0
    %919 = vmatprep.subr.mxu0 0.0
    %920 = vmatpush2.msra.mxu0 0.0
    %921 = vmatprep.subr.mxu0 0.0
    %922 = vmatpush2.msra.mxu0 0.0
    %923 = vmatprep.subr.mxu0 0.0
    %924 = vmatpush2.msra.mxu0 0.0
    %925 = vmatprep.subr.mxu0 0.0
    %926 = vmatpush2.msra.mxu0 0.0
    %927 = vmatprep.subr.mxu0 0.0
    %928 = vmatpush2.msra.mxu0 0.0
    %929 = vmatprep.subr.mxu0 0.0
    %930 = vmatpush2.msra.mxu0 0.0
    %931 = vmatprep.subr.mxu0 0.0
    %932 = vmatpush2.msra.mxu0 0.0
    %933 = vmatprep.subr.mxu0 0.0
    %934 = vmatpush2.msra.mxu0 0.0
    %935 = vmatprep.subr.mxu0 0.0
    %936 = vmatpush2.msra.mxu0 0.0
    %937 = vmatprep.subr.mxu0 0.0
    %938 = vmatpush2.msra.mxu0 0.0
    %939 = vmatprep.mubr.f32.mxu0 0.0
    %940 = vmatmul.mubr.f32.gmra.mxu0 %v838
    %v941 = vpop.f32.mrf.mxu0
    %v942 = vadd.f32 0.0, %v941
    %v943 = vpop.f32.mrf.mxu0
    %944 = vdwg.mxu0
    %945 = vmatprep.subr.mxu0 0.0
    %946 = vmatpush1.msra.mxu0 %v858
    %947 = vmatprep.subr.mxu0 0.0
    %948 = vmatpush1.msra.mxu0 %v857
    %949 = vmatprep.subr.mxu0 0.0
    %950 = vmatpush1.msra.mxu0 %v856
    %951 = vmatprep.subr.mxu0 0.0
    %952 = vmatpush1.msra.mxu0 %v855
    %953 = vmatprep.subr.mxu0 0.0
    %954 = vmatpush1.msra.mxu0 %v854
    %955 = vmatprep.subr.mxu0 0.0
    %956 = vmatpush1.msra.mxu0 %v853
    %957 = vmatprep.subr.mxu0 0.0
    %958 = vmatpush1.msra.mxu0 %v852
    %959 = vmatprep.subr.mxu0 0.0
    %960 = vmatpush1.msra.mxu0 %v851
    %961 = vmatprep.subr.mxu0 0.0
    %962 = vmatpush1.msra.mxu0 %v850
    %963 = vmatprep.subr.mxu0 0.0
    %964 = vmatpush1.msra.mxu0 %v849
    %965 = vmatprep.subr.mxu0 0.0
    %966 = vmatpush1.msra.mxu0 %v848
    %967 = vmatprep.subr.mxu0 0.0
    %968 = vmatpush1.msra.mxu0 %v847
    %969 = vmatprep.subr.mxu0 0.0
    %970 = vmatpush1.msra.mxu0 %v846
    %971 = vmatprep.subr.mxu0 0.0
    %972 = vmatpush1.msra.mxu0 %v845
    %973 = vmatprep.subr.mxu0 0.0
    %974 = vmatpush1.msra.mxu0 %v844
    %975 = vmatprep.subr.mxu0 0.0
    %976 = vmatpush1.msra.mxu0 %v843
    %977 = vmatprep.subr.mxu0 0.0
    %978 = vmatpush2.msra.mxu0 0.0
    %979 = vmatprep.subr.mxu0 0.0
    %980 = vmatpush2.msra.mxu0 0.0
    %981 = vmatprep.subr.mxu0 0.0
    %982 = vmatpush2.msra.mxu0 0.0
    %983 = vmatprep.subr.mxu0 0.0
    %984 = vmatpush2.msra.mxu0 0.0
    %985 = vmatprep.subr.mxu0 0.0
    %986 = vmatpush2.msra.mxu0 0.0
    %987 = vmatprep.subr.mxu0 0.0
    %988 = vmatpush2.msra.mxu0 0.0
    %989 = vmatprep.subr.mxu0 0.0
    %990 = vmatpush2.msra.mxu0 0.0
    %991 = vmatprep.subr.mxu0 0.0
    %992 = vmatpush2.msra.mxu0 0.0
    %993 = vmatprep.subr.mxu0 0.0
    %994 = vmatpush2.msra.mxu0 0.0
    %995 = vmatprep.subr.mxu0 0.0
    %996 = vmatpush2.msra.mxu0 0.0
    %997 = vmatprep.subr.mxu0 0.0
    %998 = vmatpush2.msra.mxu0 0.0
    %999 = vmatprep.subr.mxu0 0.0
    %1000 = vmatpush2.msra.mxu0 0.0
    %1001 = vmatprep.subr.mxu0 0.0
    %1002 = vmatpush2.msra.mxu0 0.0
    %1003 = vmatprep.subr.mxu0 0.0
    %1004 = vmatpush2.msra.mxu0 0.0
    %1005 = vmatprep.subr.mxu0 0.0
    %1006 = vmatpush2.msra.mxu0 0.0
    %1007 = vmatprep.subr.mxu0 0.0
    %1008 = vmatpush2.msra.mxu0 0.0
    %1009 = vmatprep.mubr.f32.mxu0 0.0
    %1010 = vmatmul.mubr.f32.gmra.mxu0 %v663
    %v1011 = vpop.f32.mrf.mxu0
    %v1012 = vadd.f32 %v942, %v1011
    %v1013 = vpop.f32.mrf.mxu0
    %1014 = vdwg.mxu0
    %v1015 = vld [vmem:[%s7] sm:$0x1]
    %v1017 = vlaneseq
    %v1018 = vshrl.u32 %v1017, 7
    %v1019 = vsub.s32 0, %v1018
    %v1020 = vrot.slane %v1015, %v1019
    %v1022 = vadd.f32 %v1012, %v1020
    %v1023 = vmax.f32 %v1022, 0.0
    %v1024 = vld [vmem:[%s8] sm:$0xff]
    %v1025 = vld [vmem:[%s8 + $0x8] sm:$0xff]
    %v1026 = vld [vmem:[%s8 + $0x10] sm:$0xff]
    %v1027 = vld [vmem:[%s8 + $0x18] sm:$0xff]
    %v1028 = vld [vmem:[%s8 + $0x20] sm:$0xff]
    %v1029 = vld [vmem:[%s8 + $0x28] sm:$0xff]
    %v1030 = vld [vmem:[%s8 + $0x30] sm:$0xff]
    %v1031 = vld [vmem:[%s8 + $0x38] sm:$0xff]
    %v1032 = vld [vmem:[%s8 + $0x40] sm:$0xff]
    %v1033 = vld [vmem:[%s8 + $0x48] sm:$0xff]
    %v1034 = vld [vmem:[%s8 + $0x50] sm:$0xff]
    %v1035 = vld [vmem:[%s8 + $0x58] sm:$0xff]
    %v1036 = vld [vmem:[%s8 + $0x60] sm:$0xff]
    %v1037 = vld [vmem:[%s8 + $0x68] sm:$0xff]
    %v1038 = vld [vmem:[%s8 + $0x70] sm:$0xff]
    %v1039 = vld [vmem:[%s8 + $0x78] sm:$0xff]
    %v1040 = vld [vmem:[%s8 + $0x80] sm:$0xff]
    %v1041 = vld [vmem:[%s8 + $0x88] sm:$0xff]
    %v1042 = vld [vmem:[%s8 + $0x90] sm:$0xff]
    %v1043 = vld [vmem:[%s8 + $0x98] sm:$0xff]
    %v1044 = vld [vmem:[%s8 + $0xa0] sm:$0xff]
    %v1045 = vld [vmem:[%s8 + $0xa8] sm:$0xff]
    %v1046 = vld [vmem:[%s8 + $0xb0] sm:$0xff]
    %v1047 = vld [vmem:[%s8 + $0xb8] sm:$0xff]
    %v1048 = vld [vmem:[%s8 + $0xc0] sm:$0xff]
    %v1049 = vld [vmem:[%s8 + $0xc8] sm:$0xff]
    %v1050 = vld [vmem:[%s8 + $0xd0] sm:$0xff]
    %v1051 = vld [vmem:[%s8 + $0xd8] sm:$0xff]
    %v1052 = vld [vmem:[%s8 + $0xe0] sm:$0xff]
    %v1053 = vld [vmem:[%s8 + $0xe8] sm:$0xff]
    %v1054 = vld [vmem:[%s8 + $0xf0] sm:$0xff]
    %v1055 = vld [vmem:[%s8 + $0xf8] sm:$0xff]
    %v1056 = vld [vmem:[%s9] sm:$0x3]
    %v1058 = vlaneseq
    %v1059 = vshrl.u32 %v1058, 7
    %v1060 = vsub.s32 0, %v1059
    %v1061 = vrot.slane %v1056, %v1060
    %v1062 = vlaneseq
    %v1063 = vshrl.u32 %v1062, 7
    %v1064 = vsub.s32 1, %v1063
    %v1065 = vrot.slane %v1056, %v1064
    %1068 = vmatprep.subr.mxu0 %v1055
    %1069 = vmatpush1.msra.mxu0 %v1054
    %1070 = vmatprep.subr.mxu0 %v1053
    %1071 = vmatpush1.msra.mxu0 %v1052
    %1072 = vmatprep.subr.mxu0 %v1051
    %1073 = vmatpush1.msra.mxu0 %v1050
    %1074 = vmatprep.subr.mxu0 %v1049
    %1075 = vmatpush1.msra.mxu0 %v1048
    %1076 = vmatprep.subr.mxu0 %v1047
    %1077 = vmatpush1.msra.mxu0 %v1046
    %1078 = vmatprep.subr.mxu0 %v1045
    %1079 = vmatpush1.msra.mxu0 %v1044
    %1080 = vmatprep.subr.mxu0 %v1043
    %1081 = vmatpush1.msra.mxu0 %v1042
    %1082 = vmatprep.subr.mxu0 %v1041
    %1083 = vmatpush1.msra.mxu0 %v1040
    %1084 = vmatprep.subr.mxu0 %v1039
    %1085 = vmatpush1.msra.mxu0 %v1038
    %1086 = vmatprep.subr.mxu0 %v1037
    %1087 = vmatpush1.msra.mxu0 %v1036
    %1088 = vmatprep.subr.mxu0 %v1035
    %1089 = vmatpush1.msra.mxu0 %v1034
    %1090 = vmatprep.subr.mxu0 %v1033
    %1091 = vmatpush1.msra.mxu0 %v1032
    %1092 = vmatprep.subr.mxu0 %v1031
    %1093 = vmatpush1.msra.mxu0 %v1030
    %1094 = vmatprep.subr.mxu0 %v1029
    %1095 = vmatpush1.msra.mxu0 %v1028
    %1096 = vmatprep.subr.mxu0 %v1027
    %1097 = vmatpush1.msra.mxu0 %v1026
    %1098 = vmatprep.subr.mxu0 %v1025
    %1099 = vmatpush1.msra.mxu0 %v1024
    %1100 = vmatprep.subr.mxu0 0.0
    %1101 = vmatpush2.msra.mxu0 0.0
    %1102 = vmatprep.subr.mxu0 0.0
    %1103 = vmatpush2.msra.mxu0 0.0
    %1104 = vmatprep.subr.mxu0 0.0
    %1105 = vmatpush2.msra.mxu0 0.0
    %1106 = vmatprep.subr.mxu0 0.0
    %1107 = vmatpush2.msra.mxu0 0.0
    %1108 = vmatprep.subr.mxu0 0.0
    %1109 = vmatpush2.msra.mxu0 0.0
    %1110 = vmatprep.subr.mxu0 0.0
    %1111 = vmatpush2.msra.mxu0 0.0
    %1112 = vmatprep.subr.mxu0 0.0
    %1113 = vmatpush2.msra.mxu0 0.0
    %1114 = vmatprep.subr.mxu0 0.0
    %1115 = vmatpush2.msra.mxu0 0.0
    %1116 = vmatprep.subr.mxu0 0.0
    %1117 = vmatpush2.msra.mxu0 0.0
    %1118 = vmatprep.subr.mxu0 0.0
    %1119 = vmatpush2.msra.mxu0 0.0
    %1120 = vmatprep.subr.mxu0 0.0
    %1121 = vmatpush2.msra.mxu0 0.0
    %1122 = vmatprep.subr.mxu0 0.0
    %1123 = vmatpush2.msra.mxu0 0.0
    %1124 = vmatprep.subr.mxu0 0.0
    %1125 = vmatpush2.msra.mxu0 0.0
    %1126 = vmatprep.subr.mxu0 0.0
    %1127 = vmatpush2.msra.mxu0 0.0
    %1128 = vmatprep.subr.mxu0 0.0
    %1129 = vmatpush2.msra.mxu0 0.0
    %1130 = vmatprep.subr.mxu0 0.0
    %1131 = vmatpush2.msra.mxu0 0.0
    %1132 = vmatprep.mubr.f32.mxu0 0.0
    %1133 = vmatmul.mubr.f32.gmra.mxu0 %v1023
    %v1134 = vpop.f32.mrf.mxu0
    %v1135 = vadd.f32 %v1061, %v1134
    %v1136 = vpop.f32.mrf.mxu0
    %v1137 = vadd.f32 %v1065, %v1136
    %1138 = vdwg.mxu0
    %v1141 = vcombine.low %v1135, %v1137
    %v1143 = vunpack.c.l.s4 1983009808
    %v1144 = vunpack.c.0.s8 %v1143
    %v1145 = vlaneseq
    %v1146 = vshrl.u32 %v1145, 7
    %v1147 = vsub.s32 %v1144, %v1146
    %v1148 = vrot.slane %v1141, %v1147
    %1150 = vst [vmem:[%s19] sm:$0xf] %v1148
    %v1151 = vld [vmem:[%s2] sm:$0x3]
    %v1152 = vld [vmem:[%s14] sm:$0xff]
    %v1153 = vld [vmem:[%s16] sm:$0x7]
    %v1154 = vld [vmem:[%s17] sm:$0xff]
    %v1155 = vld [vmem:[%s17 + $0x8] sm:$0xff]
    %v1156 = vld [vmem:[%s18] sm:$0xff]
    %v1157 = vld [vmem:[%s18 + $0x8] sm:$0xff]
    %v1158 = vld [vmem:[%s18 + $0x10] sm:$0xff]
    %v1159 = vld [vmem:[%s18 + $0x18] sm:$0xff]
    %v1160 = vld [vmem:[%s18 + $0x20] sm:$0xff]
    %v1161 = vld [vmem:[%s18 + $0x28] sm:$0xff]
    %v1162 = vld [vmem:[%s18 + $0x30] sm:$0xff]
    %v1163 = vld [vmem:[%s18 + $0x38] sm:$0xff]
    %v1164 = vld [vmem:[%s18 + $0x40] sm:$0xff]
    %v1165 = vld [vmem:[%s18 + $0x48] sm:$0xff]
    %v1166 = vld [vmem:[%s18 + $0x50] sm:$0xff]
    %v1167 = vld [vmem:[%s18 + $0x58] sm:$0xff]
    %v1168 = vld [vmem:[%s18 + $0x60] sm:$0xff]
    %v1169 = vld [vmem:[%s18 + $0x68] sm:$0xff]
    %v1170 = vld [vmem:[%s18 + $0x70] sm:$0xff]
    %v1171 = vld [vmem:[%s18 + $0x78] sm:$0xff]
    %v1172 = vld [vmem:[#allocation6] sm:$0xff]
    %v1173 = vld [vmem:[#allocation6 + $0x8] sm:$0xff]
    %v1174 = vld [vmem:[#allocation6 + $0x10] sm:$0xff]
    %v1175 = vld [vmem:[#allocation6 + $0x18] sm:$0xff]
    %v1176 = vld [vmem:[#allocation6 + $0x20] sm:$0xff]
    %v1177 = vld [vmem:[#allocation6 + $0x28] sm:$0xff]
    %v1178 = vld [vmem:[#allocation6 + $0x30] sm:$0xff]
    %v1179 = vld [vmem:[#allocation6 + $0x38] sm:$0xff]
    %v1180 = vld [vmem:[%s12] sm:$0xff]
    %v1181 = vld [vmem:[%s12 + $0x8] sm:$0xff]
    %v1182 = vld [vmem:[%s12 + $0x10] sm:$0xff]
    %v1183 = vld [vmem:[%s12 + $0x18] sm:$0xff]
    %v1184 = vld [vmem:[%s12 + $0x20] sm:$0xff]
    %v1185 = vld [vmem:[%s12 + $0x28] sm:$0xff]
    %v1186 = vld [vmem:[%s12 + $0x30] sm:$0xff]
    %v1187 = vld [vmem:[%s12 + $0x38] sm:$0xff]
    %v1188 = vld [vmem:[%s12 + $0x40] sm:$0xff]
    %v1189 = vld [vmem:[%s12 + $0x48] sm:$0xff]
    %v1190 = vld [vmem:[%s12 + $0x50] sm:$0xff]
    %v1191 = vld [vmem:[%s12 + $0x58] sm:$0xff]
    %v1192 = vld [vmem:[%s12 + $0x60] sm:$0xff]
    %v1193 = vld [vmem:[%s12 + $0x68] sm:$0xff]
    %v1194 = vld [vmem:[%s12 + $0x70] sm:$0xff]
    %v1195 = vld [vmem:[%s12 + $0x78] sm:$0xff]
    %v1196 = vld [vmem:[%s12 + $0x80] sm:$0xff]
    %v1197 = vld [vmem:[%s12 + $0x88] sm:$0xff]
    %v1198 = vld [vmem:[%s12 + $0x90] sm:$0xff]
    %v1199 = vld [vmem:[%s12 + $0x98] sm:$0xff]
    %v1200 = vld [vmem:[%s12 + $0xa0] sm:$0xff]
    %v1201 = vld [vmem:[%s12 + $0xa8] sm:$0xff]
    %v1202 = vld [vmem:[%s12 + $0xb0] sm:$0xff]
    %v1203 = vld [vmem:[%s12 + $0xb8] sm:$0xff]
    %v1204 = vld [vmem:[%s12 + $0xc0] sm:$0xff]
    %v1205 = vld [vmem:[%s12 + $0xc8] sm:$0xff]
    %v1206 = vld [vmem:[%s12 + $0xd0] sm:$0xff]
    %v1207 = vld [vmem:[%s12 + $0xd8] sm:$0xff]
    %v1208 = vld [vmem:[%s12 + $0xe0] sm:$0xff]
    %v1209 = vld [vmem:[%s12 + $0xe8] sm:$0xff]
    %v1210 = vld [vmem:[%s12 + $0xf0] sm:$0xff]
    %v1211 = vld [vmem:[%s12 + $0xf8] sm:$0xff]
    %v1212 = vld [vmem:[%s12 + $0x100] sm:$0xff]
    %v1213 = vld [vmem:[%s12 + $0x108] sm:$0xff]
    %v1214 = vld [vmem:[%s12 + $0x110] sm:$0xff]
    %v1215 = vld [vmem:[%s12 + $0x118] sm:$0xff]
    %v1216 = vld [vmem:[%s12 + $0x120] sm:$0xff]
    %v1217 = vld [vmem:[%s12 + $0x128] sm:$0xff]
    %v1218 = vld [vmem:[%s12 + $0x130] sm:$0xff]
    %v1219 = vld [vmem:[%s12 + $0x138] sm:$0xff]
    %v1220 = vld [vmem:[%s12 + $0x140] sm:$0xff]
    %v1221 = vld [vmem:[%s12 + $0x148] sm:$0xff]
    %v1222 = vld [vmem:[%s12 + $0x150] sm:$0xff]
    %v1223 = vld [vmem:[%s12 + $0x158] sm:$0xff]
    %v1224 = vld [vmem:[%s12 + $0x160] sm:$0xff]
    %v1225 = vld [vmem:[%s12 + $0x168] sm:$0xff]
    %v1226 = vld [vmem:[%s12 + $0x170] sm:$0xff]
    %v1227 = vld [vmem:[%s12 + $0x178] sm:$0xff]
    %v1228 = vld [vmem:[%s12 + $0x180] sm:$0xff]
    %v1229 = vld [vmem:[%s12 + $0x188] sm:$0xff]
    %v1230 = vld [vmem:[%s12 + $0x190] sm:$0xff]
    %v1231 = vld [vmem:[%s12 + $0x198] sm:$0xff]
    %v1232 = vld [vmem:[%s12 + $0x1a0] sm:$0xff]
    %v1233 = vld [vmem:[%s12 + $0x1a8] sm:$0xff]
    %v1234 = vld [vmem:[%s12 + $0x1b0] sm:$0xff]
    %v1235 = vld [vmem:[%s12 + $0x1b8] sm:$0xff]
    %v1236 = vld [vmem:[%s12 + $0x1c0] sm:$0xff]
    %v1237 = vld [vmem:[%s12 + $0x1c8] sm:$0xff]
    %v1238 = vld [vmem:[%s12 + $0x1d0] sm:$0xff]
    %v1239 = vld [vmem:[%s12 + $0x1d8] sm:$0xff]
    %v1240 = vld [vmem:[%s12 + $0x1e0] sm:$0xff]
    %v1241 = vld [vmem:[%s12 + $0x1e8] sm:$0xff]
    %v1242 = vld [vmem:[%s12 + $0x1f0] sm:$0xff]
    %v1243 = vld [vmem:[%s12 + $0x1f8] sm:$0xff]
    %v1244 = vld [vmem:[%s12 + $0x200] sm:$0xff]
    %v1245 = vld [vmem:[%s12 + $0x208] sm:$0xff]
    %v1246 = vld [vmem:[%s12 + $0x210] sm:$0xff]
    %v1247 = vld [vmem:[%s12 + $0x218] sm:$0xff]
    %v1248 = vld [vmem:[%s12 + $0x220] sm:$0xff]
    %v1249 = vld [vmem:[%s12 + $0x228] sm:$0xff]
    %v1250 = vld [vmem:[%s12 + $0x230] sm:$0xff]
    %v1251 = vld [vmem:[%s12 + $0x238] sm:$0xff]
    %v1252 = vld [vmem:[%s12 + $0x240] sm:$0xff]
    %v1253 = vld [vmem:[%s12 + $0x248] sm:$0xff]
    %v1254 = vld [vmem:[%s12 + $0x250] sm:$0xff]
    %v1255 = vld [vmem:[%s12 + $0x258] sm:$0xff]
    %v1256 = vld [vmem:[%s12 + $0x260] sm:$0xff]
    %v1257 = vld [vmem:[%s12 + $0x268] sm:$0xff]
    %v1258 = vld [vmem:[%s12 + $0x270] sm:$0xff]
    %v1259 = vld [vmem:[%s12 + $0x278] sm:$0xff]
    %v1260 = vld [vmem:[%s12 + $0x280] sm:$0xff]
    %v1261 = vld [vmem:[%s12 + $0x288] sm:$0xff]
    %v1262 = vld [vmem:[%s12 + $0x290] sm:$0xff]
    %v1263 = vld [vmem:[%s12 + $0x298] sm:$0xff]
    %v1264 = vld [vmem:[%s12 + $0x2a0] sm:$0xff]
    %v1265 = vld [vmem:[%s12 + $0x2a8] sm:$0xff]
    %v1266 = vld [vmem:[%s12 + $0x2b0] sm:$0xff]
    %v1267 = vld [vmem:[%s12 + $0x2b8] sm:$0xff]
    %v1268 = vld [vmem:[%s12 + $0x2c0] sm:$0xff]
    %v1269 = vld [vmem:[%s12 + $0x2c8] sm:$0xff]
    %v1270 = vld [vmem:[%s12 + $0x2d0] sm:$0xff]
    %v1271 = vld [vmem:[%s12 + $0x2d8] sm:$0xff]
    %v1272 = vld [vmem:[%s12 + $0x2e0] sm:$0xff]
    %v1273 = vld [vmem:[%s12 + $0x2e8] sm:$0xff]
    %v1274 = vld [vmem:[%s12 + $0x2f0] sm:$0xff]
    %v1275 = vld [vmem:[%s12 + $0x2f8] sm:$0xff]
    %v1276 = vld [vmem:[%s12 + $0x300] sm:$0xff]
    %v1277 = vld [vmem:[%s12 + $0x308] sm:$0xff]
    %v1278 = vld [vmem:[%s12 + $0x310] sm:$0xff]
    %v1279 = vld [vmem:[%s12 + $0x318] sm:$0xff]
    %v1280 = vld [vmem:[%s12 + $0x320] sm:$0xff]
    %v1281 = vld [vmem:[%s12 + $0x328] sm:$0xff]
    %v1282 = vld [vmem:[%s12 + $0x330] sm:$0xff]
    %v1283 = vld [vmem:[%s12 + $0x338] sm:$0xff]
    %v1284 = vld [vmem:[%s12 + $0x340] sm:$0xff]
    %v1285 = vld [vmem:[%s12 + $0x348] sm:$0xff]
    %v1286 = vld [vmem:[%s12 + $0x350] sm:$0xff]
    %v1287 = vld [vmem:[%s12 + $0x358] sm:$0xff]
    %v1288 = vld [vmem:[%s12 + $0x360] sm:$0xff]
    %v1289 = vld [vmem:[%s12 + $0x368] sm:$0xff]
    %v1290 = vld [vmem:[%s12 + $0x370] sm:$0xff]
    %v1291 = vld [vmem:[%s12 + $0x378] sm:$0xff]
    %v1292 = vld [vmem:[%s12 + $0x380] sm:$0xff]
    %v1293 = vld [vmem:[%s12 + $0x388] sm:$0xff]
    %v1294 = vld [vmem:[%s12 + $0x390] sm:$0xff]
    %v1295 = vld [vmem:[%s12 + $0x398] sm:$0xff]
    %v1296 = vld [vmem:[%s12 + $0x3a0] sm:$0xff]
    %v1297 = vld [vmem:[%s12 + $0x3a8] sm:$0xff]
    %v1298 = vld [vmem:[%s12 + $0x3b0] sm:$0xff]
    %v1299 = vld [vmem:[%s12 + $0x3b8] sm:$0xff]
    %v1300 = vld [vmem:[%s12 + $0x3c0] sm:$0xff]
    %v1301 = vld [vmem:[%s12 + $0x3c8] sm:$0xff]
    %v1302 = vld [vmem:[%s12 + $0x3d0] sm:$0xff]
    %v1303 = vld [vmem:[%s12 + $0x3d8] sm:$0xff]
    %v1304 = vld [vmem:[%s12 + $0x3e0] sm:$0xff]
    %v1305 = vld [vmem:[%s12 + $0x3e8] sm:$0xff]
    %v1306 = vld [vmem:[%s12 + $0x3f0] sm:$0xff]
    %v1307 = vld [vmem:[%s12 + $0x3f8] sm:$0xff]
    %v1308 = vld [vmem:[#allocation7] sm:$0xff]
    %v1309 = vld [vmem:[%s10] sm:$0xff]
    %v1310 = vld [vmem:[%s10 + $0x8] sm:$0xff]
    %v1311 = vld [vmem:[%s10 + $0x10] sm:$0xff]
    %v1312 = vld [vmem:[%s10 + $0x18] sm:$0xff]
    %v1313 = vld [vmem:[%s10 + $0x20] sm:$0xff]
    %v1314 = vld [vmem:[%s10 + $0x28] sm:$0xff]
    %v1315 = vld [vmem:[%s10 + $0x30] sm:$0xff]
    %v1316 = vld [vmem:[%s10 + $0x38] sm:$0xff]
    %v1317 = vld [vmem:[%s10 + $0x40] sm:$0xff]
    %v1318 = vld [vmem:[%s10 + $0x48] sm:$0xff]
    %v1319 = vld [vmem:[%s10 + $0x50] sm:$0xff]
    %v1320 = vld [vmem:[%s10 + $0x58] sm:$0xff]
    %v1321 = vld [vmem:[%s10 + $0x60] sm:$0xff]
    %v1322 = vld [vmem:[%s10 + $0x68] sm:$0xff]
    %v1323 = vld [vmem:[%s10 + $0x70] sm:$0xff]
    %v1324 = vld [vmem:[%s10 + $0x78] sm:$0xff]
    %v1325 = vld [vmem:[%s10 + $0x80] sm:$0xff]
    %v1326 = vld [vmem:[%s10 + $0x88] sm:$0xff]
    %v1327 = vld [vmem:[%s10 + $0x90] sm:$0xff]
    %v1328 = vld [vmem:[%s10 + $0x98] sm:$0xff]
    %v1329 = vld [vmem:[%s10 + $0xa0] sm:$0xff]
    %v1330 = vld [vmem:[%s10 + $0xa8] sm:$0xff]
    %v1331 = vld [vmem:[%s10 + $0xb0] sm:$0xff]
    %v1332 = vld [vmem:[%s10 + $0xb8] sm:$0xff]
    %v1333 = vld [vmem:[%s10 + $0xc0] sm:$0xff]
    %v1334 = vld [vmem:[%s10 + $0xc8] sm:$0xff]
    %v1335 = vld [vmem:[%s10 + $0xd0] sm:$0xff]
    %v1336 = vld [vmem:[%s10 + $0xd8] sm:$0xff]
    %v1337 = vld [vmem:[%s10 + $0xe0] sm:$0xff]
    %v1338 = vld [vmem:[%s10 + $0xe8] sm:$0xff]
    %v1339 = vld [vmem:[%s10 + $0xf0] sm:$0xff]
    %v1340 = vld [vmem:[%s10 + $0xf8] sm:$0xff]
    %v1341 = vld [vmem:[%s10 + $0x100] sm:$0xff]
    %v1342 = vld [vmem:[%s10 + $0x108] sm:$0xff]
    %v1343 = vld [vmem:[%s10 + $0x110] sm:$0xff]
    %v1344 = vld [vmem:[%s10 + $0x118] sm:$0xff]
    %v1345 = vld [vmem:[%s10 + $0x120] sm:$0xff]
    %v1346 = vld [vmem:[%s10 + $0x128] sm:$0xff]
    %v1347 = vld [vmem:[%s10 + $0x130] sm:$0xff]
    %v1348 = vld [vmem:[%s10 + $0x138] sm:$0xff]
    %v1349 = vld [vmem:[%s10 + $0x140] sm:$0xff]
    %v1350 = vld [vmem:[%s10 + $0x148] sm:$0xff]
    %v1351 = vld [vmem:[%s10 + $0x150] sm:$0xff]
    %v1352 = vld [vmem:[%s10 + $0x158] sm:$0xff]
    %v1353 = vld [vmem:[%s10 + $0x160] sm:$0xff]
    %v1354 = vld [vmem:[%s10 + $0x168] sm:$0xff]
    %v1355 = vld [vmem:[%s10 + $0x170] sm:$0xff]
    %v1356 = vld [vmem:[%s10 + $0x178] sm:$0xff]
    %v1357 = vld [vmem:[%s10 + $0x180] sm:$0xff]
    %v1358 = vld [vmem:[%s10 + $0x188] sm:$0xff]
    %v1359 = vld [vmem:[%s10 + $0x190] sm:$0xff]
    %v1360 = vld [vmem:[%s10 + $0x198] sm:$0xff]
    %v1361 = vld [vmem:[%s10 + $0x1a0] sm:$0xff]
    %v1362 = vld [vmem:[%s10 + $0x1a8] sm:$0xff]
    %v1363 = vld [vmem:[%s10 + $0x1b0] sm:$0xff]
    %v1364 = vld [vmem:[%s10 + $0x1b8] sm:$0xff]
    %v1365 = vld [vmem:[%s10 + $0x1c0] sm:$0xff]
    %v1366 = vld [vmem:[%s10 + $0x1c8] sm:$0xff]
    %v1367 = vld [vmem:[%s10 + $0x1d0] sm:$0xff]
    %v1368 = vld [vmem:[%s10 + $0x1d8] sm:$0xff]
    %v1369 = vld [vmem:[%s10 + $0x1e0] sm:$0xff]
    %v1370 = vld [vmem:[%s10 + $0x1e8] sm:$0xff]
    %v1371 = vld [vmem:[%s10 + $0x1f0] sm:$0xff]
    %v1372 = vld [vmem:[%s10 + $0x1f8] sm:$0xff]
    %v1373 = vld [vmem:[%s10 + $0x200] sm:$0xff]
    %v1374 = vld [vmem:[%s10 + $0x208] sm:$0xff]
    %v1375 = vld [vmem:[%s10 + $0x210] sm:$0xff]
    %v1376 = vld [vmem:[%s10 + $0x218] sm:$0xff]
    %v1377 = vld [vmem:[%s10 + $0x220] sm:$0xff]
    %v1378 = vld [vmem:[%s10 + $0x228] sm:$0xff]
    %v1379 = vld [vmem:[%s10 + $0x230] sm:$0xff]
    %v1380 = vld [vmem:[%s10 + $0x238] sm:$0xff]
    %v1381 = vld [vmem:[%s10 + $0x240] sm:$0xff]
    %v1382 = vld [vmem:[%s10 + $0x248] sm:$0xff]
    %v1383 = vld [vmem:[%s10 + $0x250] sm:$0xff]
    %v1384 = vld [vmem:[%s10 + $0x258] sm:$0xff]
    %v1385 = vld [vmem:[%s10 + $0x260] sm:$0xff]
    %v1386 = vld [vmem:[%s10 + $0x268] sm:$0xff]
    %v1387 = vld [vmem:[%s10 + $0x270] sm:$0xff]
    %v1388 = vld [vmem:[%s10 + $0x278] sm:$0xff]
    %v1389 = vld [vmem:[%s10 + $0x280] sm:$0xff]
    %v1390 = vld [vmem:[%s10 + $0x288] sm:$0xff]
    %v1391 = vld [vmem:[%s10 + $0x290] sm:$0xff]
    %v1392 = vld [vmem:[%s10 + $0x298] sm:$0xff]
    %v1393 = vld [vmem:[%s10 + $0x2a0] sm:$0xff]
    %v1394 = vld [vmem:[%s10 + $0x2a8] sm:$0xff]
    %v1395 = vld [vmem:[%s10 + $0x2b0] sm:$0xff]
    %v1396 = vld [vmem:[%s10 + $0x2b8] sm:$0xff]
    %v1397 = vld [vmem:[%s10 + $0x2c0] sm:$0xff]
    %v1398 = vld [vmem:[%s10 + $0x2c8] sm:$0xff]
    %v1399 = vld [vmem:[%s10 + $0x2d0] sm:$0xff]
    %v1400 = vld [vmem:[%s10 + $0x2d8] sm:$0xff]
    %v1401 = vld [vmem:[%s10 + $0x2e0] sm:$0xff]
    %v1402 = vld [vmem:[%s10 + $0x2e8] sm:$0xff]
    %v1403 = vld [vmem:[%s10 + $0x2f0] sm:$0xff]
    %v1404 = vld [vmem:[%s10 + $0x2f8] sm:$0xff]
    %v1405 = vld [vmem:[%s10 + $0x300] sm:$0xff]
    %v1406 = vld [vmem:[%s10 + $0x308] sm:$0xff]
    %v1407 = vld [vmem:[%s10 + $0x310] sm:$0xff]
    %v1408 = vld [vmem:[%s10 + $0x318] sm:$0xff]
    %v1409 = vld [vmem:[%s10 + $0x320] sm:$0xff]
    %v1410 = vld [vmem:[%s10 + $0x328] sm:$0xff]
    %v1411 = vld [vmem:[%s10 + $0x330] sm:$0xff]
    %v1412 = vld [vmem:[%s10 + $0x338] sm:$0xff]
    %v1413 = vld [vmem:[%s10 + $0x340] sm:$0xff]
    %v1414 = vld [vmem:[%s10 + $0x348] sm:$0xff]
    %v1415 = vld [vmem:[%s10 + $0x350] sm:$0xff]
    %v1416 = vld [vmem:[%s10 + $0x358] sm:$0xff]
    %v1417 = vld [vmem:[%s10 + $0x360] sm:$0xff]
    %v1418 = vld [vmem:[%s10 + $0x368] sm:$0xff]
    %v1419 = vld [vmem:[%s10 + $0x370] sm:$0xff]
    %v1420 = vld [vmem:[%s10 + $0x378] sm:$0xff]
    %v1421 = vld [vmem:[%s10 + $0x380] sm:$0xff]
    %v1422 = vld [vmem:[%s10 + $0x388] sm:$0xff]
    %v1423 = vld [vmem:[%s10 + $0x390] sm:$0xff]
    %v1424 = vld [vmem:[%s10 + $0x398] sm:$0xff]
    %v1425 = vld [vmem:[%s10 + $0x3a0] sm:$0xff]
    %v1426 = vld [vmem:[%s10 + $0x3a8] sm:$0xff]
    %v1427 = vld [vmem:[%s10 + $0x3b0] sm:$0xff]
    %v1428 = vld [vmem:[%s10 + $0x3b8] sm:$0xff]
    %v1429 = vld [vmem:[%s10 + $0x3c0] sm:$0xff]
    %v1430 = vld [vmem:[%s10 + $0x3c8] sm:$0xff]
    %v1431 = vld [vmem:[%s10 + $0x3d0] sm:$0xff]
    %v1432 = vld [vmem:[%s10 + $0x3d8] sm:$0xff]
    %v1433 = vld [vmem:[%s10 + $0x3e0] sm:$0xff]
    %v1434 = vld [vmem:[%s10 + $0x3e8] sm:$0xff]
    %v1435 = vld [vmem:[%s10 + $0x3f0] sm:$0xff]
    %v1436 = vld [vmem:[%s10 + $0x3f8] sm:$0xff]
    %1437 = vmatprep.subr.mxu0 %v1430
    %1438 = vmatpush1.msra.mxu0 %v1429
    %1439 = vmatprep.subr.mxu0 %v1422
    %1440 = vmatpush1.msra.mxu0 %v1421
    %1441 = vmatprep.subr.mxu0 %v1414
    %1442 = vmatpush1.msra.mxu0 %v1413
    %1443 = vmatprep.subr.mxu0 %v1406
    %1444 = vmatpush1.msra.mxu0 %v1405
    %1445 = vmatprep.subr.mxu0 %v1398
    %1446 = vmatpush1.msra.mxu0 %v1397
    %1447 = vmatprep.subr.mxu0 %v1390
    %1448 = vmatpush1.msra.mxu0 %v1389
    %1449 = vmatprep.subr.mxu0 %v1382
    %1450 = vmatpush1.msra.mxu0 %v1381
    %1451 = vmatprep.subr.mxu0 %v1374
    %1452 = vmatpush1.msra.mxu0 %v1373
    %1453 = vmatprep.subr.mxu0 %v1366
    %1454 = vmatpush1.msra.mxu0 %v1365
    %1455 = vmatprep.subr.mxu0 %v1358
    %1456 = vmatpush1.msra.mxu0 %v1357
    %1457 = vmatprep.subr.mxu0 %v1350
    %1458 = vmatpush1.msra.mxu0 %v1349
    %1459 = vmatprep.subr.mxu0 %v1342
    %1460 = vmatpush1.msra.mxu0 %v1341
    %1461 = vmatprep.subr.mxu0 %v1334
    %1462 = vmatpush1.msra.mxu0 %v1333
    %1463 = vmatprep.subr.mxu0 %v1326
    %1464 = vmatpush1.msra.mxu0 %v1325
    %1465 = vmatprep.subr.mxu0 %v1318
    %1466 = vmatpush1.msra.mxu0 %v1317
    %1467 = vmatprep.subr.mxu0 %v1310
    %1468 = vmatpush1.msra.mxu0 %v1309
    %1469 = vmatprep.subr.mxu0 0.0
    %1470 = vmatpush2.msra.mxu0 0.0
    %1471 = vmatprep.subr.mxu0 0.0
    %1472 = vmatpush2.msra.mxu0 0.0
    %1473 = vmatprep.subr.mxu0 0.0
    %1474 = vmatpush2.msra.mxu0 0.0
    %1475 = vmatprep.subr.mxu0 0.0
    %1476 = vmatpush2.msra.mxu0 0.0
    %1477 = vmatprep.subr.mxu0 0.0
    %1478 = vmatpush2.msra.mxu0 0.0
    %1479 = vmatprep.subr.mxu0 0.0
    %1480 = vmatpush2.msra.mxu0 0.0
    %1481 = vmatprep.subr.mxu0 0.0
    %1482 = vmatpush2.msra.mxu0 0.0
    %1483 = vmatprep.subr.mxu0 0.0
    %1484 = vmatpush2.msra.mxu0 0.0
    %1485 = vmatprep.subr.mxu0 0.0
    %1486 = vmatpush2.msra.mxu0 0.0
    %1487 = vmatprep.subr.mxu0 0.0
    %1488 = vmatpush2.msra.mxu0 0.0
    %1489 = vmatprep.subr.mxu0 0.0
    %1490 = vmatpush2.msra.mxu0 0.0
    %1491 = vmatprep.subr.mxu0 0.0
    %1492 = vmatpush2.msra.mxu0 0.0
    %1493 = vmatprep.subr.mxu0 0.0
    %1494 = vmatpush2.msra.mxu0 0.0
    %1495 = vmatprep.subr.mxu0 0.0
    %1496 = vmatpush2.msra.mxu0 0.0
    %1497 = vmatprep.subr.mxu0 0.0
    %1498 = vmatpush2.msra.mxu0 0.0
    %1499 = vmatprep.subr.mxu0 0.0
    %1500 = vmatpush2.msra.mxu0 0.0
    %1501 = vmatprep.mubr.f32.mxu0 0.0
    %1502 = vmatmul.mubr.f32.gmra.mxu0 %v1023
    %v1503 = vpop.f32.mrf.mxu0
    %v1504 = vadd.f32 0.0, %v1503
    %v1505 = vpop.f32.mrf.mxu0
    %v1506 = vadd.f32 0.0, %v1505
    %1507 = vdwg.mxu0
    %1508 = vmatprep.subr.mxu0 %v1432
    %1509 = vmatpush1.msra.mxu0 %v1431
    %1510 = vmatprep.subr.mxu0 %v1424
    %1511 = vmatpush1.msra.mxu0 %v1423
    %1512 = vmatprep.subr.mxu0 %v1416
    %1513 = vmatpush1.msra.mxu0 %v1415
    %1514 = vmatprep.subr.mxu0 %v1408
    %1515 = vmatpush1.msra.mxu0 %v1407
    %1516 = vmatprep.subr.mxu0 %v1400
    %1517 = vmatpush1.msra.mxu0 %v1399
    %1518 = vmatprep.subr.mxu0 %v1392
    %1519 = vmatpush1.msra.mxu0 %v1391
    %1520 = vmatprep.subr.mxu0 %v1384
    %1521 = vmatpush1.msra.mxu0 %v1383
    %1522 = vmatprep.subr.mxu0 %v1376
    %1523 = vmatpush1.msra.mxu0 %v1375
    %1524 = vmatprep.subr.mxu0 %v1368
    %1525 = vmatpush1.msra.mxu0 %v1367
    %1526 = vmatprep.subr.mxu0 %v1360
    %1527 = vmatpush1.msra.mxu0 %v1359
    %1528 = vmatprep.subr.mxu0 %v1352
    %1529 = vmatpush1.msra.mxu0 %v1351
    %1530 = vmatprep.subr.mxu0 %v1344
    %1531 = vmatpush1.msra.mxu0 %v1343
    %1532 = vmatprep.subr.mxu0 %v1336
    %1533 = vmatpush1.msra.mxu0 %v1335
    %1534 = vmatprep.subr.mxu0 %v1328
    %1535 = vmatpush1.msra.mxu0 %v1327
    %1536 = vmatprep.subr.mxu0 %v1320
    %1537 = vmatpush1.msra.mxu0 %v1319
    %1538 = vmatprep.subr.mxu0 %v1312
    %1539 = vmatpush1.msra.mxu0 %v1311
    %1540 = vmatprep.subr.mxu0 0.0
    %1541 = vmatpush2.msra.mxu0 0.0
    %1542 = vmatprep.subr.mxu0 0.0
    %1543 = vmatpush2.msra.mxu0 0.0
    %1544 = vmatprep.subr.mxu0 0.0
    %1545 = vmatpush2.msra.mxu0 0.0
    %1546 = vmatprep.subr.mxu0 0.0
    %1547 = vmatpush2.msra.mxu0 0.0
    %1548 = vmatprep.subr.mxu0 0.0
    %1549 = vmatpush2.msra.mxu0 0.0
    %1550 = vmatprep.subr.mxu0 0.0
    %1551 = vmatpush2.msra.mxu0 0.0
    %1552 = vmatprep.subr.mxu0 0.0
    %1553 = vmatpush2.msra.mxu0 0.0
    %1554 = vmatprep.subr.mxu0 0.0
    %1555 = vmatpush2.msra.mxu0 0.0
    %1556 = vmatprep.subr.mxu0 0.0
    %1557 = vmatpush2.msra.mxu0 0.0
    %1558 = vmatprep.subr.mxu0 0.0
    %1559 = vmatpush2.msra.mxu0 0.0
    %1560 = vmatprep.subr.mxu0 0.0
    %1561 = vmatpush2.msra.mxu0 0.0
    %1562 = vmatprep.subr.mxu0 0.0
    %1563 = vmatpush2.msra.mxu0 0.0
    %1564 = vmatprep.subr.mxu0 0.0
    %1565 = vmatpush2.msra.mxu0 0.0
    %1566 = vmatprep.subr.mxu0 0.0
    %1567 = vmatpush2.msra.mxu0 0.0
    %1568 = vmatprep.subr.mxu0 0.0
    %1569 = vmatpush2.msra.mxu0 0.0
    %1570 = vmatprep.subr.mxu0 0.0
    %1571 = vmatpush2.msra.mxu0 0.0
    %1572 = vmatprep.mubr.f32.mxu0 0.0
    %1573 = vmatmul.mubr.f32.gmra.mxu0 %v1023
    %v1574 = vpop.f32.mrf.mxu0
    %v1575 = vadd.f32 0.0, %v1574
    %v1576 = vpop.f32.mrf.mxu0
    %v1577 = vadd.f32 0.0, %v1576
    %1578 = vdwg.mxu0
    %1579 = vmatprep.subr.mxu0 %v1434
    %1580 = vmatpush1.msra.mxu0 %v1433
    %1581 = vmatprep.subr.mxu0 %v1426
    %1582 = vmatpush1.msra.mxu0 %v1425
    %1583 = vmatprep.subr.mxu0 %v1418
    %1584 = vmatpush1.msra.mxu0 %v1417
    %1585 = vmatprep.subr.mxu0 %v1410
    %1586 = vmatpush1.msra.mxu0 %v1409
    %1587 = vmatprep.subr.mxu0 %v1402
    %1588 = vmatpush1.msra.mxu0 %v1401
    %1589 = vmatprep.subr.mxu0 %v1394
    %1590 = vmatpush1.msra.mxu0 %v1393
    %1591 = vmatprep.subr.mxu0 %v1386
    %1592 = vmatpush1.msra.mxu0 %v1385
    %1593 = vmatprep.subr.mxu0 %v1378
    %1594 = vmatpush1.msra.mxu0 %v1377
    %1595 = vmatprep.subr.mxu0 %v1370
    %1596 = vmatpush1.msra.mxu0 %v1369
    %1597 = vmatprep.subr.mxu0 %v1362
    %1598 = vmatpush1.msra.mxu0 %v1361
    %1599 = vmatprep.subr.mxu0 %v1354
    %1600 = vmatpush1.msra.mxu0 %v1353
    %1601 = vmatprep.subr.mxu0 %v1346
    %1602 = vmatpush1.msra.mxu0 %v1345
    %1603 = vmatprep.subr.mxu0 %v1338
    %1604 = vmatpush1.msra.mxu0 %v1337
    %1605 = vmatprep.subr.mxu0 %v1330
    %1606 = vmatpush1.msra.mxu0 %v1329
    %1607 = vmatprep.subr.mxu0 %v1322
    %1608 = vmatpush1.msra.mxu0 %v1321
    %1609 = vmatprep.subr.mxu0 %v1314
    %1610 = vmatpush1.msra.mxu0 %v1313
    %1611 = vmatprep.subr.mxu0 0.0
    %1612 = vmatpush2.msra.mxu0 0.0
    %1613 = vmatprep.subr.mxu0 0.0
    %1614 = vmatpush2.msra.mxu0 0.0
    %1615 = vmatprep.subr.mxu0 0.0
    %1616 = vmatpush2.msra.mxu0 0.0
    %1617 = vmatprep.subr.mxu0 0.0
    %1618 = vmatpush2.msra.mxu0 0.0
    %1619 = vmatprep.subr.mxu0 0.0
    %1620 = vmatpush2.msra.mxu0 0.0
    %1621 = vmatprep.subr.mxu0 0.0
    %1622 = vmatpush2.msra.mxu0 0.0
    %1623 = vmatprep.subr.mxu0 0.0
    %1624 = vmatpush2.msra.mxu0 0.0
    %1625 = vmatprep.subr.mxu0 0.0
    %1626 = vmatpush2.msra.mxu0 0.0
    %1627 = vmatprep.subr.mxu0 0.0
    %1628 = vmatpush2.msra.mxu0 0.0
    %1629 = vmatprep.subr.mxu0 0.0
    %1630 = vmatpush2.msra.mxu0 0.0
    %1631 = vmatprep.subr.mxu0 0.0
    %1632 = vmatpush2.msra.mxu0 0.0
    %1633 = vmatprep.subr.mxu0 0.0
    %1634 = vmatpush2.msra.mxu0 0.0
    %1635 = vmatprep.subr.mxu0 0.0
    %1636 = vmatpush2.msra.mxu0 0.0
    %1637 = vmatprep.subr.mxu0 0.0
    %1638 = vmatpush2.msra.mxu0 0.0
    %1639 = vmatprep.subr.mxu0 0.0
    %1640 = vmatpush2.msra.mxu0 0.0
    %1641 = vmatprep.subr.mxu0 0.0
    %1642 = vmatpush2.msra.mxu0 0.0
    %1643 = vmatprep.mubr.f32.mxu0 0.0
    %1644 = vmatmul.mubr.f32.gmra.mxu0 %v1023
    %v1645 = vpop.f32.mrf.mxu0
    %v1646 = vadd.f32 0.0, %v1645
    %v1647 = vpop.f32.mrf.mxu0
    %v1648 = vadd.f32 0.0, %v1647
    %1649 = vdwg.mxu0
    %1650 = vmatprep.subr.mxu0 %v1436
    %1651 = vmatpush1.msra.mxu0 %v1435
    %1652 = vmatprep.subr.mxu0 %v1428
    %1653 = vmatpush1.msra.mxu0 %v1427
    %1654 = vmatprep.subr.mxu0 %v1420
    %1655 = vmatpush1.msra.mxu0 %v1419
    %1656 = vmatprep.subr.mxu0 %v1412
    %1657 = vmatpush1.msra.mxu0 %v1411
    %1658 = vmatprep.subr.mxu0 %v1404
    %1659 = vmatpush1.msra.mxu0 %v1403
    %1660 = vmatprep.subr.mxu0 %v1396
    %1661 = vmatpush1.msra.mxu0 %v1395
    %1662 = vmatprep.subr.mxu0 %v1388
    %1663 = vmatpush1.msra.mxu0 %v1387
    %1664 = vmatprep.subr.mxu0 %v1380
    %1665 = vmatpush1.msra.mxu0 %v1379
    %1666 = vmatprep.subr.mxu0 %v1372
    %1667 = vmatpush1.msra.mxu0 %v1371
    %1668 = vmatprep.subr.mxu0 %v1364
    %1669 = vmatpush1.msra.mxu0 %v1363
    %1670 = vmatprep.subr.mxu0 %v1356
    %1671 = vmatpush1.msra.mxu0 %v1355
    %1672 = vmatprep.subr.mxu0 %v1348
    %1673 = vmatpush1.msra.mxu0 %v1347
    %1674 = vmatprep.subr.mxu0 %v1340
    %1675 = vmatpush1.msra.mxu0 %v1339
    %1676 = vmatprep.subr.mxu0 %v1332
    %1677 = vmatpush1.msra.mxu0 %v1331
    %1678 = vmatprep.subr.mxu0 %v1324
    %1679 = vmatpush1.msra.mxu0 %v1323
    %1680 = vmatprep.subr.mxu0 %v1316
    %1681 = vmatpush1.msra.mxu0 %v1315
    %1682 = vmatprep.subr.mxu0 0.0
    %1683 = vmatpush2.msra.mxu0 0.0
    %1684 = vmatprep.subr.mxu0 0.0
    %1685 = vmatpush2.msra.mxu0 0.0
    %1686 = vmatprep.subr.mxu0 0.0
    %1687 = vmatpush2.msra.mxu0 0.0
    %1688 = vmatprep.subr.mxu0 0.0
    %1689 = vmatpush2.msra.mxu0 0.0
    %1690 = vmatprep.subr.mxu0 0.0
    %1691 = vmatpush2.msra.mxu0 0.0
    %1692 = vmatprep.subr.mxu0 0.0
    %1693 = vmatpush2.msra.mxu0 0.0
    %1694 = vmatprep.subr.mxu0 0.0
    %1695 = vmatpush2.msra.mxu0 0.0
    %1696 = vmatprep.subr.mxu0 0.0
    %1697 = vmatpush2.msra.mxu0 0.0
    %1698 = vmatprep.subr.mxu0 0.0
    %1699 = vmatpush2.msra.mxu0 0.0
    %1700 = vmatprep.subr.mxu0 0.0
    %1701 = vmatpush2.msra.mxu0 0.0
    %1702 = vmatprep.subr.mxu0 0.0
    %1703 = vmatpush2.msra.mxu0 0.0
    %1704 = vmatprep.subr.mxu0 0.0
    %1705 = vmatpush2.msra.mxu0 0.0
    %1706 = vmatprep.subr.mxu0 0.0
    %1707 = vmatpush2.msra.mxu0 0.0
    %1708 = vmatprep.subr.mxu0 0.0
    %1709 = vmatpush2.msra.mxu0 0.0
    %1710 = vmatprep.subr.mxu0 0.0
    %1711 = vmatpush2.msra.mxu0 0.0
    %1712 = vmatprep.subr.mxu0 0.0
    %1713 = vmatpush2.msra.mxu0 0.0
    %1714 = vmatprep.mubr.f32.mxu0 0.0
    %1715 = vmatmul.mubr.f32.gmra.mxu0 %v1023
    %v1716 = vpop.f32.mrf.mxu0
    %v1717 = vadd.f32 0.0, %v1716
    %v1718 = vpop.f32.mrf.mxu0
    %v1719 = vadd.f32 0.0, %v1718
    %1720 = vdwg.mxu0
    %v1721 = vlaneseq
    %v1722 = vshrl.u32 %v1721, 7
    %v1723 = vsub.s32 0, %v1722
    %v1724 = vrot.slane %v1504, %v1723
    %v1725 = vlaneseq
    %v1726 = vshrl.u32 %v1725, 7
    %v1727 = vsub.s32 0, %v1726
    %v1728 = vrot.slane %v1506, %v1727
    %v1729 = vlaneseq
    %v1730 = vshrl.u32 %v1729, 7
    %v1731 = vsub.s32 0, %v1730
    %v1732 = vrot.slane %v1575, %v1731
    %v1733 = vlaneseq
    %v1734 = vshrl.u32 %v1733, 7
    %v1735 = vsub.s32 0, %v1734
    %v1736 = vrot.slane %v1577, %v1735
    %v1737 = vlaneseq
    %v1738 = vshrl.u32 %v1737, 7
    %v1739 = vsub.s32 0, %v1738
    %v1740 = vrot.slane %v1646, %v1739
    %v1741 = vlaneseq
    %v1742 = vshrl.u32 %v1741, 7
    %v1743 = vsub.s32 0, %v1742
    %v1744 = vrot.slane %v1648, %v1743
    %v1745 = vlaneseq
    %v1746 = vshrl.u32 %v1745, 7
    %v1747 = vsub.s32 0, %v1746
    %v1748 = vrot.slane %v1717, %v1747
    %v1749 = vlaneseq
    %v1750 = vshrl.u32 %v1749, 7
    %v1751 = vsub.s32 0, %v1750
    %v1752 = vrot.slane %v1719, %v1751
    %v1753 = vmul.f32 %v1172, %v1724
    %v1754 = vmul.f32 %v1173, %v1728
    %v1755 = vmul.f32 %v1174, %v1732
    %v1756 = vmul.f32 %v1175, %v1736
    %v1757 = vmul.f32 %v1176, %v1740
    %v1758 = vmul.f32 %v1177, %v1744
    %v1759 = vmul.f32 %v1178, %v1748
    %v1760 = vmul.f32 %v1179, %v1752
    %1761 = vmatprep.subr.mxu0 0.0
    %1762 = vmatpush1.msra.mxu0 %v1195
    %1763 = vmatprep.subr.mxu0 0.0
    %1764 = vmatpush1.msra.mxu0 %v1194
    %1765 = vmatprep.subr.mxu0 0.0
    %1766 = vmatpush1.msra.mxu0 %v1193
    %1767 = vmatprep.subr.mxu0 0.0
    %1768 = vmatpush1.msra.mxu0 %v1192
    %1769 = vmatprep.subr.mxu0 0.0
    %1770 = vmatpush1.msra.mxu0 %v1191
    %1771 = vmatprep.subr.mxu0 0.0
    %1772 = vmatpush1.msra.mxu0 %v1190
    %1773 = vmatprep.subr.mxu0 0.0
    %1774 = vmatpush1.msra.mxu0 %v1189
    %1775 = vmatprep.subr.mxu0 0.0
    %1776 = vmatpush1.msra.mxu0 %v1188
    %1777 = vmatprep.subr.mxu0 0.0
    %1778 = vmatpush1.msra.mxu0 %v1187
    %1779 = vmatprep.subr.mxu0 0.0
    %1780 = vmatpush1.msra.mxu0 %v1186
    %1781 = vmatprep.subr.mxu0 0.0
    %1782 = vmatpush1.msra.mxu0 %v1185
    %1783 = vmatprep.subr.mxu0 0.0
    %1784 = vmatpush1.msra.mxu0 %v1184
    %1785 = vmatprep.subr.mxu0 0.0
    %1786 = vmatpush1.msra.mxu0 %v1183
    %1787 = vmatprep.subr.mxu0 0.0
    %1788 = vmatpush1.msra.mxu0 %v1182
    %1789 = vmatprep.subr.mxu0 0.0
    %1790 = vmatpush1.msra.mxu0 %v1181
    %1791 = vmatprep.subr.mxu0 0.0
    %1792 = vmatpush1.msra.mxu0 %v1180
    %1793 = vmatprep.subr.mxu0 0.0
    %1794 = vmatpush2.msra.mxu0 %v1211
    %1795 = vmatprep.subr.mxu0 0.0
    %1796 = vmatpush2.msra.mxu0 %v1210
    %1797 = vmatprep.subr.mxu0 0.0
    %1798 = vmatpush2.msra.mxu0 %v1209
    %1799 = vmatprep.subr.mxu0 0.0
    %1800 = vmatpush2.msra.mxu0 %v1208
    %1801 = vmatprep.subr.mxu0 0.0
    %1802 = vmatpush2.msra.mxu0 %v1207
    %1803 = vmatprep.subr.mxu0 0.0
    %1804 = vmatpush2.msra.mxu0 %v1206
    %1805 = vmatprep.subr.mxu0 0.0
    %1806 = vmatpush2.msra.mxu0 %v1205
    %1807 = vmatprep.subr.mxu0 0.0
    %1808 = vmatpush2.msra.mxu0 %v1204
    %1809 = vmatprep.subr.mxu0 0.0
    %1810 = vmatpush2.msra.mxu0 %v1203
    %1811 = vmatprep.subr.mxu0 0.0
    %1812 = vmatpush2.msra.mxu0 %v1202
    %1813 = vmatprep.subr.mxu0 0.0
    %1814 = vmatpush2.msra.mxu0 %v1201
    %1815 = vmatprep.subr.mxu0 0.0
    %1816 = vmatpush2.msra.mxu0 %v1200
    %1817 = vmatprep.subr.mxu0 0.0
    %1818 = vmatpush2.msra.mxu0 %v1199
    %1819 = vmatprep.subr.mxu0 0.0
    %1820 = vmatpush2.msra.mxu0 %v1198
    %1821 = vmatprep.subr.mxu0 0.0
    %1822 = vmatpush2.msra.mxu0 %v1197
    %1823 = vmatprep.subr.mxu0 0.0
    %1824 = vmatpush2.msra.mxu0 %v1196
    %1825 = vmatprep.mubr.f32.mxu0 %v1754
    %1826 = vmatmul.mubr.f32.gmra.mxu0 %v1753
    %v1827 = vpop.f32.mrf.mxu0
    %v1828 = vadd.f32 %v1308, %v1827
    %v1829 = vpop.f32.mrf.mxu0
    %1830 = vdwg.mxu0
    %1831 = vmatprep.subr.mxu0 0.0
    %1832 = vmatpush1.msra.mxu0 %v1227
    %1833 = vmatprep.subr.mxu0 0.0
    %1834 = vmatpush1.msra.mxu0 %v1226
    %1835 = vmatprep.subr.mxu0 0.0
    %1836 = vmatpush1.msra.mxu0 %v1225
    %1837 = vmatprep.subr.mxu0 0.0
    %1838 = vmatpush1.msra.mxu0 %v1224
    %1839 = vmatprep.subr.mxu0 0.0
    %1840 = vmatpush1.msra.mxu0 %v1223
    %1841 = vmatprep.subr.mxu0 0.0
    %1842 = vmatpush1.msra.mxu0 %v1222
    %1843 = vmatprep.subr.mxu0 0.0
    %1844 = vmatpush1.msra.mxu0 %v1221
    %1845 = vmatprep.subr.mxu0 0.0
    %1846 = vmatpush1.msra.mxu0 %v1220
    %1847 = vmatprep.subr.mxu0 0.0
    %1848 = vmatpush1.msra.mxu0 %v1219
    %1849 = vmatprep.subr.mxu0 0.0
    %1850 = vmatpush1.msra.mxu0 %v1218
    %1851 = vmatprep.subr.mxu0 0.0
    %1852 = vmatpush1.msra.mxu0 %v1217
    %1853 = vmatprep.subr.mxu0 0.0
    %1854 = vmatpush1.msra.mxu0 %v1216
    %1855 = vmatprep.subr.mxu0 0.0
    %1856 = vmatpush1.msra.mxu0 %v1215
    %1857 = vmatprep.subr.mxu0 0.0
    %1858 = vmatpush1.msra.mxu0 %v1214
    %1859 = vmatprep.subr.mxu0 0.0
    %1860 = vmatpush1.msra.mxu0 %v1213
    %1861 = vmatprep.subr.mxu0 0.0
    %1862 = vmatpush1.msra.mxu0 %v1212
    %1863 = vmatprep.subr.mxu0 0.0
    %1864 = vmatpush2.msra.mxu0 %v1243
    %1865 = vmatprep.subr.mxu0 0.0
    %1866 = vmatpush2.msra.mxu0 %v1242
    %1867 = vmatprep.subr.mxu0 0.0
    %1868 = vmatpush2.msra.mxu0 %v1241
    %1869 = vmatprep.subr.mxu0 0.0
    %1870 = vmatpush2.msra.mxu0 %v1240
    %1871 = vmatprep.subr.mxu0 0.0
    %1872 = vmatpush2.msra.mxu0 %v1239
    %1873 = vmatprep.subr.mxu0 0.0
    %1874 = vmatpush2.msra.mxu0 %v1238
    %1875 = vmatprep.subr.mxu0 0.0
    %1876 = vmatpush2.msra.mxu0 %v1237
    %1877 = vmatprep.subr.mxu0 0.0
    %1878 = vmatpush2.msra.mxu0 %v1236
    %1879 = vmatprep.subr.mxu0 0.0
    %1880 = vmatpush2.msra.mxu0 %v1235
    %1881 = vmatprep.subr.mxu0 0.0
    %1882 = vmatpush2.msra.mxu0 %v1234
    %1883 = vmatprep.subr.mxu0 0.0
    %1884 = vmatpush2.msra.mxu0 %v1233
    %1885 = vmatprep.subr.mxu0 0.0
    %1886 = vmatpush2.msra.mxu0 %v1232
    %1887 = vmatprep.subr.mxu0 0.0
    %1888 = vmatpush2.msra.mxu0 %v1231
    %1889 = vmatprep.subr.mxu0 0.0
    %1890 = vmatpush2.msra.mxu0 %v1230
    %1891 = vmatprep.subr.mxu0 0.0
    %1892 = vmatpush2.msra.mxu0 %v1229
    %1893 = vmatprep.subr.mxu0 0.0
    %1894 = vmatpush2.msra.mxu0 %v1228
    %1895 = vmatprep.mubr.f32.mxu0 %v1756
    %1896 = vmatmul.mubr.f32.gmra.mxu0 %v1755
    %v1897 = vpop.f32.mrf.mxu0
    %v1898 = vadd.f32 %v1828, %v1897
    %v1899 = vpop.f32.mrf.mxu0
    %1900 = vdwg.mxu0
    %1901 = vmatprep.subr.mxu0 0.0
    %1902 = vmatpush1.msra.mxu0 %v1259
    %1903 = vmatprep.subr.mxu0 0.0
    %1904 = vmatpush1.msra.mxu0 %v1258
    %1905 = vmatprep.subr.mxu0 0.0
    %1906 = vmatpush1.msra.mxu0 %v1257
    %1907 = vmatprep.subr.mxu0 0.0
    %1908 = vmatpush1.msra.mxu0 %v1256
    %1909 = vmatprep.subr.mxu0 0.0
    %1910 = vmatpush1.msra.mxu0 %v1255
    %1911 = vmatprep.subr.mxu0 0.0
    %1912 = vmatpush1.msra.mxu0 %v1254
    %1913 = vmatprep.subr.mxu0 0.0
    %1914 = vmatpush1.msra.mxu0 %v1253
    %1915 = vmatprep.subr.mxu0 0.0
    %1916 = vmatpush1.msra.mxu0 %v1252
    %1917 = vmatprep.subr.mxu0 0.0
    %1918 = vmatpush1.msra.mxu0 %v1251
    %1919 = vmatprep.subr.mxu0 0.0
    %1920 = vmatpush1.msra.mxu0 %v1250
    %1921 = vmatprep.subr.mxu0 0.0
    %1922 = vmatpush1.msra.mxu0 %v1249
    %1923 = vmatprep.subr.mxu0 0.0
    %1924 = vmatpush1.msra.mxu0 %v1248
    %1925 = vmatprep.subr.mxu0 0.0
    %1926 = vmatpush1.msra.mxu0 %v1247
    %1927 = vmatprep.subr.mxu0 0.0
    %1928 = vmatpush1.msra.mxu0 %v1246
    %1929 = vmatprep.subr.mxu0 0.0
    %1930 = vmatpush1.msra.mxu0 %v1245
    %1931 = vmatprep.subr.mxu0 0.0
    %1932 = vmatpush1.msra.mxu0 %v1244
    %1933 = vmatprep.subr.mxu0 0.0
    %1934 = vmatpush2.msra.mxu0 %v1275
    %1935 = vmatprep.subr.mxu0 0.0
    %1936 = vmatpush2.msra.mxu0 %v1274
    %1937 = vmatprep.subr.mxu0 0.0
    %1938 = vmatpush2.msra.mxu0 %v1273
    %1939 = vmatprep.subr.mxu0 0.0
    %1940 = vmatpush2.msra.mxu0 %v1272
    %1941 = vmatprep.subr.mxu0 0.0
    %1942 = vmatpush2.msra.mxu0 %v1271
    %1943 = vmatprep.subr.mxu0 0.0
    %1944 = vmatpush2.msra.mxu0 %v1270
    %1945 = vmatprep.subr.mxu0 0.0
    %1946 = vmatpush2.msra.mxu0 %v1269
    %1947 = vmatprep.subr.mxu0 0.0
    %1948 = vmatpush2.msra.mxu0 %v1268
    %1949 = vmatprep.subr.mxu0 0.0
    %1950 = vmatpush2.msra.mxu0 %v1267
    %1951 = vmatprep.subr.mxu0 0.0
    %1952 = vmatpush2.msra.mxu0 %v1266
    %1953 = vmatprep.subr.mxu0 0.0
    %1954 = vmatpush2.msra.mxu0 %v1265
    %1955 = vmatprep.subr.mxu0 0.0
    %1956 = vmatpush2.msra.mxu0 %v1264
    %1957 = vmatprep.subr.mxu0 0.0
    %1958 = vmatpush2.msra.mxu0 %v1263
    %1959 = vmatprep.subr.mxu0 0.0
    %1960 = vmatpush2.msra.mxu0 %v1262
    %1961 = vmatprep.subr.mxu0 0.0
    %1962 = vmatpush2.msra.mxu0 %v1261
    %1963 = vmatprep.subr.mxu0 0.0
    %1964 = vmatpush2.msra.mxu0 %v1260
    %1965 = vmatprep.mubr.f32.mxu0 %v1758
    %1966 = vmatmul.mubr.f32.gmra.mxu0 %v1757
    %v1967 = vpop.f32.mrf.mxu0
    %v1968 = vadd.f32 %v1898, %v1967
    %v1969 = vpop.f32.mrf.mxu0
    %1970 = vdwg.mxu0
    %1971 = vmatprep.subr.mxu0 0.0
    %1972 = vmatpush1.msra.mxu0 %v1291
    %1973 = vmatprep.subr.mxu0 0.0
    %1974 = vmatpush1.msra.mxu0 %v1290
    %1975 = vmatprep.subr.mxu0 0.0
    %1976 = vmatpush1.msra.mxu0 %v1289
    %1977 = vmatprep.subr.mxu0 0.0
    %1978 = vmatpush1.msra.mxu0 %v1288
    %1979 = vmatprep.subr.mxu0 0.0
    %1980 = vmatpush1.msra.mxu0 %v1287
    %1981 = vmatprep.subr.mxu0 0.0
    %1982 = vmatpush1.msra.mxu0 %v1286
    %1983 = vmatprep.subr.mxu0 0.0
    %1984 = vmatpush1.msra.mxu0 %v1285
    %1985 = vmatprep.subr.mxu0 0.0
    %1986 = vmatpush1.msra.mxu0 %v1284
    %1987 = vmatprep.subr.mxu0 0.0
    %1988 = vmatpush1.msra.mxu0 %v1283
    %1989 = vmatprep.subr.mxu0 0.0
    %1990 = vmatpush1.msra.mxu0 %v1282
    %1991 = vmatprep.subr.mxu0 0.0
    %1992 = vmatpush1.msra.mxu0 %v1281
    %1993 = vmatprep.subr.mxu0 0.0
    %1994 = vmatpush1.msra.mxu0 %v1280
    %1995 = vmatprep.subr.mxu0 0.0
    %1996 = vmatpush1.msra.mxu0 %v1279
    %1997 = vmatprep.subr.mxu0 0.0
    %1998 = vmatpush1.msra.mxu0 %v1278
    %1999 = vmatprep.subr.mxu0 0.0
    %2000 = vmatpush1.msra.mxu0 %v1277
    %2001 = vmatprep.subr.mxu0 0.0
    %2002 = vmatpush1.msra.mxu0 %v1276
    %2003 = vmatprep.subr.mxu0 0.0
    %2004 = vmatpush2.msra.mxu0 %v1307
    %2005 = vmatprep.subr.mxu0 0.0
    %2006 = vmatpush2.msra.mxu0 %v1306
    %2007 = vmatprep.subr.mxu0 0.0
    %2008 = vmatpush2.msra.mxu0 %v1305
    %2009 = vmatprep.subr.mxu0 0.0
    %2010 = vmatpush2.msra.mxu0 %v1304
    %2011 = vmatprep.subr.mxu0 0.0
    %2012 = vmatpush2.msra.mxu0 %v1303
    %2013 = vmatprep.subr.mxu0 0.0
    %2014 = vmatpush2.msra.mxu0 %v1302
    %2015 = vmatprep.subr.mxu0 0.0
    %2016 = vmatpush2.msra.mxu0 %v1301
    %2017 = vmatprep.subr.mxu0 0.0
    %2018 = vmatpush2.msra.mxu0 %v1300
    %2019 = vmatprep.subr.mxu0 0.0
    %2020 = vmatpush2.msra.mxu0 %v1299
    %2021 = vmatprep.subr.mxu0 0.0
    %2022 = vmatpush2.msra.mxu0 %v1298
    %2023 = vmatprep.subr.mxu0 0.0
    %2024 = vmatpush2.msra.mxu0 %v1297
    %2025 = vmatprep.subr.mxu0 0.0
    %2026 = vmatpush2.msra.mxu0 %v1296
    %2027 = vmatprep.subr.mxu0 0.0
    %2028 = vmatpush2.msra.mxu0 %v1295
    %2029 = vmatprep.subr.mxu0 0.0
    %2030 = vmatpush2.msra.mxu0 %v1294
    %2031 = vmatprep.subr.mxu0 0.0
    %2032 = vmatpush2.msra.mxu0 %v1293
    %2033 = vmatprep.subr.mxu0 0.0
    %2034 = vmatpush2.msra.mxu0 %v1292
    %2035 = vmatprep.mubr.f32.mxu0 %v1760
    %2036 = vmatmul.mubr.f32.gmra.mxu0 %v1759
    %v2037 = vpop.f32.mrf.mxu0
    %v2038 = vadd.f32 %v1968, %v2037
    %v2039 = vpop.f32.mrf.mxu0
    %2040 = vdwg.mxu0
    %v2041 = vld [vmem:[%s15] sm:$0xff]
    %v2042 = vlaneseq
    %v2043 = vshrl.u32 %v2042, 7
    %v2044 = vsub.s32 0, %v2043
    %v2045 = vrot.slane %v1151, %v2044
    %v2046 = vmul.f32 %v2041, %v2045
    %vm2047 = vcmask 64512
    %v2049 = vsel %vm2047, %v2046, 0
    %2051 = vmatprep.subr.mxu0 0.0
    %2052 = vmatpush1.msra.mxu0 0.0
    %2053 = vmatprep.subr.mxu0 0.0
    %2054 = vmatpush1.msra.mxu0 0.0
    %2055 = vmatprep.subr.mxu0 0.0
    %2056 = vmatpush1.msra.mxu0 0.0
    %2057 = vmatprep.subr.mxu0 0.0
    %2058 = vmatpush1.msra.mxu0 0.0
    %2059 = vmatprep.subr.mxu0 0.0
    %2060 = vmatpush1.msra.mxu0 0.0
    %2061 = vmatprep.subr.mxu0 0.0
    %2062 = vmatpush1.msra.mxu0 0.0
    %2063 = vmatprep.subr.mxu0 0.0
    %2064 = vmatpush1.msra.mxu0 0.0
    %2065 = vmatprep.subr.mxu0 0.0
    %2066 = vmatpush1.msra.mxu0 0.0
    %2067 = vmatprep.subr.mxu0 0.0
    %2068 = vmatpush1.msra.mxu0 0.0
    %2069 = vmatprep.subr.mxu0 0.0
    %2070 = vmatpush1.msra.mxu0 0.0
    %2071 = vmatprep.subr.mxu0 0.0
    %2072 = vmatpush1.msra.mxu0 0.0
    %2073 = vmatprep.subr.mxu0 0.0
    %2074 = vmatpush1.msra.mxu0 0.0
    %2075 = vmatprep.subr.mxu0 0.0
    %2076 = vmatpush1.msra.mxu0 0.0
    %2077 = vmatprep.subr.mxu0 0.0
    %2078 = vmatpush1.msra.mxu0 0.0
    %2079 = vmatprep.subr.mxu0 0.0
    %2080 = vmatpush1.msra.mxu0 0.0
    %2081 = vmatprep.subr.mxu0 0.0
    %2082 = vmatpush1.msra.mxu0 %v1152
    %2083 = vmatprep.subr.mxu0 0.0
    %2084 = vmatpush2.msra.mxu0 0.0
    %2085 = vmatprep.subr.mxu0 0.0
    %2086 = vmatpush2.msra.mxu0 0.0
    %2087 = vmatprep.subr.mxu0 0.0
    %2088 = vmatpush2.msra.mxu0 0.0
    %2089 = vmatprep.subr.mxu0 0.0
    %2090 = vmatpush2.msra.mxu0 0.0
    %2091 = vmatprep.subr.mxu0 0.0
    %2092 = vmatpush2.msra.mxu0 0.0
    %2093 = vmatprep.subr.mxu0 0.0
    %2094 = vmatpush2.msra.mxu0 0.0
    %2095 = vmatprep.subr.mxu0 0.0
    %2096 = vmatpush2.msra.mxu0 0.0
    %2097 = vmatprep.subr.mxu0 0.0
    %2098 = vmatpush2.msra.mxu0 0.0
    %2099 = vmatprep.subr.mxu0 0.0
    %2100 = vmatpush2.msra.mxu0 0.0
    %2101 = vmatprep.subr.mxu0 0.0
    %2102 = vmatpush2.msra.mxu0 0.0
    %2103 = vmatprep.subr.mxu0 0.0
    %2104 = vmatpush2.msra.mxu0 0.0
    %2105 = vmatprep.subr.mxu0 0.0
    %2106 = vmatpush2.msra.mxu0 0.0
    %2107 = vmatprep.subr.mxu0 0.0
    %2108 = vmatpush2.msra.mxu0 0.0
    %2109 = vmatprep.subr.mxu0 0.0
    %2110 = vmatpush2.msra.mxu0 0.0
    %2111 = vmatprep.subr.mxu0 0.0
    %2112 = vmatpush2.msra.mxu0 0.0
    %2113 = vmatprep.subr.mxu0 0.0
    %2114 = vmatpush2.msra.mxu0 0.0
    %2115 = vmatprep.mubr.f32.mxu0 0.0
    %2116 = vmatmul.mubr.f32.gmra.mxu0 %v2049
    %v2117 = vpop.f32.mrf.mxu0
    %v2118 = vadd.f32 0.0, %v2117
    %v2119 = vpop.f32.mrf.mxu0
    %2120 = vdwg.mxu0
    %vm2121 = vcmp.ge.f32.partialorder %v2118, 0.0
    %v2122 = vmul.f32 %v2118, 0.2
    %v2123 = vsel %vm2121, %v2118, %v2122
    %v2124 = vmul.f32 %v2123, 1.4142135
    %s2125 = scalar_lea.vmem %s15, 8
    %v2126 = vld [vmem:[%s2125] sm:$0xff]
    %2128 = vrot.lane.b32.xlu0 %v2045, 120
    %v2129 = vpop.permute.xlu0 %2128
    %v2131 = vmul.f32 %v2126, %v2129
    %v2133 = vsel %vm2047, %v2131, 0
    %2135 = vmatprep.subr.mxu0 0.0
    %2136 = vmatpush1.msra.mxu0 0.0
    %2137 = vmatprep.subr.mxu0 0.0
    %2138 = vmatpush1.msra.mxu0 0.0
    %2139 = vmatprep.subr.mxu0 0.0
    %2140 = vmatpush1.msra.mxu0 0.0
    %2141 = vmatprep.subr.mxu0 0.0
    %2142 = vmatpush1.msra.mxu0 0.0
    %2143 = vmatprep.subr.mxu0 0.0
    %2144 = vmatpush1.msra.mxu0 0.0
    %2145 = vmatprep.subr.mxu0 0.0
    %2146 = vmatpush1.msra.mxu0 0.0
    %2147 = vmatprep.subr.mxu0 0.0
    %2148 = vmatpush1.msra.mxu0 0.0
    %2149 = vmatprep.subr.mxu0 0.0
    %2150 = vmatpush1.msra.mxu0 0.0
    %2151 = vmatprep.subr.mxu0 0.0
    %2152 = vmatpush1.msra.mxu0 0.0
    %2153 = vmatprep.subr.mxu0 0.0
    %2154 = vmatpush1.msra.mxu0 0.0
    %2155 = vmatprep.subr.mxu0 0.0
    %2156 = vmatpush1.msra.mxu0 0.0
    %2157 = vmatprep.subr.mxu0 0.0
    %2158 = vmatpush1.msra.mxu0 0.0
    %2159 = vmatprep.subr.mxu0 0.0
    %2160 = vmatpush1.msra.mxu0 0.0
    %2161 = vmatprep.subr.mxu0 0.0
    %2162 = vmatpush1.msra.mxu0 0.0
    %2163 = vmatprep.subr.mxu0 0.0
    %2164 = vmatpush1.msra.mxu0 0.0
    %2165 = vmatprep.subr.mxu0 0.0
    %2166 = vmatpush1.msra.mxu0 %v2124
    %2167 = vmatprep.subr.mxu0 0.0
    %2168 = vmatpush2.msra.mxu0 0.0
    %2169 = vmatprep.subr.mxu0 0.0
    %2170 = vmatpush2.msra.mxu0 0.0
    %2171 = vmatprep.subr.mxu0 0.0
    %2172 = vmatpush2.msra.mxu0 0.0
    %2173 = vmatprep.subr.mxu0 0.0
    %2174 = vmatpush2.msra.mxu0 0.0
    %2175 = vmatprep.subr.mxu0 0.0
    %2176 = vmatpush2.msra.mxu0 0.0
    %2177 = vmatprep.subr.mxu0 0.0
    %2178 = vmatpush2.msra.mxu0 0.0
    %2179 = vmatprep.subr.mxu0 0.0
    %2180 = vmatpush2.msra.mxu0 0.0
    %2181 = vmatprep.subr.mxu0 0.0
    %2182 = vmatpush2.msra.mxu0 0.0
    %2183 = vmatprep.subr.mxu0 0.0
    %2184 = vmatpush2.msra.mxu0 0.0
    %2185 = vmatprep.subr.mxu0 0.0
    %2186 = vmatpush2.msra.mxu0 0.0
    %2187 = vmatprep.subr.mxu0 0.0
    %2188 = vmatpush2.msra.mxu0 0.0
    %2189 = vmatprep.subr.mxu0 0.0
    %2190 = vmatpush2.msra.mxu0 0.0
    %2191 = vmatprep.subr.mxu0 0.0
    %2192 = vmatpush2.msra.mxu0 0.0
    %2193 = vmatprep.subr.mxu0 0.0
    %2194 = vmatpush2.msra.mxu0 0.0
    %2195 = vmatprep.subr.mxu0 0.0
    %2196 = vmatpush2.msra.mxu0 0.0
    %2197 = vmatprep.subr.mxu0 0.0
    %2198 = vmatpush2.msra.mxu0 0.0
    %2199 = vmatprep.mubr.f32.mxu0 0.0
    %2200 = vmatmul.mubr.f32.gmra.mxu0 %v2133
    %v2201 = vpop.f32.mrf.mxu0
    %v2202 = vadd.f32 0.0, %v2201
    %v2203 = vpop.f32.mrf.mxu0
    %2204 = vdwg.mxu0
    %vm2205 = vcmp.ge.f32.partialorder %v2202, 0.0
    %v2206 = vmul.f32 %v2202, 0.2
    %v2207 = vsel %vm2205, %v2202, %v2206
    %v2208 = vmul.f32 %v2207, 1.4142135
    %vm2209 = vcmask 130048
    %v2211 = vsel %vm2209, %v2208, 0
    %2213 = vmatprep.subr.mxu0 0.0
    %2214 = vmatpush1.msra.mxu0 0.0
    %2215 = vmatprep.subr.mxu0 0.0
    %2216 = vmatpush1.msra.mxu0 0.0
    %2217 = vmatprep.subr.mxu0 0.0
    %2218 = vmatpush1.msra.mxu0 0.0
    %2219 = vmatprep.subr.mxu0 0.0
    %2220 = vmatpush1.msra.mxu0 0.0
    %2221 = vmatprep.subr.mxu0 0.0
    %2222 = vmatpush1.msra.mxu0 0.0
    %2223 = vmatprep.subr.mxu0 0.0
    %2224 = vmatpush1.msra.mxu0 0.0
    %2225 = vmatprep.subr.mxu0 0.0
    %2226 = vmatpush1.msra.mxu0 0.0
    %2227 = vmatprep.subr.mxu0 0.0
    %2228 = vmatpush1.msra.mxu0 0.0
    %2229 = vmatprep.subr.mxu0 0.0
    %2230 = vmatpush1.msra.mxu0 0.0
    %2231 = vmatprep.subr.mxu0 0.0
    %2232 = vmatpush1.msra.mxu0 0.0
    %2233 = vmatprep.subr.mxu0 0.0
    %2234 = vmatpush1.msra.mxu0 0.0
    %2235 = vmatprep.subr.mxu0 0.0
    %2236 = vmatpush1.msra.mxu0 0.0
    %2237 = vmatprep.subr.mxu0 0.0
    %2238 = vmatpush1.msra.mxu0 0.0
    %2239 = vmatprep.subr.mxu0 0.0
    %2240 = vmatpush1.msra.mxu0 0.0
    %2241 = vmatprep.subr.mxu0 0.0
    %2242 = vmatpush1.msra.mxu0 %v1155
    %2243 = vmatprep.subr.mxu0 0.0
    %2244 = vmatpush1.msra.mxu0 %v1154
    %2245 = vmatprep.subr.mxu0 0.0
    %2246 = vmatpush2.msra.mxu0 0.0
    %2247 = vmatprep.subr.mxu0 0.0
    %2248 = vmatpush2.msra.mxu0 0.0
    %2249 = vmatprep.subr.mxu0 0.0
    %2250 = vmatpush2.msra.mxu0 0.0
    %2251 = vmatprep.subr.mxu0 0.0
    %2252 = vmatpush2.msra.mxu0 0.0
    %2253 = vmatprep.subr.mxu0 0.0
    %2254 = vmatpush2.msra.mxu0 0.0
    %2255 = vmatprep.subr.mxu0 0.0
    %2256 = vmatpush2.msra.mxu0 0.0
    %2257 = vmatprep.subr.mxu0 0.0
    %2258 = vmatpush2.msra.mxu0 0.0
    %2259 = vmatprep.subr.mxu0 0.0
    %2260 = vmatpush2.msra.mxu0 0.0
    %2261 = vmatprep.subr.mxu0 0.0
    %2262 = vmatpush2.msra.mxu0 0.0
    %2263 = vmatprep.subr.mxu0 0.0
    %2264 = vmatpush2.msra.mxu0 0.0
    %2265 = vmatprep.subr.mxu0 0.0
    %2266 = vmatpush2.msra.mxu0 0.0
    %2267 = vmatprep.subr.mxu0 0.0
    %2268 = vmatpush2.msra.mxu0 0.0
    %2269 = vmatprep.subr.mxu0 0.0
    %2270 = vmatpush2.msra.mxu0 0.0
    %2271 = vmatprep.subr.mxu0 0.0
    %2272 = vmatpush2.msra.mxu0 0.0
    %2273 = vmatprep.subr.mxu0 0.0
    %2274 = vmatpush2.msra.mxu0 0.0
    %2275 = vmatprep.subr.mxu0 0.0
    %2276 = vmatpush2.msra.mxu0 0.0
    %2277 = vmatprep.mubr.f32.mxu0 0.0
    %2278 = vmatmul.mubr.f32.gmra.mxu0 %v2211
    %v2279 = vpop.f32.mrf.mxu0
    %v2280 = vadd.f32 0.0, %v2279
    %v2281 = vpop.f32.mrf.mxu0
    %2282 = vdwg.mxu0
    %s2283 = scalar_lea.vmem %s15, 16
    %v2284 = vld [vmem:[%s2283] sm:$0xff]
    %v2285 = vadd.f32 %v2284, %v2038
    %2286 = vrot.lane.b32.xlu0 %v2045, 112
    %v2287 = vpop.permute.xlu0 %2286
    %v2289 = vmul.f32 %v2285, %v2287
    %v2291 = vsel %vm2047, %v2289, 0
    %2293 = vmatprep.subr.mxu0 0.0
    %2294 = vmatpush1.msra.mxu0 0.0
    %2295 = vmatprep.subr.mxu0 0.0
    %2296 = vmatpush1.msra.mxu0 0.0
    %2297 = vmatprep.subr.mxu0 0.0
    %2298 = vmatpush1.msra.mxu0 0.0
    %2299 = vmatprep.subr.mxu0 0.0
    %2300 = vmatpush1.msra.mxu0 0.0
    %2301 = vmatprep.subr.mxu0 0.0
    %2302 = vmatpush1.msra.mxu0 0.0
    %2303 = vmatprep.subr.mxu0 0.0
    %2304 = vmatpush1.msra.mxu0 0.0
    %2305 = vmatprep.subr.mxu0 0.0
    %2306 = vmatpush1.msra.mxu0 0.0
    %2307 = vmatprep.subr.mxu0 0.0
    %2308 = vmatpush1.msra.mxu0 0.0
    %2309 = vmatprep.subr.mxu0 0.0
    %2310 = vmatpush1.msra.mxu0 0.0
    %2311 = vmatprep.subr.mxu0 0.0
    %2312 = vmatpush1.msra.mxu0 0.0
    %2313 = vmatprep.subr.mxu0 0.0
    %2314 = vmatpush1.msra.mxu0 0.0
    %2315 = vmatprep.subr.mxu0 0.0
    %2316 = vmatpush1.msra.mxu0 0.0
    %2317 = vmatprep.subr.mxu0 0.0
    %2318 = vmatpush1.msra.mxu0 0.0
    %2319 = vmatprep.subr.mxu0 0.0
    %2320 = vmatpush1.msra.mxu0 0.0
    %2321 = vmatprep.subr.mxu0 0.0
    %2322 = vmatpush1.msra.mxu0 0.0
    %2323 = vmatprep.subr.mxu0 0.0
    %2324 = vmatpush1.msra.mxu0 %v2280
    %2325 = vmatprep.subr.mxu0 0.0
    %2326 = vmatpush2.msra.mxu0 0.0
    %2327 = vmatprep.subr.mxu0 0.0
    %2328 = vmatpush2.msra.mxu0 0.0
    %2329 = vmatprep.subr.mxu0 0.0
    %2330 = vmatpush2.msra.mxu0 0.0
    %2331 = vmatprep.subr.mxu0 0.0
    %2332 = vmatpush2.msra.mxu0 0.0
    %2333 = vmatprep.subr.mxu0 0.0
    %2334 = vmatpush2.msra.mxu0 0.0
    %2335 = vmatprep.subr.mxu0 0.0
    %2336 = vmatpush2.msra.mxu0 0.0
    %2337 = vmatprep.subr.mxu0 0.0
    %2338 = vmatpush2.msra.mxu0 0.0
    %2339 = vmatprep.subr.mxu0 0.0
    %2340 = vmatpush2.msra.mxu0 0.0
    %2341 = vmatprep.subr.mxu0 0.0
    %2342 = vmatpush2.msra.mxu0 0.0
    %2343 = vmatprep.subr.mxu0 0.0
    %2344 = vmatpush2.msra.mxu0 0.0
    %2345 = vmatprep.subr.mxu0 0.0
    %2346 = vmatpush2.msra.mxu0 0.0
    %2347 = vmatprep.subr.mxu0 0.0
    %2348 = vmatpush2.msra.mxu0 0.0
    %2349 = vmatprep.subr.mxu0 0.0
    %2350 = vmatpush2.msra.mxu0 0.0
    %2351 = vmatprep.subr.mxu0 0.0
    %2352 = vmatpush2.msra.mxu0 0.0
    %2353 = vmatprep.subr.mxu0 0.0
    %2354 = vmatpush2.msra.mxu0 0.0
    %2355 = vmatprep.subr.mxu0 0.0
    %2356 = vmatpush2.msra.mxu0 0.0
    %2357 = vmatprep.mubr.f32.mxu0 0.0
    %2358 = vmatmul.mubr.f32.gmra.mxu0 %v2291
    %v2359 = vpop.f32.mrf.mxu0
    %v2360 = vadd.f32 0.0, %v2359
    %v2361 = vpop.f32.mrf.mxu0
    %2362 = vdwg.mxu0
    %vm2363 = vcmp.ge.f32.partialorder %v2360, 0.0
    %v2364 = vmul.f32 %v2360, 0.2
    %v2365 = vsel %vm2363, %v2360, %v2364
    %v2366 = vmul.f32 %v2365, 1.4142135
    %s2367 = scalar_lea.vmem %s15, 24
    %v2368 = vld [vmem:[%s2367] sm:$0xff]
    %2370 = vrot.lane.b32.xlu0 %v2038, 120
    %v2371 = vpop.permute.xlu0 %2370
    %v2373 = vadd.f32 %v2368, %v2371
    %2374 = vrot.lane.b32.xlu0 %v2045, 104
    %v2375 = vpop.permute.xlu0 %2374
    %v2377 = vmul.f32 %v2373, %v2375
    %v2379 = vsel %vm2047, %v2377, 0
    %2381 = vmatprep.subr.mxu0 0.0
    %2382 = vmatpush1.msra.mxu0 0.0
    %2383 = vmatprep.subr.mxu0 0.0
    %2384 = vmatpush1.msra.mxu0 0.0
    %2385 = vmatprep.subr.mxu0 0.0
    %2386 = vmatpush1.msra.mxu0 0.0
    %2387 = vmatprep.subr.mxu0 0.0
    %2388 = vmatpush1.msra.mxu0 0.0
    %2389 = vmatprep.subr.mxu0 0.0
    %2390 = vmatpush1.msra.mxu0 0.0
    %2391 = vmatprep.subr.mxu0 0.0
    %2392 = vmatpush1.msra.mxu0 0.0
    %2393 = vmatprep.subr.mxu0 0.0
    %2394 = vmatpush1.msra.mxu0 0.0
    %2395 = vmatprep.subr.mxu0 0.0
    %2396 = vmatpush1.msra.mxu0 0.0
    %2397 = vmatprep.subr.mxu0 0.0
    %2398 = vmatpush1.msra.mxu0 0.0
    %2399 = vmatprep.subr.mxu0 0.0
    %2400 = vmatpush1.msra.mxu0 0.0
    %2401 = vmatprep.subr.mxu0 0.0
    %2402 = vmatpush1.msra.mxu0 0.0
    %2403 = vmatprep.subr.mxu0 0.0
    %2404 = vmatpush1.msra.mxu0 0.0
    %2405 = vmatprep.subr.mxu0 0.0
    %2406 = vmatpush1.msra.mxu0 0.0
    %2407 = vmatprep.subr.mxu0 0.0
    %2408 = vmatpush1.msra.mxu0 0.0
    %2409 = vmatprep.subr.mxu0 0.0
    %2410 = vmatpush1.msra.mxu0 0.0
    %2411 = vmatprep.subr.mxu0 0.0
    %2412 = vmatpush1.msra.mxu0 %v2366
    %2413 = vmatprep.subr.mxu0 0.0
    %2414 = vmatpush2.msra.mxu0 0.0
    %2415 = vmatprep.subr.mxu0 0.0
    %2416 = vmatpush2.msra.mxu0 0.0
    %2417 = vmatprep.subr.mxu0 0.0
    %2418 = vmatpush2.msra.mxu0 0.0
    %2419 = vmatprep.subr.mxu0 0.0
    %2420 = vmatpush2.msra.mxu0 0.0
    %2421 = vmatprep.subr.mxu0 0.0
    %2422 = vmatpush2.msra.mxu0 0.0
    %2423 = vmatprep.subr.mxu0 0.0
    %2424 = vmatpush2.msra.mxu0 0.0
    %2425 = vmatprep.subr.mxu0 0.0
    %2426 = vmatpush2.msra.mxu0 0.0
    %2427 = vmatprep.subr.mxu0 0.0
    %2428 = vmatpush2.msra.mxu0 0.0
    %2429 = vmatprep.subr.mxu0 0.0
    %2430 = vmatpush2.msra.mxu0 0.0
    %2431 = vmatprep.subr.mxu0 0.0
    %2432 = vmatpush2.msra.mxu0 0.0
    %2433 = vmatprep.subr.mxu0 0.0
    %2434 = vmatpush2.msra.mxu0 0.0
    %2435 = vmatprep.subr.mxu0 0.0
    %2436 = vmatpush2.msra.mxu0 0.0
    %2437 = vmatprep.subr.mxu0 0.0
    %2438 = vmatpush2.msra.mxu0 0.0
    %2439 = vmatprep.subr.mxu0 0.0
    %2440 = vmatpush2.msra.mxu0 0.0
    %2441 = vmatprep.subr.mxu0 0.0
    %2442 = vmatpush2.msra.mxu0 0.0
    %2443 = vmatprep.subr.mxu0 0.0
    %2444 = vmatpush2.msra.mxu0 0.0
    %2445 = vmatprep.mubr.f32.mxu0 0.0
    %2446 = vmatmul.mubr.f32.gmra.mxu0 %v2379
    %v2447 = vpop.f32.mrf.mxu0
    %v2448 = vadd.f32 0.0, %v2447
    %v2449 = vpop.f32.mrf.mxu0
    %2450 = vdwg.mxu0
    %vm2451 = vcmp.ge.f32.partialorder %v2448, 0.0
    %v2452 = vmul.f32 %v2448, 0.2
    %v2453 = vsel %vm2451, %v2448, %v2452
    %v2454 = vmul.f32 %v2453, 1.4142135
    %vm2455 = vcmask 523264
    %v2457 = vsel %vm2455, %v2454, 0
    %2459 = vmatprep.subr.mxu0 0.0
    %2460 = vmatpush1.msra.mxu0 0.0
    %2461 = vmatprep.subr.mxu0 0.0
    %2462 = vmatpush1.msra.mxu0 0.0
    %2463 = vmatprep.subr.mxu0 0.0
    %2464 = vmatpush1.msra.mxu0 0.0
    %2465 = vmatprep.subr.mxu0 0.0
    %2466 = vmatpush1.msra.mxu0 0.0
    %2467 = vmatprep.subr.mxu0 0.0
    %2468 = vmatpush1.msra.mxu0 0.0
    %2469 = vmatprep.subr.mxu0 0.0
    %2470 = vmatpush1.msra.mxu0 0.0
    %2471 = vmatprep.subr.mxu0 0.0
    %2472 = vmatpush1.msra.mxu0 0.0
    %2473 = vmatprep.subr.mxu0 0.0
    %2474 = vmatpush1.msra.mxu0 0.0
    %2475 = vmatprep.subr.mxu0 %v1171
    %2476 = vmatpush1.msra.mxu0 %v1170
    %2477 = vmatprep.subr.mxu0 %v1169
    %2478 = vmatpush1.msra.mxu0 %v1168
    %2479 = vmatprep.subr.mxu0 %v1167
    %2480 = vmatpush1.msra.mxu0 %v1166
    %2481 = vmatprep.subr.mxu0 %v1165
    %2482 = vmatpush1.msra.mxu0 %v1164
    %2483 = vmatprep.subr.mxu0 %v1163
    %2484 = vmatpush1.msra.mxu0 %v1162
    %2485 = vmatprep.subr.mxu0 %v1161
    %2486 = vmatpush1.msra.mxu0 %v1160
    %2487 = vmatprep.subr.mxu0 %v1159
    %2488 = vmatpush1.msra.mxu0 %v1158
    %2489 = vmatprep.subr.mxu0 %v1157
    %2490 = vmatpush1.msra.mxu0 %v1156
    %2491 = vmatprep.subr.mxu0 0.0
    %2492 = vmatpush2.msra.mxu0 0.0
    %2493 = vmatprep.subr.mxu0 0.0
    %2494 = vmatpush2.msra.mxu0 0.0
    %2495 = vmatprep.subr.mxu0 0.0
    %2496 = vmatpush2.msra.mxu0 0.0
    %2497 = vmatprep.subr.mxu0 0.0
    %2498 = vmatpush2.msra.mxu0 0.0
    %2499 = vmatprep.subr.mxu0 0.0
    %2500 = vmatpush2.msra.mxu0 0.0
    %2501 = vmatprep.subr.mxu0 0.0
    %2502 = vmatpush2.msra.mxu0 0.0
    %2503 = vmatprep.subr.mxu0 0.0
    %2504 = vmatpush2.msra.mxu0 0.0
    %2505 = vmatprep.subr.mxu0 0.0
    %2506 = vmatpush2.msra.mxu0 0.0
    %2507 = vmatprep.subr.mxu0 0.0
    %2508 = vmatpush2.msra.mxu0 0.0
    %2509 = vmatprep.subr.mxu0 0.0
    %2510 = vmatpush2.msra.mxu0 0.0
    %2511 = vmatprep.subr.mxu0 0.0
    %2512 = vmatpush2.msra.mxu0 0.0
    %2513 = vmatprep.subr.mxu0 0.0
    %2514 = vmatpush2.msra.mxu0 0.0
    %2515 = vmatprep.subr.mxu0 0.0
    %2516 = vmatpush2.msra.mxu0 0.0
    %2517 = vmatprep.subr.mxu0 0.0
    %2518 = vmatpush2.msra.mxu0 0.0
    %2519 = vmatprep.subr.mxu0 0.0
    %2520 = vmatpush2.msra.mxu0 0.0
    %2521 = vmatprep.subr.mxu0 0.0
    %2522 = vmatpush2.msra.mxu0 0.0
    %2523 = vmatprep.mubr.f32.mxu0 0.0
    %2524 = vmatmul.mubr.f32.gmra.mxu0 %v2457
    %v2525 = vpop.f32.mrf.mxu0
    %v2526 = vadd.f32 0.0, %v2525
    %v2527 = vpop.f32.mrf.mxu0
    %v2528 = vadd.f32 0.0, %v2527
    %2529 = vdwg.mxu0
    %s2530 = scalar_lea.vmem %s15, 32
    %v2531 = vld [vmem:[%s2530] sm:$0xff]
    %2532 = vrot.lane.b32.xlu0 %v2038, 112
    %v2533 = vpop.permute.xlu0 %2532
    %v2535 = vadd.f32 %v2531, %v2533
    %2536 = vrot.lane.b32.xlu0 %v2045, 96
    %v2537 = vpop.permute.xlu0 %2536
    %v2539 = vmul.f32 %v2535, %v2537
    %v2541 = vsel %vm2047, %v2539, 0
    %2543 = vmatprep.subr.mxu0 0.0
    %2544 = vmatpush1.msra.mxu0 0.0
    %2545 = vmatprep.subr.mxu0 0.0
    %2546 = vmatpush1.msra.mxu0 0.0
    %2547 = vmatprep.subr.mxu0 0.0
    %2548 = vmatpush1.msra.mxu0 0.0
    %2549 = vmatprep.subr.mxu0 0.0
    %2550 = vmatpush1.msra.mxu0 0.0
    %2551 = vmatprep.subr.mxu0 0.0
    %2552 = vmatpush1.msra.mxu0 0.0
    %2553 = vmatprep.subr.mxu0 0.0
    %2554 = vmatpush1.msra.mxu0 0.0
    %2555 = vmatprep.subr.mxu0 0.0
    %2556 = vmatpush1.msra.mxu0 0.0
    %2557 = vmatprep.subr.mxu0 0.0
    %2558 = vmatpush1.msra.mxu0 0.0
    %2559 = vmatprep.subr.mxu0 0.0
    %2560 = vmatpush1.msra.mxu0 0.0
    %2561 = vmatprep.subr.mxu0 0.0
    %2562 = vmatpush1.msra.mxu0 0.0
    %2563 = vmatprep.subr.mxu0 0.0
    %2564 = vmatpush1.msra.mxu0 0.0
    %2565 = vmatprep.subr.mxu0 0.0
    %2566 = vmatpush1.msra.mxu0 0.0
    %2567 = vmatprep.subr.mxu0 0.0
    %2568 = vmatpush1.msra.mxu0 0.0
    %2569 = vmatprep.subr.mxu0 0.0
    %2570 = vmatpush1.msra.mxu0 0.0
    %2571 = vmatprep.subr.mxu0 0.0
    %2572 = vmatpush1.msra.mxu0 0.0
    %2573 = vmatprep.subr.mxu0 %v2528
    %2574 = vmatpush1.msra.mxu0 %v2526
    %2575 = vmatprep.subr.mxu0 0.0
    %2576 = vmatpush2.msra.mxu0 0.0
    %2577 = vmatprep.subr.mxu0 0.0
    %2578 = vmatpush2.msra.mxu0 0.0
    %2579 = vmatprep.subr.mxu0 0.0
    %2580 = vmatpush2.msra.mxu0 0.0
    %2581 = vmatprep.subr.mxu0 0.0
    %2582 = vmatpush2.msra.mxu0 0.0
    %2583 = vmatprep.subr.mxu0 0.0
    %2584 = vmatpush2.msra.mxu0 0.0
    %2585 = vmatprep.subr.mxu0 0.0
    %2586 = vmatpush2.msra.mxu0 0.0
    %2587 = vmatprep.subr.mxu0 0.0
    %2588 = vmatpush2.msra.mxu0 0.0
    %2589 = vmatprep.subr.mxu0 0.0
    %2590 = vmatpush2.msra.mxu0 0.0
    %2591 = vmatprep.subr.mxu0 0.0
    %2592 = vmatpush2.msra.mxu0 0.0
    %2593 = vmatprep.subr.mxu0 0.0
    %2594 = vmatpush2.msra.mxu0 0.0
    %2595 = vmatprep.subr.mxu0 0.0
    %2596 = vmatpush2.msra.mxu0 0.0
    %2597 = vmatprep.subr.mxu0 0.0
    %2598 = vmatpush2.msra.mxu0 0.0
    %2599 = vmatprep.subr.mxu0 0.0
    %2600 = vmatpush2.msra.mxu0 0.0
    %2601 = vmatprep.subr.mxu0 0.0
    %2602 = vmatpush2.msra.mxu0 0.0
    %2603 = vmatprep.subr.mxu0 0.0
    %2604 = vmatpush2.msra.mxu0 0.0
    %2605 = vmatprep.subr.mxu0 0.0
    %2606 = vmatpush2.msra.mxu0 0.0
    %2607 = vmatprep.mubr.f32.mxu0 0.0
    %2608 = vmatmul.mubr.f32.gmra.mxu0 %v2541
    %v2609 = vpop.f32.mrf.mxu0
    %v2610 = vadd.f32 0.0, %v2609
    %v2611 = vpop.f32.mrf.mxu0
    %v2612 = vadd.f32 0.0, %v2611
    %2613 = vdwg.mxu0
    %vm2614 = vcmp.ge.f32.partialorder %v2610, 0.0
    %vm2615 = vcmp.ge.f32.partialorder %v2612, 0.0
    %v2616 = vmul.f32 %v2610, 0.2
    %v2617 = vmul.f32 %v2612, 0.2
    %v2618 = vsel %vm2614, %v2610, %v2616
    %v2619 = vsel %vm2615, %v2612, %v2617
    %v2620 = vmul.f32 %v2618, 1.4142135
    %v2621 = vmul.f32 %v2619, 1.4142135
    %s2622 = scalar_lea.vmem %s15, 40
    %v2623 = vld [vmem:[%s2622] sm:$0xff]
    %2624 = vrot.lane.b32.xlu0 %v2038, 104
    %v2625 = vpop.permute.xlu0 %2624
    %v2627 = vadd.f32 %v2623, %v2625
    %2628 = vrot.lane.b32.xlu0 %v2045, 88
    %v2629 = vpop.permute.xlu0 %2628
    %v2631 = vmul.f32 %v2627, %v2629
    %v2633 = vsel %vm2047, %v2631, 0
    %2635 = vmatprep.subr.mxu0 0.0
    %2636 = vmatpush1.msra.mxu0 0.0
    %2637 = vmatprep.subr.mxu0 0.0
    %2638 = vmatpush1.msra.mxu0 0.0
    %2639 = vmatprep.subr.mxu0 0.0
    %2640 = vmatpush1.msra.mxu0 0.0
    %2641 = vmatprep.subr.mxu0 0.0
    %2642 = vmatpush1.msra.mxu0 0.0
    %2643 = vmatprep.subr.mxu0 0.0
    %2644 = vmatpush1.msra.mxu0 0.0
    %2645 = vmatprep.subr.mxu0 0.0
    %2646 = vmatpush1.msra.mxu0 0.0
    %2647 = vmatprep.subr.mxu0 0.0
    %2648 = vmatpush1.msra.mxu0 0.0
    %2649 = vmatprep.subr.mxu0 0.0
    %2650 = vmatpush1.msra.mxu0 0.0
    %2651 = vmatprep.subr.mxu0 0.0
    %2652 = vmatpush1.msra.mxu0 0.0
    %2653 = vmatprep.subr.mxu0 0.0
    %2654 = vmatpush1.msra.mxu0 0.0
    %2655 = vmatprep.subr.mxu0 0.0
    %2656 = vmatpush1.msra.mxu0 0.0
    %2657 = vmatprep.subr.mxu0 0.0
    %2658 = vmatpush1.msra.mxu0 0.0
    %2659 = vmatprep.subr.mxu0 0.0
    %2660 = vmatpush1.msra.mxu0 0.0
    %2661 = vmatprep.subr.mxu0 0.0
    %2662 = vmatpush1.msra.mxu0 0.0
    %2663 = vmatprep.subr.mxu0 0.0
    %2664 = vmatpush1.msra.mxu0 0.0
    %2665 = vmatprep.subr.mxu0 %v2621
    %2666 = vmatpush1.msra.mxu0 %v2620
    %2667 = vmatprep.subr.mxu0 0.0
    %2668 = vmatpush2.msra.mxu0 0.0
    %2669 = vmatprep.subr.mxu0 0.0
    %2670 = vmatpush2.msra.mxu0 0.0
    %2671 = vmatprep.subr.mxu0 0.0
    %2672 = vmatpush2.msra.mxu0 0.0
    %2673 = vmatprep.subr.mxu0 0.0
    %2674 = vmatpush2.msra.mxu0 0.0
    %2675 = vmatprep.subr.mxu0 0.0
    %2676 = vmatpush2.msra.mxu0 0.0
    %2677 = vmatprep.subr.mxu0 0.0
    %2678 = vmatpush2.msra.mxu0 0.0
    %2679 = vmatprep.subr.mxu0 0.0
    %2680 = vmatpush2.msra.mxu0 0.0
    %2681 = vmatprep.subr.mxu0 0.0
    %2682 = vmatpush2.msra.mxu0 0.0
    %2683 = vmatprep.subr.mxu0 0.0
    %2684 = vmatpush2.msra.mxu0 0.0
    %2685 = vmatprep.subr.mxu0 0.0
    %2686 = vmatpush2.msra.mxu0 0.0
    %2687 = vmatprep.subr.mxu0 0.0
    %2688 = vmatpush2.msra.mxu0 0.0
    %2689 = vmatprep.subr.mxu0 0.0
    %2690 = vmatpush2.msra.mxu0 0.0
    %2691 = vmatprep.subr.mxu0 0.0
    %2692 = vmatpush2.msra.mxu0 0.0
    %2693 = vmatprep.subr.mxu0 0.0
    %2694 = vmatpush2.msra.mxu0 0.0
    %2695 = vmatprep.subr.mxu0 0.0
    %2696 = vmatpush2.msra.mxu0 0.0
    %2697 = vmatprep.subr.mxu0 0.0
    %2698 = vmatpush2.msra.mxu0 0.0
    %2699 = vmatprep.mubr.f32.mxu0 0.0
    %2700 = vmatmul.mubr.f32.gmra.mxu0 %v2633
    %v2701 = vpop.f32.mrf.mxu0
    %v2702 = vadd.f32 0.0, %v2701
    %v2703 = vpop.f32.mrf.mxu0
    %v2704 = vadd.f32 0.0, %v2703
    %2705 = vdwg.mxu0
    %vm2706 = vcmp.ge.f32.partialorder %v2702, 0.0
    %vm2707 = vcmp.ge.f32.partialorder %v2704, 0.0
    %v2708 = vmul.f32 %v2702, 0.2
    %v2709 = vmul.f32 %v2704, 0.2
    %v2710 = vsel %vm2706, %v2702, %v2708
    %v2711 = vsel %vm2707, %v2704, %v2709
    %v2712 = vmul.f32 %v2710, 1.4142135
    %v2713 = vmul.f32 %v2711, 1.4142135
    %v2715 = vsel %vm2047, %v1153, 0
    %2717 = vmatprep.subr.mxu0 0.0
    %2718 = vmatpush1.msra.mxu0 0.0
    %2719 = vmatprep.subr.mxu0 0.0
    %2720 = vmatpush1.msra.mxu0 0.0
    %2721 = vmatprep.subr.mxu0 0.0
    %2722 = vmatpush1.msra.mxu0 0.0
    %2723 = vmatprep.subr.mxu0 0.0
    %2724 = vmatpush1.msra.mxu0 0.0
    %2725 = vmatprep.subr.mxu0 0.0
    %2726 = vmatpush1.msra.mxu0 0.0
    %2727 = vmatprep.subr.mxu0 0.0
    %2728 = vmatpush1.msra.mxu0 0.0
    %2729 = vmatprep.subr.mxu0 0.0
    %2730 = vmatpush1.msra.mxu0 0.0
    %2731 = vmatprep.subr.mxu0 0.0
    %2732 = vmatpush1.msra.mxu0 0.0
    %2733 = vmatprep.subr.mxu0 0.0
    %2734 = vmatpush1.msra.mxu0 0.0
    %2735 = vmatprep.subr.mxu0 0.0
    %2736 = vmatpush1.msra.mxu0 0.0
    %2737 = vmatprep.subr.mxu0 0.0
    %2738 = vmatpush1.msra.mxu0 0.0
    %2739 = vmatprep.subr.mxu0 0.0
    %2740 = vmatpush1.msra.mxu0 0.0
    %2741 = vmatprep.subr.mxu0 0.0
    %2742 = vmatpush1.msra.mxu0 0.0
    %2743 = vmatprep.subr.mxu0 0.0
    %2744 = vmatpush1.msra.mxu0 0.0
    %2745 = vmatprep.subr.mxu0 0.0
    %2746 = vmatpush1.msra.mxu0 0.0
    %2747 = vmatprep.subr.mxu0 %v2713
    %2748 = vmatpush1.msra.mxu0 %v2712
    %2749 = vmatprep.subr.mxu0 0.0
    %2750 = vmatpush2.msra.mxu0 0.0
    %2751 = vmatprep.subr.mxu0 0.0
    %2752 = vmatpush2.msra.mxu0 0.0
    %2753 = vmatprep.subr.mxu0 0.0
    %2754 = vmatpush2.msra.mxu0 0.0
    %2755 = vmatprep.subr.mxu0 0.0
    %2756 = vmatpush2.msra.mxu0 0.0
    %2757 = vmatprep.subr.mxu0 0.0
    %2758 = vmatpush2.msra.mxu0 0.0
    %2759 = vmatprep.subr.mxu0 0.0
    %2760 = vmatpush2.msra.mxu0 0.0
    %2761 = vmatprep.subr.mxu0 0.0
    %2762 = vmatpush2.msra.mxu0 0.0
    %2763 = vmatprep.subr.mxu0 0.0
    %2764 = vmatpush2.msra.mxu0 0.0
    %2765 = vmatprep.subr.mxu0 0.0
    %2766 = vmatpush2.msra.mxu0 0.0
    %2767 = vmatprep.subr.mxu0 0.0
    %2768 = vmatpush2.msra.mxu0 0.0
    %2769 = vmatprep.subr.mxu0 0.0
    %2770 = vmatpush2.msra.mxu0 0.0
    %2771 = vmatprep.subr.mxu0 0.0
    %2772 = vmatpush2.msra.mxu0 0.0
    %2773 = vmatprep.subr.mxu0 0.0
    %2774 = vmatpush2.msra.mxu0 0.0
    %2775 = vmatprep.subr.mxu0 0.0
    %2776 = vmatpush2.msra.mxu0 0.0
    %2777 = vmatprep.subr.mxu0 0.0
    %2778 = vmatpush2.msra.mxu0 0.0
    %2779 = vmatprep.subr.mxu0 0.0
    %2780 = vmatpush2.msra.mxu0 0.0
    %2781 = vmatprep.mubr.f32.mxu0 0.0
    %2782 = vmatmul.mubr.f32.gmra.mxu0 %v2715
    %v2783 = vpop.f32.mrf.mxu0
    %v2784 = vadd.f32 0.0, %v2783
    %v2785 = vpop.f32.mrf.mxu0
    %v2786 = vadd.f32 0.0, %v2785
    %2787 = vdwg.mxu0
    %v2790 = vcombine.low %v2784, %v2786
    %2792 = vst [vmem:[%s20] sm:$0x77] %v2790
    %v2793 = vld [vmem:[%s10] sm:$0xff]
    %v2794 = vld [vmem:[%s10 + $0x8] sm:$0xff]
    %v2795 = vld [vmem:[%s10 + $0x10] sm:$0xff]
    %v2796 = vld [vmem:[%s10 + $0x18] sm:$0xff]
    %v2797 = vld [vmem:[%s10 + $0x20] sm:$0xff]
    %v2798 = vld [vmem:[%s10 + $0x28] sm:$0xff]
    %v2799 = vld [vmem:[%s10 + $0x30] sm:$0xff]
    %v2800 = vld [vmem:[%s10 + $0x38] sm:$0xff]
    %v2801 = vld [vmem:[%s10 + $0x40] sm:$0xff]
    %v2802 = vld [vmem:[%s10 + $0x48] sm:$0xff]
    %v2803 = vld [vmem:[%s10 + $0x50] sm:$0xff]
    %v2804 = vld [vmem:[%s10 + $0x58] sm:$0xff]
    %v2805 = vld [vmem:[%s10 + $0x60] sm:$0xff]
    %v2806 = vld [vmem:[%s10 + $0x68] sm:$0xff]
    %v2807 = vld [vmem:[%s10 + $0x70] sm:$0xff]
    %v2808 = vld [vmem:[%s10 + $0x78] sm:$0xff]
    %v2809 = vld [vmem:[%s10 + $0x80] sm:$0xff]
    %v2810 = vld [vmem:[%s10 + $0x88] sm:$0xff]
    %v2811 = vld [vmem:[%s10 + $0x90] sm:$0xff]
    %v2812 = vld [vmem:[%s10 + $0x98] sm:$0xff]
    %v2813 = vld [vmem:[%s10 + $0xa0] sm:$0xff]
    %v2814 = vld [vmem:[%s10 + $0xa8] sm:$0xff]
    %v2815 = vld [vmem:[%s10 + $0xb0] sm:$0xff]
    %v2816 = vld [vmem:[%s10 + $0xb8] sm:$0xff]
    %v2817 = vld [vmem:[%s10 + $0xc0] sm:$0xff]
    %v2818 = vld [vmem:[%s10 + $0xc8] sm:$0xff]
    %v2819 = vld [vmem:[%s10 + $0xd0] sm:$0xff]
    %v2820 = vld [vmem:[%s10 + $0xd8] sm:$0xff]
    %v2821 = vld [vmem:[%s10 + $0xe0] sm:$0xff]
    %v2822 = vld [vmem:[%s10 + $0xe8] sm:$0xff]
    %v2823 = vld [vmem:[%s10 + $0xf0] sm:$0xff]
    %v2824 = vld [vmem:[%s10 + $0xf8] sm:$0xff]
    %v2825 = vld [vmem:[%s10 + $0x100] sm:$0xff]
    %v2826 = vld [vmem:[%s10 + $0x108] sm:$0xff]
    %v2827 = vld [vmem:[%s10 + $0x110] sm:$0xff]
    %v2828 = vld [vmem:[%s10 + $0x118] sm:$0xff]
    %v2829 = vld [vmem:[%s10 + $0x120] sm:$0xff]
    %v2830 = vld [vmem:[%s10 + $0x128] sm:$0xff]
    %v2831 = vld [vmem:[%s10 + $0x130] sm:$0xff]
    %v2832 = vld [vmem:[%s10 + $0x138] sm:$0xff]
    %v2833 = vld [vmem:[%s10 + $0x140] sm:$0xff]
    %v2834 = vld [vmem:[%s10 + $0x148] sm:$0xff]
    %v2835 = vld [vmem:[%s10 + $0x150] sm:$0xff]
    %v2836 = vld [vmem:[%s10 + $0x158] sm:$0xff]
    %v2837 = vld [vmem:[%s10 + $0x160] sm:$0xff]
    %v2838 = vld [vmem:[%s10 + $0x168] sm:$0xff]
    %v2839 = vld [vmem:[%s10 + $0x170] sm:$0xff]
    %v2840 = vld [vmem:[%s10 + $0x178] sm:$0xff]
    %v2841 = vld [vmem:[%s10 + $0x180] sm:$0xff]
    %v2842 = vld [vmem:[%s10 + $0x188] sm:$0xff]
    %v2843 = vld [vmem:[%s10 + $0x190] sm:$0xff]
    %v2844 = vld [vmem:[%s10 + $0x198] sm:$0xff]
    %v2845 = vld [vmem:[%s10 + $0x1a0] sm:$0xff]
    %v2846 = vld [vmem:[%s10 + $0x1a8] sm:$0xff]
    %v2847 = vld [vmem:[%s10 + $0x1b0] sm:$0xff]
    %v2848 = vld [vmem:[%s10 + $0x1b8] sm:$0xff]
    %v2849 = vld [vmem:[%s10 + $0x1c0] sm:$0xff]
    %v2850 = vld [vmem:[%s10 + $0x1c8] sm:$0xff]
    %v2851 = vld [vmem:[%s10 + $0x1d0] sm:$0xff]
    %v2852 = vld [vmem:[%s10 + $0x1d8] sm:$0xff]
    %v2853 = vld [vmem:[%s10 + $0x1e0] sm:$0xff]
    %v2854 = vld [vmem:[%s10 + $0x1e8] sm:$0xff]
    %v2855 = vld [vmem:[%s10 + $0x1f0] sm:$0xff]
    %v2856 = vld [vmem:[%s10 + $0x1f8] sm:$0xff]
    %v2857 = vld [vmem:[%s10 + $0x200] sm:$0xff]
    %v2858 = vld [vmem:[%s10 + $0x208] sm:$0xff]
    %v2859 = vld [vmem:[%s10 + $0x210] sm:$0xff]
    %v2860 = vld [vmem:[%s10 + $0x218] sm:$0xff]
    %v2861 = vld [vmem:[%s10 + $0x220] sm:$0xff]
    %v2862 = vld [vmem:[%s10 + $0x228] sm:$0xff]
    %v2863 = vld [vmem:[%s10 + $0x230] sm:$0xff]
    %v2864 = vld [vmem:[%s10 + $0x238] sm:$0xff]
    %v2865 = vld [vmem:[%s10 + $0x240] sm:$0xff]
    %v2866 = vld [vmem:[%s10 + $0x248] sm:$0xff]
    %v2867 = vld [vmem:[%s10 + $0x250] sm:$0xff]
    %v2868 = vld [vmem:[%s10 + $0x258] sm:$0xff]
    %v2869 = vld [vmem:[%s10 + $0x260] sm:$0xff]
    %v2870 = vld [vmem:[%s10 + $0x268] sm:$0xff]
    %v2871 = vld [vmem:[%s10 + $0x270] sm:$0xff]
    %v2872 = vld [vmem:[%s10 + $0x278] sm:$0xff]
    %v2873 = vld [vmem:[%s10 + $0x280] sm:$0xff]
    %v2874 = vld [vmem:[%s10 + $0x288] sm:$0xff]
    %v2875 = vld [vmem:[%s10 + $0x290] sm:$0xff]
    %v2876 = vld [vmem:[%s10 + $0x298] sm:$0xff]
    %v2877 = vld [vmem:[%s10 + $0x2a0] sm:$0xff]
    %v2878 = vld [vmem:[%s10 + $0x2a8] sm:$0xff]
    %v2879 = vld [vmem:[%s10 + $0x2b0] sm:$0xff]
    %v2880 = vld [vmem:[%s10 + $0x2b8] sm:$0xff]
    %v2881 = vld [vmem:[%s10 + $0x2c0] sm:$0xff]
    %v2882 = vld [vmem:[%s10 + $0x2c8] sm:$0xff]
    %v2883 = vld [vmem:[%s10 + $0x2d0] sm:$0xff]
    %v2884 = vld [vmem:[%s10 + $0x2d8] sm:$0xff]
    %v2885 = vld [vmem:[%s10 + $0x2e0] sm:$0xff]
    %v2886 = vld [vmem:[%s10 + $0x2e8] sm:$0xff]
    %v2887 = vld [vmem:[%s10 + $0x2f0] sm:$0xff]
    %v2888 = vld [vmem:[%s10 + $0x2f8] sm:$0xff]
    %v2889 = vld [vmem:[%s10 + $0x300] sm:$0xff]
    %v2890 = vld [vmem:[%s10 + $0x308] sm:$0xff]
    %v2891 = vld [vmem:[%s10 + $0x310] sm:$0xff]
    %v2892 = vld [vmem:[%s10 + $0x318] sm:$0xff]
    %v2893 = vld [vmem:[%s10 + $0x320] sm:$0xff]
    %v2894 = vld [vmem:[%s10 + $0x328] sm:$0xff]
    %v2895 = vld [vmem:[%s10 + $0x330] sm:$0xff]
    %v2896 = vld [vmem:[%s10 + $0x338] sm:$0xff]
    %v2897 = vld [vmem:[%s10 + $0x340] sm:$0xff]
    %v2898 = vld [vmem:[%s10 + $0x348] sm:$0xff]
    %v2899 = vld [vmem:[%s10 + $0x350] sm:$0xff]
    %v2900 = vld [vmem:[%s10 + $0x358] sm:$0xff]
    %v2901 = vld [vmem:[%s10 + $0x360] sm:$0xff]
    %v2902 = vld [vmem:[%s10 + $0x368] sm:$0xff]
    %v2903 = vld [vmem:[%s10 + $0x370] sm:$0xff]
    %v2904 = vld [vmem:[%s10 + $0x378] sm:$0xff]
    %v2905 = vld [vmem:[%s10 + $0x380] sm:$0xff]
    %v2906 = vld [vmem:[%s10 + $0x388] sm:$0xff]
    %v2907 = vld [vmem:[%s10 + $0x390] sm:$0xff]
    %v2908 = vld [vmem:[%s10 + $0x398] sm:$0xff]
    %v2909 = vld [vmem:[%s10 + $0x3a0] sm:$0xff]
    %v2910 = vld [vmem:[%s10 + $0x3a8] sm:$0xff]
    %v2911 = vld [vmem:[%s10 + $0x3b0] sm:$0xff]
    %v2912 = vld [vmem:[%s10 + $0x3b8] sm:$0xff]
    %v2913 = vld [vmem:[%s10 + $0x3c0] sm:$0xff]
    %v2914 = vld [vmem:[%s10 + $0x3c8] sm:$0xff]
    %v2915 = vld [vmem:[%s10 + $0x3d0] sm:$0xff]
    %v2916 = vld [vmem:[%s10 + $0x3d8] sm:$0xff]
    %v2917 = vld [vmem:[%s10 + $0x3e0] sm:$0xff]
    %v2918 = vld [vmem:[%s10 + $0x3e8] sm:$0xff]
    %v2919 = vld [vmem:[%s10 + $0x3f0] sm:$0xff]
    %v2920 = vld [vmem:[%s10 + $0x3f8] sm:$0xff]
    %v2922 = vrot.slane %v1023, 1
    %2924 = vmatprep.subr.mxu0 %v2914
    %2925 = vmatpush1.msra.mxu0 %v2913
    %2926 = vmatprep.subr.mxu0 %v2906
    %2927 = vmatpush1.msra.mxu0 %v2905
    %2928 = vmatprep.subr.mxu0 %v2898
    %2929 = vmatpush1.msra.mxu0 %v2897
    %2930 = vmatprep.subr.mxu0 %v2890
    %2931 = vmatpush1.msra.mxu0 %v2889
    %2932 = vmatprep.subr.mxu0 %v2882
    %2933 = vmatpush1.msra.mxu0 %v2881
    %2934 = vmatprep.subr.mxu0 %v2874
    %2935 = vmatpush1.msra.mxu0 %v2873
    %2936 = vmatprep.subr.mxu0 %v2866
    %2937 = vmatpush1.msra.mxu0 %v2865
    %2938 = vmatprep.subr.mxu0 %v2858
    %2939 = vmatpush1.msra.mxu0 %v2857
    %2940 = vmatprep.subr.mxu0 %v2850
    %2941 = vmatpush1.msra.mxu0 %v2849
    %2942 = vmatprep.subr.mxu0 %v2842
    %2943 = vmatpush1.msra.mxu0 %v2841
    %2944 = vmatprep.subr.mxu0 %v2834
    %2945 = vmatpush1.msra.mxu0 %v2833
    %2946 = vmatprep.subr.mxu0 %v2826
    %2947 = vmatpush1.msra.mxu0 %v2825
    %2948 = vmatprep.subr.mxu0 %v2818
    %2949 = vmatpush1.msra.mxu0 %v2817
    %2950 = vmatprep.subr.mxu0 %v2810
    %2951 = vmatpush1.msra.mxu0 %v2809
    %2952 = vmatprep.subr.mxu0 %v2802
    %2953 = vmatpush1.msra.mxu0 %v2801
    %2954 = vmatprep.subr.mxu0 %v2794
    %2955 = vmatpush1.msra.mxu0 %v2793
    %2956 = vmatprep.subr.mxu0 0.0
    %2957 = vmatpush2.msra.mxu0 0.0
    %2958 = vmatprep.subr.mxu0 0.0
    %2959 = vmatpush2.msra.mxu0 0.0
    %2960 = vmatprep.subr.mxu0 0.0
    %2961 = vmatpush2.msra.mxu0 0.0
    %2962 = vmatprep.subr.mxu0 0.0
    %2963 = vmatpush2.msra.mxu0 0.0
    %2964 = vmatprep.subr.mxu0 0.0
    %2965 = vmatpush2.msra.mxu0 0.0
    %2966 = vmatprep.subr.mxu0 0.0
    %2967 = vmatpush2.msra.mxu0 0.0
    %2968 = vmatprep.subr.mxu0 0.0
    %2969 = vmatpush2.msra.mxu0 0.0
    %2970 = vmatprep.subr.mxu0 0.0
    %2971 = vmatpush2.msra.mxu0 0.0
    %2972 = vmatprep.subr.mxu0 0.0
    %2973 = vmatpush2.msra.mxu0 0.0
    %2974 = vmatprep.subr.mxu0 0.0
    %2975 = vmatpush2.msra.mxu0 0.0
    %2976 = vmatprep.subr.mxu0 0.0
    %2977 = vmatpush2.msra.mxu0 0.0
    %2978 = vmatprep.subr.mxu0 0.0
    %2979 = vmatpush2.msra.mxu0 0.0
    %2980 = vmatprep.subr.mxu0 0.0
    %2981 = vmatpush2.msra.mxu0 0.0
    %2982 = vmatprep.subr.mxu0 0.0
    %2983 = vmatpush2.msra.mxu0 0.0
    %2984 = vmatprep.subr.mxu0 0.0
    %2985 = vmatpush2.msra.mxu0 0.0
    %2986 = vmatprep.subr.mxu0 0.0
    %2987 = vmatpush2.msra.mxu0 0.0
    %2988 = vmatprep.mubr.f32.mxu0 0.0
    %2989 = vmatmul.mubr.f32.gmra.mxu0 %v2922
    %v2990 = vpop.f32.mrf.mxu0
    %v2991 = vadd.f32 0.0, %v2990
    %v2992 = vpop.f32.mrf.mxu0
    %v2993 = vadd.f32 0.0, %v2992
    %2994 = vdwg.mxu0
    %2995 = vmatprep.subr.mxu0 %v2916
    %2996 = vmatpush1.msra.mxu0 %v2915
    %2997 = vmatprep.subr.mxu0 %v2908
    %2998 = vmatpush1.msra.mxu0 %v2907
    %2999 = vmatprep.subr.mxu0 %v2900
    %3000 = vmatpush1.msra.mxu0 %v2899
    %3001 = vmatprep.subr.mxu0 %v2892
    %3002 = vmatpush1.msra.mxu0 %v2891
    %3003 = vmatprep.subr.mxu0 %v2884
    %3004 = vmatpush1.msra.mxu0 %v2883
    %3005 = vmatprep.subr.mxu0 %v2876
    %3006 = vmatpush1.msra.mxu0 %v2875
    %3007 = vmatprep.subr.mxu0 %v2868
    %3008 = vmatpush1.msra.mxu0 %v2867
    %3009 = vmatprep.subr.mxu0 %v2860
    %3010 = vmatpush1.msra.mxu0 %v2859
    %3011 = vmatprep.subr.mxu0 %v2852
    %3012 = vmatpush1.msra.mxu0 %v2851
    %3013 = vmatprep.subr.mxu0 %v2844
    %3014 = vmatpush1.msra.mxu0 %v2843
    %3015 = vmatprep.subr.mxu0 %v2836
    %3016 = vmatpush1.msra.mxu0 %v2835
    %3017 = vmatprep.subr.mxu0 %v2828
    %3018 = vmatpush1.msra.mxu0 %v2827
    %3019 = vmatprep.subr.mxu0 %v2820
    %3020 = vmatpush1.msra.mxu0 %v2819
    %3021 = vmatprep.subr.mxu0 %v2812
    %3022 = vmatpush1.msra.mxu0 %v2811
    %3023 = vmatprep.subr.mxu0 %v2804
    %3024 = vmatpush1.msra.mxu0 %v2803
    %3025 = vmatprep.subr.mxu0 %v2796
    %3026 = vmatpush1.msra.mxu0 %v2795
    %3027 = vmatprep.subr.mxu0 0.0
    %3028 = vmatpush2.msra.mxu0 0.0
    %3029 = vmatprep.subr.mxu0 0.0
    %3030 = vmatpush2.msra.mxu0 0.0
    %3031 = vmatprep.subr.mxu0 0.0
    %3032 = vmatpush2.msra.mxu0 0.0
    %3033 = vmatprep.subr.mxu0 0.0
    %3034 = vmatpush2.msra.mxu0 0.0
    %3035 = vmatprep.subr.mxu0 0.0
    %3036 = vmatpush2.msra.mxu0 0.0
    %3037 = vmatprep.subr.mxu0 0.0
    %3038 = vmatpush2.msra.mxu0 0.0
    %3039 = vmatprep.subr.mxu0 0.0
    %3040 = vmatpush2.msra.mxu0 0.0
    %3041 = vmatprep.subr.mxu0 0.0
    %3042 = vmatpush2.msra.mxu0 0.0
    %3043 = vmatprep.subr.mxu0 0.0
    %3044 = vmatpush2.msra.mxu0 0.0
    %3045 = vmatprep.subr.mxu0 0.0
    %3046 = vmatpush2.msra.mxu0 0.0
    %3047 = vmatprep.subr.mxu0 0.0
    %3048 = vmatpush2.msra.mxu0 0.0
    %3049 = vmatprep.subr.mxu0 0.0
    %3050 = vmatpush2.msra.mxu0 0.0
    %3051 = vmatprep.subr.mxu0 0.0
    %3052 = vmatpush2.msra.mxu0 0.0
    %3053 = vmatprep.subr.mxu0 0.0
    %3054 = vmatpush2.msra.mxu0 0.0
    %3055 = vmatprep.subr.mxu0 0.0
    %3056 = vmatpush2.msra.mxu0 0.0
    %3057 = vmatprep.subr.mxu0 0.0
    %3058 = vmatpush2.msra.mxu0 0.0
    %3059 = vmatprep.mubr.f32.mxu0 0.0
    %3060 = vmatmul.mubr.f32.gmra.mxu0 %v2922
    %v3061 = vpop.f32.mrf.mxu0
    %v3062 = vadd.f32 0.0, %v3061
    %v3063 = vpop.f32.mrf.mxu0
    %v3064 = vadd.f32 0.0, %v3063
    %3065 = vdwg.mxu0
    %3066 = vmatprep.subr.mxu0 %v2918
    %3067 = vmatpush1.msra.mxu0 %v2917
    %3068 = vmatprep.subr.mxu0 %v2910
    %3069 = vmatpush1.msra.mxu0 %v2909
    %3070 = vmatprep.subr.mxu0 %v2902
    %3071 = vmatpush1.msra.mxu0 %v2901
    %3072 = vmatprep.subr.mxu0 %v2894
    %3073 = vmatpush1.msra.mxu0 %v2893
    %3074 = vmatprep.subr.mxu0 %v2886
    %3075 = vmatpush1.msra.mxu0 %v2885
    %3076 = vmatprep.subr.mxu0 %v2878
    %3077 = vmatpush1.msra.mxu0 %v2877
    %3078 = vmatprep.subr.mxu0 %v2870
    %3079 = vmatpush1.msra.mxu0 %v2869
    %3080 = vmatprep.subr.mxu0 %v2862
    %3081 = vmatpush1.msra.mxu0 %v2861
    %3082 = vmatprep.subr.mxu0 %v2854
    %3083 = vmatpush1.msra.mxu0 %v2853
    %3084 = vmatprep.subr.mxu0 %v2846
    %3085 = vmatpush1.msra.mxu0 %v2845
    %3086 = vmatprep.subr.mxu0 %v2838
    %3087 = vmatpush1.msra.mxu0 %v2837
    %3088 = vmatprep.subr.mxu0 %v2830
    %3089 = vmatpush1.msra.mxu0 %v2829
    %3090 = vmatprep.subr.mxu0 %v2822
    %3091 = vmatpush1.msra.mxu0 %v2821
    %3092 = vmatprep.subr.mxu0 %v2814
    %3093 = vmatpush1.msra.mxu0 %v2813
    %3094 = vmatprep.subr.mxu0 %v2806
    %3095 = vmatpush1.msra.mxu0 %v2805
    %3096 = vmatprep.subr.mxu0 %v2798
    %3097 = vmatpush1.msra.mxu0 %v2797
    %3098 = vmatprep.subr.mxu0 0.0
    %3099 = vmatpush2.msra.mxu0 0.0
    %3100 = vmatprep.subr.mxu0 0.0
    %3101 = vmatpush2.msra.mxu0 0.0
    %3102 = vmatprep.subr.mxu0 0.0
    %3103 = vmatpush2.msra.mxu0 0.0
    %3104 = vmatprep.subr.mxu0 0.0
    %3105 = vmatpush2.msra.mxu0 0.0
    %3106 = vmatprep.subr.mxu0 0.0
    %3107 = vmatpush2.msra.mxu0 0.0
    %3108 = vmatprep.subr.mxu0 0.0
    %3109 = vmatpush2.msra.mxu0 0.0
    %3110 = vmatprep.subr.mxu0 0.0
    %3111 = vmatpush2.msra.mxu0 0.0
    %3112 = vmatprep.subr.mxu0 0.0
    %3113 = vmatpush2.msra.mxu0 0.0
    %3114 = vmatprep.subr.mxu0 0.0
    %3115 = vmatpush2.msra.mxu0 0.0
    %3116 = vmatprep.subr.mxu0 0.0
    %3117 = vmatpush2.msra.mxu0 0.0
    %3118 = vmatprep.subr.mxu0 0.0
    %3119 = vmatpush2.msra.mxu0 0.0
    %3120 = vmatprep.subr.mxu0 0.0
    %3121 = vmatpush2.msra.mxu0 0.0
    %3122 = vmatprep.subr.mxu0 0.0
    %3123 = vmatpush2.msra.mxu0 0.0
    %3124 = vmatprep.subr.mxu0 0.0
    %3125 = vmatpush2.msra.mxu0 0.0
    %3126 = vmatprep.subr.mxu0 0.0
    %3127 = vmatpush2.msra.mxu0 0.0
    %3128 = vmatprep.subr.mxu0 0.0
    %3129 = vmatpush2.msra.mxu0 0.0
    %3130 = vmatprep.mubr.f32.mxu0 0.0
    %3131 = vmatmul.mubr.f32.gmra.mxu0 %v2922
    %v3132 = vpop.f32.mrf.mxu0
    %v3133 = vadd.f32 0.0, %v3132
    %v3134 = vpop.f32.mrf.mxu0
    %v3135 = vadd.f32 0.0, %v3134
    %3136 = vdwg.mxu0
    %3137 = vmatprep.subr.mxu0 %v2920
    %3138 = vmatpush1.msra.mxu0 %v2919
    %3139 = vmatprep.subr.mxu0 %v2912
    %3140 = vmatpush1.msra.mxu0 %v2911
    %3141 = vmatprep.subr.mxu0 %v2904
    %3142 = vmatpush1.msra.mxu0 %v2903
    %3143 = vmatprep.subr.mxu0 %v2896
    %3144 = vmatpush1.msra.mxu0 %v2895
    %3145 = vmatprep.subr.mxu0 %v2888
    %3146 = vmatpush1.msra.mxu0 %v2887
    %3147 = vmatprep.subr.mxu0 %v2880
    %3148 = vmatpush1.msra.mxu0 %v2879
    %3149 = vmatprep.subr.mxu0 %v2872
    %3150 = vmatpush1.msra.mxu0 %v2871
    %3151 = vmatprep.subr.mxu0 %v2864
    %3152 = vmatpush1.msra.mxu0 %v2863
    %3153 = vmatprep.subr.mxu0 %v2856
    %3154 = vmatpush1.msra.mxu0 %v2855
    %3155 = vmatprep.subr.mxu0 %v2848
    %3156 = vmatpush1.msra.mxu0 %v2847
    %3157 = vmatprep.subr.mxu0 %v2840
    %3158 = vmatpush1.msra.mxu0 %v2839
    %3159 = vmatprep.subr.mxu0 %v2832
    %3160 = vmatpush1.msra.mxu0 %v2831
    %3161 = vmatprep.subr.mxu0 %v2824
    %3162 = vmatpush1.msra.mxu0 %v2823
    %3163 = vmatprep.subr.mxu0 %v2816
    %3164 = vmatpush1.msra.mxu0 %v2815
    %3165 = vmatprep.subr.mxu0 %v2808
    %3166 = vmatpush1.msra.mxu0 %v2807
    %3167 = vmatprep.subr.mxu0 %v2800
    %3168 = vmatpush1.msra.mxu0 %v2799
    %3169 = vmatprep.subr.mxu0 0.0
    %3170 = vmatpush2.msra.mxu0 0.0
    %3171 = vmatprep.subr.mxu0 0.0
    %3172 = vmatpush2.msra.mxu0 0.0
    %3173 = vmatprep.subr.mxu0 0.0
    %3174 = vmatpush2.msra.mxu0 0.0
    %3175 = vmatprep.subr.mxu0 0.0
    %3176 = vmatpush2.msra.mxu0 0.0
    %3177 = vmatprep.subr.mxu0 0.0
    %3178 = vmatpush2.msra.mxu0 0.0
    %3179 = vmatprep.subr.mxu0 0.0
    %3180 = vmatpush2.msra.mxu0 0.0
    %3181 = vmatprep.subr.mxu0 0.0
    %3182 = vmatpush2.msra.mxu0 0.0
    %3183 = vmatprep.subr.mxu0 0.0
    %3184 = vmatpush2.msra.mxu0 0.0
    %3185 = vmatprep.subr.mxu0 0.0
    %3186 = vmatpush2.msra.mxu0 0.0
    %3187 = vmatprep.subr.mxu0 0.0
    %3188 = vmatpush2.msra.mxu0 0.0
    %3189 = vmatprep.subr.mxu0 0.0
    %3190 = vmatpush2.msra.mxu0 0.0
    %3191 = vmatprep.subr.mxu0 0.0
    %3192 = vmatpush2.msra.mxu0 0.0
    %3193 = vmatprep.subr.mxu0 0.0
    %3194 = vmatpush2.msra.mxu0 0.0
    %3195 = vmatprep.subr.mxu0 0.0
    %3196 = vmatpush2.msra.mxu0 0.0
    %3197 = vmatprep.subr.mxu0 0.0
    %3198 = vmatpush2.msra.mxu0 0.0
    %3199 = vmatprep.subr.mxu0 0.0
    %3200 = vmatpush2.msra.mxu0 0.0
    %3201 = vmatprep.mubr.f32.mxu0 0.0
    %3202 = vmatmul.mubr.f32.gmra.mxu0 %v2922
    %v3203 = vpop.f32.mrf.mxu0
    %v3204 = vadd.f32 0.0, %v3203
    %v3205 = vpop.f32.mrf.mxu0
    %v3206 = vadd.f32 0.0, %v3205
    %3207 = vdwg.mxu0
    %v3208 = vlaneseq
    %v3209 = vshrl.u32 %v3208, 7
    %v3210 = vsub.s32 0, %v3209
    %v3211 = vrot.slane %v2991, %v3210
    %v3212 = vlaneseq
    %v3213 = vshrl.u32 %v3212, 7
    %v3214 = vsub.s32 0, %v3213
    %v3215 = vrot.slane %v2993, %v3214
    %v3216 = vlaneseq
    %v3217 = vshrl.u32 %v3216, 7
    %v3218 = vsub.s32 0, %v3217
    %v3219 = vrot.slane %v3062, %v3218
    %v3220 = vlaneseq
    %v3221 = vshrl.u32 %v3220, 7
    %v3222 = vsub.s32 0, %v3221
    %v3223 = vrot.slane %v3064, %v3222
    %v3224 = vlaneseq
    %v3225 = vshrl.u32 %v3224, 7
    %v3226 = vsub.s32 0, %v3225
    %v3227 = vrot.slane %v3133, %v3226
    %v3228 = vlaneseq
    %v3229 = vshrl.u32 %v3228, 7
    %v3230 = vsub.s32 0, %v3229
    %v3231 = vrot.slane %v3135, %v3230
    %v3232 = vlaneseq
    %v3233 = vshrl.u32 %v3232, 7
    %v3234 = vsub.s32 0, %v3233
    %v3235 = vrot.slane %v3204, %v3234
    %v3236 = vlaneseq
    %v3237 = vshrl.u32 %v3236, 7
    %v3238 = vsub.s32 0, %v3237
    %v3239 = vrot.slane %v3206, %v3238
    %v3240 = vmul.f32 %v1172, %v3211
    %v3241 = vmul.f32 %v1173, %v3215
    %v3242 = vmul.f32 %v1174, %v3219
    %v3243 = vmul.f32 %v1175, %v3223
    %v3244 = vmul.f32 %v1176, %v3227
    %v3245 = vmul.f32 %v1177, %v3231
    %v3246 = vmul.f32 %v1178, %v3235
    %v3247 = vmul.f32 %v1179, %v3239
    %3248 = vmatprep.subr.mxu0 0.0
    %3249 = vmatpush1.msra.mxu0 %v1195
    %3250 = vmatprep.subr.mxu0 0.0
    %3251 = vmatpush1.msra.mxu0 %v1194
    %3252 = vmatprep.subr.mxu0 0.0
    %3253 = vmatpush1.msra.mxu0 %v1193
    %3254 = vmatprep.subr.mxu0 0.0
    %3255 = vmatpush1.msra.mxu0 %v1192
    %3256 = vmatprep.subr.mxu0 0.0
    %3257 = vmatpush1.msra.mxu0 %v1191
    %3258 = vmatprep.subr.mxu0 0.0
    %3259 = vmatpush1.msra.mxu0 %v1190
    %3260 = vmatprep.subr.mxu0 0.0
    %3261 = vmatpush1.msra.mxu0 %v1189
    %3262 = vmatprep.subr.mxu0 0.0
    %3263 = vmatpush1.msra.mxu0 %v1188
    %3264 = vmatprep.subr.mxu0 0.0
    %3265 = vmatpush1.msra.mxu0 %v1187
    %3266 = vmatprep.subr.mxu0 0.0
    %3267 = vmatpush1.msra.mxu0 %v1186
    %3268 = vmatprep.subr.mxu0 0.0
    %3269 = vmatpush1.msra.mxu0 %v1185
    %3270 = vmatprep.subr.mxu0 0.0
    %3271 = vmatpush1.msra.mxu0 %v1184
    %3272 = vmatprep.subr.mxu0 0.0
    %3273 = vmatpush1.msra.mxu0 %v1183
    %3274 = vmatprep.subr.mxu0 0.0
    %3275 = vmatpush1.msra.mxu0 %v1182
    %3276 = vmatprep.subr.mxu0 0.0
    %3277 = vmatpush1.msra.mxu0 %v1181
    %3278 = vmatprep.subr.mxu0 0.0
    %3279 = vmatpush1.msra.mxu0 %v1180
    %3280 = vmatprep.subr.mxu0 0.0
    %3281 = vmatpush2.msra.mxu0 %v1211
    %3282 = vmatprep.subr.mxu0 0.0
    %3283 = vmatpush2.msra.mxu0 %v1210
    %3284 = vmatprep.subr.mxu0 0.0
    %3285 = vmatpush2.msra.mxu0 %v1209
    %3286 = vmatprep.subr.mxu0 0.0
    %3287 = vmatpush2.msra.mxu0 %v1208
    %3288 = vmatprep.subr.mxu0 0.0
    %3289 = vmatpush2.msra.mxu0 %v1207
    %3290 = vmatprep.subr.mxu0 0.0
    %3291 = vmatpush2.msra.mxu0 %v1206
    %3292 = vmatprep.subr.mxu0 0.0
    %3293 = vmatpush2.msra.mxu0 %v1205
    %3294 = vmatprep.subr.mxu0 0.0
    %3295 = vmatpush2.msra.mxu0 %v1204
    %3296 = vmatprep.subr.mxu0 0.0
    %3297 = vmatpush2.msra.mxu0 %v1203
    %3298 = vmatprep.subr.mxu0 0.0
    %3299 = vmatpush2.msra.mxu0 %v1202
    %3300 = vmatprep.subr.mxu0 0.0
    %3301 = vmatpush2.msra.mxu0 %v1201
    %3302 = vmatprep.subr.mxu0 0.0
    %3303 = vmatpush2.msra.mxu0 %v1200
    %3304 = vmatprep.subr.mxu0 0.0
    %3305 = vmatpush2.msra.mxu0 %v1199
    %3306 = vmatprep.subr.mxu0 0.0
    %3307 = vmatpush2.msra.mxu0 %v1198
    %3308 = vmatprep.subr.mxu0 0.0
    %3309 = vmatpush2.msra.mxu0 %v1197
    %3310 = vmatprep.subr.mxu0 0.0
    %3311 = vmatpush2.msra.mxu0 %v1196
    %3312 = vmatprep.mubr.f32.mxu0 %v3241
    %3313 = vmatmul.mubr.f32.gmra.mxu0 %v3240
    %v3314 = vpop.f32.mrf.mxu0
    %v3315 = vadd.f32 %v1308, %v3314
    %v3316 = vpop.f32.mrf.mxu0
    %3317 = vdwg.mxu0
    %3318 = vmatprep.subr.mxu0 0.0
    %3319 = vmatpush1.msra.mxu0 %v1227
    %3320 = vmatprep.subr.mxu0 0.0
    %3321 = vmatpush1.msra.mxu0 %v1226
    %3322 = vmatprep.subr.mxu0 0.0
    %3323 = vmatpush1.msra.mxu0 %v1225
    %3324 = vmatprep.subr.mxu0 0.0
    %3325 = vmatpush1.msra.mxu0 %v1224
    %3326 = vmatprep.subr.mxu0 0.0
    %3327 = vmatpush1.msra.mxu0 %v1223
    %3328 = vmatprep.subr.mxu0 0.0
    %3329 = vmatpush1.msra.mxu0 %v1222
    %3330 = vmatprep.subr.mxu0 0.0
    %3331 = vmatpush1.msra.mxu0 %v1221
    %3332 = vmatprep.subr.mxu0 0.0
    %3333 = vmatpush1.msra.mxu0 %v1220
    %3334 = vmatprep.subr.mxu0 0.0
    %3335 = vmatpush1.msra.mxu0 %v1219
    %3336 = vmatprep.subr.mxu0 0.0
    %3337 = vmatpush1.msra.mxu0 %v1218
    %3338 = vmatprep.subr.mxu0 0.0
    %3339 = vmatpush1.msra.mxu0 %v1217
    %3340 = vmatprep.subr.mxu0 0.0
    %3341 = vmatpush1.msra.mxu0 %v1216
    %3342 = vmatprep.subr.mxu0 0.0
    %3343 = vmatpush1.msra.mxu0 %v1215
    %3344 = vmatprep.subr.mxu0 0.0
    %3345 = vmatpush1.msra.mxu0 %v1214
    %3346 = vmatprep.subr.mxu0 0.0
    %3347 = vmatpush1.msra.mxu0 %v1213
    %3348 = vmatprep.subr.mxu0 0.0
    %3349 = vmatpush1.msra.mxu0 %v1212
    %3350 = vmatprep.subr.mxu0 0.0
    %3351 = vmatpush2.msra.mxu0 %v1243
    %3352 = vmatprep.subr.mxu0 0.0
    %3353 = vmatpush2.msra.mxu0 %v1242
    %3354 = vmatprep.subr.mxu0 0.0
    %3355 = vmatpush2.msra.mxu0 %v1241
    %3356 = vmatprep.subr.mxu0 0.0
    %3357 = vmatpush2.msra.mxu0 %v1240
    %3358 = vmatprep.subr.mxu0 0.0
    %3359 = vmatpush2.msra.mxu0 %v1239
    %3360 = vmatprep.subr.mxu0 0.0
    %3361 = vmatpush2.msra.mxu0 %v1238
    %3362 = vmatprep.subr.mxu0 0.0
    %3363 = vmatpush2.msra.mxu0 %v1237
    %3364 = vmatprep.subr.mxu0 0.0
    %3365 = vmatpush2.msra.mxu0 %v1236
    %3366 = vmatprep.subr.mxu0 0.0
    %3367 = vmatpush2.msra.mxu0 %v1235
    %3368 = vmatprep.subr.mxu0 0.0
    %3369 = vmatpush2.msra.mxu0 %v1234
    %3370 = vmatprep.subr.mxu0 0.0
    %3371 = vmatpush2.msra.mxu0 %v1233
    %3372 = vmatprep.subr.mxu0 0.0
    %3373 = vmatpush2.msra.mxu0 %v1232
    %3374 = vmatprep.subr.mxu0 0.0
    %3375 = vmatpush2.msra.mxu0 %v1231
    %3376 = vmatprep.subr.mxu0 0.0
    %3377 = vmatpush2.msra.mxu0 %v1230
    %3378 = vmatprep.subr.mxu0 0.0
    %3379 = vmatpush2.msra.mxu0 %v1229
    %3380 = vmatprep.subr.mxu0 0.0
    %3381 = vmatpush2.msra.mxu0 %v1228
    %3382 = vmatprep.mubr.f32.mxu0 %v3243
    %3383 = vmatmul.mubr.f32.gmra.mxu0 %v3242
    %v3384 = vpop.f32.mrf.mxu0
    %v3385 = vadd.f32 %v3315, %v3384
    %v3386 = vpop.f32.mrf.mxu0
    %3387 = vdwg.mxu0
    %3388 = vmatprep.subr.mxu0 0.0
    %3389 = vmatpush1.msra.mxu0 %v1259
    %3390 = vmatprep.subr.mxu0 0.0
    %3391 = vmatpush1.msra.mxu0 %v1258
    %3392 = vmatprep.subr.mxu0 0.0
    %3393 = vmatpush1.msra.mxu0 %v1257
    %3394 = vmatprep.subr.mxu0 0.0
    %3395 = vmatpush1.msra.mxu0 %v1256
    %3396 = vmatprep.subr.mxu0 0.0
    %3397 = vmatpush1.msra.mxu0 %v1255
    %3398 = vmatprep.subr.mxu0 0.0
    %3399 = vmatpush1.msra.mxu0 %v1254
    %3400 = vmatprep.subr.mxu0 0.0
    %3401 = vmatpush1.msra.mxu0 %v1253
    %3402 = vmatprep.subr.mxu0 0.0
    %3403 = vmatpush1.msra.mxu0 %v1252
    %3404 = vmatprep.subr.mxu0 0.0
    %3405 = vmatpush1.msra.mxu0 %v1251
    %3406 = vmatprep.subr.mxu0 0.0
    %3407 = vmatpush1.msra.mxu0 %v1250
    %3408 = vmatprep.subr.mxu0 0.0
    %3409 = vmatpush1.msra.mxu0 %v1249
    %3410 = vmatprep.subr.mxu0 0.0
    %3411 = vmatpush1.msra.mxu0 %v1248
    %3412 = vmatprep.subr.mxu0 0.0
    %3413 = vmatpush1.msra.mxu0 %v1247
    %3414 = vmatprep.subr.mxu0 0.0
    %3415 = vmatpush1.msra.mxu0 %v1246
    %3416 = vmatprep.subr.mxu0 0.0
    %3417 = vmatpush1.msra.mxu0 %v1245
    %3418 = vmatprep.subr.mxu0 0.0
    %3419 = vmatpush1.msra.mxu0 %v1244
    %3420 = vmatprep.subr.mxu0 0.0
    %3421 = vmatpush2.msra.mxu0 %v1275
    %3422 = vmatprep.subr.mxu0 0.0
    %3423 = vmatpush2.msra.mxu0 %v1274
    %3424 = vmatprep.subr.mxu0 0.0
    %3425 = vmatpush2.msra.mxu0 %v1273
    %3426 = vmatprep.subr.mxu0 0.0
    %3427 = vmatpush2.msra.mxu0 %v1272
    %3428 = vmatprep.subr.mxu0 0.0
    %3429 = vmatpush2.msra.mxu0 %v1271
    %3430 = vmatprep.subr.mxu0 0.0
    %3431 = vmatpush2.msra.mxu0 %v1270
    %3432 = vmatprep.subr.mxu0 0.0
    %3433 = vmatpush2.msra.mxu0 %v1269
    %3434 = vmatprep.subr.mxu0 0.0
    %3435 = vmatpush2.msra.mxu0 %v1268
    %3436 = vmatprep.subr.mxu0 0.0
    %3437 = vmatpush2.msra.mxu0 %v1267
    %3438 = vmatprep.subr.mxu0 0.0
    %3439 = vmatpush2.msra.mxu0 %v1266
    %3440 = vmatprep.subr.mxu0 0.0
    %3441 = vmatpush2.msra.mxu0 %v1265
    %3442 = vmatprep.subr.mxu0 0.0
    %3443 = vmatpush2.msra.mxu0 %v1264
    %3444 = vmatprep.subr.mxu0 0.0
    %3445 = vmatpush2.msra.mxu0 %v1263
    %3446 = vmatprep.subr.mxu0 0.0
    %3447 = vmatpush2.msra.mxu0 %v1262
    %3448 = vmatprep.subr.mxu0 0.0
    %3449 = vmatpush2.msra.mxu0 %v1261
    %3450 = vmatprep.subr.mxu0 0.0
    %3451 = vmatpush2.msra.mxu0 %v1260
    %3452 = vmatprep.mubr.f32.mxu0 %v3245
    %3453 = vmatmul.mubr.f32.gmra.mxu0 %v3244
    %v3454 = vpop.f32.mrf.mxu0
    %v3455 = vadd.f32 %v3385, %v3454
    %v3456 = vpop.f32.mrf.mxu0
    %3457 = vdwg.mxu0
    %3458 = vmatprep.subr.mxu0 0.0
    %3459 = vmatpush1.msra.mxu0 %v1291
    %3460 = vmatprep.subr.mxu0 0.0
    %3461 = vmatpush1.msra.mxu0 %v1290
    %3462 = vmatprep.subr.mxu0 0.0
    %3463 = vmatpush1.msra.mxu0 %v1289
    %3464 = vmatprep.subr.mxu0 0.0
    %3465 = vmatpush1.msra.mxu0 %v1288
    %3466 = vmatprep.subr.mxu0 0.0
    %3467 = vmatpush1.msra.mxu0 %v1287
    %3468 = vmatprep.subr.mxu0 0.0
    %3469 = vmatpush1.msra.mxu0 %v1286
    %3470 = vmatprep.subr.mxu0 0.0
    %3471 = vmatpush1.msra.mxu0 %v1285
    %3472 = vmatprep.subr.mxu0 0.0
    %3473 = vmatpush1.msra.mxu0 %v1284
    %3474 = vmatprep.subr.mxu0 0.0
    %3475 = vmatpush1.msra.mxu0 %v1283
    %3476 = vmatprep.subr.mxu0 0.0
    %3477 = vmatpush1.msra.mxu0 %v1282
    %3478 = vmatprep.subr.mxu0 0.0
    %3479 = vmatpush1.msra.mxu0 %v1281
    %3480 = vmatprep.subr.mxu0 0.0
    %3481 = vmatpush1.msra.mxu0 %v1280
    %3482 = vmatprep.subr.mxu0 0.0
    %3483 = vmatpush1.msra.mxu0 %v1279
    %3484 = vmatprep.subr.mxu0 0.0
    %3485 = vmatpush1.msra.mxu0 %v1278
    %3486 = vmatprep.subr.mxu0 0.0
    %3487 = vmatpush1.msra.mxu0 %v1277
    %3488 = vmatprep.subr.mxu0 0.0
    %3489 = vmatpush1.msra.mxu0 %v1276
    %3490 = vmatprep.subr.mxu0 0.0
    %3491 = vmatpush2.msra.mxu0 %v1307
    %3492 = vmatprep.subr.mxu0 0.0
    %3493 = vmatpush2.msra.mxu0 %v1306
    %3494 = vmatprep.subr.mxu0 0.0
    %3495 = vmatpush2.msra.mxu0 %v1305
    %3496 = vmatprep.subr.mxu0 0.0
    %3497 = vmatpush2.msra.mxu0 %v1304
    %3498 = vmatprep.subr.mxu0 0.0
    %3499 = vmatpush2.msra.mxu0 %v1303
    %3500 = vmatprep.subr.mxu0 0.0
    %3501 = vmatpush2.msra.mxu0 %v1302
    %3502 = vmatprep.subr.mxu0 0.0
    %3503 = vmatpush2.msra.mxu0 %v1301
    %3504 = vmatprep.subr.mxu0 0.0
    %3505 = vmatpush2.msra.mxu0 %v1300
    %3506 = vmatprep.subr.mxu0 0.0
    %3507 = vmatpush2.msra.mxu0 %v1299
    %3508 = vmatprep.subr.mxu0 0.0
    %3509 = vmatpush2.msra.mxu0 %v1298
    %3510 = vmatprep.subr.mxu0 0.0
    %3511 = vmatpush2.msra.mxu0 %v1297
    %3512 = vmatprep.subr.mxu0 0.0
    %3513 = vmatpush2.msra.mxu0 %v1296
    %3514 = vmatprep.subr.mxu0 0.0
    %3515 = vmatpush2.msra.mxu0 %v1295
    %3516 = vmatprep.subr.mxu0 0.0
    %3517 = vmatpush2.msra.mxu0 %v1294
    %3518 = vmatprep.subr.mxu0 0.0
    %3519 = vmatpush2.msra.mxu0 %v1293
    %3520 = vmatprep.subr.mxu0 0.0
    %3521 = vmatpush2.msra.mxu0 %v1292
    %3522 = vmatprep.mubr.f32.mxu0 %v3247
    %3523 = vmatmul.mubr.f32.gmra.mxu0 %v3246
    %v3524 = vpop.f32.mrf.mxu0
    %v3525 = vadd.f32 %v3455, %v3524
    %v3526 = vpop.f32.mrf.mxu0
    %3527 = vdwg.mxu0
    %v3528 = vld [vmem:[%s15] sm:$0xff]
    %v3529 = vlaneseq
    %v3530 = vshrl.u32 %v3529, 7
    %v3531 = vsub.s32 1, %v3530
    %v3532 = vrot.slane %v1151, %v3531
    %v3533 = vmul.f32 %v3528, %v3532
    %v3535 = vsel %vm2047, %v3533, 0
    %3537 = vmatprep.subr.mxu0 0.0
    %3538 = vmatpush1.msra.mxu0 0.0
    %3539 = vmatprep.subr.mxu0 0.0
    %3540 = vmatpush1.msra.mxu0 0.0
    %3541 = vmatprep.subr.mxu0 0.0
    %3542 = vmatpush1.msra.mxu0 0.0
    %3543 = vmatprep.subr.mxu0 0.0
    %3544 = vmatpush1.msra.mxu0 0.0
    %3545 = vmatprep.subr.mxu0 0.0
    %3546 = vmatpush1.msra.mxu0 0.0
    %3547 = vmatprep.subr.mxu0 0.0
    %3548 = vmatpush1.msra.mxu0 0.0
    %3549 = vmatprep.subr.mxu0 0.0
    %3550 = vmatpush1.msra.mxu0 0.0
    %3551 = vmatprep.subr.mxu0 0.0
    %3552 = vmatpush1.msra.mxu0 0.0
    %3553 = vmatprep.subr.mxu0 0.0
    %3554 = vmatpush1.msra.mxu0 0.0
    %3555 = vmatprep.subr.mxu0 0.0
    %3556 = vmatpush1.msra.mxu0 0.0
    %3557 = vmatprep.subr.mxu0 0.0
    %3558 = vmatpush1.msra.mxu0 0.0
    %3559 = vmatprep.subr.mxu0 0.0
    %3560 = vmatpush1.msra.mxu0 0.0
    %3561 = vmatprep.subr.mxu0 0.0
    %3562 = vmatpush1.msra.mxu0 0.0
    %3563 = vmatprep.subr.mxu0 0.0
    %3564 = vmatpush1.msra.mxu0 0.0
    %3565 = vmatprep.subr.mxu0 0.0
    %3566 = vmatpush1.msra.mxu0 0.0
    %3567 = vmatprep.subr.mxu0 0.0
    %3568 = vmatpush1.msra.mxu0 %v1152
    %3569 = vmatprep.subr.mxu0 0.0
    %3570 = vmatpush2.msra.mxu0 0.0
    %3571 = vmatprep.subr.mxu0 0.0
    %3572 = vmatpush2.msra.mxu0 0.0
    %3573 = vmatprep.subr.mxu0 0.0
    %3574 = vmatpush2.msra.mxu0 0.0
    %3575 = vmatprep.subr.mxu0 0.0
    %3576 = vmatpush2.msra.mxu0 0.0
    %3577 = vmatprep.subr.mxu0 0.0
    %3578 = vmatpush2.msra.mxu0 0.0
    %3579 = vmatprep.subr.mxu0 0.0
    %3580 = vmatpush2.msra.mxu0 0.0
    %3581 = vmatprep.subr.mxu0 0.0
    %3582 = vmatpush2.msra.mxu0 0.0
    %3583 = vmatprep.subr.mxu0 0.0
    %3584 = vmatpush2.msra.mxu0 0.0
    %3585 = vmatprep.subr.mxu0 0.0
    %3586 = vmatpush2.msra.mxu0 0.0
    %3587 = vmatprep.subr.mxu0 0.0
    %3588 = vmatpush2.msra.mxu0 0.0
    %3589 = vmatprep.subr.mxu0 0.0
    %3590 = vmatpush2.msra.mxu0 0.0
    %3591 = vmatprep.subr.mxu0 0.0
    %3592 = vmatpush2.msra.mxu0 0.0
    %3593 = vmatprep.subr.mxu0 0.0
    %3594 = vmatpush2.msra.mxu0 0.0
    %3595 = vmatprep.subr.mxu0 0.0
    %3596 = vmatpush2.msra.mxu0 0.0
    %3597 = vmatprep.subr.mxu0 0.0
    %3598 = vmatpush2.msra.mxu0 0.0
    %3599 = vmatprep.subr.mxu0 0.0
    %3600 = vmatpush2.msra.mxu0 0.0
    %3601 = vmatprep.mubr.f32.mxu0 0.0
    %3602 = vmatmul.mubr.f32.gmra.mxu0 %v3535
    %v3603 = vpop.f32.mrf.mxu0
    %v3604 = vadd.f32 0.0, %v3603
    %v3605 = vpop.f32.mrf.mxu0
    %3606 = vdwg.mxu0
    %vm3607 = vcmp.ge.f32.partialorder %v3604, 0.0
    %v3608 = vmul.f32 %v3604, 0.2
    %v3609 = vsel %vm3607, %v3604, %v3608
    %v3610 = vmul.f32 %v3609, 1.4142135
    %v3611 = vld [vmem:[%s2125] sm:$0xff]
    %3613 = vrot.lane.b32.xlu0 %v3532, 120
    %v3614 = vpop.permute.xlu0 %3613
    %v3616 = vmul.f32 %v3611, %v3614
    %v3618 = vsel %vm2047, %v3616, 0
    %3620 = vmatprep.subr.mxu0 0.0
    %3621 = vmatpush1.msra.mxu0 0.0
    %3622 = vmatprep.subr.mxu0 0.0
    %3623 = vmatpush1.msra.mxu0 0.0
    %3624 = vmatprep.subr.mxu0 0.0
    %3625 = vmatpush1.msra.mxu0 0.0
    %3626 = vmatprep.subr.mxu0 0.0
    %3627 = vmatpush1.msra.mxu0 0.0
    %3628 = vmatprep.subr.mxu0 0.0
    %3629 = vmatpush1.msra.mxu0 0.0
    %3630 = vmatprep.subr.mxu0 0.0
    %3631 = vmatpush1.msra.mxu0 0.0
    %3632 = vmatprep.subr.mxu0 0.0
    %3633 = vmatpush1.msra.mxu0 0.0
    %3634 = vmatprep.subr.mxu0 0.0
    %3635 = vmatpush1.msra.mxu0 0.0
    %3636 = vmatprep.subr.mxu0 0.0
    %3637 = vmatpush1.msra.mxu0 0.0
    %3638 = vmatprep.subr.mxu0 0.0
    %3639 = vmatpush1.msra.mxu0 0.0
    %3640 = vmatprep.subr.mxu0 0.0
    %3641 = vmatpush1.msra.mxu0 0.0
    %3642 = vmatprep.subr.mxu0 0.0
    %3643 = vmatpush1.msra.mxu0 0.0
    %3644 = vmatprep.subr.mxu0 0.0
    %3645 = vmatpush1.msra.mxu0 0.0
    %3646 = vmatprep.subr.mxu0 0.0
    %3647 = vmatpush1.msra.mxu0 0.0
    %3648 = vmatprep.subr.mxu0 0.0
    %3649 = vmatpush1.msra.mxu0 0.0
    %3650 = vmatprep.subr.mxu0 0.0
    %3651 = vmatpush1.msra.mxu0 %v3610
    %3652 = vmatprep.subr.mxu0 0.0
    %3653 = vmatpush2.msra.mxu0 0.0
    %3654 = vmatprep.subr.mxu0 0.0
    %3655 = vmatpush2.msra.mxu0 0.0
    %3656 = vmatprep.subr.mxu0 0.0
    %3657 = vmatpush2.msra.mxu0 0.0
    %3658 = vmatprep.subr.mxu0 0.0
    %3659 = vmatpush2.msra.mxu0 0.0
    %3660 = vmatprep.subr.mxu0 0.0
    %3661 = vmatpush2.msra.mxu0 0.0
    %3662 = vmatprep.subr.mxu0 0.0
    %3663 = vmatpush2.msra.mxu0 0.0
    %3664 = vmatprep.subr.mxu0 0.0
    %3665 = vmatpush2.msra.mxu0 0.0
    %3666 = vmatprep.subr.mxu0 0.0
    %3667 = vmatpush2.msra.mxu0 0.0
    %3668 = vmatprep.subr.mxu0 0.0
    %3669 = vmatpush2.msra.mxu0 0.0
    %3670 = vmatprep.subr.mxu0 0.0
    %3671 = vmatpush2.msra.mxu0 0.0
    %3672 = vmatprep.subr.mxu0 0.0
    %3673 = vmatpush2.msra.mxu0 0.0
    %3674 = vmatprep.subr.mxu0 0.0
    %3675 = vmatpush2.msra.mxu0 0.0
    %3676 = vmatprep.subr.mxu0 0.0
    %3677 = vmatpush2.msra.mxu0 0.0
    %3678 = vmatprep.subr.mxu0 0.0
    %3679 = vmatpush2.msra.mxu0 0.0
    %3680 = vmatprep.subr.mxu0 0.0
    %3681 = vmatpush2.msra.mxu0 0.0
    %3682 = vmatprep.subr.mxu0 0.0
    %3683 = vmatpush2.msra.mxu0 0.0
    %3684 = vmatprep.mubr.f32.mxu0 0.0
    %3685 = vmatmul.mubr.f32.gmra.mxu0 %v3618
    %v3686 = vpop.f32.mrf.mxu0
    %v3687 = vadd.f32 0.0, %v3686
    %v3688 = vpop.f32.mrf.mxu0
    %3689 = vdwg.mxu0
    %vm3690 = vcmp.ge.f32.partialorder %v3687, 0.0
    %v3691 = vmul.f32 %v3687, 0.2
    %v3692 = vsel %vm3690, %v3687, %v3691
    %v3693 = vmul.f32 %v3692, 1.4142135
    %v3695 = vsel %vm2209, %v3693, 0
    %3697 = vmatprep.subr.mxu0 0.0
    %3698 = vmatpush1.msra.mxu0 0.0
    %3699 = vmatprep.subr.mxu0 0.0
    %3700 = vmatpush1.msra.mxu0 0.0
    %3701 = vmatprep.subr.mxu0 0.0
    %3702 = vmatpush1.msra.mxu0 0.0
    %3703 = vmatprep.subr.mxu0 0.0
    %3704 = vmatpush1.msra.mxu0 0.0
    %3705 = vmatprep.subr.mxu0 0.0
    %3706 = vmatpush1.msra.mxu0 0.0
    %3707 = vmatprep.subr.mxu0 0.0
    %3708 = vmatpush1.msra.mxu0 0.0
    %3709 = vmatprep.subr.mxu0 0.0
    %3710 = vmatpush1.msra.mxu0 0.0
    %3711 = vmatprep.subr.mxu0 0.0
    %3712 = vmatpush1.msra.mxu0 0.0
    %3713 = vmatprep.subr.mxu0 0.0
    %3714 = vmatpush1.msra.mxu0 0.0
    %3715 = vmatprep.subr.mxu0 0.0
    %3716 = vmatpush1.msra.mxu0 0.0
    %3717 = vmatprep.subr.mxu0 0.0
    %3718 = vmatpush1.msra.mxu0 0.0
    %3719 = vmatprep.subr.mxu0 0.0
    %3720 = vmatpush1.msra.mxu0 0.0
    %3721 = vmatprep.subr.mxu0 0.0
    %3722 = vmatpush1.msra.mxu0 0.0
    %3723 = vmatprep.subr.mxu0 0.0
    %3724 = vmatpush1.msra.mxu0 0.0
    %3725 = vmatprep.subr.mxu0 0.0
    %3726 = vmatpush1.msra.mxu0 %v1155
    %3727 = vmatprep.subr.mxu0 0.0
    %3728 = vmatpush1.msra.mxu0 %v1154
    %3729 = vmatprep.subr.mxu0 0.0
    %3730 = vmatpush2.msra.mxu0 0.0
    %3731 = vmatprep.subr.mxu0 0.0
    %3732 = vmatpush2.msra.mxu0 0.0
    %3733 = vmatprep.subr.mxu0 0.0
    %3734 = vmatpush2.msra.mxu0 0.0
    %3735 = vmatprep.subr.mxu0 0.0
    %3736 = vmatpush2.msra.mxu0 0.0
    %3737 = vmatprep.subr.mxu0 0.0
    %3738 = vmatpush2.msra.mxu0 0.0
    %3739 = vmatprep.subr.mxu0 0.0
    %3740 = vmatpush2.msra.mxu0 0.0
    %3741 = vmatprep.subr.mxu0 0.0
    %3742 = vmatpush2.msra.mxu0 0.0
    %3743 = vmatprep.subr.mxu0 0.0
    %3744 = vmatpush2.msra.mxu0 0.0
    %3745 = vmatprep.subr.mxu0 0.0
    %3746 = vmatpush2.msra.mxu0 0.0
    %3747 = vmatprep.subr.mxu0 0.0
    %3748 = vmatpush2.msra.mxu0 0.0
    %3749 = vmatprep.subr.mxu0 0.0
    %3750 = vmatpush2.msra.mxu0 0.0
    %3751 = vmatprep.subr.mxu0 0.0
    %3752 = vmatpush2.msra.mxu0 0.0
    %3753 = vmatprep.subr.mxu0 0.0
    %3754 = vmatpush2.msra.mxu0 0.0
    %3755 = vmatprep.subr.mxu0 0.0
    %3756 = vmatpush2.msra.mxu0 0.0
    %3757 = vmatprep.subr.mxu0 0.0
    %3758 = vmatpush2.msra.mxu0 0.0
    %3759 = vmatprep.subr.mxu0 0.0
    %3760 = vmatpush2.msra.mxu0 0.0
    %3761 = vmatprep.mubr.f32.mxu0 0.0
    %3762 = vmatmul.mubr.f32.gmra.mxu0 %v3695
    %v3763 = vpop.f32.mrf.mxu0
    %v3764 = vadd.f32 0.0, %v3763
    %v3765 = vpop.f32.mrf.mxu0
    %3766 = vdwg.mxu0
    %v3767 = vld [vmem:[%s2283] sm:$0xff]
    %v3768 = vadd.f32 %v3767, %v3525
    %3769 = vrot.lane.b32.xlu0 %v3532, 112
    %v3770 = vpop.permute.xlu0 %3769
    %v3772 = vmul.f32 %v3768, %v3770
    %v3774 = vsel %vm2047, %v3772, 0
    %3776 = vmatprep.subr.mxu0 0.0
    %3777 = vmatpush1.msra.mxu0 0.0
    %3778 = vmatprep.subr.mxu0 0.0
    %3779 = vmatpush1.msra.mxu0 0.0
    %3780 = vmatprep.subr.mxu0 0.0
    %3781 = vmatpush1.msra.mxu0 0.0
    %3782 = vmatprep.subr.mxu0 0.0
    %3783 = vmatpush1.msra.mxu0 0.0
    %3784 = vmatprep.subr.mxu0 0.0
    %3785 = vmatpush1.msra.mxu0 0.0
    %3786 = vmatprep.subr.mxu0 0.0
    %3787 = vmatpush1.msra.mxu0 0.0
    %3788 = vmatprep.subr.mxu0 0.0
    %3789 = vmatpush1.msra.mxu0 0.0
    %3790 = vmatprep.subr.mxu0 0.0
    %3791 = vmatpush1.msra.mxu0 0.0
    %3792 = vmatprep.subr.mxu0 0.0
    %3793 = vmatpush1.msra.mxu0 0.0
    %3794 = vmatprep.subr.mxu0 0.0
    %3795 = vmatpush1.msra.mxu0 0.0
    %3796 = vmatprep.subr.mxu0 0.0
    %3797 = vmatpush1.msra.mxu0 0.0
    %3798 = vmatprep.subr.mxu0 0.0
    %3799 = vmatpush1.msra.mxu0 0.0
    %3800 = vmatprep.subr.mxu0 0.0
    %3801 = vmatpush1.msra.mxu0 0.0
    %3802 = vmatprep.subr.mxu0 0.0
    %3803 = vmatpush1.msra.mxu0 0.0
    %3804 = vmatprep.subr.mxu0 0.0
    %3805 = vmatpush1.msra.mxu0 0.0
    %3806 = vmatprep.subr.mxu0 0.0
    %3807 = vmatpush1.msra.mxu0 %v3764
    %3808 = vmatprep.subr.mxu0 0.0
    %3809 = vmatpush2.msra.mxu0 0.0
    %3810 = vmatprep.subr.mxu0 0.0
    %3811 = vmatpush2.msra.mxu0 0.0
    %3812 = vmatprep.subr.mxu0 0.0
    %3813 = vmatpush2.msra.mxu0 0.0
    %3814 = vmatprep.subr.mxu0 0.0
    %3815 = vmatpush2.msra.mxu0 0.0
    %3816 = vmatprep.subr.mxu0 0.0
    %3817 = vmatpush2.msra.mxu0 0.0
    %3818 = vmatprep.subr.mxu0 0.0
    %3819 = vmatpush2.msra.mxu0 0.0
    %3820 = vmatprep.subr.mxu0 0.0
    %3821 = vmatpush2.msra.mxu0 0.0
    %3822 = vmatprep.subr.mxu0 0.0
    %3823 = vmatpush2.msra.mxu0 0.0
    %3824 = vmatprep.subr.mxu0 0.0
    %3825 = vmatpush2.msra.mxu0 0.0
    %3826 = vmatprep.subr.mxu0 0.0
    %3827 = vmatpush2.msra.mxu0 0.0
    %3828 = vmatprep.subr.mxu0 0.0
    %3829 = vmatpush2.msra.mxu0 0.0
    %3830 = vmatprep.subr.mxu0 0.0
    %3831 = vmatpush2.msra.mxu0 0.0
    %3832 = vmatprep.subr.mxu0 0.0
    %3833 = vmatpush2.msra.mxu0 0.0
    %3834 = vmatprep.subr.mxu0 0.0
    %3835 = vmatpush2.msra.mxu0 0.0
    %3836 = vmatprep.subr.mxu0 0.0
    %3837 = vmatpush2.msra.mxu0 0.0
    %3838 = vmatprep.subr.mxu0 0.0
    %3839 = vmatpush2.msra.mxu0 0.0
    %3840 = vmatprep.mubr.f32.mxu0 0.0
    %3841 = vmatmul.mubr.f32.gmra.mxu0 %v3774
    %v3842 = vpop.f32.mrf.mxu0
    %v3843 = vadd.f32 0.0, %v3842
    %v3844 = vpop.f32.mrf.mxu0
    %3845 = vdwg.mxu0
    %vm3846 = vcmp.ge.f32.partialorder %v3843, 0.0
    %v3847 = vmul.f32 %v3843, 0.2
    %v3848 = vsel %vm3846, %v3843, %v3847
    %v3849 = vmul.f32 %v3848, 1.4142135
    %v3850 = vld [vmem:[%s2367] sm:$0xff]
    %3852 = vrot.lane.b32.xlu0 %v3525, 120
    %v3853 = vpop.permute.xlu0 %3852
    %v3855 = vadd.f32 %v3850, %v3853
    %3856 = vrot.lane.b32.xlu0 %v3532, 104
    %v3857 = vpop.permute.xlu0 %3856
    %v3859 = vmul.f32 %v3855, %v3857
    %v3861 = vsel %vm2047, %v3859, 0
    %3863 = vmatprep.subr.mxu0 0.0
    %3864 = vmatpush1.msra.mxu0 0.0
    %3865 = vmatprep.subr.mxu0 0.0
    %3866 = vmatpush1.msra.mxu0 0.0
    %3867 = vmatprep.subr.mxu0 0.0
    %3868 = vmatpush1.msra.mxu0 0.0
    %3869 = vmatprep.subr.mxu0 0.0
    %3870 = vmatpush1.msra.mxu0 0.0
    %3871 = vmatprep.subr.mxu0 0.0
    %3872 = vmatpush1.msra.mxu0 0.0
    %3873 = vmatprep.subr.mxu0 0.0
    %3874 = vmatpush1.msra.mxu0 0.0
    %3875 = vmatprep.subr.mxu0 0.0
    %3876 = vmatpush1.msra.mxu0 0.0
    %3877 = vmatprep.subr.mxu0 0.0
    %3878 = vmatpush1.msra.mxu0 0.0
    %3879 = vmatprep.subr.mxu0 0.0
    %3880 = vmatpush1.msra.mxu0 0.0
    %3881 = vmatprep.subr.mxu0 0.0
    %3882 = vmatpush1.msra.mxu0 0.0
    %3883 = vmatprep.subr.mxu0 0.0
    %3884 = vmatpush1.msra.mxu0 0.0
    %3885 = vmatprep.subr.mxu0 0.0
    %3886 = vmatpush1.msra.mxu0 0.0
    %3887 = vmatprep.subr.mxu0 0.0
    %3888 = vmatpush1.msra.mxu0 0.0
    %3889 = vmatprep.subr.mxu0 0.0
    %3890 = vmatpush1.msra.mxu0 0.0
    %3891 = vmatprep.subr.mxu0 0.0
    %3892 = vmatpush1.msra.mxu0 0.0
    %3893 = vmatprep.subr.mxu0 0.0
    %3894 = vmatpush1.msra.mxu0 %v3849
    %3895 = vmatprep.subr.mxu0 0.0
    %3896 = vmatpush2.msra.mxu0 0.0
    %3897 = vmatprep.subr.mxu0 0.0
    %3898 = vmatpush2.msra.mxu0 0.0
    %3899 = vmatprep.subr.mxu0 0.0
    %3900 = vmatpush2.msra.mxu0 0.0
    %3901 = vmatprep.subr.mxu0 0.0
    %3902 = vmatpush2.msra.mxu0 0.0
    %3903 = vmatprep.subr.mxu0 0.0
    %3904 = vmatpush2.msra.mxu0 0.0
    %3905 = vmatprep.subr.mxu0 0.0
    %3906 = vmatpush2.msra.mxu0 0.0
    %3907 = vmatprep.subr.mxu0 0.0
    %3908 = vmatpush2.msra.mxu0 0.0
    %3909 = vmatprep.subr.mxu0 0.0
    %3910 = vmatpush2.msra.mxu0 0.0
    %3911 = vmatprep.subr.mxu0 0.0
    %3912 = vmatpush2.msra.mxu0 0.0
    %3913 = vmatprep.subr.mxu0 0.0
    %3914 = vmatpush2.msra.mxu0 0.0
    %3915 = vmatprep.subr.mxu0 0.0
    %3916 = vmatpush2.msra.mxu0 0.0
    %3917 = vmatprep.subr.mxu0 0.0
    %3918 = vmatpush2.msra.mxu0 0.0
    %3919 = vmatprep.subr.mxu0 0.0
    %3920 = vmatpush2.msra.mxu0 0.0
    %3921 = vmatprep.subr.mxu0 0.0
    %3922 = vmatpush2.msra.mxu0 0.0
    %3923 = vmatprep.subr.mxu0 0.0
    %3924 = vmatpush2.msra.mxu0 0.0
    %3925 = vmatprep.subr.mxu0 0.0
    %3926 = vmatpush2.msra.mxu0 0.0
    %3927 = vmatprep.mubr.f32.mxu0 0.0
    %3928 = vmatmul.mubr.f32.gmra.mxu0 %v3861
    %v3929 = vpop.f32.mrf.mxu0
    %v3930 = vadd.f32 0.0, %v3929
    %v3931 = vpop.f32.mrf.mxu0
    %3932 = vdwg.mxu0
    %vm3933 = vcmp.ge.f32.partialorder %v3930, 0.0
    %v3934 = vmul.f32 %v3930, 0.2
    %v3935 = vsel %vm3933, %v3930, %v3934
    %v3936 = vmul.f32 %v3935, 1.4142135
    %v3938 = vsel %vm2455, %v3936, 0
    %3940 = vmatprep.subr.mxu0 0.0
    %3941 = vmatpush1.msra.mxu0 0.0
    %3942 = vmatprep.subr.mxu0 0.0
    %3943 = vmatpush1.msra.mxu0 0.0
    %3944 = vmatprep.subr.mxu0 0.0
    %3945 = vmatpush1.msra.mxu0 0.0
    %3946 = vmatprep.subr.mxu0 0.0
    %3947 = vmatpush1.msra.mxu0 0.0
    %3948 = vmatprep.subr.mxu0 0.0
    %3949 = vmatpush1.msra.mxu0 0.0
    %3950 = vmatprep.subr.mxu0 0.0
    %3951 = vmatpush1.msra.mxu0 0.0
    %3952 = vmatprep.subr.mxu0 0.0
    %3953 = vmatpush1.msra.mxu0 0.0
    %3954 = vmatprep.subr.mxu0 0.0
    %3955 = vmatpush1.msra.mxu0 0.0
    %3956 = vmatprep.subr.mxu0 %v1171
    %3957 = vmatpush1.msra.mxu0 %v1170
    %3958 = vmatprep.subr.mxu0 %v1169
    %3959 = vmatpush1.msra.mxu0 %v1168
    %3960 = vmatprep.subr.mxu0 %v1167
    %3961 = vmatpush1.msra.mxu0 %v1166
    %3962 = vmatprep.subr.mxu0 %v1165
    %3963 = vmatpush1.msra.mxu0 %v1164
    %3964 = vmatprep.subr.mxu0 %v1163
    %3965 = vmatpush1.msra.mxu0 %v1162
    %3966 = vmatprep.subr.mxu0 %v1161
    %3967 = vmatpush1.msra.mxu0 %v1160
    %3968 = vmatprep.subr.mxu0 %v1159
    %3969 = vmatpush1.msra.mxu0 %v1158
    %3970 = vmatprep.subr.mxu0 %v1157
    %3971 = vmatpush1.msra.mxu0 %v1156
    %3972 = vmatprep.subr.mxu0 0.0
    %3973 = vmatpush2.msra.mxu0 0.0
    %3974 = vmatprep.subr.mxu0 0.0
    %3975 = vmatpush2.msra.mxu0 0.0
    %3976 = vmatprep.subr.mxu0 0.0
    %3977 = vmatpush2.msra.mxu0 0.0
    %3978 = vmatprep.subr.mxu0 0.0
    %3979 = vmatpush2.msra.mxu0 0.0
    %3980 = vmatprep.subr.mxu0 0.0
    %3981 = vmatpush2.msra.mxu0 0.0
    %3982 = vmatprep.subr.mxu0 0.0
    %3983 = vmatpush2.msra.mxu0 0.0
    %3984 = vmatprep.subr.mxu0 0.0
    %3985 = vmatpush2.msra.mxu0 0.0
    %3986 = vmatprep.subr.mxu0 0.0
    %3987 = vmatpush2.msra.mxu0 0.0
    %3988 = vmatprep.subr.mxu0 0.0
    %3989 = vmatpush2.msra.mxu0 0.0
    %3990 = vmatprep.subr.mxu0 0.0
    %3991 = vmatpush2.msra.mxu0 0.0
    %3992 = vmatprep.subr.mxu0 0.0
    %3993 = vmatpush2.msra.mxu0 0.0
    %3994 = vmatprep.subr.mxu0 0.0
    %3995 = vmatpush2.msra.mxu0 0.0
    %3996 = vmatprep.subr.mxu0 0.0
    %3997 = vmatpush2.msra.mxu0 0.0
    %3998 = vmatprep.subr.mxu0 0.0
    %3999 = vmatpush2.msra.mxu0 0.0
    %4000 = vmatprep.subr.mxu0 0.0
    %4001 = vmatpush2.msra.mxu0 0.0
    %4002 = vmatprep.subr.mxu0 0.0
    %4003 = vmatpush2.msra.mxu0 0.0
    %4004 = vmatprep.mubr.f32.mxu0 0.0
    %4005 = vmatmul.mubr.f32.gmra.mxu0 %v3938
    %v4006 = vpop.f32.mrf.mxu0
    %v4007 = vadd.f32 0.0, %v4006
    %v4008 = vpop.f32.mrf.mxu0
    %v4009 = vadd.f32 0.0, %v4008
    %4010 = vdwg.mxu0
    %v4011 = vld [vmem:[%s2530] sm:$0xff]
    %4012 = vrot.lane.b32.xlu0 %v3525, 112
    %v4013 = vpop.permute.xlu0 %4012
    %v4015 = vadd.f32 %v4011, %v4013
    %4016 = vrot.lane.b32.xlu0 %v3532, 96
    %v4017 = vpop.permute.xlu0 %4016
    %v4019 = vmul.f32 %v4015, %v4017
    %v4021 = vsel %vm2047, %v4019, 0
    %4023 = vmatprep.subr.mxu0 0.0
    %4024 = vmatpush1.msra.mxu0 0.0
    %4025 = vmatprep.subr.mxu0 0.0
    %4026 = vmatpush1.msra.mxu0 0.0
    %4027 = vmatprep.subr.mxu0 0.0
    %4028 = vmatpush1.msra.mxu0 0.0
    %4029 = vmatprep.subr.mxu0 0.0
    %4030 = vmatpush1.msra.mxu0 0.0
    %4031 = vmatprep.subr.mxu0 0.0
    %4032 = vmatpush1.msra.mxu0 0.0
    %4033 = vmatprep.subr.mxu0 0.0
    %4034 = vmatpush1.msra.mxu0 0.0
    %4035 = vmatprep.subr.mxu0 0.0
    %4036 = vmatpush1.msra.mxu0 0.0
    %4037 = vmatprep.subr.mxu0 0.0
    %4038 = vmatpush1.msra.mxu0 0.0
    %4039 = vmatprep.subr.mxu0 0.0
    %4040 = vmatpush1.msra.mxu0 0.0
    %4041 = vmatprep.subr.mxu0 0.0
    %4042 = vmatpush1.msra.mxu0 0.0
    %4043 = vmatprep.subr.mxu0 0.0
    %4044 = vmatpush1.msra.mxu0 0.0
    %4045 = vmatprep.subr.mxu0 0.0
    %4046 = vmatpush1.msra.mxu0 0.0
    %4047 = vmatprep.subr.mxu0 0.0
    %4048 = vmatpush1.msra.mxu0 0.0
    %4049 = vmatprep.subr.mxu0 0.0
    %4050 = vmatpush1.msra.mxu0 0.0
    %4051 = vmatprep.subr.mxu0 0.0
    %4052 = vmatpush1.msra.mxu0 0.0
    %4053 = vmatprep.subr.mxu0 %v4009
    %4054 = vmatpush1.msra.mxu0 %v4007
    %4055 = vmatprep.subr.mxu0 0.0
    %4056 = vmatpush2.msra.mxu0 0.0
    %4057 = vmatprep.subr.mxu0 0.0
    %4058 = vmatpush2.msra.mxu0 0.0
    %4059 = vmatprep.subr.mxu0 0.0
    %4060 = vmatpush2.msra.mxu0 0.0
    %4061 = vmatprep.subr.mxu0 0.0
    %4062 = vmatpush2.msra.mxu0 0.0
    %4063 = vmatprep.subr.mxu0 0.0
    %4064 = vmatpush2.msra.mxu0 0.0
    %4065 = vmatprep.subr.mxu0 0.0
    %4066 = vmatpush2.msra.mxu0 0.0
    %4067 = vmatprep.subr.mxu0 0.0
    %4068 = vmatpush2.msra.mxu0 0.0
    %4069 = vmatprep.subr.mxu0 0.0
    %4070 = vmatpush2.msra.mxu0 0.0
    %4071 = vmatprep.subr.mxu0 0.0
    %4072 = vmatpush2.msra.mxu0 0.0
    %4073 = vmatprep.subr.mxu0 0.0
    %4074 = vmatpush2.msra.mxu0 0.0
    %4075 = vmatprep.subr.mxu0 0.0
    %4076 = vmatpush2.msra.mxu0 0.0
    %4077 = vmatprep.subr.mxu0 0.0
    %4078 = vmatpush2.msra.mxu0 0.0
    %4079 = vmatprep.subr.mxu0 0.0
    %4080 = vmatpush2.msra.mxu0 0.0
    %4081 = vmatprep.subr.mxu0 0.0
    %4082 = vmatpush2.msra.mxu0 0.0
    %4083 = vmatprep.subr.mxu0 0.0
    %4084 = vmatpush2.msra.mxu0 0.0
    %4085 = vmatprep.subr.mxu0 0.0
    %4086 = vmatpush2.msra.mxu0 0.0
    %4087 = vmatprep.mubr.f32.mxu0 0.0
    %4088 = vmatmul.mubr.f32.gmra.mxu0 %v4021
    %v4089 = vpop.f32.mrf.mxu0
    %v4090 = vadd.f32 0.0, %v4089
    %v4091 = vpop.f32.mrf.mxu0
    %v4092 = vadd.f32 0.0, %v4091
    %4093 = vdwg.mxu0
    %vm4094 = vcmp.ge.f32.partialorder %v4090, 0.0
    %vm4095 = vcmp.ge.f32.partialorder %v4092, 0.0
    %v4096 = vmul.f32 %v4090, 0.2
    %v4097 = vmul.f32 %v4092, 0.2
    %v4098 = vsel %vm4094, %v4090, %v4096
    %v4099 = vsel %vm4095, %v4092, %v4097
    %v4100 = vmul.f32 %v4098, 1.4142135
    %v4101 = vmul.f32 %v4099, 1.4142135
    %v4102 = vld [vmem:[%s2622] sm:$0xff]
    %4103 = vrot.lane.b32.xlu0 %v3525, 104
    %v4104 = vpop.permute.xlu0 %4103
    %v4106 = vadd.f32 %v4102, %v4104
    %4107 = vrot.lane.b32.xlu0 %v3532, 88
    %v4108 = vpop.permute.xlu0 %4107
    %v4110 = vmul.f32 %v4106, %v4108
    %v4112 = vsel %vm2047, %v4110, 0
    %4114 = vmatprep.subr.mxu0 0.0
    %4115 = vmatpush1.msra.mxu0 0.0
    %4116 = vmatprep.subr.mxu0 0.0
    %4117 = vmatpush1.msra.mxu0 0.0
    %4118 = vmatprep.subr.mxu0 0.0
    %4119 = vmatpush1.msra.mxu0 0.0
    %4120 = vmatprep.subr.mxu0 0.0
    %4121 = vmatpush1.msra.mxu0 0.0
    %4122 = vmatprep.subr.mxu0 0.0
    %4123 = vmatpush1.msra.mxu0 0.0
    %4124 = vmatprep.subr.mxu0 0.0
    %4125 = vmatpush1.msra.mxu0 0.0
    %4126 = vmatprep.subr.mxu0 0.0
    %4127 = vmatpush1.msra.mxu0 0.0
    %4128 = vmatprep.subr.mxu0 0.0
    %4129 = vmatpush1.msra.mxu0 0.0
    %4130 = vmatprep.subr.mxu0 0.0
    %4131 = vmatpush1.msra.mxu0 0.0
    %4132 = vmatprep.subr.mxu0 0.0
    %4133 = vmatpush1.msra.mxu0 0.0
    %4134 = vmatprep.subr.mxu0 0.0
    %4135 = vmatpush1.msra.mxu0 0.0
    %4136 = vmatprep.subr.mxu0 0.0
    %4137 = vmatpush1.msra.mxu0 0.0
    %4138 = vmatprep.subr.mxu0 0.0
    %4139 = vmatpush1.msra.mxu0 0.0
    %4140 = vmatprep.subr.mxu0 0.0
    %4141 = vmatpush1.msra.mxu0 0.0
    %4142 = vmatprep.subr.mxu0 0.0
    %4143 = vmatpush1.msra.mxu0 0.0
    %4144 = vmatprep.subr.mxu0 %v4101
    %4145 = vmatpush1.msra.mxu0 %v4100
    %4146 = vmatprep.subr.mxu0 0.0
    %4147 = vmatpush2.msra.mxu0 0.0
    %4148 = vmatprep.subr.mxu0 0.0
    %4149 = vmatpush2.msra.mxu0 0.0
    %4150 = vmatprep.subr.mxu0 0.0
    %4151 = vmatpush2.msra.mxu0 0.0
    %4152 = vmatprep.subr.mxu0 0.0
    %4153 = vmatpush2.msra.mxu0 0.0
    %4154 = vmatprep.subr.mxu0 0.0
    %4155 = vmatpush2.msra.mxu0 0.0
    %4156 = vmatprep.subr.mxu0 0.0
    %4157 = vmatpush2.msra.mxu0 0.0
    %4158 = vmatprep.subr.mxu0 0.0
    %4159 = vmatpush2.msra.mxu0 0.0
    %4160 = vmatprep.subr.mxu0 0.0
    %4161 = vmatpush2.msra.mxu0 0.0
    %4162 = vmatprep.subr.mxu0 0.0
    %4163 = vmatpush2.msra.mxu0 0.0
    %4164 = vmatprep.subr.mxu0 0.0
    %4165 = vmatpush2.msra.mxu0 0.0
    %4166 = vmatprep.subr.mxu0 0.0
    %4167 = vmatpush2.msra.mxu0 0.0
    %4168 = vmatprep.subr.mxu0 0.0
    %4169 = vmatpush2.msra.mxu0 0.0
    %4170 = vmatprep.subr.mxu0 0.0
    %4171 = vmatpush2.msra.mxu0 0.0
    %4172 = vmatprep.subr.mxu0 0.0
    %4173 = vmatpush2.msra.mxu0 0.0
    %4174 = vmatprep.subr.mxu0 0.0
    %4175 = vmatpush2.msra.mxu0 0.0
    %4176 = vmatprep.subr.mxu0 0.0
    %4177 = vmatpush2.msra.mxu0 0.0
    %4178 = vmatprep.mubr.f32.mxu0 0.0
    %4179 = vmatmul.mubr.f32.gmra.mxu0 %v4112
    %v4180 = vpop.f32.mrf.mxu0
    %v4181 = vadd.f32 0.0, %v4180
    %v4182 = vpop.f32.mrf.mxu0
    %v4183 = vadd.f32 0.0, %v4182
    %4184 = vdwg.mxu0
    %vm4185 = vcmp.ge.f32.partialorder %v4181, 0.0
    %vm4186 = vcmp.ge.f32.partialorder %v4183, 0.0
    %v4187 = vmul.f32 %v4181, 0.2
    %v4188 = vmul.f32 %v4183, 0.2
    %v4189 = vsel %vm4185, %v4181, %v4187
    %v4190 = vsel %vm4186, %v4183, %v4188
    %v4191 = vmul.f32 %v4189, 1.4142135
    %v4192 = vmul.f32 %v4190, 1.4142135
    %4193 = vmatprep.subr.mxu0 0.0
    %4194 = vmatpush1.msra.mxu0 0.0
    %4195 = vmatprep.subr.mxu0 0.0
    %4196 = vmatpush1.msra.mxu0 0.0
    %4197 = vmatprep.subr.mxu0 0.0
    %4198 = vmatpush1.msra.mxu0 0.0
    %4199 = vmatprep.subr.mxu0 0.0
    %4200 = vmatpush1.msra.mxu0 0.0
    %4201 = vmatprep.subr.mxu0 0.0
    %4202 = vmatpush1.msra.mxu0 0.0
    %4203 = vmatprep.subr.mxu0 0.0
    %4204 = vmatpush1.msra.mxu0 0.0
    %4205 = vmatprep.subr.mxu0 0.0
    %4206 = vmatpush1.msra.mxu0 0.0
    %4207 = vmatprep.subr.mxu0 0.0
    %4208 = vmatpush1.msra.mxu0 0.0
    %4209 = vmatprep.subr.mxu0 0.0
    %4210 = vmatpush1.msra.mxu0 0.0
    %4211 = vmatprep.subr.mxu0 0.0
    %4212 = vmatpush1.msra.mxu0 0.0
    %4213 = vmatprep.subr.mxu0 0.0
    %4214 = vmatpush1.msra.mxu0 0.0
    %4215 = vmatprep.subr.mxu0 0.0
    %4216 = vmatpush1.msra.mxu0 0.0
    %4217 = vmatprep.subr.mxu0 0.0
    %4218 = vmatpush1.msra.mxu0 0.0
    %4219 = vmatprep.subr.mxu0 0.0
    %4220 = vmatpush1.msra.mxu0 0.0
    %4221 = vmatprep.subr.mxu0 0.0
    %4222 = vmatpush1.msra.mxu0 0.0
    %4223 = vmatprep.subr.mxu0 %v4192
    %4224 = vmatpush1.msra.mxu0 %v4191
    %4225 = vmatprep.subr.mxu0 0.0
    %4226 = vmatpush2.msra.mxu0 0.0
    %4227 = vmatprep.subr.mxu0 0.0
    %4228 = vmatpush2.msra.mxu0 0.0
    %4229 = vmatprep.subr.mxu0 0.0
    %4230 = vmatpush2.msra.mxu0 0.0
    %4231 = vmatprep.subr.mxu0 0.0
    %4232 = vmatpush2.msra.mxu0 0.0
    %4233 = vmatprep.subr.mxu0 0.0
    %4234 = vmatpush2.msra.mxu0 0.0
    %4235 = vmatprep.subr.mxu0 0.0
    %4236 = vmatpush2.msra.mxu0 0.0
    %4237 = vmatprep.subr.mxu0 0.0
    %4238 = vmatpush2.msra.mxu0 0.0
    %4239 = vmatprep.subr.mxu0 0.0
    %4240 = vmatpush2.msra.mxu0 0.0
    %4241 = vmatprep.subr.mxu0 0.0
    %4242 = vmatpush2.msra.mxu0 0.0
    %4243 = vmatprep.subr.mxu0 0.0
    %4244 = vmatpush2.msra.mxu0 0.0
    %4245 = vmatprep.subr.mxu0 0.0
    %4246 = vmatpush2.msra.mxu0 0.0
    %4247 = vmatprep.subr.mxu0 0.0
    %4248 = vmatpush2.msra.mxu0 0.0
    %4249 = vmatprep.subr.mxu0 0.0
    %4250 = vmatpush2.msra.mxu0 0.0
    %4251 = vmatprep.subr.mxu0 0.0
    %4252 = vmatpush2.msra.mxu0 0.0
    %4253 = vmatprep.subr.mxu0 0.0
    %4254 = vmatpush2.msra.mxu0 0.0
    %4255 = vmatprep.subr.mxu0 0.0
    %4256 = vmatpush2.msra.mxu0 0.0
    %4257 = vmatprep.mubr.f32.mxu0 0.0
    %4258 = vmatmul.mubr.f32.gmra.mxu0 %v2715
    %v4259 = vpop.f32.mrf.mxu0
    %v4260 = vadd.f32 0.0, %v4259
    %v4261 = vpop.f32.mrf.mxu0
    %v4262 = vadd.f32 0.0, %v4261
    %4263 = vdwg.mxu0
    %v4266 = vcombine.low %v4260, %v4262
    %s4268 = scalar_lea.vmem %s20, 8
    %4269 = vst [vmem:[%s4268] sm:$0x77] %v4266
    // Predicated region
    $region94: #{hyper_inverter_forward.3} parent=1 // pred_check
      _
    $region95: #{hyper_inverter_forward.3} parent=1 // pred_check_branch
      %4271 = sbr.rel (0) target = $region97
    $region96: #{hyper_inverter_forward.3} parent=1 // pred_region
      _
    $region97: #{hyper_inverter_forward.3} parent=1 // pred_fallthru
      _
    // Predicated region
    $region98: #{hyper_inverter_forward.3} parent=1 // pred_check
      _
    $region99: #{hyper_inverter_forward.3} parent=1 // pred_check_branch
      %4273 = sbr.rel (0) target = $region101
    $region100: #{hyper_inverter_forward.3} parent=1 // pred_region
      _
    $region101: #{hyper_inverter_forward.3} parent=1 // pred_fallthru
      _
    // Predicated region
    $region102: #{hyper_inverter_forward.3} parent=1 // pred_check
      _
    $region103: #{hyper_inverter_forward.3} parent=1 // pred_check_branch
      %4275 = sbr.rel (0) target = $region105
    $region104: #{hyper_inverter_forward.3} parent=1 // pred_region
      _
    $region105: #{hyper_inverter_forward.3} parent=1 // pred_fallthru
      _
    // Predicated region
    $region106: #{hyper_inverter_forward.3} parent=1 // pred_check
      _
    $region107: #{hyper_inverter_forward.3} parent=1 // pred_check_branch
      %4277 = sbr.rel (0) target = $region109
    $region108: #{hyper_inverter_forward.3} parent=1 // pred_region
      _
    $region109: #{hyper_inverter_forward.3} parent=1 // pred_fallthru
      _
    %4278 = vsyncpa [#allocation3], 1
    %4279 = vsyncpa [#allocation5], 1
    %4280 = vsyncpa [#allocation8], 1

</llo_original>
